<compile_context>
chip_gen: v7x
topology: tpu7x:2x2x1
jax: 0.10.0
libtpu: 0.0.40
codegen_flags: <defaults>
</compile_context>

<pallas_src>
import jax
import jax.numpy as jnp
from jax import lax
from jax.experimental import pallas as pl
from jax.experimental.pallas import tpu as pltpu

EPS = 1e-5
LANE = 128


def _residual_block_kernel(x_ref, w1_ref, w2_ref, pvec_ref, alpha_ref,
                           out_ref, canvas_ref):
    n, h, w, cp = x_ref.shape
    nhw = n * h * w
    inv_nhw = jnp.float32(1.0 / nhw)

    # Per-channel parameter table: rows = [b1, g1, be1, b2, g2, be2, 0, 0]
    pv = pvec_ref[...]                       # (8, Cp) fp32
    b1, g1, be1 = pv[0], pv[1], pv[2]
    b2, g2, be2 = pv[3], pv[4], pv[5]
    alpha = alpha_ref[0]                     # shared PReLU scalar (SMEM)

    # ---- zero ONLY the 1-pixel halo of the shared canvas (interior is
    #      overwritten before each conv; halo stays zero for both convs) ----
    zrow = jnp.zeros((n, 1, w + 2, cp), jnp.float32)
    zcol = jnp.zeros((n, h + 2, 1, cp), jnp.float32)
    canvas_ref[:, 0:1, :, :] = zrow
    canvas_ref[:, h + 1:h + 2, :, :] = zrow
    canvas_ref[:, :, 0:1, :] = zcol
    canvas_ref[:, :, w + 1:w + 2, :] = zcol

    def conv3x3(w_ref, bias):
        # 9 unrolled per-tap matmuls: (nhw, Cp) bf16 x (Cp, Cp) bf16 -> fp32.
        # Each tap's LHS is a statically shifted canvas window (no im2col
        # patch slab is ever materialized).
        acc = None
        for dy in range(3):
            for dx in range(3):
                lhs = canvas_ref[:, dy:dy + h, dx:dx + w, :].reshape(nhw, cp)
                part = jnp.dot(lhs.astype(jnp.bfloat16), w_ref[dy * 3 + dx],
                               preferred_element_type=jnp.float32)
                acc = part if acc is None else acc + part
        # NOTE: BN subtracts the batch mean right after, so the conv bias is
        # mathematically cancelled; it is kept for fidelity (one cheap VPU add).
        return acc + bias

    def batchnorm(y, gamma, beta):
        # Single-pass stats: sum and sum-of-squares (fp32), biased variance.
        s1 = jnp.sum(y, axis=0)
        s2 = jnp.sum(y * y, axis=0)
        mean = s1 * inv_nhw
        var = s2 * inv_nhw - mean * mean
        scale = gamma * lax.rsqrt(var + EPS)
        shift = beta - mean * scale
        return y * scale + shift

    # ---- conv1 -> bn1 -> PReLU ----
    x = x_ref[...]                                           # (n,h,w,cp) fp32
    canvas_ref[:, 1:h + 1, 1:w + 1, :] = x
    y = conv3x3(w1_ref, b1)
    y = batchnorm(y, g1, be1)
    y = jnp.where(y > 0, y, alpha * y)

    # ---- conv2 -> bn2 -> residual add (canvas reused, halo already zero) ----
    canvas_ref[:, 1:h + 1, 1:w + 1, :] = y.reshape(n, h, w, cp)
    r = conv3x3(w2_ref, b2)
    r = batchnorm(r, g2, be2)

    out_ref[...] = x.reshape(nhw, cp) + r                    # lane-dense store


@jax.jit
def residual_block_pallas(x_nchw, params):
    N, C, H, W = x_nchw.shape
    Cp = ((C + LANE - 1) // LANE) * LANE                    # lane-dense channels

    # NCHW (PyTorch) -> NHWC, pad channels with zeros to Cp (layout plumbing
    # stays in the wrapper; padded channels are exact zeros end-to-end).
    x = jnp.transpose(x_nchw, (0, 2, 3, 1)).astype(jnp.float32)
    x = jnp.pad(x, ((0, 0), (0, 0), (0, 0), (0, Cp - C)))

    def pad_weight(w_hwio):                                  # (3,3,C,C) HWIO
        wp = jnp.zeros((3, 3, Cp, Cp), jnp.float32).at[:, :, :C, :C].set(w_hwio)
        # per-tap layout: tap index t = dy*3+dx, slab (Cin, Cout)
        return wp.reshape(9, Cp, Cp).astype(jnp.bfloat16)

    w1 = pad_weight(params["w1"])
    w2 = pad_weight(params["w2"])

    def pad_vec(v, fill=0.0):
        return jnp.full((Cp,), fill, jnp.float32).at[:C].set(v.reshape(-1))

    pvec = jnp.stack([
        pad_vec(params["b1"]), pad_vec(params["g1"], 1.0), pad_vec(params["be1"]),
        pad_vec(params["b2"]), pad_vec(params["g2"], 1.0), pad_vec(params["be2"]),
        jnp.zeros((Cp,), jnp.float32), jnp.zeros((Cp,), jnp.float32),
    ])                                                       # (8, Cp)

    alpha = params["alpha"].reshape(-1)[:1].astype(jnp.float32)   # (1,) scalar

    vmem = pl.BlockSpec(memory_space=pltpu.MemorySpace.VMEM)
    smem = pl.BlockSpec(memory_space=pltpu.MemorySpace.SMEM)

    out2d = pl.pallas_call(
        _residual_block_kernel,
        out_shape=jax.ShapeDtypeStruct((N * H * W, Cp), jnp.float32),
        in_specs=[vmem, vmem, vmem, vmem, smem],
        out_specs=vmem,
        scratch_shapes=[pltpu.VMEM((N, H + 2, W + 2, Cp), jnp.float32)],
    )(x, w1, w2, pvec, alpha)

    out = out2d.reshape(N, H, W, Cp)[:, :, :, :C]
    return jnp.transpose(out, (0, 3, 1, 2))                  # back to NCHW


@jax.jit
def residual_block_ref(x_nchw, params):
    # Pure-JAX fp32 reference (XLA conv), same math as the PyTorch module.
    x = jnp.transpose(x_nchw, (0, 2, 3, 1)).astype(jnp.float32)

    def conv(a, w, b):
        y = lax.conv_general_dilated(
            a, w, window_strides=(1, 1), padding="SAME",
            dimension_numbers=("NHWC", "HWIO", "NHWC"))
        return y + b.reshape(1, 1, 1, -1)

    def bn(y, g, be):
        mean = jnp.mean(y, axis=(0, 1, 2), keepdims=True)
        var = jnp.mean((y - mean) ** 2, axis=(0, 1, 2), keepdims=True)
        return (y - mean) * lax.rsqrt(var + EPS) * g.reshape(1, 1, 1, -1) \
            + be.reshape(1, 1, 1, -1)

    y = conv(x, params["w1"], params["b1"])
    y = bn(y, params["g1"], params["be1"])
    a = params["alpha"][0, 0]
    y = jnp.where(y > 0, y, a * y)
    r = conv(y, params["w2"], params["b2"])
    r = bn(r, params["g2"], params["be2"])
    return jnp.transpose(x + r, (0, 3, 1, 2))


def make_params(channels, key):
    ks = jax.random.split(key, 8)
    C = channels
    return {
        # conv weights in HWIO layout (kh, kw, Cin, Cout); a PyTorch OIHW
        # weight converts via transpose(2, 3, 1, 0).
        "w1": 0.1 * jax.random.normal(ks[0], (3, 3, C, C), jnp.float32),
        "b1": 0.1 * jax.random.normal(ks[1], (1, C), jnp.float32),
        "g1": 1.0 + 0.1 * jax.random.normal(ks[2], (1, C), jnp.float32),
        "be1": 0.1 * jax.random.normal(ks[3], (1, C), jnp.float32),
        "alpha": jnp.full((1, 1), 0.25, jnp.float32),   # PReLU default init
        "w2": 0.1 * jax.random.normal(ks[4], (3, 3, C, C), jnp.float32),
        "b2": 0.1 * jax.random.normal(ks[5], (1, C), jnp.float32),
        "g2": 1.0 + 0.1 * jax.random.normal(ks[6], (1, C), jnp.float32),
        "be2": 0.1 * jax.random.normal(ks[7], (1, C), jnp.float32),
    }


if __name__ == "__main__":
    key = jax.random.PRNGKey(0)
    k_x, k_p = jax.random.split(key)

    N, C, H, W = 2, 4, 16, 16          # PyTorch-style NCHW input
    x = jax.random.normal(k_x, (N, C, H, W), jnp.float32)
    params = make_params(C, k_p)

    out = jax.block_until_ready(residual_block_pallas(x, params))
    ref = jax.block_until_ready(residual_block_ref(x, params))

    assert out.shape == (N, C, H, W)
    max_err = float(jnp.max(jnp.abs(out - ref)))
    # bf16 MXU inputs (fp32 accumulation) -> tolerance accounts for bf16
    # input rounding through two convs + two BN normalizations.
    assert jnp.allclose(out, ref, atol=3e-2, rtol=3e-2), \
        f"max abs err = {max_err}"

    print("KERNEL_OK")
</pallas_src>

<mosaic_0001>
module attributes {stable_mosaic.version = 11 : i64} {
  func.func @_residual_block_kernel(%arg0: memref<2x16x16x128xf32, #tpu.memory_space<vmem>>, %arg1: memref<9x128x128xbf16, #tpu.memory_space<vmem>>, %arg2: memref<9x128x128xbf16, #tpu.memory_space<vmem>>, %arg3: memref<8x128xf32, #tpu.memory_space<vmem>>, %arg4: memref<1xf32, #tpu.memory_space<smem>>, %arg5: memref<512x128xf32, #tpu.memory_space<vmem>>, %arg6: memref<2x18x18x128xf32, #tpu.memory_space<vmem>>) attributes {dimension_semantics = [], scalar_prefetch = 0 : i64, scratch_operands = 1 : i64, tpu.core_type = #tpu.core_type<tc>} {
    %c0 = arith.constant 0 : index
    %c0_0 = arith.constant 0 : index
    %0 = vector.load %arg3[%c0, %c0_0] : memref<8x128xf32, #tpu.memory_space<vmem>>, vector<8x128xf32>
    %1 = vector.extract_strided_slice %0 {offsets = [0, 0], sizes = [1, 128], strides = [1, 1]} : vector<8x128xf32> to vector<1x128xf32>
    %2 = vector.shape_cast %1 : vector<1x128xf32> to vector<128xf32>
    %3 = vector.extract_strided_slice %0 {offsets = [1, 0], sizes = [1, 128], strides = [1, 1]} : vector<8x128xf32> to vector<1x128xf32>
    %4 = vector.shape_cast %3 : vector<1x128xf32> to vector<128xf32>
    %5 = vector.extract_strided_slice %0 {offsets = [2, 0], sizes = [1, 128], strides = [1, 1]} : vector<8x128xf32> to vector<1x128xf32>
    %6 = vector.shape_cast %5 : vector<1x128xf32> to vector<128xf32>
    %7 = vector.extract_strided_slice %0 {offsets = [3, 0], sizes = [1, 128], strides = [1, 1]} : vector<8x128xf32> to vector<1x128xf32>
    %8 = vector.shape_cast %7 : vector<1x128xf32> to vector<128xf32>
    %9 = vector.extract_strided_slice %0 {offsets = [4, 0], sizes = [1, 128], strides = [1, 1]} : vector<8x128xf32> to vector<1x128xf32>
    %10 = vector.shape_cast %9 : vector<1x128xf32> to vector<128xf32>
    %11 = vector.extract_strided_slice %0 {offsets = [5, 0], sizes = [1, 128], strides = [1, 1]} : vector<8x128xf32> to vector<1x128xf32>
    %12 = vector.shape_cast %11 : vector<1x128xf32> to vector<128xf32>
    %c0_1 = arith.constant 0 : index
    %13 = memref.load %arg4[%c0_1] : memref<1xf32, #tpu.memory_space<smem>>
    %cst = arith.constant 0.000000e+00 : f32
    %14 = vector.broadcast %cst : f32 to vector<2x1x18x128xf32>
    %cst_2 = arith.constant 0.000000e+00 : f32
    %15 = vector.broadcast %cst_2 : f32 to vector<2x18x1x128xf32>
    %c0_3 = arith.constant 0 : index
    %c0_4 = arith.constant 0 : index
    %c0_5 = arith.constant 0 : index
    %c0_6 = arith.constant 0 : index
    %16 = vector.load %arg6[%c0_3, %c0_4, %c0_5, %c0_6] : memref<2x18x18x128xf32, #tpu.memory_space<vmem>>, vector<2x1x18x128xf32>
    tpu.vector_store %arg6[%c0_3, %c0_4, %c0_5, %c0_6], %14 {strides = array<i32>} : memref<2x18x18x128xf32, #tpu.memory_space<vmem>>, vector<2x1x18x128xf32>,
    %c0_7 = arith.constant 0 : index
    %c17 = arith.constant 17 : index
    %c0_8 = arith.constant 0 : index
    %c0_9 = arith.constant 0 : index
    %17 = vector.load %arg6[%c0_7, %c17, %c0_8, %c0_9] : memref<2x18x18x128xf32, #tpu.memory_space<vmem>>, vector<2x1x18x128xf32>
    tpu.vector_store %arg6[%c0_7, %c17, %c0_8, %c0_9], %14 {strides = array<i32>} : memref<2x18x18x128xf32, #tpu.memory_space<vmem>>, vector<2x1x18x128xf32>,
    %c0_10 = arith.constant 0 : index
    %c0_11 = arith.constant 0 : index
    %c0_12 = arith.constant 0 : index
    %c0_13 = arith.constant 0 : index
    %18 = vector.load %arg6[%c0_10, %c0_11, %c0_12, %c0_13] : memref<2x18x18x128xf32, #tpu.memory_space<vmem>>, vector<2x18x1x128xf32>
    tpu.vector_store %arg6[%c0_10, %c0_11, %c0_12, %c0_13], %15 {strides = array<i32>} : memref<2x18x18x128xf32, #tpu.memory_space<vmem>>, vector<2x18x1x128xf32>,
    %c0_14 = arith.constant 0 : index
    %c0_15 = arith.constant 0 : index
    %c17_16 = arith.constant 17 : index
    %c0_17 = arith.constant 0 : index
    %19 = vector.load %arg6[%c0_14, %c0_15, %c17_16, %c0_17] : memref<2x18x18x128xf32, #tpu.memory_space<vmem>>, vector<2x18x1x128xf32>
    tpu.vector_store %arg6[%c0_14, %c0_15, %c17_16, %c0_17], %15 {strides = array<i32>} : memref<2x18x18x128xf32, #tpu.memory_space<vmem>>, vector<2x18x1x128xf32>,
    %c0_18 = arith.constant 0 : index
    %c0_19 = arith.constant 0 : index
    %c0_20 = arith.constant 0 : index
    %c0_21 = arith.constant 0 : index
    %20 = vector.load %arg0[%c0_18, %c0_19, %c0_20, %c0_21] : memref<2x16x16x128xf32, #tpu.memory_space<vmem>>, vector<2x16x16x128xf32>
    %c0_22 = arith.constant 0 : index
    %c1 = arith.constant 1 : index
    %c1_23 = arith.constant 1 : index
    %c0_24 = arith.constant 0 : index
    %21 = vector.load %arg6[%c0_22, %c1, %c1_23, %c0_24] : memref<2x18x18x128xf32, #tpu.memory_space<vmem>>, vector<2x16x16x128xf32>
    tpu.vector_store %arg6[%c0_22, %c1, %c1_23, %c0_24], %20 {strides = array<i32>} : memref<2x18x18x128xf32, #tpu.memory_space<vmem>>, vector<2x16x16x128xf32>,
    %c0_25 = arith.constant 0 : index
    %c0_26 = arith.constant 0 : index
    %c0_27 = arith.constant 0 : index
    %c0_28 = arith.constant 0 : index
    %22 = vector.load %arg6[%c0_25, %c0_26, %c0_27, %c0_28] : memref<2x18x18x128xf32, #tpu.memory_space<vmem>>, vector<2x16x16x128xf32>
    %23 = vector.shape_cast %22 : vector<2x16x16x128xf32> to vector<512x128xf32>
    %24 = arith.truncf %23 : vector<512x128xf32> to vector<512x128xbf16>
    %c0_29 = arith.constant 0 : index
    %c0_30 = arith.constant 0 : index
    %c0_31 = arith.constant 0 : index
    %25 = vector.load %arg1[%c0_29, %c0_30, %c0_31] : memref<9x128x128xbf16, #tpu.memory_space<vmem>>, vector<1x128x128xbf16>
    %26 = vector.shape_cast %25 : vector<1x128x128xbf16> to vector<128x128xbf16>
    %cst_32 = arith.constant dense<0.000000e+00> : vector<512x128xf32>
    %27 = tpu.matmul %24, %26, %cst_32 {dimension_numbers = #tpu.dot_dimension_numbers<[1], [0], [0], [1], [0, 0, 1, 1], [], []>} : vector<512x128xbf16>, vector<128x128xbf16>, vector<512x128xf32> -> vector<512x128xf32>
    %c0_33 = arith.constant 0 : index
    %c0_34 = arith.constant 0 : index
    %c1_35 = arith.constant 1 : index
    %c0_36 = arith.constant 0 : index
    %28 = vector.load %arg6[%c0_33, %c0_34, %c1_35, %c0_36] : memref<2x18x18x128xf32, #tpu.memory_space<vmem>>, vector<2x16x16x128xf32>
    %29 = vector.shape_cast %28 : vector<2x16x16x128xf32> to vector<512x128xf32>
    %30 = arith.truncf %29 : vector<512x128xf32> to vector<512x128xbf16>
    %c1_37 = arith.constant 1 : index
    %c0_38 = arith.constant 0 : index
    %c0_39 = arith.constant 0 : index
    %31 = vector.load %arg1[%c1_37, %c0_38, %c0_39] : memref<9x128x128xbf16, #tpu.memory_space<vmem>>, vector<1x128x128xbf16>
    %32 = vector.shape_cast %31 : vector<1x128x128xbf16> to vector<128x128xbf16>
    %cst_40 = arith.constant dense<0.000000e+00> : vector<512x128xf32>
    %33 = tpu.matmul %30, %32, %cst_40 {dimension_numbers = #tpu.dot_dimension_numbers<[1], [0], [0], [1], [0, 0, 1, 1], [], []>} : vector<512x128xbf16>, vector<128x128xbf16>, vector<512x128xf32> -> vector<512x128xf32>
    %34 = arith.addf %27, %33 : vector<512x128xf32>
    %c0_41 = arith.constant 0 : index
    %c0_42 = arith.constant 0 : index
    %c2 = arith.constant 2 : index
    %c0_43 = arith.constant 0 : index
    %35 = vector.load %arg6[%c0_41, %c0_42, %c2, %c0_43] : memref<2x18x18x128xf32, #tpu.memory_space<vmem>>, vector<2x16x16x128xf32>
    %36 = vector.shape_cast %35 : vector<2x16x16x128xf32> to vector<512x128xf32>
    %37 = arith.truncf %36 : vector<512x128xf32> to vector<512x128xbf16>
    %c2_44 = arith.constant 2 : index
    %c0_45 = arith.constant 0 : index
    %c0_46 = arith.constant 0 : index
    %38 = vector.load %arg1[%c2_44, %c0_45, %c0_46] : memref<9x128x128xbf16, #tpu.memory_space<vmem>>, vector<1x128x128xbf16>
    %39 = vector.shape_cast %38 : vector<1x128x128xbf16> to vector<128x128xbf16>
    %cst_47 = arith.constant dense<0.000000e+00> : vector<512x128xf32>
    %40 = tpu.matmul %37, %39, %cst_47 {dimension_numbers = #tpu.dot_dimension_numbers<[1], [0], [0], [1], [0, 0, 1, 1], [], []>} : vector<512x128xbf16>, vector<128x128xbf16>, vector<512x128xf32> -> vector<512x128xf32>
    %41 = arith.addf %34, %40 : vector<512x128xf32>
    %c0_48 = arith.constant 0 : index
    %c1_49 = arith.constant 1 : index
    %c0_50 = arith.constant 0 : index
    %c0_51 = arith.constant 0 : index
    %42 = vector.load %arg6[%c0_48, %c1_49, %c0_50, %c0_51] : memref<2x18x18x128xf32, #tpu.memory_space<vmem>>, vector<2x16x16x128xf32>
    %43 = vector.shape_cast %42 : vector<2x16x16x128xf32> to vector<512x128xf32>
    %44 = arith.truncf %43 : vector<512x128xf32> to vector<512x128xbf16>
    %c3 = arith.constant 3 : index
    %c0_52 = arith.constant 0 : index
    %c0_53 = arith.constant 0 : index
    %45 = vector.load %arg1[%c3, %c0_52, %c0_53] : memref<9x128x128xbf16, #tpu.memory_space<vmem>>, vector<1x128x128xbf16>
    %46 = vector.shape_cast %45 : vector<1x128x128xbf16> to vector<128x128xbf16>
    %cst_54 = arith.constant dense<0.000000e+00> : vector<512x128xf32>
    %47 = tpu.matmul %44, %46, %cst_54 {dimension_numbers = #tpu.dot_dimension_numbers<[1], [0], [0], [1], [0, 0, 1, 1], [], []>} : vector<512x128xbf16>, vector<128x128xbf16>, vector<512x128xf32> -> vector<512x128xf32>
    %48 = arith.addf %41, %47 : vector<512x128xf32>
    %c0_55 = arith.constant 0 : index
    %c1_56 = arith.constant 1 : index
    %c1_57 = arith.constant 1 : index
    %c0_58 = arith.constant 0 : index
    %49 = vector.load %arg6[%c0_55, %c1_56, %c1_57, %c0_58] : memref<2x18x18x128xf32, #tpu.memory_space<vmem>>, vector<2x16x16x128xf32>
    %50 = vector.shape_cast %49 : vector<2x16x16x128xf32> to vector<512x128xf32>
    %51 = arith.truncf %50 : vector<512x128xf32> to vector<512x128xbf16>
    %c4 = arith.constant 4 : index
    %c0_59 = arith.constant 0 : index
    %c0_60 = arith.constant 0 : index
    %52 = vector.load %arg1[%c4, %c0_59, %c0_60] : memref<9x128x128xbf16, #tpu.memory_space<vmem>>, vector<1x128x128xbf16>
    %53 = vector.shape_cast %52 : vector<1x128x128xbf16> to vector<128x128xbf16>
    %cst_61 = arith.constant dense<0.000000e+00> : vector<512x128xf32>
    %54 = tpu.matmul %51, %53, %cst_61 {dimension_numbers = #tpu.dot_dimension_numbers<[1], [0], [0], [1], [0, 0, 1, 1], [], []>} : vector<512x128xbf16>, vector<128x128xbf16>, vector<512x128xf32> -> vector<512x128xf32>
    %55 = arith.addf %48, %54 : vector<512x128xf32>
    %c0_62 = arith.constant 0 : index
    %c1_63 = arith.constant 1 : index
    %c2_64 = arith.constant 2 : index
    %c0_65 = arith.constant 0 : index
    %56 = vector.load %arg6[%c0_62, %c1_63, %c2_64, %c0_65] : memref<2x18x18x128xf32, #tpu.memory_space<vmem>>, vector<2x16x16x128xf32>
    %57 = vector.shape_cast %56 : vector<2x16x16x128xf32> to vector<512x128xf32>
    %58 = arith.truncf %57 : vector<512x128xf32> to vector<512x128xbf16>
    %c5 = arith.constant 5 : index
    %c0_66 = arith.constant 0 : index
    %c0_67 = arith.constant 0 : index
    %59 = vector.load %arg1[%c5, %c0_66, %c0_67] : memref<9x128x128xbf16, #tpu.memory_space<vmem>>, vector<1x128x128xbf16>
    %60 = vector.shape_cast %59 : vector<1x128x128xbf16> to vector<128x128xbf16>
    %cst_68 = arith.constant dense<0.000000e+00> : vector<512x128xf32>
    %61 = tpu.matmul %58, %60, %cst_68 {dimension_numbers = #tpu.dot_dimension_numbers<[1], [0], [0], [1], [0, 0, 1, 1], [], []>} : vector<512x128xbf16>, vector<128x128xbf16>, vector<512x128xf32> -> vector<512x128xf32>
    %62 = arith.addf %55, %61 : vector<512x128xf32>
    %c0_69 = arith.constant 0 : index
    %c2_70 = arith.constant 2 : index
    %c0_71 = arith.constant 0 : index
    %c0_72 = arith.constant 0 : index
    %63 = vector.load %arg6[%c0_69, %c2_70, %c0_71, %c0_72] : memref<2x18x18x128xf32, #tpu.memory_space<vmem>>, vector<2x16x16x128xf32>
    %64 = vector.shape_cast %63 : vector<2x16x16x128xf32> to vector<512x128xf32>
    %65 = arith.truncf %64 : vector<512x128xf32> to vector<512x128xbf16>
    %c6 = arith.constant 6 : index
    %c0_73 = arith.constant 0 : index
    %c0_74 = arith.constant 0 : index
    %66 = vector.load %arg1[%c6, %c0_73, %c0_74] : memref<9x128x128xbf16, #tpu.memory_space<vmem>>, vector<1x128x128xbf16>
    %67 = vector.shape_cast %66 : vector<1x128x128xbf16> to vector<128x128xbf16>
    %cst_75 = arith.constant dense<0.000000e+00> : vector<512x128xf32>
    %68 = tpu.matmul %65, %67, %cst_75 {dimension_numbers = #tpu.dot_dimension_numbers<[1], [0], [0], [1], [0, 0, 1, 1], [], []>} : vector<512x128xbf16>, vector<128x128xbf16>, vector<512x128xf32> -> vector<512x128xf32>
    %69 = arith.addf %62, %68 : vector<512x128xf32>
    %c0_76 = arith.constant 0 : index
    %c2_77 = arith.constant 2 : index
    %c1_78 = arith.constant 1 : index
    %c0_79 = arith.constant 0 : index
    %70 = vector.load %arg6[%c0_76, %c2_77, %c1_78, %c0_79] : memref<2x18x18x128xf32, #tpu.memory_space<vmem>>, vector<2x16x16x128xf32>
    %71 = vector.shape_cast %70 : vector<2x16x16x128xf32> to vector<512x128xf32>
    %72 = arith.truncf %71 : vector<512x128xf32> to vector<512x128xbf16>
    %c7 = arith.constant 7 : index
    %c0_80 = arith.constant 0 : index
    %c0_81 = arith.constant 0 : index
    %73 = vector.load %arg1[%c7, %c0_80, %c0_81] : memref<9x128x128xbf16, #tpu.memory_space<vmem>>, vector<1x128x128xbf16>
    %74 = vector.shape_cast %73 : vector<1x128x128xbf16> to vector<128x128xbf16>
    %cst_82 = arith.constant dense<0.000000e+00> : vector<512x128xf32>
    %75 = tpu.matmul %72, %74, %cst_82 {dimension_numbers = #tpu.dot_dimension_numbers<[1], [0], [0], [1], [0, 0, 1, 1], [], []>} : vector<512x128xbf16>, vector<128x128xbf16>, vector<512x128xf32> -> vector<512x128xf32>
    %76 = arith.addf %69, %75 : vector<512x128xf32>
    %c0_83 = arith.constant 0 : index
    %c2_84 = arith.constant 2 : index
    %c2_85 = arith.constant 2 : index
    %c0_86 = arith.constant 0 : index
    %77 = vector.load %arg6[%c0_83, %c2_84, %c2_85, %c0_86] : memref<2x18x18x128xf32, #tpu.memory_space<vmem>>, vector<2x16x16x128xf32>
    %78 = vector.shape_cast %77 : vector<2x16x16x128xf32> to vector<512x128xf32>
    %79 = arith.truncf %78 : vector<512x128xf32> to vector<512x128xbf16>
    %c8 = arith.constant 8 : index
    %c0_87 = arith.constant 0 : index
    %c0_88 = arith.constant 0 : index
    %80 = vector.load %arg1[%c8, %c0_87, %c0_88] : memref<9x128x128xbf16, #tpu.memory_space<vmem>>, vector<1x128x128xbf16>
    %81 = vector.shape_cast %80 : vector<1x128x128xbf16> to vector<128x128xbf16>
    %cst_89 = arith.constant dense<0.000000e+00> : vector<512x128xf32>
    %82 = tpu.matmul %79, %81, %cst_89 {dimension_numbers = #tpu.dot_dimension_numbers<[1], [0], [0], [1], [0, 0, 1, 1], [], []>} : vector<512x128xbf16>, vector<128x128xbf16>, vector<512x128xf32> -> vector<512x128xf32>
    %83 = arith.addf %76, %82 : vector<512x128xf32>
    %84 = vector.shape_cast %2 : vector<128xf32> to vector<1x128xf32>
    %85 = vector.broadcast %84 : vector<1x128xf32> to vector<512x128xf32>
    %86 = arith.addf %83, %85 : vector<512x128xf32>
    %cst_90 = arith.constant dense<0.000000e+00> : vector<128xf32>
    %87 = vector.multi_reduction <add>, %86, %cst_90 [0] : vector<512x128xf32> to vector<128xf32>
    %88 = arith.mulf %86, %86 : vector<512x128xf32>
    %cst_91 = arith.constant dense<0.000000e+00> : vector<128xf32>
    %89 = vector.multi_reduction <add>, %88, %cst_91 [0] : vector<512x128xf32> to vector<128xf32>
    %cst_92 = arith.constant 0.001953125 : f32
    %90 = vector.broadcast %cst_92 : f32 to vector<128xf32>
    %91 = arith.mulf %87, %90 : vector<128xf32>
    %cst_93 = arith.constant 0.001953125 : f32
    %92 = vector.broadcast %cst_93 : f32 to vector<128xf32>
    %93 = arith.mulf %89, %92 : vector<128xf32>
    %94 = arith.mulf %91, %91 : vector<128xf32>
    %95 = arith.subf %93, %94 : vector<128xf32>
    %cst_94 = arith.constant 9.99999974E-6 : f32
    %96 = vector.broadcast %cst_94 : f32 to vector<128xf32>
    %97 = arith.addf %95, %96 : vector<128xf32>
    %98 = math.rsqrt %97 : vector<128xf32>
    %99 = arith.mulf %4, %98 : vector<128xf32>
    %100 = arith.mulf %91, %99 : vector<128xf32>
    %101 = arith.subf %6, %100 : vector<128xf32>
    %102 = vector.shape_cast %99 : vector<128xf32> to vector<1x128xf32>
    %103 = vector.broadcast %102 : vector<1x128xf32> to vector<512x128xf32>
    %104 = arith.mulf %86, %103 : vector<512x128xf32>
    %105 = vector.shape_cast %101 : vector<128xf32> to vector<1x128xf32>
    %106 = vector.broadcast %105 : vector<1x128xf32> to vector<512x128xf32>
    %107 = arith.addf %104, %106 : vector<512x128xf32>
    %cst_95 = arith.constant 0.000000e+00 : f32
    %108 = vector.broadcast %cst_95 : f32 to vector<512x128xf32>
    %109 = arith.cmpf ogt, %107, %108 : vector<512x128xf32>
    %110 = vector.broadcast %13 : f32 to vector<512x128xf32>
    %111 = arith.mulf %110, %107 : vector<512x128xf32>
    %112 = arith.select %109, %107, %111 : vector<512x128xi1>, vector<512x128xf32>
    %113 = vector.shape_cast %112 : vector<512x128xf32> to vector<2x16x16x128xf32>
    %c0_96 = arith.constant 0 : index
    %c1_97 = arith.constant 1 : index
    %c1_98 = arith.constant 1 : index
    %c0_99 = arith.constant 0 : index
    %114 = vector.load %arg6[%c0_96, %c1_97, %c1_98, %c0_99] : memref<2x18x18x128xf32, #tpu.memory_space<vmem>>, vector<2x16x16x128xf32>
    tpu.vector_store %arg6[%c0_96, %c1_97, %c1_98, %c0_99], %113 {strides = array<i32>} : memref<2x18x18x128xf32, #tpu.memory_space<vmem>>, vector<2x16x16x128xf32>,
    %c0_100 = arith.constant 0 : index
    %c0_101 = arith.constant 0 : index
    %c0_102 = arith.constant 0 : index
    %c0_103 = arith.constant 0 : index
    %115 = vector.load %arg6[%c0_100, %c0_101, %c0_102, %c0_103] : memref<2x18x18x128xf32, #tpu.memory_space<vmem>>, vector<2x16x16x128xf32>
    %116 = vector.shape_cast %115 : vector<2x16x16x128xf32> to vector<512x128xf32>
    %117 = arith.truncf %116 : vector<512x128xf32> to vector<512x128xbf16>
    %c0_104 = arith.constant 0 : index
    %c0_105 = arith.constant 0 : index
    %c0_106 = arith.constant 0 : index
    %118 = vector.load %arg2[%c0_104, %c0_105, %c0_106] : memref<9x128x128xbf16, #tpu.memory_space<vmem>>, vector<1x128x128xbf16>
    %119 = vector.shape_cast %118 : vector<1x128x128xbf16> to vector<128x128xbf16>
    %cst_107 = arith.constant dense<0.000000e+00> : vector<512x128xf32>
    %120 = tpu.matmul %117, %119, %cst_107 {dimension_numbers = #tpu.dot_dimension_numbers<[1], [0], [0], [1], [0, 0, 1, 1], [], []>} : vector<512x128xbf16>, vector<128x128xbf16>, vector<512x128xf32> -> vector<512x128xf32>
    %c0_108 = arith.constant 0 : index
    %c0_109 = arith.constant 0 : index
    %c1_110 = arith.constant 1 : index
    %c0_111 = arith.constant 0 : index
    %121 = vector.load %arg6[%c0_108, %c0_109, %c1_110, %c0_111] : memref<2x18x18x128xf32, #tpu.memory_space<vmem>>, vector<2x16x16x128xf32>
    %122 = vector.shape_cast %121 : vector<2x16x16x128xf32> to vector<512x128xf32>
    %123 = arith.truncf %122 : vector<512x128xf32> to vector<512x128xbf16>
    %c1_112 = arith.constant 1 : index
    %c0_113 = arith.constant 0 : index
    %c0_114 = arith.constant 0 : index
    %124 = vector.load %arg2[%c1_112, %c0_113, %c0_114] : memref<9x128x128xbf16, #tpu.memory_space<vmem>>, vector<1x128x128xbf16>
    %125 = vector.shape_cast %124 : vector<1x128x128xbf16> to vector<128x128xbf16>
    %cst_115 = arith.constant dense<0.000000e+00> : vector<512x128xf32>
    %126 = tpu.matmul %123, %125, %cst_115 {dimension_numbers = #tpu.dot_dimension_numbers<[1], [0], [0], [1], [0, 0, 1, 1], [], []>} : vector<512x128xbf16>, vector<128x128xbf16>, vector<512x128xf32> -> vector<512x128xf32>
    %127 = arith.addf %120, %126 : vector<512x128xf32>
    %c0_116 = arith.constant 0 : index
    %c0_117 = arith.constant 0 : index
    %c2_118 = arith.constant 2 : index
    %c0_119 = arith.constant 0 : index
    %128 = vector.load %arg6[%c0_116, %c0_117, %c2_118, %c0_119] : memref<2x18x18x128xf32, #tpu.memory_space<vmem>>, vector<2x16x16x128xf32>
    %129 = vector.shape_cast %128 : vector<2x16x16x128xf32> to vector<512x128xf32>
    %130 = arith.truncf %129 : vector<512x128xf32> to vector<512x128xbf16>
    %c2_120 = arith.constant 2 : index
    %c0_121 = arith.constant 0 : index
    %c0_122 = arith.constant 0 : index
    %131 = vector.load %arg2[%c2_120, %c0_121, %c0_122] : memref<9x128x128xbf16, #tpu.memory_space<vmem>>, vector<1x128x128xbf16>
    %132 = vector.shape_cast %131 : vector<1x128x128xbf16> to vector<128x128xbf16>
    %cst_123 = arith.constant dense<0.000000e+00> : vector<512x128xf32>
    %133 = tpu.matmul %130, %132, %cst_123 {dimension_numbers = #tpu.dot_dimension_numbers<[1], [0], [0], [1], [0, 0, 1, 1], [], []>} : vector<512x128xbf16>, vector<128x128xbf16>, vector<512x128xf32> -> vector<512x128xf32>
    %134 = arith.addf %127, %133 : vector<512x128xf32>
    %c0_124 = arith.constant 0 : index
    %c1_125 = arith.constant 1 : index
    %c0_126 = arith.constant 0 : index
    %c0_127 = arith.constant 0 : index
    %135 = vector.load %arg6[%c0_124, %c1_125, %c0_126, %c0_127] : memref<2x18x18x128xf32, #tpu.memory_space<vmem>>, vector<2x16x16x128xf32>
    %136 = vector.shape_cast %135 : vector<2x16x16x128xf32> to vector<512x128xf32>
    %137 = arith.truncf %136 : vector<512x128xf32> to vector<512x128xbf16>
    %c3_128 = arith.constant 3 : index
    %c0_129 = arith.constant 0 : index
    %c0_130 = arith.constant 0 : index
    %138 = vector.load %arg2[%c3_128, %c0_129, %c0_130] : memref<9x128x128xbf16, #tpu.memory_space<vmem>>, vector<1x128x128xbf16>
    %139 = vector.shape_cast %138 : vector<1x128x128xbf16> to vector<128x128xbf16>
    %cst_131 = arith.constant dense<0.000000e+00> : vector<512x128xf32>
    %140 = tpu.matmul %137, %139, %cst_131 {dimension_numbers = #tpu.dot_dimension_numbers<[1], [0], [0], [1], [0, 0, 1, 1], [], []>} : vector<512x128xbf16>, vector<128x128xbf16>, vector<512x128xf32> -> vector<512x128xf32>
    %141 = arith.addf %134, %140 : vector<512x128xf32>
    %c0_132 = arith.constant 0 : index
    %c1_133 = arith.constant 1 : index
    %c1_134 = arith.constant 1 : index
    %c0_135 = arith.constant 0 : index
    %142 = vector.load %arg6[%c0_132, %c1_133, %c1_134, %c0_135] : memref<2x18x18x128xf32, #tpu.memory_space<vmem>>, vector<2x16x16x128xf32>
    %143 = vector.shape_cast %142 : vector<2x16x16x128xf32> to vector<512x128xf32>
    %144 = arith.truncf %143 : vector<512x128xf32> to vector<512x128xbf16>
    %c4_136 = arith.constant 4 : index
    %c0_137 = arith.constant 0 : index
    %c0_138 = arith.constant 0 : index
    %145 = vector.load %arg2[%c4_136, %c0_137, %c0_138] : memref<9x128x128xbf16, #tpu.memory_space<vmem>>, vector<1x128x128xbf16>
    %146 = vector.shape_cast %145 : vector<1x128x128xbf16> to vector<128x128xbf16>
    %cst_139 = arith.constant dense<0.000000e+00> : vector<512x128xf32>
    %147 = tpu.matmul %144, %146, %cst_139 {dimension_numbers = #tpu.dot_dimension_numbers<[1], [0], [0], [1], [0, 0, 1, 1], [], []>} : vector<512x128xbf16>, vector<128x128xbf16>, vector<512x128xf32> -> vector<512x128xf32>
    %148 = arith.addf %141, %147 : vector<512x128xf32>
    %c0_140 = arith.constant 0 : index
    %c1_141 = arith.constant 1 : index
    %c2_142 = arith.constant 2 : index
    %c0_143 = arith.constant 0 : index
    %149 = vector.load %arg6[%c0_140, %c1_141, %c2_142, %c0_143] : memref<2x18x18x128xf32, #tpu.memory_space<vmem>>, vector<2x16x16x128xf32>
    %150 = vector.shape_cast %149 : vector<2x16x16x128xf32> to vector<512x128xf32>
    %151 = arith.truncf %150 : vector<512x128xf32> to vector<512x128xbf16>
    %c5_144 = arith.constant 5 : index
    %c0_145 = arith.constant 0 : index
    %c0_146 = arith.constant 0 : index
    %152 = vector.load %arg2[%c5_144, %c0_145, %c0_146] : memref<9x128x128xbf16, #tpu.memory_space<vmem>>, vector<1x128x128xbf16>
    %153 = vector.shape_cast %152 : vector<1x128x128xbf16> to vector<128x128xbf16>
    %cst_147 = arith.constant dense<0.000000e+00> : vector<512x128xf32>
    %154 = tpu.matmul %151, %153, %cst_147 {dimension_numbers = #tpu.dot_dimension_numbers<[1], [0], [0], [1], [0, 0, 1, 1], [], []>} : vector<512x128xbf16>, vector<128x128xbf16>, vector<512x128xf32> -> vector<512x128xf32>
    %155 = arith.addf %148, %154 : vector<512x128xf32>
    %c0_148 = arith.constant 0 : index
    %c2_149 = arith.constant 2 : index
    %c0_150 = arith.constant 0 : index
    %c0_151 = arith.constant 0 : index
    %156 = vector.load %arg6[%c0_148, %c2_149, %c0_150, %c0_151] : memref<2x18x18x128xf32, #tpu.memory_space<vmem>>, vector<2x16x16x128xf32>
    %157 = vector.shape_cast %156 : vector<2x16x16x128xf32> to vector<512x128xf32>
    %158 = arith.truncf %157 : vector<512x128xf32> to vector<512x128xbf16>
    %c6_152 = arith.constant 6 : index
    %c0_153 = arith.constant 0 : index
    %c0_154 = arith.constant 0 : index
    %159 = vector.load %arg2[%c6_152, %c0_153, %c0_154] : memref<9x128x128xbf16, #tpu.memory_space<vmem>>, vector<1x128x128xbf16>
    %160 = vector.shape_cast %159 : vector<1x128x128xbf16> to vector<128x128xbf16>
    %cst_155 = arith.constant dense<0.000000e+00> : vector<512x128xf32>
    %161 = tpu.matmul %158, %160, %cst_155 {dimension_numbers = #tpu.dot_dimension_numbers<[1], [0], [0], [1], [0, 0, 1, 1], [], []>} : vector<512x128xbf16>, vector<128x128xbf16>, vector<512x128xf32> -> vector<512x128xf32>
    %162 = arith.addf %155, %161 : vector<512x128xf32>
    %c0_156 = arith.constant 0 : index
    %c2_157 = arith.constant 2 : index
    %c1_158 = arith.constant 1 : index
    %c0_159 = arith.constant 0 : index
    %163 = vector.load %arg6[%c0_156, %c2_157, %c1_158, %c0_159] : memref<2x18x18x128xf32, #tpu.memory_space<vmem>>, vector<2x16x16x128xf32>
    %164 = vector.shape_cast %163 : vector<2x16x16x128xf32> to vector<512x128xf32>
    %165 = arith.truncf %164 : vector<512x128xf32> to vector<512x128xbf16>
    %c7_160 = arith.constant 7 : index
    %c0_161 = arith.constant 0 : index
    %c0_162 = arith.constant 0 : index
    %166 = vector.load %arg2[%c7_160, %c0_161, %c0_162] : memref<9x128x128xbf16, #tpu.memory_space<vmem>>, vector<1x128x128xbf16>
    %167 = vector.shape_cast %166 : vector<1x128x128xbf16> to vector<128x128xbf16>
    %cst_163 = arith.constant dense<0.000000e+00> : vector<512x128xf32>
    %168 = tpu.matmul %165, %167, %cst_163 {dimension_numbers = #tpu.dot_dimension_numbers<[1], [0], [0], [1], [0, 0, 1, 1], [], []>} : vector<512x128xbf16>, vector<128x128xbf16>, vector<512x128xf32> -> vector<512x128xf32>
    %169 = arith.addf %162, %168 : vector<512x128xf32>
    %c0_164 = arith.constant 0 : index
    %c2_165 = arith.constant 2 : index
    %c2_166 = arith.constant 2 : index
    %c0_167 = arith.constant 0 : index
    %170 = vector.load %arg6[%c0_164, %c2_165, %c2_166, %c0_167] : memref<2x18x18x128xf32, #tpu.memory_space<vmem>>, vector<2x16x16x128xf32>
    %171 = vector.shape_cast %170 : vector<2x16x16x128xf32> to vector<512x128xf32>
    %172 = arith.truncf %171 : vector<512x128xf32> to vector<512x128xbf16>
    %c8_168 = arith.constant 8 : index
    %c0_169 = arith.constant 0 : index
    %c0_170 = arith.constant 0 : index
    %173 = vector.load %arg2[%c8_168, %c0_169, %c0_170] : memref<9x128x128xbf16, #tpu.memory_space<vmem>>, vector<1x128x128xbf16>
    %174 = vector.shape_cast %173 : vector<1x128x128xbf16> to vector<128x128xbf16>
    %cst_171 = arith.constant dense<0.000000e+00> : vector<512x128xf32>
    %175 = tpu.matmul %172, %174, %cst_171 {dimension_numbers = #tpu.dot_dimension_numbers<[1], [0], [0], [1], [0, 0, 1, 1], [], []>} : vector<512x128xbf16>, vector<128x128xbf16>, vector<512x128xf32> -> vector<512x128xf32>
    %176 = arith.addf %169, %175 : vector<512x128xf32>
    %177 = vector.shape_cast %8 : vector<128xf32> to vector<1x128xf32>
    %178 = vector.broadcast %177 : vector<1x128xf32> to vector<512x128xf32>
    %179 = arith.addf %176, %178 : vector<512x128xf32>
    %cst_172 = arith.constant dense<0.000000e+00> : vector<128xf32>
    %180 = vector.multi_reduction <add>, %179, %cst_172 [0] : vector<512x128xf32> to vector<128xf32>
    %181 = arith.mulf %179, %179 : vector<512x128xf32>
    %cst_173 = arith.constant dense<0.000000e+00> : vector<128xf32>
    %182 = vector.multi_reduction <add>, %181, %cst_173 [0] : vector<512x128xf32> to vector<128xf32>
    %cst_174 = arith.constant 0.001953125 : f32
    %183 = vector.broadcast %cst_174 : f32 to vector<128xf32>
    %184 = arith.mulf %180, %183 : vector<128xf32>
    %cst_175 = arith.constant 0.001953125 : f32
    %185 = vector.broadcast %cst_175 : f32 to vector<128xf32>
    %186 = arith.mulf %182, %185 : vector<128xf32>
    %187 = arith.mulf %184, %184 : vector<128xf32>
    %188 = arith.subf %186, %187 : vector<128xf32>
    %cst_176 = arith.constant 9.99999974E-6 : f32
    %189 = vector.broadcast %cst_176 : f32 to vector<128xf32>
    %190 = arith.addf %188, %189 : vector<128xf32>
    %191 = math.rsqrt %190 : vector<128xf32>
    %192 = arith.mulf %10, %191 : vector<128xf32>
    %193 = arith.mulf %184, %192 : vector<128xf32>
    %194 = arith.subf %12, %193 : vector<128xf32>
    %195 = vector.shape_cast %192 : vector<128xf32> to vector<1x128xf32>
    %196 = vector.broadcast %195 : vector<1x128xf32> to vector<512x128xf32>
    %197 = arith.mulf %179, %196 : vector<512x128xf32>
    %198 = vector.shape_cast %194 : vector<128xf32> to vector<1x128xf32>
    %199 = vector.broadcast %198 : vector<1x128xf32> to vector<512x128xf32>
    %200 = arith.addf %197, %199 : vector<512x128xf32>
    %201 = vector.shape_cast %20 : vector<2x16x16x128xf32> to vector<512x128xf32>
    %202 = arith.addf %201, %200 : vector<512x128xf32>
    %c0_177 = arith.constant 0 : index
    %c0_178 = arith.constant 0 : index
    %203 = vector.load %arg5[%c0_177, %c0_178] : memref<512x128xf32, #tpu.memory_space<vmem>>, vector<512x128xf32>
    tpu.vector_store %arg5[%c0_177, %c0_178], %202 {strides = array<i32>} : memref<512x128xf32, #tpu.memory_space<vmem>>, vector<512x128xf32>,
    return
  }
}

</mosaic_0001>

<llo_original>
// kernel: residual_block_pallas.1
$region0: #{residual_block_pallas.1}
  #allocation0 [shape = 'u32[]', space=smem, size = 0x4, offset = 0x4, fixed_abs, tag = 'smem constant byte address 0x4 - core index']
  #allocation1 [shape = 'u32[144,128]{1,0:T(1,128)}', space=vmem, size = 0x12000, scoped, tag = 'internal scratch']
  #allocation2 [shape = 'f32[2,18,18,128]{3,2,1,0:T(8,128)}', space=vmem, size = 0x6c000, scoped, tag = 'scratch operand']
  #allocation3 [shape = 'f32[1]{0:T(128)S(6)}', space=smem, size = 0x200, scoped, tag = 'scoped memory for residual_block_pallas.1']
  %s0 = inlined_call_operand.vmem [shape: f32[2,16,16,128], index: 0, kind: input, shape index: {}]
  %s1 = inlined_call_operand.vmem [shape: bf16[9,128,128], index: 1, kind: input, shape index: {}]
  %s2 = inlined_call_operand.vmem [shape: bf16[9,128,128], index: 2, kind: input, shape index: {}]
  %s3 = inlined_call_operand.vmem [shape: f32[8,128], index: 3, kind: input, shape index: {}]
  %s4 = inlined_call_operand.<no memory space> [shape: f32[1], index: 4, kind: input, shape index: {}]
  %s5 = inlined_call_operand.vmem [shape: f32[512,128], index: 5, kind: output, shape index: {}]
  %s6 = sld [smem:[#allocation0]]
  $region30: #{residual_block_pallas.1} parent=0
    _
  %s8 = ssub.s32 1, %s6
  %s9 = scalar_select 0, %s8, %s6
  %10 = sst [smem:[#allocation3]] %s4
  // Predicated region
  $region2: #{residual_block_pallas.1} parent=0 // pred_check
    _
  $region3: #{residual_block_pallas.1} parent=0 // pred_check_branch
    %12 = sbr.rel (0) target = $region5
  $region4: #{residual_block_pallas.1} parent=0 // pred_region
    _
  $region5: #{residual_block_pallas.1} parent=0 // pred_fallthru
    _
  // Predicated region
  $region6: #{residual_block_pallas.1} parent=0 // pred_check
    _
  $region7: #{residual_block_pallas.1} parent=0 // pred_check_branch
    %14 = sbr.rel (0) target = $region9
  $region8: #{residual_block_pallas.1} parent=0 // pred_region
    _
  $region9: #{residual_block_pallas.1} parent=0 // pred_fallthru
    _
  // Predicated region
  $region10: #{residual_block_pallas.1} parent=0 // pred_check
    _
  $region11: #{residual_block_pallas.1} parent=0 // pred_check_branch
    %16 = sbr.rel (0) target = $region13
  $region12: #{residual_block_pallas.1} parent=0 // pred_region
    _
  $region13: #{residual_block_pallas.1} parent=0 // pred_fallthru
    _
  // Predicated region
  $region14: #{residual_block_pallas.1} parent=0 // pred_check
    _
  $region15: #{residual_block_pallas.1} parent=0 // pred_check_branch
    %18 = sbr.rel (0) target = $region17
  $region16: #{residual_block_pallas.1} parent=0 // pred_region
    _
  $region17: #{residual_block_pallas.1} parent=0 // pred_fallthru
    _
  // Predicated region
  $region18: #{residual_block_pallas.1} parent=0 // pred_check
    _
  $region19: #{residual_block_pallas.1} parent=0 // pred_check_branch
    %20 = sbr.rel (0) target = $region21
  $region20: #{residual_block_pallas.1} parent=0 // pred_region
    _
  $region21: #{residual_block_pallas.1} parent=0 // pred_fallthru
    _
  %v22 = vld [vmem:[%s3] sm:$0xff]
  %s23 = sld [smem:[#allocation3]]
  %24 = vst [vmem:[#allocation2] sm:$0xff] 0.0
  %25 = vst [vmem:[#allocation2 + $0x8] sm:$0xff] 0.0
  %26 = vst [vmem:[#allocation2 + $0x10] sm:$0x3] 0.0
  %27 = vst [vmem:[#allocation2 + $0x1b0] sm:$0xff] 0.0
  %28 = vst [vmem:[#allocation2 + $0x1b8] sm:$0xff] 0.0
  %29 = vst [vmem:[#allocation2 + $0x1c0] sm:$0x3] 0.0
  %s30 = scalar_lea.vmem [#allocation2], 408
  %31 = vst [vmem:[%s30] sm:$0xff] 0.0
  %32 = vst [vmem:[%s30 + $0x8] sm:$0xff] 0.0
  %33 = vst [vmem:[%s30 + $0x10] sm:$0x3] 0.0
  %34 = vst [vmem:[%s30 + $0x1b0] sm:$0xff] 0.0
  %35 = vst [vmem:[%s30 + $0x1b8] sm:$0xff] 0.0
  %36 = vst [vmem:[%s30 + $0x1c0] sm:$0x3] 0.0
  %37 = vst [vmem:[#allocation2] sm:$0x1] 0.0
  %38 = vst [vmem:[#allocation2 + $0x18] sm:$0x1] 0.0
  %39 = vst [vmem:[#allocation2 + $0x30] sm:$0x1] 0.0
  %40 = vst [vmem:[#allocation2 + $0x48] sm:$0x1] 0.0
  %41 = vst [vmem:[#allocation2 + $0x60] sm:$0x1] 0.0
  %42 = vst [vmem:[#allocation2 + $0x78] sm:$0x1] 0.0
  %43 = vst [vmem:[#allocation2 + $0x90] sm:$0x1] 0.0
  %44 = vst [vmem:[#allocation2 + $0xa8] sm:$0x1] 0.0
  %45 = vst [vmem:[#allocation2 + $0xc0] sm:$0x1] 0.0
  %46 = vst [vmem:[#allocation2 + $0xd8] sm:$0x1] 0.0
  %47 = vst [vmem:[#allocation2 + $0xf0] sm:$0x1] 0.0
  %48 = vst [vmem:[#allocation2 + $0x108] sm:$0x1] 0.0
  %49 = vst [vmem:[#allocation2 + $0x120] sm:$0x1] 0.0
  %50 = vst [vmem:[#allocation2 + $0x138] sm:$0x1] 0.0
  %51 = vst [vmem:[#allocation2 + $0x150] sm:$0x1] 0.0
  %52 = vst [vmem:[#allocation2 + $0x168] sm:$0x1] 0.0
  %53 = vst [vmem:[#allocation2 + $0x180] sm:$0x1] 0.0
  %54 = vst [vmem:[#allocation2 + $0x198] sm:$0x1] 0.0
  %55 = vst [vmem:[#allocation2 + $0x1b0] sm:$0x1] 0.0
  %56 = vst [vmem:[#allocation2 + $0x1c8] sm:$0x1] 0.0
  %57 = vst [vmem:[#allocation2 + $0x1e0] sm:$0x1] 0.0
  %58 = vst [vmem:[#allocation2 + $0x1f8] sm:$0x1] 0.0
  %59 = vst [vmem:[#allocation2 + $0x210] sm:$0x1] 0.0
  %60 = vst [vmem:[#allocation2 + $0x228] sm:$0x1] 0.0
  %61 = vst [vmem:[#allocation2 + $0x240] sm:$0x1] 0.0
  %62 = vst [vmem:[#allocation2 + $0x258] sm:$0x1] 0.0
  %63 = vst [vmem:[#allocation2 + $0x270] sm:$0x1] 0.0
  %64 = vst [vmem:[#allocation2 + $0x288] sm:$0x1] 0.0
  %65 = vst [vmem:[#allocation2 + $0x2a0] sm:$0x1] 0.0
  %66 = vst [vmem:[#allocation2 + $0x2b8] sm:$0x1] 0.0
  %67 = vst [vmem:[#allocation2 + $0x2d0] sm:$0x1] 0.0
  %68 = vst [vmem:[#allocation2 + $0x2e8] sm:$0x1] 0.0
  %69 = vst [vmem:[#allocation2 + $0x300] sm:$0x1] 0.0
  %70 = vst [vmem:[#allocation2 + $0x318] sm:$0x1] 0.0
  %71 = vst [vmem:[#allocation2 + $0x330] sm:$0x1] 0.0
  %72 = vst [vmem:[#allocation2 + $0x348] sm:$0x1] 0.0
  %73 = vst [vmem:[#allocation2 + $0x11] sm:$0x1] 0.0
  %74 = vst [vmem:[#allocation2 + $0x29] sm:$0x1] 0.0
  %75 = vst [vmem:[#allocation2 + $0x41] sm:$0x1] 0.0
  %76 = vst [vmem:[#allocation2 + $0x59] sm:$0x1] 0.0
  %77 = vst [vmem:[#allocation2 + $0x71] sm:$0x1] 0.0
  %78 = vst [vmem:[#allocation2 + $0x89] sm:$0x1] 0.0
  %79 = vst [vmem:[#allocation2 + $0xa1] sm:$0x1] 0.0
  %80 = vst [vmem:[#allocation2 + $0xb9] sm:$0x1] 0.0
  %81 = vst [vmem:[#allocation2 + $0xd1] sm:$0x1] 0.0
  %82 = vst [vmem:[#allocation2 + $0xe9] sm:$0x1] 0.0
  %83 = vst [vmem:[#allocation2 + $0x101] sm:$0x1] 0.0
  %84 = vst [vmem:[#allocation2 + $0x119] sm:$0x1] 0.0
  %85 = vst [vmem:[#allocation2 + $0x131] sm:$0x1] 0.0
  %86 = vst [vmem:[#allocation2 + $0x149] sm:$0x1] 0.0
  %87 = vst [vmem:[#allocation2 + $0x161] sm:$0x1] 0.0
  %88 = vst [vmem:[#allocation2 + $0x179] sm:$0x1] 0.0
  %89 = vst [vmem:[#allocation2 + $0x191] sm:$0x1] 0.0
  %90 = vst [vmem:[#allocation2 + $0x1a9] sm:$0x1] 0.0
  %91 = vst [vmem:[#allocation2 + $0x1c1] sm:$0x1] 0.0
  %92 = vst [vmem:[#allocation2 + $0x1d9] sm:$0x1] 0.0
  %93 = vst [vmem:[#allocation2 + $0x1f1] sm:$0x1] 0.0
  %94 = vst [vmem:[#allocation2 + $0x209] sm:$0x1] 0.0
  %95 = vst [vmem:[#allocation2 + $0x221] sm:$0x1] 0.0
  %96 = vst [vmem:[#allocation2 + $0x239] sm:$0x1] 0.0
  %97 = vst [vmem:[#allocation2 + $0x251] sm:$0x1] 0.0
  %98 = vst [vmem:[#allocation2 + $0x269] sm:$0x1] 0.0
  %99 = vst [vmem:[#allocation2 + $0x281] sm:$0x1] 0.0
  %100 = vst [vmem:[#allocation2 + $0x299] sm:$0x1] 0.0
  %101 = vst [vmem:[#allocation2 + $0x2b1] sm:$0x1] 0.0
  %102 = vst [vmem:[#allocation2 + $0x2c9] sm:$0x1] 0.0
  %103 = vst [vmem:[#allocation2 + $0x2e1] sm:$0x1] 0.0
  %104 = vst [vmem:[#allocation2 + $0x2f9] sm:$0x1] 0.0
  %105 = vst [vmem:[#allocation2 + $0x311] sm:$0x1] 0.0
  %106 = vst [vmem:[#allocation2 + $0x329] sm:$0x1] 0.0
  %107 = vst [vmem:[#allocation2 + $0x341] sm:$0x1] 0.0
  %108 = vst [vmem:[#allocation2 + $0x359] sm:$0x1] 0.0
  %v109 = vld [vmem:[%s0] sm:$0xff]
  %v110 = vld [vmem:[%s0 + $0x8] sm:$0xff]
  %v111 = vld [vmem:[%s0 + $0x10] sm:$0xff]
  %v112 = vld [vmem:[%s0 + $0x18] sm:$0xff]
  %v113 = vld [vmem:[%s0 + $0x20] sm:$0xff]
  %v114 = vld [vmem:[%s0 + $0x28] sm:$0xff]
  %v115 = vld [vmem:[%s0 + $0x30] sm:$0xff]
  %v116 = vld [vmem:[%s0 + $0x38] sm:$0xff]
  %v117 = vld [vmem:[%s0 + $0x40] sm:$0xff]
  %v118 = vld [vmem:[%s0 + $0x48] sm:$0xff]
  %v119 = vld [vmem:[%s0 + $0x50] sm:$0xff]
  %v120 = vld [vmem:[%s0 + $0x58] sm:$0xff]
  %v121 = vld [vmem:[%s0 + $0x60] sm:$0xff]
  %v122 = vld [vmem:[%s0 + $0x68] sm:$0xff]
  %v123 = vld [vmem:[%s0 + $0x70] sm:$0xff]
  %v124 = vld [vmem:[%s0 + $0x78] sm:$0xff]
  %v125 = vld [vmem:[%s0 + $0x80] sm:$0xff]
  %v126 = vld [vmem:[%s0 + $0x88] sm:$0xff]
  %v127 = vld [vmem:[%s0 + $0x90] sm:$0xff]
  %v128 = vld [vmem:[%s0 + $0x98] sm:$0xff]
  %v129 = vld [vmem:[%s0 + $0xa0] sm:$0xff]
  %v130 = vld [vmem:[%s0 + $0xa8] sm:$0xff]
  %v131 = vld [vmem:[%s0 + $0xb0] sm:$0xff]
  %v132 = vld [vmem:[%s0 + $0xb8] sm:$0xff]
  %v133 = vld [vmem:[%s0 + $0xc0] sm:$0xff]
  %v134 = vld [vmem:[%s0 + $0xc8] sm:$0xff]
  %v135 = vld [vmem:[%s0 + $0xd0] sm:$0xff]
  %v136 = vld [vmem:[%s0 + $0xd8] sm:$0xff]
  %v137 = vld [vmem:[%s0 + $0xe0] sm:$0xff]
  %v138 = vld [vmem:[%s0 + $0xe8] sm:$0xff]
  %v139 = vld [vmem:[%s0 + $0xf0] sm:$0xff]
  %v140 = vld [vmem:[%s0 + $0xf8] sm:$0xff]
  %v141 = vld [vmem:[%s0 + $0x100] sm:$0xff]
  %v142 = vld [vmem:[%s0 + $0x108] sm:$0xff]
  %v143 = vld [vmem:[%s0 + $0x110] sm:$0xff]
  %v144 = vld [vmem:[%s0 + $0x118] sm:$0xff]
  %v145 = vld [vmem:[%s0 + $0x120] sm:$0xff]
  %v146 = vld [vmem:[%s0 + $0x128] sm:$0xff]
  %v147 = vld [vmem:[%s0 + $0x130] sm:$0xff]
  %v148 = vld [vmem:[%s0 + $0x138] sm:$0xff]
  %v149 = vld [vmem:[%s0 + $0x140] sm:$0xff]
  %v150 = vld [vmem:[%s0 + $0x148] sm:$0xff]
  %v151 = vld [vmem:[%s0 + $0x150] sm:$0xff]
  %v152 = vld [vmem:[%s0 + $0x158] sm:$0xff]
  %v153 = vld [vmem:[%s0 + $0x160] sm:$0xff]
  %v154 = vld [vmem:[%s0 + $0x168] sm:$0xff]
  %v155 = vld [vmem:[%s0 + $0x170] sm:$0xff]
  %v156 = vld [vmem:[%s0 + $0x178] sm:$0xff]
  %v157 = vld [vmem:[%s0 + $0x180] sm:$0xff]
  %v158 = vld [vmem:[%s0 + $0x188] sm:$0xff]
  %v159 = vld [vmem:[%s0 + $0x190] sm:$0xff]
  %v160 = vld [vmem:[%s0 + $0x198] sm:$0xff]
  %v161 = vld [vmem:[%s0 + $0x1a0] sm:$0xff]
  %v162 = vld [vmem:[%s0 + $0x1a8] sm:$0xff]
  %v163 = vld [vmem:[%s0 + $0x1b0] sm:$0xff]
  %v164 = vld [vmem:[%s0 + $0x1b8] sm:$0xff]
  %v165 = vld [vmem:[%s0 + $0x1c0] sm:$0xff]
  %v166 = vld [vmem:[%s0 + $0x1c8] sm:$0xff]
  %v167 = vld [vmem:[%s0 + $0x1d0] sm:$0xff]
  %v168 = vld [vmem:[%s0 + $0x1d8] sm:$0xff]
  %v169 = vld [vmem:[%s0 + $0x1e0] sm:$0xff]
  %v170 = vld [vmem:[%s0 + $0x1e8] sm:$0xff]
  %v171 = vld [vmem:[%s0 + $0x1f0] sm:$0xff]
  %v172 = vld [vmem:[%s0 + $0x1f8] sm:$0xff]
  %s173 = scalar_lea.vmem [#allocation2], 24
  %174 = vst [vmem:[%s173 + $0x1] sm:$0xff] %v109
  %175 = vst [vmem:[%s173 + $0x9] sm:$0xff] %v110
  %176 = vst [vmem:[%s173 + $0x19] sm:$0xff] %v111
  %177 = vst [vmem:[%s173 + $0x21] sm:$0xff] %v112
  %178 = vst [vmem:[%s173 + $0x31] sm:$0xff] %v113
  %179 = vst [vmem:[%s173 + $0x39] sm:$0xff] %v114
  %180 = vst [vmem:[%s173 + $0x49] sm:$0xff] %v115
  %181 = vst [vmem:[%s173 + $0x51] sm:$0xff] %v116
  %182 = vst [vmem:[%s173 + $0x61] sm:$0xff] %v117
  %183 = vst [vmem:[%s173 + $0x69] sm:$0xff] %v118
  %184 = vst [vmem:[%s173 + $0x79] sm:$0xff] %v119
  %185 = vst [vmem:[%s173 + $0x81] sm:$0xff] %v120
  %186 = vst [vmem:[%s173 + $0x91] sm:$0xff] %v121
  %187 = vst [vmem:[%s173 + $0x99] sm:$0xff] %v122
  %188 = vst [vmem:[%s173 + $0xa9] sm:$0xff] %v123
  %189 = vst [vmem:[%s173 + $0xb1] sm:$0xff] %v124
  %190 = vst [vmem:[%s173 + $0xc1] sm:$0xff] %v125
  %191 = vst [vmem:[%s173 + $0xc9] sm:$0xff] %v126
  %192 = vst [vmem:[%s173 + $0xd9] sm:$0xff] %v127
  %193 = vst [vmem:[%s173 + $0xe1] sm:$0xff] %v128
  %194 = vst [vmem:[%s173 + $0xf1] sm:$0xff] %v129
  %195 = vst [vmem:[%s173 + $0xf9] sm:$0xff] %v130
  %196 = vst [vmem:[%s173 + $0x109] sm:$0xff] %v131
  %197 = vst [vmem:[%s173 + $0x111] sm:$0xff] %v132
  %198 = vst [vmem:[%s173 + $0x121] sm:$0xff] %v133
  %199 = vst [vmem:[%s173 + $0x129] sm:$0xff] %v134
  %200 = vst [vmem:[%s173 + $0x139] sm:$0xff] %v135
  %201 = vst [vmem:[%s173 + $0x141] sm:$0xff] %v136
  %202 = vst [vmem:[%s173 + $0x151] sm:$0xff] %v137
  %203 = vst [vmem:[%s173 + $0x159] sm:$0xff] %v138
  %204 = vst [vmem:[%s173 + $0x169] sm:$0xff] %v139
  %205 = vst [vmem:[%s173 + $0x171] sm:$0xff] %v140
  %206 = vst [vmem:[%s173 + $0x1b1] sm:$0xff] %v141
  %207 = vst [vmem:[%s173 + $0x1b9] sm:$0xff] %v142
  %208 = vst [vmem:[%s173 + $0x1c9] sm:$0xff] %v143
  %209 = vst [vmem:[%s173 + $0x1d1] sm:$0xff] %v144
  %210 = vst [vmem:[%s173 + $0x1e1] sm:$0xff] %v145
  %211 = vst [vmem:[%s173 + $0x1e9] sm:$0xff] %v146
  %212 = vst [vmem:[%s173 + $0x1f9] sm:$0xff] %v147
  %213 = vst [vmem:[%s173 + $0x201] sm:$0xff] %v148
  %214 = vst [vmem:[%s173 + $0x211] sm:$0xff] %v149
  %215 = vst [vmem:[%s173 + $0x219] sm:$0xff] %v150
  %216 = vst [vmem:[%s173 + $0x229] sm:$0xff] %v151
  %217 = vst [vmem:[%s173 + $0x231] sm:$0xff] %v152
  %218 = vst [vmem:[%s173 + $0x241] sm:$0xff] %v153
  %219 = vst [vmem:[%s173 + $0x249] sm:$0xff] %v154
  %220 = vst [vmem:[%s173 + $0x259] sm:$0xff] %v155
  %221 = vst [vmem:[%s173 + $0x261] sm:$0xff] %v156
  %222 = vst [vmem:[%s173 + $0x271] sm:$0xff] %v157
  %223 = vst [vmem:[%s173 + $0x279] sm:$0xff] %v158
  %224 = vst [vmem:[%s173 + $0x289] sm:$0xff] %v159
  %225 = vst [vmem:[%s173 + $0x291] sm:$0xff] %v160
  %226 = vst [vmem:[%s173 + $0x2a1] sm:$0xff] %v161
  %227 = vst [vmem:[%s173 + $0x2a9] sm:$0xff] %v162
  %228 = vst [vmem:[%s173 + $0x2b9] sm:$0xff] %v163
  %229 = vst [vmem:[%s173 + $0x2c1] sm:$0xff] %v164
  %230 = vst [vmem:[%s173 + $0x2d1] sm:$0xff] %v165
  %231 = vst [vmem:[%s173 + $0x2d9] sm:$0xff] %v166
  %232 = vst [vmem:[%s173 + $0x2e9] sm:$0xff] %v167
  %233 = vst [vmem:[%s173 + $0x2f1] sm:$0xff] %v168
  %234 = vst [vmem:[%s173 + $0x301] sm:$0xff] %v169
  %235 = vst [vmem:[%s173 + $0x309] sm:$0xff] %v170
  %236 = vst [vmem:[%s173 + $0x319] sm:$0xff] %v171
  %237 = vst [vmem:[%s173 + $0x321] sm:$0xff] %v172
  %v238 = vld [vmem:[#allocation2] sm:$0xff]
  %v239 = vld [vmem:[#allocation2 + $0x8] sm:$0xff]
  %v240 = vld [vmem:[#allocation2 + $0x18] sm:$0xff]
  %v241 = vld [vmem:[#allocation2 + $0x20] sm:$0xff]
  %v242 = vld [vmem:[#allocation2 + $0x30] sm:$0xff]
  %v243 = vld [vmem:[#allocation2 + $0x38] sm:$0xff]
  %v244 = vld [vmem:[#allocation2 + $0x48] sm:$0xff]
  %v245 = vld [vmem:[#allocation2 + $0x50] sm:$0xff]
  %v246 = vld [vmem:[#allocation2 + $0x60] sm:$0xff]
  %v247 = vld [vmem:[#allocation2 + $0x68] sm:$0xff]
  %v248 = vld [vmem:[#allocation2 + $0x78] sm:$0xff]
  %v249 = vld [vmem:[#allocation2 + $0x80] sm:$0xff]
  %v250 = vld [vmem:[#allocation2 + $0x90] sm:$0xff]
  %v251 = vld [vmem:[#allocation2 + $0x98] sm:$0xff]
  %v252 = vld [vmem:[#allocation2 + $0xa8] sm:$0xff]
  %v253 = vld [vmem:[#allocation2 + $0xb0] sm:$0xff]
  %v254 = vld [vmem:[#allocation2 + $0xc0] sm:$0xff]
  %v255 = vld [vmem:[#allocation2 + $0xc8] sm:$0xff]
  %v256 = vld [vmem:[#allocation2 + $0xd8] sm:$0xff]
  %v257 = vld [vmem:[#allocation2 + $0xe0] sm:$0xff]
  %v258 = vld [vmem:[#allocation2 + $0xf0] sm:$0xff]
  %v259 = vld [vmem:[#allocation2 + $0xf8] sm:$0xff]
  %v260 = vld [vmem:[#allocation2 + $0x108] sm:$0xff]
  %v261 = vld [vmem:[#allocation2 + $0x110] sm:$0xff]
  %v262 = vld [vmem:[#allocation2 + $0x120] sm:$0xff]
  %v263 = vld [vmem:[#allocation2 + $0x128] sm:$0xff]
  %v264 = vld [vmem:[#allocation2 + $0x138] sm:$0xff]
  %v265 = vld [vmem:[#allocation2 + $0x140] sm:$0xff]
  %v266 = vld [vmem:[#allocation2 + $0x150] sm:$0xff]
  %v267 = vld [vmem:[#allocation2 + $0x158] sm:$0xff]
  %v268 = vld [vmem:[#allocation2 + $0x168] sm:$0xff]
  %v269 = vld [vmem:[#allocation2 + $0x170] sm:$0xff]
  %v270 = vld [vmem:[#allocation2 + $0x1b0] sm:$0xff]
  %v271 = vld [vmem:[#allocation2 + $0x1b8] sm:$0xff]
  %v272 = vld [vmem:[#allocation2 + $0x1c8] sm:$0xff]
  %v273 = vld [vmem:[#allocation2 + $0x1d0] sm:$0xff]
  %v274 = vld [vmem:[#allocation2 + $0x1e0] sm:$0xff]
  %v275 = vld [vmem:[#allocation2 + $0x1e8] sm:$0xff]
  %v276 = vld [vmem:[#allocation2 + $0x1f8] sm:$0xff]
  %v277 = vld [vmem:[#allocation2 + $0x200] sm:$0xff]
  %v278 = vld [vmem:[#allocation2 + $0x210] sm:$0xff]
  %v279 = vld [vmem:[#allocation2 + $0x218] sm:$0xff]
  %v280 = vld [vmem:[#allocation2 + $0x228] sm:$0xff]
  %v281 = vld [vmem:[#allocation2 + $0x230] sm:$0xff]
  %v282 = vld [vmem:[#allocation2 + $0x240] sm:$0xff]
  %v283 = vld [vmem:[#allocation2 + $0x248] sm:$0xff]
  %v284 = vld [vmem:[#allocation2 + $0x258] sm:$0xff]
  %v285 = vld [vmem:[#allocation2 + $0x260] sm:$0xff]
  %v286 = vld [vmem:[#allocation2 + $0x270] sm:$0xff]
  %v287 = vld [vmem:[#allocation2 + $0x278] sm:$0xff]
  %v288 = vld [vmem:[#allocation2 + $0x288] sm:$0xff]
  %v289 = vld [vmem:[#allocation2 + $0x290] sm:$0xff]
  %v290 = vld [vmem:[#allocation2 + $0x2a0] sm:$0xff]
  %v291 = vld [vmem:[#allocation2 + $0x2a8] sm:$0xff]
  %v292 = vld [vmem:[#allocation2 + $0x2b8] sm:$0xff]
  %v293 = vld [vmem:[#allocation2 + $0x2c0] sm:$0xff]
  %v294 = vld [vmem:[#allocation2 + $0x2d0] sm:$0xff]
  %v295 = vld [vmem:[#allocation2 + $0x2d8] sm:$0xff]
  %v296 = vld [vmem:[#allocation2 + $0x2e8] sm:$0xff]
  %v297 = vld [vmem:[#allocation2 + $0x2f0] sm:$0xff]
  %v298 = vld [vmem:[#allocation2 + $0x300] sm:$0xff]
  %v299 = vld [vmem:[#allocation2 + $0x308] sm:$0xff]
  %v300 = vld [vmem:[#allocation2 + $0x318] sm:$0xff]
  %v301 = vld [vmem:[#allocation2 + $0x320] sm:$0xff]
  %v302 = vpack.c.bf16 %v239, %v238
  %v303 = vpack.c.bf16 %v241, %v240
  %v304 = vpack.c.bf16 %v243, %v242
  %v305 = vpack.c.bf16 %v245, %v244
  %v306 = vpack.c.bf16 %v247, %v246
  %v307 = vpack.c.bf16 %v249, %v248
  %v308 = vpack.c.bf16 %v251, %v250
  %v309 = vpack.c.bf16 %v253, %v252
  %v310 = vpack.c.bf16 %v255, %v254
  %v311 = vpack.c.bf16 %v257, %v256
  %v312 = vpack.c.bf16 %v259, %v258
  %v313 = vpack.c.bf16 %v261, %v260
  %v314 = vpack.c.bf16 %v263, %v262
  %v315 = vpack.c.bf16 %v265, %v264
  %v316 = vpack.c.bf16 %v267, %v266
  %v317 = vpack.c.bf16 %v269, %v268
  %v318 = vpack.c.bf16 %v271, %v270
  %v319 = vpack.c.bf16 %v273, %v272
  %v320 = vpack.c.bf16 %v275, %v274
  %v321 = vpack.c.bf16 %v277, %v276
  %v322 = vpack.c.bf16 %v279, %v278
  %v323 = vpack.c.bf16 %v281, %v280
  %v324 = vpack.c.bf16 %v283, %v282
  %v325 = vpack.c.bf16 %v285, %v284
  %v326 = vpack.c.bf16 %v287, %v286
  %v327 = vpack.c.bf16 %v289, %v288
  %v328 = vpack.c.bf16 %v291, %v290
  %v329 = vpack.c.bf16 %v293, %v292
  %v330 = vpack.c.bf16 %v295, %v294
  %v331 = vpack.c.bf16 %v297, %v296
  %v332 = vpack.c.bf16 %v299, %v298
  %v333 = vpack.c.bf16 %v301, %v300
  %v334 = vld [vmem:[%s1] sm:$0xf]
  %v335 = vld [vmem:[%s1 + $0x4] sm:$0xf]
  %v336 = vld [vmem:[%s1 + $0x8] sm:$0xf]
  %v337 = vld [vmem:[%s1 + $0xc] sm:$0xf]
  %v338 = vld [vmem:[%s1 + $0x10] sm:$0xf]
  %v339 = vld [vmem:[%s1 + $0x14] sm:$0xf]
  %v340 = vld [vmem:[%s1 + $0x18] sm:$0xf]
  %v341 = vld [vmem:[%s1 + $0x1c] sm:$0xf]
  %v342 = vld [vmem:[%s1 + $0x20] sm:$0xf]
  %v343 = vld [vmem:[%s1 + $0x24] sm:$0xf]
  %v344 = vld [vmem:[%s1 + $0x28] sm:$0xf]
  %v345 = vld [vmem:[%s1 + $0x2c] sm:$0xf]
  %v346 = vld [vmem:[%s1 + $0x30] sm:$0xf]
  %v347 = vld [vmem:[%s1 + $0x34] sm:$0xf]
  %v348 = vld [vmem:[%s1 + $0x38] sm:$0xf]
  %v349 = vld [vmem:[%s1 + $0x3c] sm:$0xf]
  %v350 = vld [vmem:[#allocation2 + $0x1] sm:$0xff]
  %v351 = vld [vmem:[#allocation2 + $0x9] sm:$0xff]
  %v352 = vld [vmem:[#allocation2 + $0x19] sm:$0xff]
  %v353 = vld [vmem:[#allocation2 + $0x21] sm:$0xff]
  %v354 = vld [vmem:[#allocation2 + $0x31] sm:$0xff]
  %v355 = vld [vmem:[#allocation2 + $0x39] sm:$0xff]
  %v356 = vld [vmem:[#allocation2 + $0x49] sm:$0xff]
  %v357 = vld [vmem:[#allocation2 + $0x51] sm:$0xff]
  %v358 = vld [vmem:[#allocation2 + $0x61] sm:$0xff]
  %v359 = vld [vmem:[#allocation2 + $0x69] sm:$0xff]
  %v360 = vld [vmem:[#allocation2 + $0x79] sm:$0xff]
  %v361 = vld [vmem:[#allocation2 + $0x81] sm:$0xff]
  %v362 = vld [vmem:[#allocation2 + $0x91] sm:$0xff]
  %v363 = vld [vmem:[#allocation2 + $0x99] sm:$0xff]
  %v364 = vld [vmem:[#allocation2 + $0xa9] sm:$0xff]
  %v365 = vld [vmem:[#allocation2 + $0xb1] sm:$0xff]
  %v366 = vld [vmem:[#allocation2 + $0xc1] sm:$0xff]
  %v367 = vld [vmem:[#allocation2 + $0xc9] sm:$0xff]
  %v368 = vld [vmem:[#allocation2 + $0xd9] sm:$0xff]
  %v369 = vld [vmem:[#allocation2 + $0xe1] sm:$0xff]
  %v370 = vld [vmem:[#allocation2 + $0xf1] sm:$0xff]
  %v371 = vld [vmem:[#allocation2 + $0xf9] sm:$0xff]
  %v372 = vld [vmem:[#allocation2 + $0x109] sm:$0xff]
  %v373 = vld [vmem:[#allocation2 + $0x111] sm:$0xff]
  %v374 = vld [vmem:[#allocation2 + $0x121] sm:$0xff]
  %v375 = vld [vmem:[#allocation2 + $0x129] sm:$0xff]
  %v376 = vld [vmem:[#allocation2 + $0x139] sm:$0xff]
  %v377 = vld [vmem:[#allocation2 + $0x141] sm:$0xff]
  %v378 = vld [vmem:[#allocation2 + $0x151] sm:$0xff]
  %v379 = vld [vmem:[#allocation2 + $0x159] sm:$0xff]
  %v380 = vld [vmem:[#allocation2 + $0x169] sm:$0xff]
  %v381 = vld [vmem:[#allocation2 + $0x171] sm:$0xff]
  %v382 = vld [vmem:[#allocation2 + $0x1b1] sm:$0xff]
  %v383 = vld [vmem:[#allocation2 + $0x1b9] sm:$0xff]
  %v384 = vld [vmem:[#allocation2 + $0x1c9] sm:$0xff]
  %v385 = vld [vmem:[#allocation2 + $0x1d1] sm:$0xff]
  %v386 = vld [vmem:[#allocation2 + $0x1e1] sm:$0xff]
  %v387 = vld [vmem:[#allocation2 + $0x1e9] sm:$0xff]
  %v388 = vld [vmem:[#allocation2 + $0x1f9] sm:$0xff]
  %v389 = vld [vmem:[#allocation2 + $0x201] sm:$0xff]
  %v390 = vld [vmem:[#allocation2 + $0x211] sm:$0xff]
  %v391 = vld [vmem:[#allocation2 + $0x219] sm:$0xff]
  %v392 = vld [vmem:[#allocation2 + $0x229] sm:$0xff]
  %v393 = vld [vmem:[#allocation2 + $0x231] sm:$0xff]
  %v394 = vld [vmem:[#allocation2 + $0x241] sm:$0xff]
  %v395 = vld [vmem:[#allocation2 + $0x249] sm:$0xff]
  %v396 = vld [vmem:[#allocation2 + $0x259] sm:$0xff]
  %v397 = vld [vmem:[#allocation2 + $0x261] sm:$0xff]
  %v398 = vld [vmem:[#allocation2 + $0x271] sm:$0xff]
  %v399 = vld [vmem:[#allocation2 + $0x279] sm:$0xff]
  %v400 = vld [vmem:[#allocation2 + $0x289] sm:$0xff]
  %v401 = vld [vmem:[#allocation2 + $0x291] sm:$0xff]
  %v402 = vld [vmem:[#allocation2 + $0x2a1] sm:$0xff]
  %v403 = vld [vmem:[#allocation2 + $0x2a9] sm:$0xff]
  %v404 = vld [vmem:[#allocation2 + $0x2b9] sm:$0xff]
  %v405 = vld [vmem:[#allocation2 + $0x2c1] sm:$0xff]
  %v406 = vld [vmem:[#allocation2 + $0x2d1] sm:$0xff]
  %v407 = vld [vmem:[#allocation2 + $0x2d9] sm:$0xff]
  %v408 = vld [vmem:[#allocation2 + $0x2e9] sm:$0xff]
  %v409 = vld [vmem:[#allocation2 + $0x2f1] sm:$0xff]
  %v410 = vld [vmem:[#allocation2 + $0x301] sm:$0xff]
  %v411 = vld [vmem:[#allocation2 + $0x309] sm:$0xff]
  %v412 = vld [vmem:[#allocation2 + $0x319] sm:$0xff]
  %v413 = vld [vmem:[#allocation2 + $0x321] sm:$0xff]
  %v414 = vpack.c.bf16 %v351, %v350
  %v415 = vpack.c.bf16 %v353, %v352
  %v416 = vpack.c.bf16 %v355, %v354
  %v417 = vpack.c.bf16 %v357, %v356
  %v418 = vpack.c.bf16 %v359, %v358
  %v419 = vpack.c.bf16 %v361, %v360
  %v420 = vpack.c.bf16 %v363, %v362
  %v421 = vpack.c.bf16 %v365, %v364
  %v422 = vpack.c.bf16 %v367, %v366
  %v423 = vpack.c.bf16 %v369, %v368
  %v424 = vpack.c.bf16 %v371, %v370
  %v425 = vpack.c.bf16 %v373, %v372
  %v426 = vpack.c.bf16 %v375, %v374
  %v427 = vpack.c.bf16 %v377, %v376
  %v428 = vpack.c.bf16 %v379, %v378
  %v429 = vpack.c.bf16 %v381, %v380
  %v430 = vpack.c.bf16 %v383, %v382
  %v431 = vpack.c.bf16 %v385, %v384
  %v432 = vpack.c.bf16 %v387, %v386
  %v433 = vpack.c.bf16 %v389, %v388
  %v434 = vpack.c.bf16 %v391, %v390
  %v435 = vpack.c.bf16 %v393, %v392
  %v436 = vpack.c.bf16 %v395, %v394
  %v437 = vpack.c.bf16 %v397, %v396
  %v438 = vpack.c.bf16 %v399, %v398
  %v439 = vpack.c.bf16 %v401, %v400
  %v440 = vpack.c.bf16 %v403, %v402
  %v441 = vpack.c.bf16 %v405, %v404
  %v442 = vpack.c.bf16 %v407, %v406
  %v443 = vpack.c.bf16 %v409, %v408
  %v444 = vpack.c.bf16 %v411, %v410
  %v445 = vpack.c.bf16 %v413, %v412
  %s446 = scalar_lea.vmem %s1, 64
  %v447 = vld [vmem:[%s446] sm:$0xf]
  %v448 = vld [vmem:[%s446 + $0x4] sm:$0xf]
  %v449 = vld [vmem:[%s446 + $0x8] sm:$0xf]
  %v450 = vld [vmem:[%s446 + $0xc] sm:$0xf]
  %v451 = vld [vmem:[%s446 + $0x10] sm:$0xf]
  %v452 = vld [vmem:[%s446 + $0x14] sm:$0xf]
  %v453 = vld [vmem:[%s446 + $0x18] sm:$0xf]
  %v454 = vld [vmem:[%s446 + $0x1c] sm:$0xf]
  %v455 = vld [vmem:[%s446 + $0x20] sm:$0xf]
  %v456 = vld [vmem:[%s446 + $0x24] sm:$0xf]
  %v457 = vld [vmem:[%s446 + $0x28] sm:$0xf]
  %v458 = vld [vmem:[%s446 + $0x2c] sm:$0xf]
  %v459 = vld [vmem:[%s446 + $0x30] sm:$0xf]
  %v460 = vld [vmem:[%s446 + $0x34] sm:$0xf]
  %v461 = vld [vmem:[%s446 + $0x38] sm:$0xf]
  %v462 = vld [vmem:[%s446 + $0x3c] sm:$0xf]
  %v479 = vunpack.c.l.b16 %v447
  %v480 = vunpack.c.l.b16 %v448
  %v481 = vunpack.c.l.b16 %v449
  %v482 = vunpack.c.l.b16 %v450
  %v483 = vunpack.c.l.b16 %v451
  %v484 = vunpack.c.l.b16 %v452
  %v485 = vunpack.c.l.b16 %v453
  %v486 = vunpack.c.l.b16 %v454
  %v487 = vunpack.c.l.b16 %v455
  %v488 = vunpack.c.l.b16 %v456
  %v489 = vunpack.c.l.b16 %v457
  %v490 = vunpack.c.l.b16 %v458
  %v491 = vunpack.c.l.b16 %v459
  %v492 = vunpack.c.l.b16 %v460
  %v493 = vunpack.c.l.b16 %v461
  %v494 = vunpack.c.l.b16 %v462
  %v495 = vpack.c.b16 %v480, %v479
  %v496 = vpack.c.b16 %v482, %v481
  %v497 = vpack.c.b16 %v484, %v483
  %v498 = vpack.c.b16 %v486, %v485
  %v499 = vpack.c.b16 %v488, %v487
  %v500 = vpack.c.b16 %v490, %v489
  %v501 = vpack.c.b16 %v492, %v491
  %v502 = vpack.c.b16 %v494, %v493
  %511 = vmatprep.subr.bf16.mxu0 0
  %512 = vmatpush1.bf16.msra.mxu0 %v495
  %513 = vmatprep.subr.bf16.mxu0 0
  %514 = vmatpush1.bf16.msra.mxu0 %v496
  %515 = vmatprep.subr.bf16.mxu0 0
  %516 = vmatpush1.bf16.msra.mxu0 %v497
  %517 = vmatprep.subr.bf16.mxu0 0
  %518 = vmatpush1.bf16.msra.mxu0 %v498
  %519 = vmatprep.subr.bf16.mxu0 0
  %520 = vmatpush1.bf16.msra.mxu0 %v499
  %521 = vmatprep.subr.bf16.mxu0 0
  %522 = vmatpush1.bf16.msra.mxu0 %v500
  %523 = vmatprep.subr.bf16.mxu0 0
  %524 = vmatpush1.bf16.msra.mxu0 %v501
  %525 = vmatprep.subr.bf16.mxu0 0
  %526 = vmatpush1.bf16.msra.mxu0 %v502
  %527 = vmatprep.subr.bf16.mxu0 0
  %528 = vmatpush1.bf16.msra.mxu0 0
  %529 = vmatprep.subr.bf16.mxu0 0
  %530 = vmatpush1.bf16.msra.mxu0 0
  %531 = vmatprep.subr.bf16.mxu0 0
  %532 = vmatpush1.bf16.msra.mxu0 0
  %533 = vmatprep.subr.bf16.mxu0 0
  %534 = vmatpush1.bf16.msra.mxu0 0
  %535 = vmatprep.subr.bf16.mxu0 0
  %536 = vmatpush1.bf16.msra.mxu0 0
  %537 = vmatprep.subr.bf16.mxu0 0
  %538 = vmatpush1.bf16.msra.mxu0 0
  %539 = vmatprep.subr.bf16.mxu0 0
  %540 = vmatpush1.bf16.msra.mxu0 0
  %541 = vmatprep.subr.bf16.mxu0 0
  %542 = vmatpush1.bf16.msra.mxu0 0
  %543 = vmatprep.mubr.bf16.mxu0 0
  %544 = vmatmul.mubr.bf16.gmra.mrb[0].mxu0 %v414
  %v545 = vpop.f32.mrb[0].mxu0
  %v546 = vadd.f32 0.0, %v545
  %v547 = vpop.f32.mrb[0].mxu0
  %v548 = vpop.f32.mrb[0].mxu0
  %v549 = vadd.f32 0.0, %v548
  %v550 = vpop.f32.mrb[0].mxu0
  %551 = vmatprep.mubr.bf16.mxu0 0
  %552 = vmatmul.mubr.bf16.gmra.mrb[0].mxu0 %v415
  %v553 = vpop.f32.mrb[0].mxu0
  %v554 = vadd.f32 0.0, %v553
  %v555 = vpop.f32.mrb[0].mxu0
  %v556 = vpop.f32.mrb[0].mxu0
  %v557 = vadd.f32 0.0, %v556
  %v558 = vpop.f32.mrb[0].mxu0
  %559 = vmatprep.mubr.bf16.mxu0 0
  %560 = vmatmul.mubr.bf16.gmra.mrb[0].mxu0 %v416
  %v561 = vpop.f32.mrb[0].mxu0
  %v562 = vadd.f32 0.0, %v561
  %v563 = vpop.f32.mrb[0].mxu0
  %v564 = vpop.f32.mrb[0].mxu0
  %v565 = vadd.f32 0.0, %v564
  %v566 = vpop.f32.mrb[0].mxu0
  %567 = vmatprep.mubr.bf16.mxu0 0
  %568 = vmatmul.mubr.bf16.gmra.mrb[0].mxu0 %v417
  %v569 = vpop.f32.mrb[0].mxu0
  %v570 = vadd.f32 0.0, %v569
  %v571 = vpop.f32.mrb[0].mxu0
  %v572 = vpop.f32.mrb[0].mxu0
  %v573 = vadd.f32 0.0, %v572
  %v574 = vpop.f32.mrb[0].mxu0
  %575 = vmatprep.mubr.bf16.mxu0 0
  %576 = vmatmul.mubr.bf16.gmra.mrb[0].mxu0 %v418
  %v577 = vpop.f32.mrb[0].mxu0
  %v578 = vadd.f32 0.0, %v577
  %v579 = vpop.f32.mrb[0].mxu0
  %v580 = vpop.f32.mrb[0].mxu0
  %v581 = vadd.f32 0.0, %v580
  %v582 = vpop.f32.mrb[0].mxu0
  %583 = vmatprep.mubr.bf16.mxu0 0
  %584 = vmatmul.mubr.bf16.gmra.mrb[0].mxu0 %v419
  %v585 = vpop.f32.mrb[0].mxu0
  %v586 = vadd.f32 0.0, %v585
  %v587 = vpop.f32.mrb[0].mxu0
  %v588 = vpop.f32.mrb[0].mxu0
  %v589 = vadd.f32 0.0, %v588
  %v590 = vpop.f32.mrb[0].mxu0
  %591 = vmatprep.mubr.bf16.mxu0 0
  %592 = vmatmul.mubr.bf16.gmra.mrb[0].mxu0 %v420
  %v593 = vpop.f32.mrb[0].mxu0
  %v594 = vadd.f32 0.0, %v593
  %v595 = vpop.f32.mrb[0].mxu0
  %v596 = vpop.f32.mrb[0].mxu0
  %v597 = vadd.f32 0.0, %v596
  %v598 = vpop.f32.mrb[0].mxu0
  %599 = vmatprep.mubr.bf16.mxu0 0
  %600 = vmatmul.mubr.bf16.gmra.mrb[0].mxu0 %v421
  %v601 = vpop.f32.mrb[0].mxu0
  %v602 = vadd.f32 0.0, %v601
  %v603 = vpop.f32.mrb[0].mxu0
  %v604 = vpop.f32.mrb[0].mxu0
  %v605 = vadd.f32 0.0, %v604
  %v606 = vpop.f32.mrb[0].mxu0
  %607 = vmatprep.mubr.bf16.mxu0 0
  %608 = vmatmul.mubr.bf16.gmra.mrb[0].mxu0 %v422
  %v609 = vpop.f32.mrb[0].mxu0
  %v610 = vadd.f32 0.0, %v609
  %v611 = vpop.f32.mrb[0].mxu0
  %v612 = vpop.f32.mrb[0].mxu0
  %v613 = vadd.f32 0.0, %v612
  %v614 = vpop.f32.mrb[0].mxu0
  %615 = vmatprep.mubr.bf16.mxu0 0
  %616 = vmatmul.mubr.bf16.gmra.mrb[0].mxu0 %v423
  %v617 = vpop.f32.mrb[0].mxu0
  %v618 = vadd.f32 0.0, %v617
  %v619 = vpop.f32.mrb[0].mxu0
  %v620 = vpop.f32.mrb[0].mxu0
  %v621 = vadd.f32 0.0, %v620
  %v622 = vpop.f32.mrb[0].mxu0
  %623 = vmatprep.mubr.bf16.mxu0 0
  %624 = vmatmul.mubr.bf16.gmra.mrb[0].mxu0 %v424
  %v625 = vpop.f32.mrb[0].mxu0
  %v626 = vadd.f32 0.0, %v625
  %v627 = vpop.f32.mrb[0].mxu0
  %v628 = vpop.f32.mrb[0].mxu0
  %v629 = vadd.f32 0.0, %v628
  %v630 = vpop.f32.mrb[0].mxu0
  %631 = vmatprep.mubr.bf16.mxu0 0
  %632 = vmatmul.mubr.bf16.gmra.mrb[0].mxu0 %v425
  %v633 = vpop.f32.mrb[0].mxu0
  %v634 = vadd.f32 0.0, %v633
  %v635 = vpop.f32.mrb[0].mxu0
  %v636 = vpop.f32.mrb[0].mxu0
  %v637 = vadd.f32 0.0, %v636
  %v638 = vpop.f32.mrb[0].mxu0
  %639 = vmatprep.mubr.bf16.mxu0 0
  %640 = vmatmul.mubr.bf16.gmra.mrb[0].mxu0 %v426
  %v641 = vpop.f32.mrb[0].mxu0
  %v642 = vadd.f32 0.0, %v641
  %v643 = vpop.f32.mrb[0].mxu0
  %v644 = vpop.f32.mrb[0].mxu0
  %v645 = vadd.f32 0.0, %v644
  %v646 = vpop.f32.mrb[0].mxu0
  %647 = vmatprep.mubr.bf16.mxu0 0
  %648 = vmatmul.mubr.bf16.gmra.mrb[0].mxu0 %v427
  %v649 = vpop.f32.mrb[0].mxu0
  %v650 = vadd.f32 0.0, %v649
  %v651 = vpop.f32.mrb[0].mxu0
  %v652 = vpop.f32.mrb[0].mxu0
  %v653 = vadd.f32 0.0, %v652
  %v654 = vpop.f32.mrb[0].mxu0
  %655 = vmatprep.mubr.bf16.mxu0 0
  %656 = vmatmul.mubr.bf16.gmra.mrb[0].mxu0 %v428
  %v657 = vpop.f32.mrb[0].mxu0
  %v658 = vadd.f32 0.0, %v657
  %v659 = vpop.f32.mrb[0].mxu0
  %v660 = vpop.f32.mrb[0].mxu0
  %v661 = vadd.f32 0.0, %v660
  %v662 = vpop.f32.mrb[0].mxu0
  %663 = vmatprep.mubr.bf16.mxu0 0
  %664 = vmatmul.mubr.bf16.gmra.mrb[0].mxu0 %v429
  %v665 = vpop.f32.mrb[0].mxu0
  %v666 = vadd.f32 0.0, %v665
  %v667 = vpop.f32.mrb[0].mxu0
  %v668 = vpop.f32.mrb[0].mxu0
  %v669 = vadd.f32 0.0, %v668
  %v670 = vpop.f32.mrb[0].mxu0
  %671 = vmatprep.mubr.bf16.mxu0 0
  %672 = vmatmul.mubr.bf16.gmra.mrb[0].mxu0 %v430
  %v673 = vpop.f32.mrb[0].mxu0
  %v674 = vadd.f32 0.0, %v673
  %v675 = vpop.f32.mrb[0].mxu0
  %v676 = vpop.f32.mrb[0].mxu0
  %v677 = vadd.f32 0.0, %v676
  %v678 = vpop.f32.mrb[0].mxu0
  %679 = vmatprep.mubr.bf16.mxu0 0
  %680 = vmatmul.mubr.bf16.gmra.mrb[0].mxu0 %v431
  %v681 = vpop.f32.mrb[0].mxu0
  %v682 = vadd.f32 0.0, %v681
  %v683 = vpop.f32.mrb[0].mxu0
  %v684 = vpop.f32.mrb[0].mxu0
  %v685 = vadd.f32 0.0, %v684
  %v686 = vpop.f32.mrb[0].mxu0
  %687 = vmatprep.mubr.bf16.mxu0 0
  %688 = vmatmul.mubr.bf16.gmra.mrb[0].mxu0 %v432
  %v689 = vpop.f32.mrb[0].mxu0
  %v690 = vadd.f32 0.0, %v689
  %v691 = vpop.f32.mrb[0].mxu0
  %v692 = vpop.f32.mrb[0].mxu0
  %v693 = vadd.f32 0.0, %v692
  %v694 = vpop.f32.mrb[0].mxu0
  %695 = vmatprep.mubr.bf16.mxu0 0
  %696 = vmatmul.mubr.bf16.gmra.mrb[0].mxu0 %v433
  %v697 = vpop.f32.mrb[0].mxu0
  %v698 = vadd.f32 0.0, %v697
  %v699 = vpop.f32.mrb[0].mxu0
  %v700 = vpop.f32.mrb[0].mxu0
  %v701 = vadd.f32 0.0, %v700
  %v702 = vpop.f32.mrb[0].mxu0
  %703 = vmatprep.mubr.bf16.mxu0 0
  %704 = vmatmul.mubr.bf16.gmra.mrb[0].mxu0 %v434
  %v705 = vpop.f32.mrb[0].mxu0
  %v706 = vadd.f32 0.0, %v705
  %v707 = vpop.f32.mrb[0].mxu0
  %v708 = vpop.f32.mrb[0].mxu0
  %v709 = vadd.f32 0.0, %v708
  %v710 = vpop.f32.mrb[0].mxu0
  %711 = vmatprep.mubr.bf16.mxu0 0
  %712 = vmatmul.mubr.bf16.gmra.mrb[0].mxu0 %v435
  %v713 = vpop.f32.mrb[0].mxu0
  %v714 = vadd.f32 0.0, %v713
  %v715 = vpop.f32.mrb[0].mxu0
  %v716 = vpop.f32.mrb[0].mxu0
  %v717 = vadd.f32 0.0, %v716
  %v718 = vpop.f32.mrb[0].mxu0
  %719 = vmatprep.mubr.bf16.mxu0 0
  %720 = vmatmul.mubr.bf16.gmra.mrb[0].mxu0 %v436
  %v721 = vpop.f32.mrb[0].mxu0
  %v722 = vadd.f32 0.0, %v721
  %v723 = vpop.f32.mrb[0].mxu0
  %v724 = vpop.f32.mrb[0].mxu0
  %v725 = vadd.f32 0.0, %v724
  %v726 = vpop.f32.mrb[0].mxu0
  %727 = vmatprep.mubr.bf16.mxu0 0
  %728 = vmatmul.mubr.bf16.gmra.mrb[0].mxu0 %v437
  %v729 = vpop.f32.mrb[0].mxu0
  %v730 = vadd.f32 0.0, %v729
  %v731 = vpop.f32.mrb[0].mxu0
  %v732 = vpop.f32.mrb[0].mxu0
  %v733 = vadd.f32 0.0, %v732
  %v734 = vpop.f32.mrb[0].mxu0
  %735 = vmatprep.mubr.bf16.mxu0 0
  %736 = vmatmul.mubr.bf16.gmra.mrb[0].mxu0 %v438
  %v737 = vpop.f32.mrb[0].mxu0
  %v738 = vadd.f32 0.0, %v737
  %v739 = vpop.f32.mrb[0].mxu0
  %v740 = vpop.f32.mrb[0].mxu0
  %v741 = vadd.f32 0.0, %v740
  %v742 = vpop.f32.mrb[0].mxu0
  %743 = vmatprep.mubr.bf16.mxu0 0
  %744 = vmatmul.mubr.bf16.gmra.mrb[0].mxu0 %v439
  %v745 = vpop.f32.mrb[0].mxu0
  %v746 = vadd.f32 0.0, %v745
  %v747 = vpop.f32.mrb[0].mxu0
  %v748 = vpop.f32.mrb[0].mxu0
  %v749 = vadd.f32 0.0, %v748
  %v750 = vpop.f32.mrb[0].mxu0
  %751 = vmatprep.mubr.bf16.mxu0 0
  %752 = vmatmul.mubr.bf16.gmra.mrb[0].mxu0 %v440
  %v753 = vpop.f32.mrb[0].mxu0
  %v754 = vadd.f32 0.0, %v753
  %v755 = vpop.f32.mrb[0].mxu0
  %v756 = vpop.f32.mrb[0].mxu0
  %v757 = vadd.f32 0.0, %v756
  %v758 = vpop.f32.mrb[0].mxu0
  %759 = vmatprep.mubr.bf16.mxu0 0
  %760 = vmatmul.mubr.bf16.gmra.mrb[0].mxu0 %v441
  %v761 = vpop.f32.mrb[0].mxu0
  %v762 = vadd.f32 0.0, %v761
  %v763 = vpop.f32.mrb[0].mxu0
  %v764 = vpop.f32.mrb[0].mxu0
  %v765 = vadd.f32 0.0, %v764
  %v766 = vpop.f32.mrb[0].mxu0
  %767 = vmatprep.mubr.bf16.mxu0 0
  %768 = vmatmul.mubr.bf16.gmra.mrb[0].mxu0 %v442
  %v769 = vpop.f32.mrb[0].mxu0
  %v770 = vadd.f32 0.0, %v769
  %v771 = vpop.f32.mrb[0].mxu0
  %v772 = vpop.f32.mrb[0].mxu0
  %v773 = vadd.f32 0.0, %v772
  %v774 = vpop.f32.mrb[0].mxu0
  %775 = vmatprep.mubr.bf16.mxu0 0
  %776 = vmatmul.mubr.bf16.gmra.mrb[0].mxu0 %v443
  %v777 = vpop.f32.mrb[0].mxu0
  %v778 = vadd.f32 0.0, %v777
  %v779 = vpop.f32.mrb[0].mxu0
  %v780 = vpop.f32.mrb[0].mxu0
  %v781 = vadd.f32 0.0, %v780
  %v782 = vpop.f32.mrb[0].mxu0
  %783 = vmatprep.mubr.bf16.mxu0 0
  %784 = vmatmul.mubr.bf16.gmra.mrb[0].mxu0 %v444
  %v785 = vpop.f32.mrb[0].mxu0
  %v786 = vadd.f32 0.0, %v785
  %v787 = vpop.f32.mrb[0].mxu0
  %v788 = vpop.f32.mrb[0].mxu0
  %v789 = vadd.f32 0.0, %v788
  %v790 = vpop.f32.mrb[0].mxu0
  %791 = vmatprep.mubr.bf16.mxu0 0
  %792 = vmatmul.mubr.bf16.gmra.mrb[0].mxu0 %v445
  %v793 = vpop.f32.mrb[0].mxu0
  %v794 = vadd.f32 0.0, %v793
  %v795 = vpop.f32.mrb[0].mxu0
  %v796 = vpop.f32.mrb[0].mxu0
  %v797 = vadd.f32 0.0, %v796
  %v798 = vpop.f32.mrb[0].mxu0
  %799 = vdwg.mxu0
  %v816 = vunpack.c.l.b16 %v334
  %v817 = vunpack.c.l.b16 %v335
  %v818 = vunpack.c.l.b16 %v336
  %v819 = vunpack.c.l.b16 %v337
  %v820 = vunpack.c.l.b16 %v338
  %v821 = vunpack.c.l.b16 %v339
  %v822 = vunpack.c.l.b16 %v340
  %v823 = vunpack.c.l.b16 %v341
  %v824 = vunpack.c.l.b16 %v342
  %v825 = vunpack.c.l.b16 %v343
  %v826 = vunpack.c.l.b16 %v344
  %v827 = vunpack.c.l.b16 %v345
  %v828 = vunpack.c.l.b16 %v346
  %v829 = vunpack.c.l.b16 %v347
  %v830 = vunpack.c.l.b16 %v348
  %v831 = vunpack.c.l.b16 %v349
  %v832 = vpack.c.b16 %v817, %v816
  %v833 = vpack.c.b16 %v819, %v818
  %v834 = vpack.c.b16 %v821, %v820
  %v835 = vpack.c.b16 %v823, %v822
  %v836 = vpack.c.b16 %v825, %v824
  %v837 = vpack.c.b16 %v827, %v826
  %v838 = vpack.c.b16 %v829, %v828
  %v839 = vpack.c.b16 %v831, %v830
  %848 = vmatprep.subr.bf16.mxu0 0
  %849 = vmatpush1.bf16.msra.mxu0 %v832
  %850 = vmatprep.subr.bf16.mxu0 0
  %851 = vmatpush1.bf16.msra.mxu0 %v833
  %852 = vmatprep.subr.bf16.mxu0 0
  %853 = vmatpush1.bf16.msra.mxu0 %v834
  %854 = vmatprep.subr.bf16.mxu0 0
  %855 = vmatpush1.bf16.msra.mxu0 %v835
  %856 = vmatprep.subr.bf16.mxu0 0
  %857 = vmatpush1.bf16.msra.mxu0 %v836
  %858 = vmatprep.subr.bf16.mxu0 0
  %859 = vmatpush1.bf16.msra.mxu0 %v837
  %860 = vmatprep.subr.bf16.mxu0 0
  %861 = vmatpush1.bf16.msra.mxu0 %v838
  %862 = vmatprep.subr.bf16.mxu0 0
  %863 = vmatpush1.bf16.msra.mxu0 %v839
  %864 = vmatprep.subr.bf16.mxu0 0
  %865 = vmatpush1.bf16.msra.mxu0 0
  %866 = vmatprep.subr.bf16.mxu0 0
  %867 = vmatpush1.bf16.msra.mxu0 0
  %868 = vmatprep.subr.bf16.mxu0 0
  %869 = vmatpush1.bf16.msra.mxu0 0
  %870 = vmatprep.subr.bf16.mxu0 0
  %871 = vmatpush1.bf16.msra.mxu0 0
  %872 = vmatprep.subr.bf16.mxu0 0
  %873 = vmatpush1.bf16.msra.mxu0 0
  %874 = vmatprep.subr.bf16.mxu0 0
  %875 = vmatpush1.bf16.msra.mxu0 0
  %876 = vmatprep.subr.bf16.mxu0 0
  %877 = vmatpush1.bf16.msra.mxu0 0
  %878 = vmatprep.subr.bf16.mxu0 0
  %879 = vmatpush1.bf16.msra.mxu0 0
  %880 = vmatprep.mubr.bf16.mxu0 0
  %881 = vmatmul.mubr.bf16.gmra.mrb[0].mxu0 %v302
  %v882 = vpop.f32.mrb[0].mxu0
  %v883 = vadd.f32 %v546, %v882
  %v884 = vpop.f32.mrb[0].mxu0
  %v885 = vpop.f32.mrb[0].mxu0
  %v886 = vadd.f32 %v549, %v885
  %v887 = vpop.f32.mrb[0].mxu0
  %888 = vmatprep.mubr.bf16.mxu0 0
  %889 = vmatmul.mubr.bf16.gmra.mrb[0].mxu0 %v303
  %v890 = vpop.f32.mrb[0].mxu0
  %v891 = vadd.f32 %v554, %v890
  %v892 = vpop.f32.mrb[0].mxu0
  %v893 = vpop.f32.mrb[0].mxu0
  %v894 = vadd.f32 %v557, %v893
  %v895 = vpop.f32.mrb[0].mxu0
  %896 = vmatprep.mubr.bf16.mxu0 0
  %897 = vmatmul.mubr.bf16.gmra.mrb[0].mxu0 %v304
  %v898 = vpop.f32.mrb[0].mxu0
  %v899 = vadd.f32 %v562, %v898
  %v900 = vpop.f32.mrb[0].mxu0
  %v901 = vpop.f32.mrb[0].mxu0
  %v902 = vadd.f32 %v565, %v901
  %v903 = vpop.f32.mrb[0].mxu0
  %904 = vmatprep.mubr.bf16.mxu0 0
  %905 = vmatmul.mubr.bf16.gmra.mrb[0].mxu0 %v305
  %v906 = vpop.f32.mrb[0].mxu0
  %v907 = vadd.f32 %v570, %v906
  %v908 = vpop.f32.mrb[0].mxu0
  %v909 = vpop.f32.mrb[0].mxu0
  %v910 = vadd.f32 %v573, %v909
  %v911 = vpop.f32.mrb[0].mxu0
  %912 = vmatprep.mubr.bf16.mxu0 0
  %913 = vmatmul.mubr.bf16.gmra.mrb[0].mxu0 %v306
  %v914 = vpop.f32.mrb[0].mxu0
  %v915 = vadd.f32 %v578, %v914
  %v916 = vpop.f32.mrb[0].mxu0
  %v917 = vpop.f32.mrb[0].mxu0
  %v918 = vadd.f32 %v581, %v917
  %v919 = vpop.f32.mrb[0].mxu0
  %920 = vmatprep.mubr.bf16.mxu0 0
  %921 = vmatmul.mubr.bf16.gmra.mrb[0].mxu0 %v307
  %v922 = vpop.f32.mrb[0].mxu0
  %v923 = vadd.f32 %v586, %v922
  %v924 = vpop.f32.mrb[0].mxu0
  %v925 = vpop.f32.mrb[0].mxu0
  %v926 = vadd.f32 %v589, %v925
  %v927 = vpop.f32.mrb[0].mxu0
  %928 = vmatprep.mubr.bf16.mxu0 0
  %929 = vmatmul.mubr.bf16.gmra.mrb[0].mxu0 %v308
  %v930 = vpop.f32.mrb[0].mxu0
  %v931 = vadd.f32 %v594, %v930
  %v932 = vpop.f32.mrb[0].mxu0
  %v933 = vpop.f32.mrb[0].mxu0
  %v934 = vadd.f32 %v597, %v933
  %v935 = vpop.f32.mrb[0].mxu0
  %936 = vmatprep.mubr.bf16.mxu0 0
  %937 = vmatmul.mubr.bf16.gmra.mrb[0].mxu0 %v309
  %v938 = vpop.f32.mrb[0].mxu0
  %v939 = vadd.f32 %v602, %v938
  %v940 = vpop.f32.mrb[0].mxu0
  %v941 = vpop.f32.mrb[0].mxu0
  %v942 = vadd.f32 %v605, %v941
  %v943 = vpop.f32.mrb[0].mxu0
  %944 = vmatprep.mubr.bf16.mxu0 0
  %945 = vmatmul.mubr.bf16.gmra.mrb[0].mxu0 %v310
  %v946 = vpop.f32.mrb[0].mxu0
  %v947 = vadd.f32 %v610, %v946
  %v948 = vpop.f32.mrb[0].mxu0
  %v949 = vpop.f32.mrb[0].mxu0
  %v950 = vadd.f32 %v613, %v949
  %v951 = vpop.f32.mrb[0].mxu0
  %952 = vmatprep.mubr.bf16.mxu0 0
  %953 = vmatmul.mubr.bf16.gmra.mrb[0].mxu0 %v311
  %v954 = vpop.f32.mrb[0].mxu0
  %v955 = vadd.f32 %v618, %v954
  %v956 = vpop.f32.mrb[0].mxu0
  %v957 = vpop.f32.mrb[0].mxu0
  %v958 = vadd.f32 %v621, %v957
  %v959 = vpop.f32.mrb[0].mxu0
  %960 = vmatprep.mubr.bf16.mxu0 0
  %961 = vmatmul.mubr.bf16.gmra.mrb[0].mxu0 %v312
  %v962 = vpop.f32.mrb[0].mxu0
  %v963 = vadd.f32 %v626, %v962
  %v964 = vpop.f32.mrb[0].mxu0
  %v965 = vpop.f32.mrb[0].mxu0
  %v966 = vadd.f32 %v629, %v965
  %v967 = vpop.f32.mrb[0].mxu0
  %968 = vmatprep.mubr.bf16.mxu0 0
  %969 = vmatmul.mubr.bf16.gmra.mrb[0].mxu0 %v313
  %v970 = vpop.f32.mrb[0].mxu0
  %v971 = vadd.f32 %v634, %v970
  %v972 = vpop.f32.mrb[0].mxu0
  %v973 = vpop.f32.mrb[0].mxu0
  %v974 = vadd.f32 %v637, %v973
  %v975 = vpop.f32.mrb[0].mxu0
  %976 = vmatprep.mubr.bf16.mxu0 0
  %977 = vmatmul.mubr.bf16.gmra.mrb[0].mxu0 %v314
  %v978 = vpop.f32.mrb[0].mxu0
  %v979 = vadd.f32 %v642, %v978
  %v980 = vpop.f32.mrb[0].mxu0
  %v981 = vpop.f32.mrb[0].mxu0
  %v982 = vadd.f32 %v645, %v981
  %v983 = vpop.f32.mrb[0].mxu0
  %984 = vmatprep.mubr.bf16.mxu0 0
  %985 = vmatmul.mubr.bf16.gmra.mrb[0].mxu0 %v315
  %v986 = vpop.f32.mrb[0].mxu0
  %v987 = vadd.f32 %v650, %v986
  %v988 = vpop.f32.mrb[0].mxu0
  %v989 = vpop.f32.mrb[0].mxu0
  %v990 = vadd.f32 %v653, %v989
  %v991 = vpop.f32.mrb[0].mxu0
  %992 = vmatprep.mubr.bf16.mxu0 0
  %993 = vmatmul.mubr.bf16.gmra.mrb[0].mxu0 %v316
  %v994 = vpop.f32.mrb[0].mxu0
  %v995 = vadd.f32 %v658, %v994
  %v996 = vpop.f32.mrb[0].mxu0
  %v997 = vpop.f32.mrb[0].mxu0
  %v998 = vadd.f32 %v661, %v997
  %v999 = vpop.f32.mrb[0].mxu0
  %1000 = vmatprep.mubr.bf16.mxu0 0
  %1001 = vmatmul.mubr.bf16.gmra.mrb[0].mxu0 %v317
  %v1002 = vpop.f32.mrb[0].mxu0
  %v1003 = vadd.f32 %v666, %v1002
  %v1004 = vpop.f32.mrb[0].mxu0
  %v1005 = vpop.f32.mrb[0].mxu0
  %v1006 = vadd.f32 %v669, %v1005
  %v1007 = vpop.f32.mrb[0].mxu0
  %1008 = vmatprep.mubr.bf16.mxu0 0
  %1009 = vmatmul.mubr.bf16.gmra.mrb[0].mxu0 %v318
  %v1010 = vpop.f32.mrb[0].mxu0
  %v1011 = vadd.f32 %v674, %v1010
  %v1012 = vpop.f32.mrb[0].mxu0
  %v1013 = vpop.f32.mrb[0].mxu0
  %v1014 = vadd.f32 %v677, %v1013
  %v1015 = vpop.f32.mrb[0].mxu0
  %1016 = vmatprep.mubr.bf16.mxu0 0
  %1017 = vmatmul.mubr.bf16.gmra.mrb[0].mxu0 %v319
  %v1018 = vpop.f32.mrb[0].mxu0
  %v1019 = vadd.f32 %v682, %v1018
  %v1020 = vpop.f32.mrb[0].mxu0
  %v1021 = vpop.f32.mrb[0].mxu0
  %v1022 = vadd.f32 %v685, %v1021
  %v1023 = vpop.f32.mrb[0].mxu0
  %1024 = vmatprep.mubr.bf16.mxu0 0
  %1025 = vmatmul.mubr.bf16.gmra.mrb[0].mxu0 %v320
  %v1026 = vpop.f32.mrb[0].mxu0
  %v1027 = vadd.f32 %v690, %v1026
  %v1028 = vpop.f32.mrb[0].mxu0
  %v1029 = vpop.f32.mrb[0].mxu0
  %v1030 = vadd.f32 %v693, %v1029
  %v1031 = vpop.f32.mrb[0].mxu0
  %1032 = vmatprep.mubr.bf16.mxu0 0
  %1033 = vmatmul.mubr.bf16.gmra.mrb[0].mxu0 %v321
  %v1034 = vpop.f32.mrb[0].mxu0
  %v1035 = vadd.f32 %v698, %v1034
  %v1036 = vpop.f32.mrb[0].mxu0
  %v1037 = vpop.f32.mrb[0].mxu0
  %v1038 = vadd.f32 %v701, %v1037
  %v1039 = vpop.f32.mrb[0].mxu0
  %1040 = vmatprep.mubr.bf16.mxu0 0
  %1041 = vmatmul.mubr.bf16.gmra.mrb[0].mxu0 %v322
  %v1042 = vpop.f32.mrb[0].mxu0
  %v1043 = vadd.f32 %v706, %v1042
  %v1044 = vpop.f32.mrb[0].mxu0
  %v1045 = vpop.f32.mrb[0].mxu0
  %v1046 = vadd.f32 %v709, %v1045
  %v1047 = vpop.f32.mrb[0].mxu0
  %1048 = vmatprep.mubr.bf16.mxu0 0
  %1049 = vmatmul.mubr.bf16.gmra.mrb[0].mxu0 %v323
  %v1050 = vpop.f32.mrb[0].mxu0
  %v1051 = vadd.f32 %v714, %v1050
  %v1052 = vpop.f32.mrb[0].mxu0
  %v1053 = vpop.f32.mrb[0].mxu0
  %v1054 = vadd.f32 %v717, %v1053
  %v1055 = vpop.f32.mrb[0].mxu0
  %1056 = vmatprep.mubr.bf16.mxu0 0
  %1057 = vmatmul.mubr.bf16.gmra.mrb[0].mxu0 %v324
  %v1058 = vpop.f32.mrb[0].mxu0
  %v1059 = vadd.f32 %v722, %v1058
  %v1060 = vpop.f32.mrb[0].mxu0
  %v1061 = vpop.f32.mrb[0].mxu0
  %v1062 = vadd.f32 %v725, %v1061
  %v1063 = vpop.f32.mrb[0].mxu0
  %1064 = vmatprep.mubr.bf16.mxu0 0
  %1065 = vmatmul.mubr.bf16.gmra.mrb[0].mxu0 %v325
  %v1066 = vpop.f32.mrb[0].mxu0
  %v1067 = vadd.f32 %v730, %v1066
  %v1068 = vpop.f32.mrb[0].mxu0
  %v1069 = vpop.f32.mrb[0].mxu0
  %v1070 = vadd.f32 %v733, %v1069
  %v1071 = vpop.f32.mrb[0].mxu0
  %1072 = vmatprep.mubr.bf16.mxu0 0
  %1073 = vmatmul.mubr.bf16.gmra.mrb[0].mxu0 %v326
  %v1074 = vpop.f32.mrb[0].mxu0
  %v1075 = vadd.f32 %v738, %v1074
  %v1076 = vpop.f32.mrb[0].mxu0
  %v1077 = vpop.f32.mrb[0].mxu0
  %v1078 = vadd.f32 %v741, %v1077
  %v1079 = vpop.f32.mrb[0].mxu0
  %1080 = vmatprep.mubr.bf16.mxu0 0
  %1081 = vmatmul.mubr.bf16.gmra.mrb[0].mxu0 %v327
  %v1082 = vpop.f32.mrb[0].mxu0
  %v1083 = vadd.f32 %v746, %v1082
  %v1084 = vpop.f32.mrb[0].mxu0
  %v1085 = vpop.f32.mrb[0].mxu0
  %v1086 = vadd.f32 %v749, %v1085
  %v1087 = vpop.f32.mrb[0].mxu0
  %1088 = vmatprep.mubr.bf16.mxu0 0
  %1089 = vmatmul.mubr.bf16.gmra.mrb[0].mxu0 %v328
  %v1090 = vpop.f32.mrb[0].mxu0
  %v1091 = vadd.f32 %v754, %v1090
  %v1092 = vpop.f32.mrb[0].mxu0
  %v1093 = vpop.f32.mrb[0].mxu0
  %v1094 = vadd.f32 %v757, %v1093
  %v1095 = vpop.f32.mrb[0].mxu0
  %1096 = vmatprep.mubr.bf16.mxu0 0
  %1097 = vmatmul.mubr.bf16.gmra.mrb[0].mxu0 %v329
  %v1098 = vpop.f32.mrb[0].mxu0
  %v1099 = vadd.f32 %v762, %v1098
  %v1100 = vpop.f32.mrb[0].mxu0
  %v1101 = vpop.f32.mrb[0].mxu0
  %v1102 = vadd.f32 %v765, %v1101
  %v1103 = vpop.f32.mrb[0].mxu0
  %1104 = vmatprep.mubr.bf16.mxu0 0
  %1105 = vmatmul.mubr.bf16.gmra.mrb[0].mxu0 %v330
  %v1106 = vpop.f32.mrb[0].mxu0
  %v1107 = vadd.f32 %v770, %v1106
  %v1108 = vpop.f32.mrb[0].mxu0
  %v1109 = vpop.f32.mrb[0].mxu0
  %v1110 = vadd.f32 %v773, %v1109
  %v1111 = vpop.f32.mrb[0].mxu0
  %1112 = vmatprep.mubr.bf16.mxu0 0
  %1113 = vmatmul.mubr.bf16.gmra.mrb[0].mxu0 %v331
  %v1114 = vpop.f32.mrb[0].mxu0
  %v1115 = vadd.f32 %v778, %v1114
  %v1116 = vpop.f32.mrb[0].mxu0
  %v1117 = vpop.f32.mrb[0].mxu0
  %v1118 = vadd.f32 %v781, %v1117
  %v1119 = vpop.f32.mrb[0].mxu0
  %1120 = vmatprep.mubr.bf16.mxu0 0
  %1121 = vmatmul.mubr.bf16.gmra.mrb[0].mxu0 %v332
  %v1122 = vpop.f32.mrb[0].mxu0
  %v1123 = vadd.f32 %v786, %v1122
  %v1124 = vpop.f32.mrb[0].mxu0
  %v1125 = vpop.f32.mrb[0].mxu0
  %v1126 = vadd.f32 %v789, %v1125
  %v1127 = vpop.f32.mrb[0].mxu0
  %1128 = vmatprep.mubr.bf16.mxu0 0
  %1129 = vmatmul.mubr.bf16.gmra.mrb[0].mxu0 %v333
  %v1130 = vpop.f32.mrb[0].mxu0
  %v1131 = vadd.f32 %v794, %v1130
  %v1132 = vpop.f32.mrb[0].mxu0
  %v1133 = vpop.f32.mrb[0].mxu0
  %v1134 = vadd.f32 %v797, %v1133
  %v1135 = vpop.f32.mrb[0].mxu0
  %1136 = vdwg.mxu0
  %v1137 = vld [vmem:[#allocation2 + $0x2] sm:$0xff]
  %v1138 = vld [vmem:[#allocation2 + $0xa] sm:$0xff]
  %v1139 = vld [vmem:[#allocation2 + $0x1a] sm:$0xff]
  %v1140 = vld [vmem:[#allocation2 + $0x22] sm:$0xff]
  %v1141 = vld [vmem:[#allocation2 + $0x32] sm:$0xff]
  %v1142 = vld [vmem:[#allocation2 + $0x3a] sm:$0xff]
  %v1143 = vld [vmem:[#allocation2 + $0x4a] sm:$0xff]
  %v1144 = vld [vmem:[#allocation2 + $0x52] sm:$0xff]
  %v1145 = vld [vmem:[#allocation2 + $0x62] sm:$0xff]
  %v1146 = vld [vmem:[#allocation2 + $0x6a] sm:$0xff]
  %v1147 = vld [vmem:[#allocation2 + $0x7a] sm:$0xff]
  %v1148 = vld [vmem:[#allocation2 + $0x82] sm:$0xff]
  %v1149 = vld [vmem:[#allocation2 + $0x92] sm:$0xff]
  %v1150 = vld [vmem:[#allocation2 + $0x9a] sm:$0xff]
  %v1151 = vld [vmem:[#allocation2 + $0xaa] sm:$0xff]
  %v1152 = vld [vmem:[#allocation2 + $0xb2] sm:$0xff]
  %v1153 = vld [vmem:[#allocation2 + $0xc2] sm:$0xff]
  %v1154 = vld [vmem:[#allocation2 + $0xca] sm:$0xff]
  %v1155 = vld [vmem:[#allocation2 + $0xda] sm:$0xff]
  %v1156 = vld [vmem:[#allocation2 + $0xe2] sm:$0xff]
  %v1157 = vld [vmem:[#allocation2 + $0xf2] sm:$0xff]
  %v1158 = vld [vmem:[#allocation2 + $0xfa] sm:$0xff]
  %v1159 = vld [vmem:[#allocation2 + $0x10a] sm:$0xff]
  %v1160 = vld [vmem:[#allocation2 + $0x112] sm:$0xff]
  %v1161 = vld [vmem:[#allocation2 + $0x122] sm:$0xff]
  %v1162 = vld [vmem:[#allocation2 + $0x12a] sm:$0xff]
  %v1163 = vld [vmem:[#allocation2 + $0x13a] sm:$0xff]
  %v1164 = vld [vmem:[#allocation2 + $0x142] sm:$0xff]
  %v1165 = vld [vmem:[#allocation2 + $0x152] sm:$0xff]
  %v1166 = vld [vmem:[#allocation2 + $0x15a] sm:$0xff]
  %v1167 = vld [vmem:[#allocation2 + $0x16a] sm:$0xff]
  %v1168 = vld [vmem:[#allocation2 + $0x172] sm:$0xff]
  %v1169 = vld [vmem:[#allocation2 + $0x1b2] sm:$0xff]
  %v1170 = vld [vmem:[#allocation2 + $0x1ba] sm:$0xff]
  %v1171 = vld [vmem:[#allocation2 + $0x1ca] sm:$0xff]
  %v1172 = vld [vmem:[#allocation2 + $0x1d2] sm:$0xff]
  %v1173 = vld [vmem:[#allocation2 + $0x1e2] sm:$0xff]
  %v1174 = vld [vmem:[#allocation2 + $0x1ea] sm:$0xff]
  %v1175 = vld [vmem:[#allocation2 + $0x1fa] sm:$0xff]
  %v1176 = vld [vmem:[#allocation2 + $0x202] sm:$0xff]
  %v1177 = vld [vmem:[#allocation2 + $0x212] sm:$0xff]
  %v1178 = vld [vmem:[#allocation2 + $0x21a] sm:$0xff]
  %v1179 = vld [vmem:[#allocation2 + $0x22a] sm:$0xff]
  %v1180 = vld [vmem:[#allocation2 + $0x232] sm:$0xff]
  %v1181 = vld [vmem:[#allocation2 + $0x242] sm:$0xff]
  %v1182 = vld [vmem:[#allocation2 + $0x24a] sm:$0xff]
  %v1183 = vld [vmem:[#allocation2 + $0x25a] sm:$0xff]
  %v1184 = vld [vmem:[#allocation2 + $0x262] sm:$0xff]
  %v1185 = vld [vmem:[#allocation2 + $0x272] sm:$0xff]
  %v1186 = vld [vmem:[#allocation2 + $0x27a] sm:$0xff]
  %v1187 = vld [vmem:[#allocation2 + $0x28a] sm:$0xff]
  %v1188 = vld [vmem:[#allocation2 + $0x292] sm:$0xff]
  %v1189 = vld [vmem:[#allocation2 + $0x2a2] sm:$0xff]
  %v1190 = vld [vmem:[#allocation2 + $0x2aa] sm:$0xff]
  %v1191 = vld [vmem:[#allocation2 + $0x2ba] sm:$0xff]
  %v1192 = vld [vmem:[#allocation2 + $0x2c2] sm:$0xff]
  %v1193 = vld [vmem:[#allocation2 + $0x2d2] sm:$0xff]
  %v1194 = vld [vmem:[#allocation2 + $0x2da] sm:$0xff]
  %v1195 = vld [vmem:[#allocation2 + $0x2ea] sm:$0xff]
  %v1196 = vld [vmem:[#allocation2 + $0x2f2] sm:$0xff]
  %v1197 = vld [vmem:[#allocation2 + $0x302] sm:$0xff]
  %v1198 = vld [vmem:[#allocation2 + $0x30a] sm:$0xff]
  %v1199 = vld [vmem:[#allocation2 + $0x31a] sm:$0xff]
  %v1200 = vld [vmem:[#allocation2 + $0x322] sm:$0xff]
  %v1201 = vpack.c.bf16 %v1138, %v1137
  %v1202 = vpack.c.bf16 %v1140, %v1139
  %v1203 = vpack.c.bf16 %v1142, %v1141
  %v1204 = vpack.c.bf16 %v1144, %v1143
  %v1205 = vpack.c.bf16 %v1146, %v1145
  %v1206 = vpack.c.bf16 %v1148, %v1147
  %v1207 = vpack.c.bf16 %v1150, %v1149
  %v1208 = vpack.c.bf16 %v1152, %v1151
  %v1209 = vpack.c.bf16 %v1154, %v1153
  %v1210 = vpack.c.bf16 %v1156, %v1155
  %v1211 = vpack.c.bf16 %v1158, %v1157
  %v1212 = vpack.c.bf16 %v1160, %v1159
  %v1213 = vpack.c.bf16 %v1162, %v1161
  %v1214 = vpack.c.bf16 %v1164, %v1163
  %v1215 = vpack.c.bf16 %v1166, %v1165
  %v1216 = vpack.c.bf16 %v1168, %v1167
  %v1217 = vpack.c.bf16 %v1170, %v1169
  %v1218 = vpack.c.bf16 %v1172, %v1171
  %v1219 = vpack.c.bf16 %v1174, %v1173
  %v1220 = vpack.c.bf16 %v1176, %v1175
  %v1221 = vpack.c.bf16 %v1178, %v1177
  %v1222 = vpack.c.bf16 %v1180, %v1179
  %v1223 = vpack.c.bf16 %v1182, %v1181
  %v1224 = vpack.c.bf16 %v1184, %v1183
  %v1225 = vpack.c.bf16 %v1186, %v1185
  %v1226 = vpack.c.bf16 %v1188, %v1187
  %v1227 = vpack.c.bf16 %v1190, %v1189
  %v1228 = vpack.c.bf16 %v1192, %v1191
  %v1229 = vpack.c.bf16 %v1194, %v1193
  %v1230 = vpack.c.bf16 %v1196, %v1195
  %v1231 = vpack.c.bf16 %v1198, %v1197
  %v1232 = vpack.c.bf16 %v1200, %v1199
  %s1233 = scalar_lea.vmem %s1, 128
  %v1234 = vld [vmem:[%s1233] sm:$0xf]
  %v1235 = vld [vmem:[%s1233 + $0x4] sm:$0xf]
  %v1236 = vld [vmem:[%s1233 + $0x8] sm:$0xf]
  %v1237 = vld [vmem:[%s1233 + $0xc] sm:$0xf]
  %v1238 = vld [vmem:[%s1233 + $0x10] sm:$0xf]
  %v1239 = vld [vmem:[%s1233 + $0x14] sm:$0xf]
  %v1240 = vld [vmem:[%s1233 + $0x18] sm:$0xf]
  %v1241 = vld [vmem:[%s1233 + $0x1c] sm:$0xf]
  %v1242 = vld [vmem:[%s1233 + $0x20] sm:$0xf]
  %v1243 = vld [vmem:[%s1233 + $0x24] sm:$0xf]
  %v1244 = vld [vmem:[%s1233 + $0x28] sm:$0xf]
  %v1245 = vld [vmem:[%s1233 + $0x2c] sm:$0xf]
  %v1246 = vld [vmem:[%s1233 + $0x30] sm:$0xf]
  %v1247 = vld [vmem:[%s1233 + $0x34] sm:$0xf]
  %v1248 = vld [vmem:[%s1233 + $0x38] sm:$0xf]
  %v1249 = vld [vmem:[%s1233 + $0x3c] sm:$0xf]
  %v1266 = vunpack.c.l.b16 %v1234
  %v1267 = vunpack.c.l.b16 %v1235
  %v1268 = vunpack.c.l.b16 %v1236
  %v1269 = vunpack.c.l.b16 %v1237
  %v1270 = vunpack.c.l.b16 %v1238
  %v1271 = vunpack.c.l.b16 %v1239
  %v1272 = vunpack.c.l.b16 %v1240
  %v1273 = vunpack.c.l.b16 %v1241
  %v1274 = vunpack.c.l.b16 %v1242
  %v1275 = vunpack.c.l.b16 %v1243
  %v1276 = vunpack.c.l.b16 %v1244
  %v1277 = vunpack.c.l.b16 %v1245
  %v1278 = vunpack.c.l.b16 %v1246
  %v1279 = vunpack.c.l.b16 %v1247
  %v1280 = vunpack.c.l.b16 %v1248
  %v1281 = vunpack.c.l.b16 %v1249
  %v1282 = vpack.c.b16 %v1267, %v1266
  %v1283 = vpack.c.b16 %v1269, %v1268
  %v1284 = vpack.c.b16 %v1271, %v1270
  %v1285 = vpack.c.b16 %v1273, %v1272
  %v1286 = vpack.c.b16 %v1275, %v1274
  %v1287 = vpack.c.b16 %v1277, %v1276
  %v1288 = vpack.c.b16 %v1279, %v1278
  %v1289 = vpack.c.b16 %v1281, %v1280
  %1298 = vmatprep.subr.bf16.mxu0 0
  %1299 = vmatpush1.bf16.msra.mxu0 %v1282
  %1300 = vmatprep.subr.bf16.mxu0 0
  %1301 = vmatpush1.bf16.msra.mxu0 %v1283
  %1302 = vmatprep.subr.bf16.mxu0 0
  %1303 = vmatpush1.bf16.msra.mxu0 %v1284
  %1304 = vmatprep.subr.bf16.mxu0 0
  %1305 = vmatpush1.bf16.msra.mxu0 %v1285
  %1306 = vmatprep.subr.bf16.mxu0 0
  %1307 = vmatpush1.bf16.msra.mxu0 %v1286
  %1308 = vmatprep.subr.bf16.mxu0 0
  %1309 = vmatpush1.bf16.msra.mxu0 %v1287
  %1310 = vmatprep.subr.bf16.mxu0 0
  %1311 = vmatpush1.bf16.msra.mxu0 %v1288
  %1312 = vmatprep.subr.bf16.mxu0 0
  %1313 = vmatpush1.bf16.msra.mxu0 %v1289
  %1314 = vmatprep.subr.bf16.mxu0 0
  %1315 = vmatpush1.bf16.msra.mxu0 0
  %1316 = vmatprep.subr.bf16.mxu0 0
  %1317 = vmatpush1.bf16.msra.mxu0 0
  %1318 = vmatprep.subr.bf16.mxu0 0
  %1319 = vmatpush1.bf16.msra.mxu0 0
  %1320 = vmatprep.subr.bf16.mxu0 0
  %1321 = vmatpush1.bf16.msra.mxu0 0
  %1322 = vmatprep.subr.bf16.mxu0 0
  %1323 = vmatpush1.bf16.msra.mxu0 0
  %1324 = vmatprep.subr.bf16.mxu0 0
  %1325 = vmatpush1.bf16.msra.mxu0 0
  %1326 = vmatprep.subr.bf16.mxu0 0
  %1327 = vmatpush1.bf16.msra.mxu0 0
  %1328 = vmatprep.subr.bf16.mxu0 0
  %1329 = vmatpush1.bf16.msra.mxu0 0
  %1330 = vmatprep.mubr.bf16.mxu0 0
  %1331 = vmatmul.mubr.bf16.gmra.mrb[0].mxu0 %v1201
  %v1332 = vpop.f32.mrb[0].mxu0
  %v1333 = vadd.f32 0.0, %v1332
  %v1334 = vpop.f32.mrb[0].mxu0
  %v1335 = vpop.f32.mrb[0].mxu0
  %v1336 = vadd.f32 0.0, %v1335
  %v1337 = vpop.f32.mrb[0].mxu0
  %1338 = vmatprep.mubr.bf16.mxu0 0
  %1339 = vmatmul.mubr.bf16.gmra.mrb[0].mxu0 %v1202
  %v1340 = vpop.f32.mrb[0].mxu0
  %v1341 = vadd.f32 0.0, %v1340
  %v1342 = vpop.f32.mrb[0].mxu0
  %v1343 = vpop.f32.mrb[0].mxu0
  %v1344 = vadd.f32 0.0, %v1343
  %v1345 = vpop.f32.mrb[0].mxu0
  %1346 = vmatprep.mubr.bf16.mxu0 0
  %1347 = vmatmul.mubr.bf16.gmra.mrb[0].mxu0 %v1203
  %v1348 = vpop.f32.mrb[0].mxu0
  %v1349 = vadd.f32 0.0, %v1348
  %v1350 = vpop.f32.mrb[0].mxu0
  %v1351 = vpop.f32.mrb[0].mxu0
  %v1352 = vadd.f32 0.0, %v1351
  %v1353 = vpop.f32.mrb[0].mxu0
  %1354 = vmatprep.mubr.bf16.mxu0 0
  %1355 = vmatmul.mubr.bf16.gmra.mrb[0].mxu0 %v1204
  %v1356 = vpop.f32.mrb[0].mxu0
  %v1357 = vadd.f32 0.0, %v1356
  %v1358 = vpop.f32.mrb[0].mxu0
  %v1359 = vpop.f32.mrb[0].mxu0
  %v1360 = vadd.f32 0.0, %v1359
  %v1361 = vpop.f32.mrb[0].mxu0
  %1362 = vmatprep.mubr.bf16.mxu0 0
  %1363 = vmatmul.mubr.bf16.gmra.mrb[0].mxu0 %v1205
  %v1364 = vpop.f32.mrb[0].mxu0
  %v1365 = vadd.f32 0.0, %v1364
  %v1366 = vpop.f32.mrb[0].mxu0
  %v1367 = vpop.f32.mrb[0].mxu0
  %v1368 = vadd.f32 0.0, %v1367
  %v1369 = vpop.f32.mrb[0].mxu0
  %1370 = vmatprep.mubr.bf16.mxu0 0
  %1371 = vmatmul.mubr.bf16.gmra.mrb[0].mxu0 %v1206
  %v1372 = vpop.f32.mrb[0].mxu0
  %v1373 = vadd.f32 0.0, %v1372
  %v1374 = vpop.f32.mrb[0].mxu0
  %v1375 = vpop.f32.mrb[0].mxu0
  %v1376 = vadd.f32 0.0, %v1375
  %v1377 = vpop.f32.mrb[0].mxu0
  %1378 = vmatprep.mubr.bf16.mxu0 0
  %1379 = vmatmul.mubr.bf16.gmra.mrb[0].mxu0 %v1207
  %v1380 = vpop.f32.mrb[0].mxu0
  %v1381 = vadd.f32 0.0, %v1380
  %v1382 = vpop.f32.mrb[0].mxu0
  %v1383 = vpop.f32.mrb[0].mxu0
  %v1384 = vadd.f32 0.0, %v1383
  %v1385 = vpop.f32.mrb[0].mxu0
  %1386 = vmatprep.mubr.bf16.mxu0 0
  %1387 = vmatmul.mubr.bf16.gmra.mrb[0].mxu0 %v1208
  %v1388 = vpop.f32.mrb[0].mxu0
  %v1389 = vadd.f32 0.0, %v1388
  %v1390 = vpop.f32.mrb[0].mxu0
  %v1391 = vpop.f32.mrb[0].mxu0
  %v1392 = vadd.f32 0.0, %v1391
  %v1393 = vpop.f32.mrb[0].mxu0
  %1394 = vmatprep.mubr.bf16.mxu0 0
  %1395 = vmatmul.mubr.bf16.gmra.mrb[0].mxu0 %v1209
  %v1396 = vpop.f32.mrb[0].mxu0
  %v1397 = vadd.f32 0.0, %v1396
  %v1398 = vpop.f32.mrb[0].mxu0
  %v1399 = vpop.f32.mrb[0].mxu0
  %v1400 = vadd.f32 0.0, %v1399
  %v1401 = vpop.f32.mrb[0].mxu0
  %1402 = vmatprep.mubr.bf16.mxu0 0
  %1403 = vmatmul.mubr.bf16.gmra.mrb[0].mxu0 %v1210
  %v1404 = vpop.f32.mrb[0].mxu0
  %v1405 = vadd.f32 0.0, %v1404
  %v1406 = vpop.f32.mrb[0].mxu0
  %v1407 = vpop.f32.mrb[0].mxu0
  %v1408 = vadd.f32 0.0, %v1407
  %v1409 = vpop.f32.mrb[0].mxu0
  %1410 = vmatprep.mubr.bf16.mxu0 0
  %1411 = vmatmul.mubr.bf16.gmra.mrb[0].mxu0 %v1211
  %v1412 = vpop.f32.mrb[0].mxu0
  %v1413 = vadd.f32 0.0, %v1412
  %v1414 = vpop.f32.mrb[0].mxu0
  %v1415 = vpop.f32.mrb[0].mxu0
  %v1416 = vadd.f32 0.0, %v1415
  %v1417 = vpop.f32.mrb[0].mxu0
  %1418 = vmatprep.mubr.bf16.mxu0 0
  %1419 = vmatmul.mubr.bf16.gmra.mrb[0].mxu0 %v1212
  %v1420 = vpop.f32.mrb[0].mxu0
  %v1421 = vadd.f32 0.0, %v1420
  %v1422 = vpop.f32.mrb[0].mxu0
  %v1423 = vpop.f32.mrb[0].mxu0
  %v1424 = vadd.f32 0.0, %v1423
  %v1425 = vpop.f32.mrb[0].mxu0
  %1426 = vmatprep.mubr.bf16.mxu0 0
  %1427 = vmatmul.mubr.bf16.gmra.mrb[0].mxu0 %v1213
  %v1428 = vpop.f32.mrb[0].mxu0
  %v1429 = vadd.f32 0.0, %v1428
  %v1430 = vpop.f32.mrb[0].mxu0
  %v1431 = vpop.f32.mrb[0].mxu0
  %v1432 = vadd.f32 0.0, %v1431
  %v1433 = vpop.f32.mrb[0].mxu0
  %1434 = vmatprep.mubr.bf16.mxu0 0
  %1435 = vmatmul.mubr.bf16.gmra.mrb[0].mxu0 %v1214
  %v1436 = vpop.f32.mrb[0].mxu0
  %v1437 = vadd.f32 0.0, %v1436
  %v1438 = vpop.f32.mrb[0].mxu0
  %v1439 = vpop.f32.mrb[0].mxu0
  %v1440 = vadd.f32 0.0, %v1439
  %v1441 = vpop.f32.mrb[0].mxu0
  %1442 = vmatprep.mubr.bf16.mxu0 0
  %1443 = vmatmul.mubr.bf16.gmra.mrb[0].mxu0 %v1215
  %v1444 = vpop.f32.mrb[0].mxu0
  %v1445 = vadd.f32 0.0, %v1444
  %v1446 = vpop.f32.mrb[0].mxu0
  %v1447 = vpop.f32.mrb[0].mxu0
  %v1448 = vadd.f32 0.0, %v1447
  %v1449 = vpop.f32.mrb[0].mxu0
  %1450 = vmatprep.mubr.bf16.mxu0 0
  %1451 = vmatmul.mubr.bf16.gmra.mrb[0].mxu0 %v1216
  %v1452 = vpop.f32.mrb[0].mxu0
  %v1453 = vadd.f32 0.0, %v1452
  %v1454 = vpop.f32.mrb[0].mxu0
  %v1455 = vpop.f32.mrb[0].mxu0
  %v1456 = vadd.f32 0.0, %v1455
  %v1457 = vpop.f32.mrb[0].mxu0
  %1458 = vmatprep.mubr.bf16.mxu0 0
  %1459 = vmatmul.mubr.bf16.gmra.mrb[0].mxu0 %v1217
  %v1460 = vpop.f32.mrb[0].mxu0
  %v1461 = vadd.f32 0.0, %v1460
  %v1462 = vpop.f32.mrb[0].mxu0
  %v1463 = vpop.f32.mrb[0].mxu0
  %v1464 = vadd.f32 0.0, %v1463
  %v1465 = vpop.f32.mrb[0].mxu0
  %1466 = vmatprep.mubr.bf16.mxu0 0
  %1467 = vmatmul.mubr.bf16.gmra.mrb[0].mxu0 %v1218
  %v1468 = vpop.f32.mrb[0].mxu0
  %v1469 = vadd.f32 0.0, %v1468
  %v1470 = vpop.f32.mrb[0].mxu0
  %v1471 = vpop.f32.mrb[0].mxu0
  %v1472 = vadd.f32 0.0, %v1471
  %v1473 = vpop.f32.mrb[0].mxu0
  %1474 = vmatprep.mubr.bf16.mxu0 0
  %1475 = vmatmul.mubr.bf16.gmra.mrb[0].mxu0 %v1219
  %v1476 = vpop.f32.mrb[0].mxu0
  %v1477 = vadd.f32 0.0, %v1476
  %v1478 = vpop.f32.mrb[0].mxu0
  %v1479 = vpop.f32.mrb[0].mxu0
  %v1480 = vadd.f32 0.0, %v1479
  %v1481 = vpop.f32.mrb[0].mxu0
  %1482 = vmatprep.mubr.bf16.mxu0 0
  %1483 = vmatmul.mubr.bf16.gmra.mrb[0].mxu0 %v1220
  %v1484 = vpop.f32.mrb[0].mxu0
  %v1485 = vadd.f32 0.0, %v1484
  %v1486 = vpop.f32.mrb[0].mxu0
  %v1487 = vpop.f32.mrb[0].mxu0
  %v1488 = vadd.f32 0.0, %v1487
  %v1489 = vpop.f32.mrb[0].mxu0
  %1490 = vmatprep.mubr.bf16.mxu0 0
  %1491 = vmatmul.mubr.bf16.gmra.mrb[0].mxu0 %v1221
  %v1492 = vpop.f32.mrb[0].mxu0
  %v1493 = vadd.f32 0.0, %v1492
  %v1494 = vpop.f32.mrb[0].mxu0
  %v1495 = vpop.f32.mrb[0].mxu0
  %v1496 = vadd.f32 0.0, %v1495
  %v1497 = vpop.f32.mrb[0].mxu0
  %1498 = vmatprep.mubr.bf16.mxu0 0
  %1499 = vmatmul.mubr.bf16.gmra.mrb[0].mxu0 %v1222
  %v1500 = vpop.f32.mrb[0].mxu0
  %v1501 = vadd.f32 0.0, %v1500
  %v1502 = vpop.f32.mrb[0].mxu0
  %v1503 = vpop.f32.mrb[0].mxu0
  %v1504 = vadd.f32 0.0, %v1503
  %v1505 = vpop.f32.mrb[0].mxu0
  %1506 = vmatprep.mubr.bf16.mxu0 0
  %1507 = vmatmul.mubr.bf16.gmra.mrb[0].mxu0 %v1223
  %v1508 = vpop.f32.mrb[0].mxu0
  %v1509 = vadd.f32 0.0, %v1508
  %v1510 = vpop.f32.mrb[0].mxu0
  %v1511 = vpop.f32.mrb[0].mxu0
  %v1512 = vadd.f32 0.0, %v1511
  %v1513 = vpop.f32.mrb[0].mxu0
  %1514 = vmatprep.mubr.bf16.mxu0 0
  %1515 = vmatmul.mubr.bf16.gmra.mrb[0].mxu0 %v1224
  %v1516 = vpop.f32.mrb[0].mxu0
  %v1517 = vadd.f32 0.0, %v1516
  %v1518 = vpop.f32.mrb[0].mxu0
  %v1519 = vpop.f32.mrb[0].mxu0
  %v1520 = vadd.f32 0.0, %v1519
  %v1521 = vpop.f32.mrb[0].mxu0
  %1522 = vmatprep.mubr.bf16.mxu0 0
  %1523 = vmatmul.mubr.bf16.gmra.mrb[0].mxu0 %v1225
  %v1524 = vpop.f32.mrb[0].mxu0
  %v1525 = vadd.f32 0.0, %v1524
  %v1526 = vpop.f32.mrb[0].mxu0
  %v1527 = vpop.f32.mrb[0].mxu0
  %v1528 = vadd.f32 0.0, %v1527
  %v1529 = vpop.f32.mrb[0].mxu0
  %1530 = vmatprep.mubr.bf16.mxu0 0
  %1531 = vmatmul.mubr.bf16.gmra.mrb[0].mxu0 %v1226
  %v1532 = vpop.f32.mrb[0].mxu0
  %v1533 = vadd.f32 0.0, %v1532
  %v1534 = vpop.f32.mrb[0].mxu0
  %v1535 = vpop.f32.mrb[0].mxu0
  %v1536 = vadd.f32 0.0, %v1535
  %v1537 = vpop.f32.mrb[0].mxu0
  %1538 = vmatprep.mubr.bf16.mxu0 0
  %1539 = vmatmul.mubr.bf16.gmra.mrb[0].mxu0 %v1227
  %v1540 = vpop.f32.mrb[0].mxu0
  %v1541 = vadd.f32 0.0, %v1540
  %v1542 = vpop.f32.mrb[0].mxu0
  %v1543 = vpop.f32.mrb[0].mxu0
  %v1544 = vadd.f32 0.0, %v1543
  %v1545 = vpop.f32.mrb[0].mxu0
  %1546 = vmatprep.mubr.bf16.mxu0 0
  %1547 = vmatmul.mubr.bf16.gmra.mrb[0].mxu0 %v1228
  %v1548 = vpop.f32.mrb[0].mxu0
  %v1549 = vadd.f32 0.0, %v1548
  %v1550 = vpop.f32.mrb[0].mxu0
  %v1551 = vpop.f32.mrb[0].mxu0
  %v1552 = vadd.f32 0.0, %v1551
  %v1553 = vpop.f32.mrb[0].mxu0
  %1554 = vmatprep.mubr.bf16.mxu0 0
  %1555 = vmatmul.mubr.bf16.gmra.mrb[0].mxu0 %v1229
  %v1556 = vpop.f32.mrb[0].mxu0
  %v1557 = vadd.f32 0.0, %v1556
  %v1558 = vpop.f32.mrb[0].mxu0
  %v1559 = vpop.f32.mrb[0].mxu0
  %v1560 = vadd.f32 0.0, %v1559
  %v1561 = vpop.f32.mrb[0].mxu0
  %1562 = vmatprep.mubr.bf16.mxu0 0
  %1563 = vmatmul.mubr.bf16.gmra.mrb[0].mxu0 %v1230
  %v1564 = vpop.f32.mrb[0].mxu0
  %v1565 = vadd.f32 0.0, %v1564
  %v1566 = vpop.f32.mrb[0].mxu0
  %v1567 = vpop.f32.mrb[0].mxu0
  %v1568 = vadd.f32 0.0, %v1567
  %v1569 = vpop.f32.mrb[0].mxu0
  %1570 = vmatprep.mubr.bf16.mxu0 0
  %1571 = vmatmul.mubr.bf16.gmra.mrb[0].mxu0 %v1231
  %v1572 = vpop.f32.mrb[0].mxu0
  %v1573 = vadd.f32 0.0, %v1572
  %v1574 = vpop.f32.mrb[0].mxu0
  %v1575 = vpop.f32.mrb[0].mxu0
  %v1576 = vadd.f32 0.0, %v1575
  %v1577 = vpop.f32.mrb[0].mxu0
  %1578 = vmatprep.mubr.bf16.mxu0 0
  %1579 = vmatmul.mubr.bf16.gmra.mrb[0].mxu0 %v1232
  %v1580 = vpop.f32.mrb[0].mxu0
  %v1581 = vadd.f32 0.0, %v1580
  %v1582 = vpop.f32.mrb[0].mxu0
  %v1583 = vpop.f32.mrb[0].mxu0
  %v1584 = vadd.f32 0.0, %v1583
  %v1585 = vpop.f32.mrb[0].mxu0
  %1586 = vdwg.mxu0
  %v1587 = vadd.f32 %v883, %v1333
  %v1588 = vadd.f32 %v886, %v1336
  %v1589 = vadd.f32 %v891, %v1341
  %v1590 = vadd.f32 %v894, %v1344
  %v1591 = vadd.f32 %v899, %v1349
  %v1592 = vadd.f32 %v902, %v1352
  %v1593 = vadd.f32 %v907, %v1357
  %v1594 = vadd.f32 %v910, %v1360
  %v1595 = vadd.f32 %v915, %v1365
  %v1596 = vadd.f32 %v918, %v1368
  %v1597 = vadd.f32 %v923, %v1373
  %v1598 = vadd.f32 %v926, %v1376
  %v1599 = vadd.f32 %v931, %v1381
  %v1600 = vadd.f32 %v934, %v1384
  %v1601 = vadd.f32 %v939, %v1389
  %v1602 = vadd.f32 %v942, %v1392
  %v1603 = vadd.f32 %v947, %v1397
  %v1604 = vadd.f32 %v950, %v1400
  %v1605 = vadd.f32 %v955, %v1405
  %v1606 = vadd.f32 %v958, %v1408
  %v1607 = vadd.f32 %v963, %v1413
  %v1608 = vadd.f32 %v966, %v1416
  %v1609 = vadd.f32 %v971, %v1421
  %v1610 = vadd.f32 %v974, %v1424
  %v1611 = vadd.f32 %v979, %v1429
  %v1612 = vadd.f32 %v982, %v1432
  %v1613 = vadd.f32 %v987, %v1437
  %v1614 = vadd.f32 %v990, %v1440
  %v1615 = vadd.f32 %v995, %v1445
  %v1616 = vadd.f32 %v998, %v1448
  %v1617 = vadd.f32 %v1003, %v1453
  %v1618 = vadd.f32 %v1006, %v1456
  %v1619 = vadd.f32 %v1011, %v1461
  %v1620 = vadd.f32 %v1014, %v1464
  %v1621 = vadd.f32 %v1019, %v1469
  %v1622 = vadd.f32 %v1022, %v1472
  %v1623 = vadd.f32 %v1027, %v1477
  %v1624 = vadd.f32 %v1030, %v1480
  %v1625 = vadd.f32 %v1035, %v1485
  %v1626 = vadd.f32 %v1038, %v1488
  %v1627 = vadd.f32 %v1043, %v1493
  %v1628 = vadd.f32 %v1046, %v1496
  %v1629 = vadd.f32 %v1051, %v1501
  %v1630 = vadd.f32 %v1054, %v1504
  %v1631 = vadd.f32 %v1059, %v1509
  %v1632 = vadd.f32 %v1062, %v1512
  %v1633 = vadd.f32 %v1067, %v1517
  %v1634 = vadd.f32 %v1070, %v1520
  %v1635 = vadd.f32 %v1075, %v1525
  %v1636 = vadd.f32 %v1078, %v1528
  %v1637 = vadd.f32 %v1083, %v1533
  %v1638 = vadd.f32 %v1086, %v1536
  %v1639 = vadd.f32 %v1091, %v1541
  %v1640 = vadd.f32 %v1094, %v1544
  %v1641 = vadd.f32 %v1099, %v1549
  %v1642 = vadd.f32 %v1102, %v1552
  %v1643 = vadd.f32 %v1107, %v1557
  %v1644 = vadd.f32 %v1110, %v1560
  %v1645 = vadd.f32 %v1115, %v1565
  %v1646 = vadd.f32 %v1118, %v1568
  %v1647 = vadd.f32 %v1123, %v1573
  %v1648 = vadd.f32 %v1126, %v1576
  %v1649 = vadd.f32 %v1131, %v1581
  %v1650 = vadd.f32 %v1134, %v1584
  %v1651 = vld [vmem:[%s173] sm:$0xff]
  %v1652 = vld [vmem:[%s173 + $0x8] sm:$0xff]
  %v1653 = vld [vmem:[%s173 + $0x18] sm:$0xff]
  %v1654 = vld [vmem:[%s173 + $0x20] sm:$0xff]
  %v1655 = vld [vmem:[%s173 + $0x30] sm:$0xff]
  %v1656 = vld [vmem:[%s173 + $0x38] sm:$0xff]
  %v1657 = vld [vmem:[%s173 + $0x48] sm:$0xff]
  %v1658 = vld [vmem:[%s173 + $0x50] sm:$0xff]
  %v1659 = vld [vmem:[%s173 + $0x60] sm:$0xff]
  %v1660 = vld [vmem:[%s173 + $0x68] sm:$0xff]
  %v1661 = vld [vmem:[%s173 + $0x78] sm:$0xff]
  %v1662 = vld [vmem:[%s173 + $0x80] sm:$0xff]
  %v1663 = vld [vmem:[%s173 + $0x90] sm:$0xff]
  %v1664 = vld [vmem:[%s173 + $0x98] sm:$0xff]
  %v1665 = vld [vmem:[%s173 + $0xa8] sm:$0xff]
  %v1666 = vld [vmem:[%s173 + $0xb0] sm:$0xff]
  %v1667 = vld [vmem:[%s173 + $0xc0] sm:$0xff]
  %v1668 = vld [vmem:[%s173 + $0xc8] sm:$0xff]
  %v1669 = vld [vmem:[%s173 + $0xd8] sm:$0xff]
  %v1670 = vld [vmem:[%s173 + $0xe0] sm:$0xff]
  %v1671 = vld [vmem:[%s173 + $0xf0] sm:$0xff]
  %v1672 = vld [vmem:[%s173 + $0xf8] sm:$0xff]
  %v1673 = vld [vmem:[%s173 + $0x108] sm:$0xff]
  %v1674 = vld [vmem:[%s173 + $0x110] sm:$0xff]
  %v1675 = vld [vmem:[%s173 + $0x120] sm:$0xff]
  %v1676 = vld [vmem:[%s173 + $0x128] sm:$0xff]
  %v1677 = vld [vmem:[%s173 + $0x138] sm:$0xff]
  %v1678 = vld [vmem:[%s173 + $0x140] sm:$0xff]
  %v1679 = vld [vmem:[%s173 + $0x150] sm:$0xff]
  %v1680 = vld [vmem:[%s173 + $0x158] sm:$0xff]
  %v1681 = vld [vmem:[%s173 + $0x168] sm:$0xff]
  %v1682 = vld [vmem:[%s173 + $0x170] sm:$0xff]
  %v1683 = vld [vmem:[%s173 + $0x1b0] sm:$0xff]
  %v1684 = vld [vmem:[%s173 + $0x1b8] sm:$0xff]
  %v1685 = vld [vmem:[%s173 + $0x1c8] sm:$0xff]
  %v1686 = vld [vmem:[%s173 + $0x1d0] sm:$0xff]
  %v1687 = vld [vmem:[%s173 + $0x1e0] sm:$0xff]
  %v1688 = vld [vmem:[%s173 + $0x1e8] sm:$0xff]
  %v1689 = vld [vmem:[%s173 + $0x1f8] sm:$0xff]
  %v1690 = vld [vmem:[%s173 + $0x200] sm:$0xff]
  %v1691 = vld [vmem:[%s173 + $0x210] sm:$0xff]
  %v1692 = vld [vmem:[%s173 + $0x218] sm:$0xff]
  %v1693 = vld [vmem:[%s173 + $0x228] sm:$0xff]
  %v1694 = vld [vmem:[%s173 + $0x230] sm:$0xff]
  %v1695 = vld [vmem:[%s173 + $0x240] sm:$0xff]
  %v1696 = vld [vmem:[%s173 + $0x248] sm:$0xff]
  %v1697 = vld [vmem:[%s173 + $0x258] sm:$0xff]
  %v1698 = vld [vmem:[%s173 + $0x260] sm:$0xff]
  %v1699 = vld [vmem:[%s173 + $0x270] sm:$0xff]
  %v1700 = vld [vmem:[%s173 + $0x278] sm:$0xff]
  %v1701 = vld [vmem:[%s173 + $0x288] sm:$0xff]
  %v1702 = vld [vmem:[%s173 + $0x290] sm:$0xff]
  %v1703 = vld [vmem:[%s173 + $0x2a0] sm:$0xff]
  %v1704 = vld [vmem:[%s173 + $0x2a8] sm:$0xff]
  %v1705 = vld [vmem:[%s173 + $0x2b8] sm:$0xff]
  %v1706 = vld [vmem:[%s173 + $0x2c0] sm:$0xff]
  %v1707 = vld [vmem:[%s173 + $0x2d0] sm:$0xff]
  %v1708 = vld [vmem:[%s173 + $0x2d8] sm:$0xff]
  %v1709 = vld [vmem:[%s173 + $0x2e8] sm:$0xff]
  %v1710 = vld [vmem:[%s173 + $0x2f0] sm:$0xff]
  %v1711 = vld [vmem:[%s173 + $0x300] sm:$0xff]
  %v1712 = vld [vmem:[%s173 + $0x308] sm:$0xff]
  %v1713 = vld [vmem:[%s173 + $0x318] sm:$0xff]
  %v1714 = vld [vmem:[%s173 + $0x320] sm:$0xff]
  %v1715 = vpack.c.bf16 %v1652, %v1651
  %v1716 = vpack.c.bf16 %v1654, %v1653
  %v1717 = vpack.c.bf16 %v1656, %v1655
  %v1718 = vpack.c.bf16 %v1658, %v1657
  %v1719 = vpack.c.bf16 %v1660, %v1659
  %v1720 = vpack.c.bf16 %v1662, %v1661
  %v1721 = vpack.c.bf16 %v1664, %v1663
  %v1722 = vpack.c.bf16 %v1666, %v1665
  %v1723 = vpack.c.bf16 %v1668, %v1667
  %v1724 = vpack.c.bf16 %v1670, %v1669
  %v1725 = vpack.c.bf16 %v1672, %v1671
  %v1726 = vpack.c.bf16 %v1674, %v1673
  %v1727 = vpack.c.bf16 %v1676, %v1675
  %v1728 = vpack.c.bf16 %v1678, %v1677
  %v1729 = vpack.c.bf16 %v1680, %v1679
  %v1730 = vpack.c.bf16 %v1682, %v1681
  %v1731 = vpack.c.bf16 %v1684, %v1683
  %v1732 = vpack.c.bf16 %v1686, %v1685
  %v1733 = vpack.c.bf16 %v1688, %v1687
  %v1734 = vpack.c.bf16 %v1690, %v1689
  %v1735 = vpack.c.bf16 %v1692, %v1691
  %v1736 = vpack.c.bf16 %v1694, %v1693
  %v1737 = vpack.c.bf16 %v1696, %v1695
  %v1738 = vpack.c.bf16 %v1698, %v1697
  %v1739 = vpack.c.bf16 %v1700, %v1699
  %v1740 = vpack.c.bf16 %v1702, %v1701
  %v1741 = vpack.c.bf16 %v1704, %v1703
  %v1742 = vpack.c.bf16 %v1706, %v1705
  %v1743 = vpack.c.bf16 %v1708, %v1707
  %v1744 = vpack.c.bf16 %v1710, %v1709
  %v1745 = vpack.c.bf16 %v1712, %v1711
  %v1746 = vpack.c.bf16 %v1714, %v1713
  %s1747 = scalar_lea.vmem %s1, 192
  %v1748 = vld [vmem:[%s1747] sm:$0xf]
  %v1749 = vld [vmem:[%s1747 + $0x4] sm:$0xf]
  %v1750 = vld [vmem:[%s1747 + $0x8] sm:$0xf]
  %v1751 = vld [vmem:[%s1747 + $0xc] sm:$0xf]
  %v1752 = vld [vmem:[%s1747 + $0x10] sm:$0xf]
  %v1753 = vld [vmem:[%s1747 + $0x14] sm:$0xf]
  %v1754 = vld [vmem:[%s1747 + $0x18] sm:$0xf]
  %v1755 = vld [vmem:[%s1747 + $0x1c] sm:$0xf]
  %v1756 = vld [vmem:[%s1747 + $0x20] sm:$0xf]
  %v1757 = vld [vmem:[%s1747 + $0x24] sm:$0xf]
  %v1758 = vld [vmem:[%s1747 + $0x28] sm:$0xf]
  %v1759 = vld [vmem:[%s1747 + $0x2c] sm:$0xf]
  %v1760 = vld [vmem:[%s1747 + $0x30] sm:$0xf]
  %v1761 = vld [vmem:[%s1747 + $0x34] sm:$0xf]
  %v1762 = vld [vmem:[%s1747 + $0x38] sm:$0xf]
  %v1763 = vld [vmem:[%s1747 + $0x3c] sm:$0xf]
  %v1780 = vunpack.c.l.b16 %v1748
  %v1781 = vunpack.c.l.b16 %v1749
  %v1782 = vunpack.c.l.b16 %v1750
  %v1783 = vunpack.c.l.b16 %v1751
  %v1784 = vunpack.c.l.b16 %v1752
  %v1785 = vunpack.c.l.b16 %v1753
  %v1786 = vunpack.c.l.b16 %v1754
  %v1787 = vunpack.c.l.b16 %v1755
  %v1788 = vunpack.c.l.b16 %v1756
  %v1789 = vunpack.c.l.b16 %v1757
  %v1790 = vunpack.c.l.b16 %v1758
  %v1791 = vunpack.c.l.b16 %v1759
  %v1792 = vunpack.c.l.b16 %v1760
  %v1793 = vunpack.c.l.b16 %v1761
  %v1794 = vunpack.c.l.b16 %v1762
  %v1795 = vunpack.c.l.b16 %v1763
  %v1796 = vpack.c.b16 %v1781, %v1780
  %v1797 = vpack.c.b16 %v1783, %v1782
  %v1798 = vpack.c.b16 %v1785, %v1784
  %v1799 = vpack.c.b16 %v1787, %v1786
  %v1800 = vpack.c.b16 %v1789, %v1788
  %v1801 = vpack.c.b16 %v1791, %v1790
  %v1802 = vpack.c.b16 %v1793, %v1792
  %v1803 = vpack.c.b16 %v1795, %v1794
  %1812 = vmatprep.subr.bf16.mxu0 0
  %1813 = vmatpush1.bf16.msra.mxu0 %v1796
  %1814 = vmatprep.subr.bf16.mxu0 0
  %1815 = vmatpush1.bf16.msra.mxu0 %v1797
  %1816 = vmatprep.subr.bf16.mxu0 0
  %1817 = vmatpush1.bf16.msra.mxu0 %v1798
  %1818 = vmatprep.subr.bf16.mxu0 0
  %1819 = vmatpush1.bf16.msra.mxu0 %v1799
  %1820 = vmatprep.subr.bf16.mxu0 0
  %1821 = vmatpush1.bf16.msra.mxu0 %v1800
  %1822 = vmatprep.subr.bf16.mxu0 0
  %1823 = vmatpush1.bf16.msra.mxu0 %v1801
  %1824 = vmatprep.subr.bf16.mxu0 0
  %1825 = vmatpush1.bf16.msra.mxu0 %v1802
  %1826 = vmatprep.subr.bf16.mxu0 0
  %1827 = vmatpush1.bf16.msra.mxu0 %v1803
  %1828 = vmatprep.subr.bf16.mxu0 0
  %1829 = vmatpush1.bf16.msra.mxu0 0
  %1830 = vmatprep.subr.bf16.mxu0 0
  %1831 = vmatpush1.bf16.msra.mxu0 0
  %1832 = vmatprep.subr.bf16.mxu0 0
  %1833 = vmatpush1.bf16.msra.mxu0 0
  %1834 = vmatprep.subr.bf16.mxu0 0
  %1835 = vmatpush1.bf16.msra.mxu0 0
  %1836 = vmatprep.subr.bf16.mxu0 0
  %1837 = vmatpush1.bf16.msra.mxu0 0
  %1838 = vmatprep.subr.bf16.mxu0 0
  %1839 = vmatpush1.bf16.msra.mxu0 0
  %1840 = vmatprep.subr.bf16.mxu0 0
  %1841 = vmatpush1.bf16.msra.mxu0 0
  %1842 = vmatprep.subr.bf16.mxu0 0
  %1843 = vmatpush1.bf16.msra.mxu0 0
  %1844 = vmatprep.mubr.bf16.mxu0 0
  %1845 = vmatmul.mubr.bf16.gmra.mrb[0].mxu0 %v1715
  %v1846 = vpop.f32.mrb[0].mxu0
  %v1847 = vadd.f32 0.0, %v1846
  %v1848 = vpop.f32.mrb[0].mxu0
  %v1849 = vpop.f32.mrb[0].mxu0
  %v1850 = vadd.f32 0.0, %v1849
  %v1851 = vpop.f32.mrb[0].mxu0
  %1852 = vmatprep.mubr.bf16.mxu0 0
  %1853 = vmatmul.mubr.bf16.gmra.mrb[0].mxu0 %v1716
  %v1854 = vpop.f32.mrb[0].mxu0
  %v1855 = vadd.f32 0.0, %v1854
  %v1856 = vpop.f32.mrb[0].mxu0
  %v1857 = vpop.f32.mrb[0].mxu0
  %v1858 = vadd.f32 0.0, %v1857
  %v1859 = vpop.f32.mrb[0].mxu0
  %1860 = vmatprep.mubr.bf16.mxu0 0
  %1861 = vmatmul.mubr.bf16.gmra.mrb[0].mxu0 %v1717
  %v1862 = vpop.f32.mrb[0].mxu0
  %v1863 = vadd.f32 0.0, %v1862
  %v1864 = vpop.f32.mrb[0].mxu0
  %v1865 = vpop.f32.mrb[0].mxu0
  %v1866 = vadd.f32 0.0, %v1865
  %v1867 = vpop.f32.mrb[0].mxu0
  %1868 = vmatprep.mubr.bf16.mxu0 0
  %1869 = vmatmul.mubr.bf16.gmra.mrb[0].mxu0 %v1718
  %v1870 = vpop.f32.mrb[0].mxu0
  %v1871 = vadd.f32 0.0, %v1870
  %v1872 = vpop.f32.mrb[0].mxu0
  %v1873 = vpop.f32.mrb[0].mxu0
  %v1874 = vadd.f32 0.0, %v1873
  %v1875 = vpop.f32.mrb[0].mxu0
  %1876 = vmatprep.mubr.bf16.mxu0 0
  %1877 = vmatmul.mubr.bf16.gmra.mrb[0].mxu0 %v1719
  %v1878 = vpop.f32.mrb[0].mxu0
  %v1879 = vadd.f32 0.0, %v1878
  %v1880 = vpop.f32.mrb[0].mxu0
  %v1881 = vpop.f32.mrb[0].mxu0
  %v1882 = vadd.f32 0.0, %v1881
  %v1883 = vpop.f32.mrb[0].mxu0
  %1884 = vmatprep.mubr.bf16.mxu0 0
  %1885 = vmatmul.mubr.bf16.gmra.mrb[0].mxu0 %v1720
  %v1886 = vpop.f32.mrb[0].mxu0
  %v1887 = vadd.f32 0.0, %v1886
  %v1888 = vpop.f32.mrb[0].mxu0
  %v1889 = vpop.f32.mrb[0].mxu0
  %v1890 = vadd.f32 0.0, %v1889
  %v1891 = vpop.f32.mrb[0].mxu0
  %1892 = vmatprep.mubr.bf16.mxu0 0
  %1893 = vmatmul.mubr.bf16.gmra.mrb[0].mxu0 %v1721
  %v1894 = vpop.f32.mrb[0].mxu0
  %v1895 = vadd.f32 0.0, %v1894
  %v1896 = vpop.f32.mrb[0].mxu0
  %v1897 = vpop.f32.mrb[0].mxu0
  %v1898 = vadd.f32 0.0, %v1897
  %v1899 = vpop.f32.mrb[0].mxu0
  %1900 = vmatprep.mubr.bf16.mxu0 0
  %1901 = vmatmul.mubr.bf16.gmra.mrb[0].mxu0 %v1722
  %v1902 = vpop.f32.mrb[0].mxu0
  %v1903 = vadd.f32 0.0, %v1902
  %v1904 = vpop.f32.mrb[0].mxu0
  %v1905 = vpop.f32.mrb[0].mxu0
  %v1906 = vadd.f32 0.0, %v1905
  %v1907 = vpop.f32.mrb[0].mxu0
  %1908 = vmatprep.mubr.bf16.mxu0 0
  %1909 = vmatmul.mubr.bf16.gmra.mrb[0].mxu0 %v1723
  %v1910 = vpop.f32.mrb[0].mxu0
  %v1911 = vadd.f32 0.0, %v1910
  %v1912 = vpop.f32.mrb[0].mxu0
  %v1913 = vpop.f32.mrb[0].mxu0
  %v1914 = vadd.f32 0.0, %v1913
  %v1915 = vpop.f32.mrb[0].mxu0
  %1916 = vmatprep.mubr.bf16.mxu0 0
  %1917 = vmatmul.mubr.bf16.gmra.mrb[0].mxu0 %v1724
  %v1918 = vpop.f32.mrb[0].mxu0
  %v1919 = vadd.f32 0.0, %v1918
  %v1920 = vpop.f32.mrb[0].mxu0
  %v1921 = vpop.f32.mrb[0].mxu0
  %v1922 = vadd.f32 0.0, %v1921
  %v1923 = vpop.f32.mrb[0].mxu0
  %1924 = vmatprep.mubr.bf16.mxu0 0
  %1925 = vmatmul.mubr.bf16.gmra.mrb[0].mxu0 %v1725
  %v1926 = vpop.f32.mrb[0].mxu0
  %v1927 = vadd.f32 0.0, %v1926
  %v1928 = vpop.f32.mrb[0].mxu0
  %v1929 = vpop.f32.mrb[0].mxu0
  %v1930 = vadd.f32 0.0, %v1929
  %v1931 = vpop.f32.mrb[0].mxu0
  %1932 = vmatprep.mubr.bf16.mxu0 0
  %1933 = vmatmul.mubr.bf16.gmra.mrb[0].mxu0 %v1726
  %v1934 = vpop.f32.mrb[0].mxu0
  %v1935 = vadd.f32 0.0, %v1934
  %v1936 = vpop.f32.mrb[0].mxu0
  %v1937 = vpop.f32.mrb[0].mxu0
  %v1938 = vadd.f32 0.0, %v1937
  %v1939 = vpop.f32.mrb[0].mxu0
  %1940 = vmatprep.mubr.bf16.mxu0 0
  %1941 = vmatmul.mubr.bf16.gmra.mrb[0].mxu0 %v1727
  %v1942 = vpop.f32.mrb[0].mxu0
  %v1943 = vadd.f32 0.0, %v1942
  %v1944 = vpop.f32.mrb[0].mxu0
  %v1945 = vpop.f32.mrb[0].mxu0
  %v1946 = vadd.f32 0.0, %v1945
  %v1947 = vpop.f32.mrb[0].mxu0
  %1948 = vmatprep.mubr.bf16.mxu0 0
  %1949 = vmatmul.mubr.bf16.gmra.mrb[0].mxu0 %v1728
  %v1950 = vpop.f32.mrb[0].mxu0
  %v1951 = vadd.f32 0.0, %v1950
  %v1952 = vpop.f32.mrb[0].mxu0
  %v1953 = vpop.f32.mrb[0].mxu0
  %v1954 = vadd.f32 0.0, %v1953
  %v1955 = vpop.f32.mrb[0].mxu0
  %1956 = vmatprep.mubr.bf16.mxu0 0
  %1957 = vmatmul.mubr.bf16.gmra.mrb[0].mxu0 %v1729
  %v1958 = vpop.f32.mrb[0].mxu0
  %v1959 = vadd.f32 0.0, %v1958
  %v1960 = vpop.f32.mrb[0].mxu0
  %v1961 = vpop.f32.mrb[0].mxu0
  %v1962 = vadd.f32 0.0, %v1961
  %v1963 = vpop.f32.mrb[0].mxu0
  %1964 = vmatprep.mubr.bf16.mxu0 0
  %1965 = vmatmul.mubr.bf16.gmra.mrb[0].mxu0 %v1730
  %v1966 = vpop.f32.mrb[0].mxu0
  %v1967 = vadd.f32 0.0, %v1966
  %v1968 = vpop.f32.mrb[0].mxu0
  %v1969 = vpop.f32.mrb[0].mxu0
  %v1970 = vadd.f32 0.0, %v1969
  %v1971 = vpop.f32.mrb[0].mxu0
  %1972 = vmatprep.mubr.bf16.mxu0 0
  %1973 = vmatmul.mubr.bf16.gmra.mrb[0].mxu0 %v1731
  %v1974 = vpop.f32.mrb[0].mxu0
  %v1975 = vadd.f32 0.0, %v1974
  %v1976 = vpop.f32.mrb[0].mxu0
  %v1977 = vpop.f32.mrb[0].mxu0
  %v1978 = vadd.f32 0.0, %v1977
  %v1979 = vpop.f32.mrb[0].mxu0
  %1980 = vmatprep.mubr.bf16.mxu0 0
  %1981 = vmatmul.mubr.bf16.gmra.mrb[0].mxu0 %v1732
  %v1982 = vpop.f32.mrb[0].mxu0
  %v1983 = vadd.f32 0.0, %v1982
  %v1984 = vpop.f32.mrb[0].mxu0
  %v1985 = vpop.f32.mrb[0].mxu0
  %v1986 = vadd.f32 0.0, %v1985
  %v1987 = vpop.f32.mrb[0].mxu0
  %1988 = vmatprep.mubr.bf16.mxu0 0
  %1989 = vmatmul.mubr.bf16.gmra.mrb[0].mxu0 %v1733
  %v1990 = vpop.f32.mrb[0].mxu0
  %v1991 = vadd.f32 0.0, %v1990
  %v1992 = vpop.f32.mrb[0].mxu0
  %v1993 = vpop.f32.mrb[0].mxu0
  %v1994 = vadd.f32 0.0, %v1993
  %v1995 = vpop.f32.mrb[0].mxu0
  %1996 = vmatprep.mubr.bf16.mxu0 0
  %1997 = vmatmul.mubr.bf16.gmra.mrb[0].mxu0 %v1734
  %v1998 = vpop.f32.mrb[0].mxu0
  %v1999 = vadd.f32 0.0, %v1998
  %v2000 = vpop.f32.mrb[0].mxu0
  %v2001 = vpop.f32.mrb[0].mxu0
  %v2002 = vadd.f32 0.0, %v2001
  %v2003 = vpop.f32.mrb[0].mxu0
  %2004 = vmatprep.mubr.bf16.mxu0 0
  %2005 = vmatmul.mubr.bf16.gmra.mrb[0].mxu0 %v1735
  %v2006 = vpop.f32.mrb[0].mxu0
  %v2007 = vadd.f32 0.0, %v2006
  %v2008 = vpop.f32.mrb[0].mxu0
  %v2009 = vpop.f32.mrb[0].mxu0
  %v2010 = vadd.f32 0.0, %v2009
  %v2011 = vpop.f32.mrb[0].mxu0
  %2012 = vmatprep.mubr.bf16.mxu0 0
  %2013 = vmatmul.mubr.bf16.gmra.mrb[0].mxu0 %v1736
  %v2014 = vpop.f32.mrb[0].mxu0
  %v2015 = vadd.f32 0.0, %v2014
  %v2016 = vpop.f32.mrb[0].mxu0
  %v2017 = vpop.f32.mrb[0].mxu0
  %v2018 = vadd.f32 0.0, %v2017
  %v2019 = vpop.f32.mrb[0].mxu0
  %2020 = vmatprep.mubr.bf16.mxu0 0
  %2021 = vmatmul.mubr.bf16.gmra.mrb[0].mxu0 %v1737
  %v2022 = vpop.f32.mrb[0].mxu0
  %v2023 = vadd.f32 0.0, %v2022
  %v2024 = vpop.f32.mrb[0].mxu0
  %v2025 = vpop.f32.mrb[0].mxu0
  %v2026 = vadd.f32 0.0, %v2025
  %v2027 = vpop.f32.mrb[0].mxu0
  %2028 = vmatprep.mubr.bf16.mxu0 0
  %2029 = vmatmul.mubr.bf16.gmra.mrb[0].mxu0 %v1738
  %v2030 = vpop.f32.mrb[0].mxu0
  %v2031 = vadd.f32 0.0, %v2030
  %v2032 = vpop.f32.mrb[0].mxu0
  %v2033 = vpop.f32.mrb[0].mxu0
  %v2034 = vadd.f32 0.0, %v2033
  %v2035 = vpop.f32.mrb[0].mxu0
  %2036 = vmatprep.mubr.bf16.mxu0 0
  %2037 = vmatmul.mubr.bf16.gmra.mrb[0].mxu0 %v1739
  %v2038 = vpop.f32.mrb[0].mxu0
  %v2039 = vadd.f32 0.0, %v2038
  %v2040 = vpop.f32.mrb[0].mxu0
  %v2041 = vpop.f32.mrb[0].mxu0
  %v2042 = vadd.f32 0.0, %v2041
  %v2043 = vpop.f32.mrb[0].mxu0
  %2044 = vmatprep.mubr.bf16.mxu0 0
  %2045 = vmatmul.mubr.bf16.gmra.mrb[0].mxu0 %v1740
  %v2046 = vpop.f32.mrb[0].mxu0
  %v2047 = vadd.f32 0.0, %v2046
  %v2048 = vpop.f32.mrb[0].mxu0
  %v2049 = vpop.f32.mrb[0].mxu0
  %v2050 = vadd.f32 0.0, %v2049
  %v2051 = vpop.f32.mrb[0].mxu0
  %2052 = vmatprep.mubr.bf16.mxu0 0
  %2053 = vmatmul.mubr.bf16.gmra.mrb[0].mxu0 %v1741
  %v2054 = vpop.f32.mrb[0].mxu0
  %v2055 = vadd.f32 0.0, %v2054
  %v2056 = vpop.f32.mrb[0].mxu0
  %v2057 = vpop.f32.mrb[0].mxu0
  %v2058 = vadd.f32 0.0, %v2057
  %v2059 = vpop.f32.mrb[0].mxu0
  %2060 = vmatprep.mubr.bf16.mxu0 0
  %2061 = vmatmul.mubr.bf16.gmra.mrb[0].mxu0 %v1742
  %v2062 = vpop.f32.mrb[0].mxu0
  %v2063 = vadd.f32 0.0, %v2062
  %v2064 = vpop.f32.mrb[0].mxu0
  %v2065 = vpop.f32.mrb[0].mxu0
  %v2066 = vadd.f32 0.0, %v2065
  %v2067 = vpop.f32.mrb[0].mxu0
  %2068 = vmatprep.mubr.bf16.mxu0 0
  %2069 = vmatmul.mubr.bf16.gmra.mrb[0].mxu0 %v1743
  %v2070 = vpop.f32.mrb[0].mxu0
  %v2071 = vadd.f32 0.0, %v2070
  %v2072 = vpop.f32.mrb[0].mxu0
  %v2073 = vpop.f32.mrb[0].mxu0
  %v2074 = vadd.f32 0.0, %v2073
  %v2075 = vpop.f32.mrb[0].mxu0
  %2076 = vmatprep.mubr.bf16.mxu0 0
  %2077 = vmatmul.mubr.bf16.gmra.mrb[0].mxu0 %v1744
  %v2078 = vpop.f32.mrb[0].mxu0
  %v2079 = vadd.f32 0.0, %v2078
  %v2080 = vpop.f32.mrb[0].mxu0
  %v2081 = vpop.f32.mrb[0].mxu0
  %v2082 = vadd.f32 0.0, %v2081
  %v2083 = vpop.f32.mrb[0].mxu0
  %2084 = vmatprep.mubr.bf16.mxu0 0
  %2085 = vmatmul.mubr.bf16.gmra.mrb[0].mxu0 %v1745
  %v2086 = vpop.f32.mrb[0].mxu0
  %v2087 = vadd.f32 0.0, %v2086
  %v2088 = vpop.f32.mrb[0].mxu0
  %v2089 = vpop.f32.mrb[0].mxu0
  %v2090 = vadd.f32 0.0, %v2089
  %v2091 = vpop.f32.mrb[0].mxu0
  %2092 = vmatprep.mubr.bf16.mxu0 0
  %2093 = vmatmul.mubr.bf16.gmra.mrb[0].mxu0 %v1746
  %v2094 = vpop.f32.mrb[0].mxu0
  %v2095 = vadd.f32 0.0, %v2094
  %v2096 = vpop.f32.mrb[0].mxu0
  %v2097 = vpop.f32.mrb[0].mxu0
  %v2098 = vadd.f32 0.0, %v2097
  %v2099 = vpop.f32.mrb[0].mxu0
  %2100 = vdwg.mxu0
  %v2101 = vadd.f32 %v1587, %v1847
  %v2102 = vadd.f32 %v1588, %v1850
  %v2103 = vadd.f32 %v1589, %v1855
  %v2104 = vadd.f32 %v1590, %v1858
  %v2105 = vadd.f32 %v1591, %v1863
  %v2106 = vadd.f32 %v1592, %v1866
  %v2107 = vadd.f32 %v1593, %v1871
  %v2108 = vadd.f32 %v1594, %v1874
  %v2109 = vadd.f32 %v1595, %v1879
  %v2110 = vadd.f32 %v1596, %v1882
  %v2111 = vadd.f32 %v1597, %v1887
  %v2112 = vadd.f32 %v1598, %v1890
  %v2113 = vadd.f32 %v1599, %v1895
  %v2114 = vadd.f32 %v1600, %v1898
  %v2115 = vadd.f32 %v1601, %v1903
  %v2116 = vadd.f32 %v1602, %v1906
  %v2117 = vadd.f32 %v1603, %v1911
  %v2118 = vadd.f32 %v1604, %v1914
  %v2119 = vadd.f32 %v1605, %v1919
  %v2120 = vadd.f32 %v1606, %v1922
  %v2121 = vadd.f32 %v1607, %v1927
  %v2122 = vadd.f32 %v1608, %v1930
  %v2123 = vadd.f32 %v1609, %v1935
  %v2124 = vadd.f32 %v1610, %v1938
  %v2125 = vadd.f32 %v1611, %v1943
  %v2126 = vadd.f32 %v1612, %v1946
  %v2127 = vadd.f32 %v1613, %v1951
  %v2128 = vadd.f32 %v1614, %v1954
  %v2129 = vadd.f32 %v1615, %v1959
  %v2130 = vadd.f32 %v1616, %v1962
  %v2131 = vadd.f32 %v1617, %v1967
  %v2132 = vadd.f32 %v1618, %v1970
  %v2133 = vadd.f32 %v1619, %v1975
  %v2134 = vadd.f32 %v1620, %v1978
  %v2135 = vadd.f32 %v1621, %v1983
  %v2136 = vadd.f32 %v1622, %v1986
  %v2137 = vadd.f32 %v1623, %v1991
  %v2138 = vadd.f32 %v1624, %v1994
  %v2139 = vadd.f32 %v1625, %v1999
  %v2140 = vadd.f32 %v1626, %v2002
  %v2141 = vadd.f32 %v1627, %v2007
  %v2142 = vadd.f32 %v1628, %v2010
  %v2143 = vadd.f32 %v1629, %v2015
  %v2144 = vadd.f32 %v1630, %v2018
  %v2145 = vadd.f32 %v1631, %v2023
  %v2146 = vadd.f32 %v1632, %v2026
  %v2147 = vadd.f32 %v1633, %v2031
  %v2148 = vadd.f32 %v1634, %v2034
  %v2149 = vadd.f32 %v1635, %v2039
  %v2150 = vadd.f32 %v1636, %v2042
  %v2151 = vadd.f32 %v1637, %v2047
  %v2152 = vadd.f32 %v1638, %v2050
  %v2153 = vadd.f32 %v1639, %v2055
  %v2154 = vadd.f32 %v1640, %v2058
  %v2155 = vadd.f32 %v1641, %v2063
  %v2156 = vadd.f32 %v1642, %v2066
  %v2157 = vadd.f32 %v1643, %v2071
  %v2158 = vadd.f32 %v1644, %v2074
  %v2159 = vadd.f32 %v1645, %v2079
  %v2160 = vadd.f32 %v1646, %v2082
  %v2161 = vadd.f32 %v1647, %v2087
  %v2162 = vadd.f32 %v1648, %v2090
  %v2163 = vadd.f32 %v1649, %v2095
  %v2164 = vadd.f32 %v1650, %v2098
  %v2165 = vld [vmem:[%s173 + $0x1] sm:$0xff]
  %v2166 = vld [vmem:[%s173 + $0x9] sm:$0xff]
  %v2167 = vld [vmem:[%s173 + $0x19] sm:$0xff]
  %v2168 = vld [vmem:[%s173 + $0x21] sm:$0xff]
  %v2169 = vld [vmem:[%s173 + $0x31] sm:$0xff]
  %v2170 = vld [vmem:[%s173 + $0x39] sm:$0xff]
  %v2171 = vld [vmem:[%s173 + $0x49] sm:$0xff]
  %v2172 = vld [vmem:[%s173 + $0x51] sm:$0xff]
  %v2173 = vld [vmem:[%s173 + $0x61] sm:$0xff]
  %v2174 = vld [vmem:[%s173 + $0x69] sm:$0xff]
  %v2175 = vld [vmem:[%s173 + $0x79] sm:$0xff]
  %v2176 = vld [vmem:[%s173 + $0x81] sm:$0xff]
  %v2177 = vld [vmem:[%s173 + $0x91] sm:$0xff]
  %v2178 = vld [vmem:[%s173 + $0x99] sm:$0xff]
  %v2179 = vld [vmem:[%s173 + $0xa9] sm:$0xff]
  %v2180 = vld [vmem:[%s173 + $0xb1] sm:$0xff]
  %v2181 = vld [vmem:[%s173 + $0xc1] sm:$0xff]
  %v2182 = vld [vmem:[%s173 + $0xc9] sm:$0xff]
  %v2183 = vld [vmem:[%s173 + $0xd9] sm:$0xff]
  %v2184 = vld [vmem:[%s173 + $0xe1] sm:$0xff]
  %v2185 = vld [vmem:[%s173 + $0xf1] sm:$0xff]
  %v2186 = vld [vmem:[%s173 + $0xf9] sm:$0xff]
  %v2187 = vld [vmem:[%s173 + $0x109] sm:$0xff]
  %v2188 = vld [vmem:[%s173 + $0x111] sm:$0xff]
  %v2189 = vld [vmem:[%s173 + $0x121] sm:$0xff]
  %v2190 = vld [vmem:[%s173 + $0x129] sm:$0xff]
  %v2191 = vld [vmem:[%s173 + $0x139] sm:$0xff]
  %v2192 = vld [vmem:[%s173 + $0x141] sm:$0xff]
  %v2193 = vld [vmem:[%s173 + $0x151] sm:$0xff]
  %v2194 = vld [vmem:[%s173 + $0x159] sm:$0xff]
  %v2195 = vld [vmem:[%s173 + $0x169] sm:$0xff]
  %v2196 = vld [vmem:[%s173 + $0x171] sm:$0xff]
  %v2197 = vld [vmem:[%s173 + $0x1b1] sm:$0xff]
  %v2198 = vld [vmem:[%s173 + $0x1b9] sm:$0xff]
  %v2199 = vld [vmem:[%s173 + $0x1c9] sm:$0xff]
  %v2200 = vld [vmem:[%s173 + $0x1d1] sm:$0xff]
  %v2201 = vld [vmem:[%s173 + $0x1e1] sm:$0xff]
  %v2202 = vld [vmem:[%s173 + $0x1e9] sm:$0xff]
  %v2203 = vld [vmem:[%s173 + $0x1f9] sm:$0xff]
  %v2204 = vld [vmem:[%s173 + $0x201] sm:$0xff]
  %v2205 = vld [vmem:[%s173 + $0x211] sm:$0xff]
  %v2206 = vld [vmem:[%s173 + $0x219] sm:$0xff]
  %v2207 = vld [vmem:[%s173 + $0x229] sm:$0xff]
  %v2208 = vld [vmem:[%s173 + $0x231] sm:$0xff]
  %v2209 = vld [vmem:[%s173 + $0x241] sm:$0xff]
  %v2210 = vld [vmem:[%s173 + $0x249] sm:$0xff]
  %v2211 = vld [vmem:[%s173 + $0x259] sm:$0xff]
  %v2212 = vld [vmem:[%s173 + $0x261] sm:$0xff]
  %v2213 = vld [vmem:[%s173 + $0x271] sm:$0xff]
  %v2214 = vld [vmem:[%s173 + $0x279] sm:$0xff]
  %v2215 = vld [vmem:[%s173 + $0x289] sm:$0xff]
  %v2216 = vld [vmem:[%s173 + $0x291] sm:$0xff]
  %v2217 = vld [vmem:[%s173 + $0x2a1] sm:$0xff]
  %v2218 = vld [vmem:[%s173 + $0x2a9] sm:$0xff]
  %v2219 = vld [vmem:[%s173 + $0x2b9] sm:$0xff]
  %v2220 = vld [vmem:[%s173 + $0x2c1] sm:$0xff]
  %v2221 = vld [vmem:[%s173 + $0x2d1] sm:$0xff]
  %v2222 = vld [vmem:[%s173 + $0x2d9] sm:$0xff]
  %v2223 = vld [vmem:[%s173 + $0x2e9] sm:$0xff]
  %v2224 = vld [vmem:[%s173 + $0x2f1] sm:$0xff]
  %v2225 = vld [vmem:[%s173 + $0x301] sm:$0xff]
  %v2226 = vld [vmem:[%s173 + $0x309] sm:$0xff]
  %v2227 = vld [vmem:[%s173 + $0x319] sm:$0xff]
  %v2228 = vld [vmem:[%s173 + $0x321] sm:$0xff]
  %v2229 = vpack.c.bf16 %v2166, %v2165
  %v2230 = vpack.c.bf16 %v2168, %v2167
  %v2231 = vpack.c.bf16 %v2170, %v2169
  %v2232 = vpack.c.bf16 %v2172, %v2171
  %v2233 = vpack.c.bf16 %v2174, %v2173
  %v2234 = vpack.c.bf16 %v2176, %v2175
  %v2235 = vpack.c.bf16 %v2178, %v2177
  %v2236 = vpack.c.bf16 %v2180, %v2179
  %v2237 = vpack.c.bf16 %v2182, %v2181
  %v2238 = vpack.c.bf16 %v2184, %v2183
  %v2239 = vpack.c.bf16 %v2186, %v2185
  %v2240 = vpack.c.bf16 %v2188, %v2187
  %v2241 = vpack.c.bf16 %v2190, %v2189
  %v2242 = vpack.c.bf16 %v2192, %v2191
  %v2243 = vpack.c.bf16 %v2194, %v2193
  %v2244 = vpack.c.bf16 %v2196, %v2195
  %v2245 = vpack.c.bf16 %v2198, %v2197
  %v2246 = vpack.c.bf16 %v2200, %v2199
  %v2247 = vpack.c.bf16 %v2202, %v2201
  %v2248 = vpack.c.bf16 %v2204, %v2203
  %v2249 = vpack.c.bf16 %v2206, %v2205
  %v2250 = vpack.c.bf16 %v2208, %v2207
  %v2251 = vpack.c.bf16 %v2210, %v2209
  %v2252 = vpack.c.bf16 %v2212, %v2211
  %v2253 = vpack.c.bf16 %v2214, %v2213
  %v2254 = vpack.c.bf16 %v2216, %v2215
  %v2255 = vpack.c.bf16 %v2218, %v2217
  %v2256 = vpack.c.bf16 %v2220, %v2219
  %v2257 = vpack.c.bf16 %v2222, %v2221
  %v2258 = vpack.c.bf16 %v2224, %v2223
  %v2259 = vpack.c.bf16 %v2226, %v2225
  %v2260 = vpack.c.bf16 %v2228, %v2227
  %s2261 = scalar_lea.vmem %s1, 256
  %v2262 = vld [vmem:[%s2261] sm:$0xf]
  %v2263 = vld [vmem:[%s2261 + $0x4] sm:$0xf]
  %v2264 = vld [vmem:[%s2261 + $0x8] sm:$0xf]
  %v2265 = vld [vmem:[%s2261 + $0xc] sm:$0xf]
  %v2266 = vld [vmem:[%s2261 + $0x10] sm:$0xf]
  %v2267 = vld [vmem:[%s2261 + $0x14] sm:$0xf]
  %v2268 = vld [vmem:[%s2261 + $0x18] sm:$0xf]
  %v2269 = vld [vmem:[%s2261 + $0x1c] sm:$0xf]
  %v2270 = vld [vmem:[%s2261 + $0x20] sm:$0xf]
  %v2271 = vld [vmem:[%s2261 + $0x24] sm:$0xf]
  %v2272 = vld [vmem:[%s2261 + $0x28] sm:$0xf]
  %v2273 = vld [vmem:[%s2261 + $0x2c] sm:$0xf]
  %v2274 = vld [vmem:[%s2261 + $0x30] sm:$0xf]
  %v2275 = vld [vmem:[%s2261 + $0x34] sm:$0xf]
  %v2276 = vld [vmem:[%s2261 + $0x38] sm:$0xf]
  %v2277 = vld [vmem:[%s2261 + $0x3c] sm:$0xf]
  %v2294 = vunpack.c.l.b16 %v2262
  %v2295 = vunpack.c.l.b16 %v2263
  %v2296 = vunpack.c.l.b16 %v2264
  %v2297 = vunpack.c.l.b16 %v2265
  %v2298 = vunpack.c.l.b16 %v2266
  %v2299 = vunpack.c.l.b16 %v2267
  %v2300 = vunpack.c.l.b16 %v2268
  %v2301 = vunpack.c.l.b16 %v2269
  %v2302 = vunpack.c.l.b16 %v2270
  %v2303 = vunpack.c.l.b16 %v2271
  %v2304 = vunpack.c.l.b16 %v2272
  %v2305 = vunpack.c.l.b16 %v2273
  %v2306 = vunpack.c.l.b16 %v2274
  %v2307 = vunpack.c.l.b16 %v2275
  %v2308 = vunpack.c.l.b16 %v2276
  %v2309 = vunpack.c.l.b16 %v2277
  %v2310 = vpack.c.b16 %v2295, %v2294
  %v2311 = vpack.c.b16 %v2297, %v2296
  %v2312 = vpack.c.b16 %v2299, %v2298
  %v2313 = vpack.c.b16 %v2301, %v2300
  %v2314 = vpack.c.b16 %v2303, %v2302
  %v2315 = vpack.c.b16 %v2305, %v2304
  %v2316 = vpack.c.b16 %v2307, %v2306
  %v2317 = vpack.c.b16 %v2309, %v2308
  %2326 = vmatprep.subr.bf16.mxu0 0
  %2327 = vmatpush1.bf16.msra.mxu0 %v2310
  %2328 = vmatprep.subr.bf16.mxu0 0
  %2329 = vmatpush1.bf16.msra.mxu0 %v2311
  %2330 = vmatprep.subr.bf16.mxu0 0
  %2331 = vmatpush1.bf16.msra.mxu0 %v2312
  %2332 = vmatprep.subr.bf16.mxu0 0
  %2333 = vmatpush1.bf16.msra.mxu0 %v2313
  %2334 = vmatprep.subr.bf16.mxu0 0
  %2335 = vmatpush1.bf16.msra.mxu0 %v2314
  %2336 = vmatprep.subr.bf16.mxu0 0
  %2337 = vmatpush1.bf16.msra.mxu0 %v2315
  %2338 = vmatprep.subr.bf16.mxu0 0
  %2339 = vmatpush1.bf16.msra.mxu0 %v2316
  %2340 = vmatprep.subr.bf16.mxu0 0
  %2341 = vmatpush1.bf16.msra.mxu0 %v2317
  %2342 = vmatprep.subr.bf16.mxu0 0
  %2343 = vmatpush1.bf16.msra.mxu0 0
  %2344 = vmatprep.subr.bf16.mxu0 0
  %2345 = vmatpush1.bf16.msra.mxu0 0
  %2346 = vmatprep.subr.bf16.mxu0 0
  %2347 = vmatpush1.bf16.msra.mxu0 0
  %2348 = vmatprep.subr.bf16.mxu0 0
  %2349 = vmatpush1.bf16.msra.mxu0 0
  %2350 = vmatprep.subr.bf16.mxu0 0
  %2351 = vmatpush1.bf16.msra.mxu0 0
  %2352 = vmatprep.subr.bf16.mxu0 0
  %2353 = vmatpush1.bf16.msra.mxu0 0
  %2354 = vmatprep.subr.bf16.mxu0 0
  %2355 = vmatpush1.bf16.msra.mxu0 0
  %2356 = vmatprep.subr.bf16.mxu0 0
  %2357 = vmatpush1.bf16.msra.mxu0 0
  %2358 = vmatprep.mubr.bf16.mxu0 0
  %2359 = vmatmul.mubr.bf16.gmra.mrb[0].mxu0 %v2229
  %v2360 = vpop.f32.mrb[0].mxu0
  %v2361 = vadd.f32 0.0, %v2360
  %v2362 = vpop.f32.mrb[0].mxu0
  %v2363 = vpop.f32.mrb[0].mxu0
  %v2364 = vadd.f32 0.0, %v2363
  %v2365 = vpop.f32.mrb[0].mxu0
  %2366 = vmatprep.mubr.bf16.mxu0 0
  %2367 = vmatmul.mubr.bf16.gmra.mrb[0].mxu0 %v2230
  %v2368 = vpop.f32.mrb[0].mxu0
  %v2369 = vadd.f32 0.0, %v2368
  %v2370 = vpop.f32.mrb[0].mxu0
  %v2371 = vpop.f32.mrb[0].mxu0
  %v2372 = vadd.f32 0.0, %v2371
  %v2373 = vpop.f32.mrb[0].mxu0
  %2374 = vmatprep.mubr.bf16.mxu0 0
  %2375 = vmatmul.mubr.bf16.gmra.mrb[0].mxu0 %v2231
  %v2376 = vpop.f32.mrb[0].mxu0
  %v2377 = vadd.f32 0.0, %v2376
  %v2378 = vpop.f32.mrb[0].mxu0
  %v2379 = vpop.f32.mrb[0].mxu0
  %v2380 = vadd.f32 0.0, %v2379
  %v2381 = vpop.f32.mrb[0].mxu0
  %2382 = vmatprep.mubr.bf16.mxu0 0
  %2383 = vmatmul.mubr.bf16.gmra.mrb[0].mxu0 %v2232
  %v2384 = vpop.f32.mrb[0].mxu0
  %v2385 = vadd.f32 0.0, %v2384
  %v2386 = vpop.f32.mrb[0].mxu0
  %v2387 = vpop.f32.mrb[0].mxu0
  %v2388 = vadd.f32 0.0, %v2387
  %v2389 = vpop.f32.mrb[0].mxu0
  %2390 = vmatprep.mubr.bf16.mxu0 0
  %2391 = vmatmul.mubr.bf16.gmra.mrb[0].mxu0 %v2233
  %v2392 = vpop.f32.mrb[0].mxu0
  %v2393 = vadd.f32 0.0, %v2392
  %v2394 = vpop.f32.mrb[0].mxu0
  %v2395 = vpop.f32.mrb[0].mxu0
  %v2396 = vadd.f32 0.0, %v2395
  %v2397 = vpop.f32.mrb[0].mxu0
  %2398 = vmatprep.mubr.bf16.mxu0 0
  %2399 = vmatmul.mubr.bf16.gmra.mrb[0].mxu0 %v2234
  %v2400 = vpop.f32.mrb[0].mxu0
  %v2401 = vadd.f32 0.0, %v2400
  %v2402 = vpop.f32.mrb[0].mxu0
  %v2403 = vpop.f32.mrb[0].mxu0
  %v2404 = vadd.f32 0.0, %v2403
  %v2405 = vpop.f32.mrb[0].mxu0
  %2406 = vmatprep.mubr.bf16.mxu0 0
  %2407 = vmatmul.mubr.bf16.gmra.mrb[0].mxu0 %v2235
  %v2408 = vpop.f32.mrb[0].mxu0
  %v2409 = vadd.f32 0.0, %v2408
  %v2410 = vpop.f32.mrb[0].mxu0
  %v2411 = vpop.f32.mrb[0].mxu0
  %v2412 = vadd.f32 0.0, %v2411
  %v2413 = vpop.f32.mrb[0].mxu0
  %2414 = vmatprep.mubr.bf16.mxu0 0
  %2415 = vmatmul.mubr.bf16.gmra.mrb[0].mxu0 %v2236
  %v2416 = vpop.f32.mrb[0].mxu0
  %v2417 = vadd.f32 0.0, %v2416
  %v2418 = vpop.f32.mrb[0].mxu0
  %v2419 = vpop.f32.mrb[0].mxu0
  %v2420 = vadd.f32 0.0, %v2419
  %v2421 = vpop.f32.mrb[0].mxu0
  %2422 = vmatprep.mubr.bf16.mxu0 0
  %2423 = vmatmul.mubr.bf16.gmra.mrb[0].mxu0 %v2237
  %v2424 = vpop.f32.mrb[0].mxu0
  %v2425 = vadd.f32 0.0, %v2424
  %v2426 = vpop.f32.mrb[0].mxu0
  %v2427 = vpop.f32.mrb[0].mxu0
  %v2428 = vadd.f32 0.0, %v2427
  %v2429 = vpop.f32.mrb[0].mxu0
  %2430 = vmatprep.mubr.bf16.mxu0 0
  %2431 = vmatmul.mubr.bf16.gmra.mrb[0].mxu0 %v2238
  %v2432 = vpop.f32.mrb[0].mxu0
  %v2433 = vadd.f32 0.0, %v2432
  %v2434 = vpop.f32.mrb[0].mxu0
  %v2435 = vpop.f32.mrb[0].mxu0
  %v2436 = vadd.f32 0.0, %v2435
  %v2437 = vpop.f32.mrb[0].mxu0
  %2438 = vmatprep.mubr.bf16.mxu0 0
  %2439 = vmatmul.mubr.bf16.gmra.mrb[0].mxu0 %v2239
  %v2440 = vpop.f32.mrb[0].mxu0
  %v2441 = vadd.f32 0.0, %v2440
  %v2442 = vpop.f32.mrb[0].mxu0
  %v2443 = vpop.f32.mrb[0].mxu0
  %v2444 = vadd.f32 0.0, %v2443
  %v2445 = vpop.f32.mrb[0].mxu0
  %2446 = vmatprep.mubr.bf16.mxu0 0
  %2447 = vmatmul.mubr.bf16.gmra.mrb[0].mxu0 %v2240
  %v2448 = vpop.f32.mrb[0].mxu0
  %v2449 = vadd.f32 0.0, %v2448
  %v2450 = vpop.f32.mrb[0].mxu0
  %v2451 = vpop.f32.mrb[0].mxu0
  %v2452 = vadd.f32 0.0, %v2451
  %v2453 = vpop.f32.mrb[0].mxu0
  %2454 = vmatprep.mubr.bf16.mxu0 0
  %2455 = vmatmul.mubr.bf16.gmra.mrb[0].mxu0 %v2241
  %v2456 = vpop.f32.mrb[0].mxu0
  %v2457 = vadd.f32 0.0, %v2456
  %v2458 = vpop.f32.mrb[0].mxu0
  %v2459 = vpop.f32.mrb[0].mxu0
  %v2460 = vadd.f32 0.0, %v2459
  %v2461 = vpop.f32.mrb[0].mxu0
  %2462 = vmatprep.mubr.bf16.mxu0 0
  %2463 = vmatmul.mubr.bf16.gmra.mrb[0].mxu0 %v2242
  %v2464 = vpop.f32.mrb[0].mxu0
  %v2465 = vadd.f32 0.0, %v2464
  %v2466 = vpop.f32.mrb[0].mxu0
  %v2467 = vpop.f32.mrb[0].mxu0
  %v2468 = vadd.f32 0.0, %v2467
  %v2469 = vpop.f32.mrb[0].mxu0
  %2470 = vmatprep.mubr.bf16.mxu0 0
  %2471 = vmatmul.mubr.bf16.gmra.mrb[0].mxu0 %v2243
  %v2472 = vpop.f32.mrb[0].mxu0
  %v2473 = vadd.f32 0.0, %v2472
  %v2474 = vpop.f32.mrb[0].mxu0
  %v2475 = vpop.f32.mrb[0].mxu0
  %v2476 = vadd.f32 0.0, %v2475
  %v2477 = vpop.f32.mrb[0].mxu0
  %2478 = vmatprep.mubr.bf16.mxu0 0
  %2479 = vmatmul.mubr.bf16.gmra.mrb[0].mxu0 %v2244
  %v2480 = vpop.f32.mrb[0].mxu0
  %v2481 = vadd.f32 0.0, %v2480
  %v2482 = vpop.f32.mrb[0].mxu0
  %v2483 = vpop.f32.mrb[0].mxu0
  %v2484 = vadd.f32 0.0, %v2483
  %v2485 = vpop.f32.mrb[0].mxu0
  %2486 = vmatprep.mubr.bf16.mxu0 0
  %2487 = vmatmul.mubr.bf16.gmra.mrb[0].mxu0 %v2245
  %v2488 = vpop.f32.mrb[0].mxu0
  %v2489 = vadd.f32 0.0, %v2488
  %v2490 = vpop.f32.mrb[0].mxu0
  %v2491 = vpop.f32.mrb[0].mxu0
  %v2492 = vadd.f32 0.0, %v2491
  %v2493 = vpop.f32.mrb[0].mxu0
  %2494 = vmatprep.mubr.bf16.mxu0 0
  %2495 = vmatmul.mubr.bf16.gmra.mrb[0].mxu0 %v2246
  %v2496 = vpop.f32.mrb[0].mxu0
  %v2497 = vadd.f32 0.0, %v2496
  %v2498 = vpop.f32.mrb[0].mxu0
  %v2499 = vpop.f32.mrb[0].mxu0
  %v2500 = vadd.f32 0.0, %v2499
  %v2501 = vpop.f32.mrb[0].mxu0
  %2502 = vmatprep.mubr.bf16.mxu0 0
  %2503 = vmatmul.mubr.bf16.gmra.mrb[0].mxu0 %v2247
  %v2504 = vpop.f32.mrb[0].mxu0
  %v2505 = vadd.f32 0.0, %v2504
  %v2506 = vpop.f32.mrb[0].mxu0
  %v2507 = vpop.f32.mrb[0].mxu0
  %v2508 = vadd.f32 0.0, %v2507
  %v2509 = vpop.f32.mrb[0].mxu0
  %2510 = vmatprep.mubr.bf16.mxu0 0
  %2511 = vmatmul.mubr.bf16.gmra.mrb[0].mxu0 %v2248
  %v2512 = vpop.f32.mrb[0].mxu0
  %v2513 = vadd.f32 0.0, %v2512
  %v2514 = vpop.f32.mrb[0].mxu0
  %v2515 = vpop.f32.mrb[0].mxu0
  %v2516 = vadd.f32 0.0, %v2515
  %v2517 = vpop.f32.mrb[0].mxu0
  %2518 = vmatprep.mubr.bf16.mxu0 0
  %2519 = vmatmul.mubr.bf16.gmra.mrb[0].mxu0 %v2249
  %v2520 = vpop.f32.mrb[0].mxu0
  %v2521 = vadd.f32 0.0, %v2520
  %v2522 = vpop.f32.mrb[0].mxu0
  %v2523 = vpop.f32.mrb[0].mxu0
  %v2524 = vadd.f32 0.0, %v2523
  %v2525 = vpop.f32.mrb[0].mxu0
  %2526 = vmatprep.mubr.bf16.mxu0 0
  %2527 = vmatmul.mubr.bf16.gmra.mrb[0].mxu0 %v2250
  %v2528 = vpop.f32.mrb[0].mxu0
  %v2529 = vadd.f32 0.0, %v2528
  %v2530 = vpop.f32.mrb[0].mxu0
  %v2531 = vpop.f32.mrb[0].mxu0
  %v2532 = vadd.f32 0.0, %v2531
  %v2533 = vpop.f32.mrb[0].mxu0
  %2534 = vmatprep.mubr.bf16.mxu0 0
  %2535 = vmatmul.mubr.bf16.gmra.mrb[0].mxu0 %v2251
  %v2536 = vpop.f32.mrb[0].mxu0
  %v2537 = vadd.f32 0.0, %v2536
  %v2538 = vpop.f32.mrb[0].mxu0
  %v2539 = vpop.f32.mrb[0].mxu0
  %v2540 = vadd.f32 0.0, %v2539
  %v2541 = vpop.f32.mrb[0].mxu0
  %2542 = vmatprep.mubr.bf16.mxu0 0
  %2543 = vmatmul.mubr.bf16.gmra.mrb[0].mxu0 %v2252
  %v2544 = vpop.f32.mrb[0].mxu0
  %v2545 = vadd.f32 0.0, %v2544
  %v2546 = vpop.f32.mrb[0].mxu0
  %v2547 = vpop.f32.mrb[0].mxu0
  %v2548 = vadd.f32 0.0, %v2547
  %v2549 = vpop.f32.mrb[0].mxu0
  %2550 = vmatprep.mubr.bf16.mxu0 0
  %2551 = vmatmul.mubr.bf16.gmra.mrb[0].mxu0 %v2253
  %v2552 = vpop.f32.mrb[0].mxu0
  %v2553 = vadd.f32 0.0, %v2552
  %v2554 = vpop.f32.mrb[0].mxu0
  %v2555 = vpop.f32.mrb[0].mxu0
  %v2556 = vadd.f32 0.0, %v2555
  %v2557 = vpop.f32.mrb[0].mxu0
  %2558 = vmatprep.mubr.bf16.mxu0 0
  %2559 = vmatmul.mubr.bf16.gmra.mrb[0].mxu0 %v2254
  %v2560 = vpop.f32.mrb[0].mxu0
  %v2561 = vadd.f32 0.0, %v2560
  %v2562 = vpop.f32.mrb[0].mxu0
  %v2563 = vpop.f32.mrb[0].mxu0
  %v2564 = vadd.f32 0.0, %v2563
  %v2565 = vpop.f32.mrb[0].mxu0
  %2566 = vmatprep.mubr.bf16.mxu0 0
  %2567 = vmatmul.mubr.bf16.gmra.mrb[0].mxu0 %v2255
  %v2568 = vpop.f32.mrb[0].mxu0
  %v2569 = vadd.f32 0.0, %v2568
  %v2570 = vpop.f32.mrb[0].mxu0
  %v2571 = vpop.f32.mrb[0].mxu0
  %v2572 = vadd.f32 0.0, %v2571
  %v2573 = vpop.f32.mrb[0].mxu0
  %2574 = vmatprep.mubr.bf16.mxu0 0
  %2575 = vmatmul.mubr.bf16.gmra.mrb[0].mxu0 %v2256
  %v2576 = vpop.f32.mrb[0].mxu0
  %v2577 = vadd.f32 0.0, %v2576
  %v2578 = vpop.f32.mrb[0].mxu0
  %v2579 = vpop.f32.mrb[0].mxu0
  %v2580 = vadd.f32 0.0, %v2579
  %v2581 = vpop.f32.mrb[0].mxu0
  %2582 = vmatprep.mubr.bf16.mxu0 0
  %2583 = vmatmul.mubr.bf16.gmra.mrb[0].mxu0 %v2257
  %v2584 = vpop.f32.mrb[0].mxu0
  %v2585 = vadd.f32 0.0, %v2584
  %v2586 = vpop.f32.mrb[0].mxu0
  %v2587 = vpop.f32.mrb[0].mxu0
  %v2588 = vadd.f32 0.0, %v2587
  %v2589 = vpop.f32.mrb[0].mxu0
  %2590 = vmatprep.mubr.bf16.mxu0 0
  %2591 = vmatmul.mubr.bf16.gmra.mrb[0].mxu0 %v2258
  %v2592 = vpop.f32.mrb[0].mxu0
  %v2593 = vadd.f32 0.0, %v2592
  %v2594 = vpop.f32.mrb[0].mxu0
  %v2595 = vpop.f32.mrb[0].mxu0
  %v2596 = vadd.f32 0.0, %v2595
  %v2597 = vpop.f32.mrb[0].mxu0
  %2598 = vmatprep.mubr.bf16.mxu0 0
  %2599 = vmatmul.mubr.bf16.gmra.mrb[0].mxu0 %v2259
  %v2600 = vpop.f32.mrb[0].mxu0
  %v2601 = vadd.f32 0.0, %v2600
  %v2602 = vpop.f32.mrb[0].mxu0
  %v2603 = vpop.f32.mrb[0].mxu0
  %v2604 = vadd.f32 0.0, %v2603
  %v2605 = vpop.f32.mrb[0].mxu0
  %2606 = vmatprep.mubr.bf16.mxu0 0
  %2607 = vmatmul.mubr.bf16.gmra.mrb[0].mxu0 %v2260
  %v2608 = vpop.f32.mrb[0].mxu0
  %v2609 = vadd.f32 0.0, %v2608
  %v2610 = vpop.f32.mrb[0].mxu0
  %v2611 = vpop.f32.mrb[0].mxu0
  %v2612 = vadd.f32 0.0, %v2611
  %v2613 = vpop.f32.mrb[0].mxu0
  %2614 = vdwg.mxu0
  %v2615 = vadd.f32 %v2101, %v2361
  %v2616 = vadd.f32 %v2102, %v2364
  %v2617 = vadd.f32 %v2103, %v2369
  %v2618 = vadd.f32 %v2104, %v2372
  %v2619 = vadd.f32 %v2105, %v2377
  %v2620 = vadd.f32 %v2106, %v2380
  %v2621 = vadd.f32 %v2107, %v2385
  %v2622 = vadd.f32 %v2108, %v2388
  %v2623 = vadd.f32 %v2109, %v2393
  %v2624 = vadd.f32 %v2110, %v2396
  %v2625 = vadd.f32 %v2111, %v2401
  %v2626 = vadd.f32 %v2112, %v2404
  %v2627 = vadd.f32 %v2113, %v2409
  %v2628 = vadd.f32 %v2114, %v2412
  %v2629 = vadd.f32 %v2115, %v2417
  %v2630 = vadd.f32 %v2116, %v2420
  %v2631 = vadd.f32 %v2117, %v2425
  %v2632 = vadd.f32 %v2118, %v2428
  %v2633 = vadd.f32 %v2119, %v2433
  %v2634 = vadd.f32 %v2120, %v2436
  %v2635 = vadd.f32 %v2121, %v2441
  %v2636 = vadd.f32 %v2122, %v2444
  %v2637 = vadd.f32 %v2123, %v2449
  %v2638 = vadd.f32 %v2124, %v2452
  %v2639 = vadd.f32 %v2125, %v2457
  %v2640 = vadd.f32 %v2126, %v2460
  %v2641 = vadd.f32 %v2127, %v2465
  %v2642 = vadd.f32 %v2128, %v2468
  %v2643 = vadd.f32 %v2129, %v2473
  %v2644 = vadd.f32 %v2130, %v2476
  %v2645 = vadd.f32 %v2131, %v2481
  %v2646 = vadd.f32 %v2132, %v2484
  %v2647 = vadd.f32 %v2133, %v2489
  %v2648 = vadd.f32 %v2134, %v2492
  %v2649 = vadd.f32 %v2135, %v2497
  %v2650 = vadd.f32 %v2136, %v2500
  %v2651 = vadd.f32 %v2137, %v2505
  %v2652 = vadd.f32 %v2138, %v2508
  %v2653 = vadd.f32 %v2139, %v2513
  %v2654 = vadd.f32 %v2140, %v2516
  %v2655 = vadd.f32 %v2141, %v2521
  %v2656 = vadd.f32 %v2142, %v2524
  %v2657 = vadd.f32 %v2143, %v2529
  %v2658 = vadd.f32 %v2144, %v2532
  %v2659 = vadd.f32 %v2145, %v2537
  %v2660 = vadd.f32 %v2146, %v2540
  %v2661 = vadd.f32 %v2147, %v2545
  %v2662 = vadd.f32 %v2148, %v2548
  %v2663 = vadd.f32 %v2149, %v2553
  %v2664 = vadd.f32 %v2150, %v2556
  %v2665 = vadd.f32 %v2151, %v2561
  %v2666 = vadd.f32 %v2152, %v2564
  %v2667 = vadd.f32 %v2153, %v2569
  %v2668 = vadd.f32 %v2154, %v2572
  %v2669 = vadd.f32 %v2155, %v2577
  %v2670 = vadd.f32 %v2156, %v2580
  %v2671 = vadd.f32 %v2157, %v2585
  %v2672 = vadd.f32 %v2158, %v2588
  %v2673 = vadd.f32 %v2159, %v2593
  %v2674 = vadd.f32 %v2160, %v2596
  %v2675 = vadd.f32 %v2161, %v2601
  %v2676 = vadd.f32 %v2162, %v2604
  %v2677 = vadd.f32 %v2163, %v2609
  %v2678 = vadd.f32 %v2164, %v2612
  %v2679 = vld [vmem:[%s173 + $0x2] sm:$0xff]
  %v2680 = vld [vmem:[%s173 + $0xa] sm:$0xff]
  %v2681 = vld [vmem:[%s173 + $0x1a] sm:$0xff]
  %v2682 = vld [vmem:[%s173 + $0x22] sm:$0xff]
  %v2683 = vld [vmem:[%s173 + $0x32] sm:$0xff]
  %v2684 = vld [vmem:[%s173 + $0x3a] sm:$0xff]
  %v2685 = vld [vmem:[%s173 + $0x4a] sm:$0xff]
  %v2686 = vld [vmem:[%s173 + $0x52] sm:$0xff]
  %v2687 = vld [vmem:[%s173 + $0x62] sm:$0xff]
  %v2688 = vld [vmem:[%s173 + $0x6a] sm:$0xff]
  %v2689 = vld [vmem:[%s173 + $0x7a] sm:$0xff]
  %v2690 = vld [vmem:[%s173 + $0x82] sm:$0xff]
  %v2691 = vld [vmem:[%s173 + $0x92] sm:$0xff]
  %v2692 = vld [vmem:[%s173 + $0x9a] sm:$0xff]
  %v2693 = vld [vmem:[%s173 + $0xaa] sm:$0xff]
  %v2694 = vld [vmem:[%s173 + $0xb2] sm:$0xff]
  %v2695 = vld [vmem:[%s173 + $0xc2] sm:$0xff]
  %v2696 = vld [vmem:[%s173 + $0xca] sm:$0xff]
  %v2697 = vld [vmem:[%s173 + $0xda] sm:$0xff]
  %v2698 = vld [vmem:[%s173 + $0xe2] sm:$0xff]
  %v2699 = vld [vmem:[%s173 + $0xf2] sm:$0xff]
  %v2700 = vld [vmem:[%s173 + $0xfa] sm:$0xff]
  %v2701 = vld [vmem:[%s173 + $0x10a] sm:$0xff]
  %v2702 = vld [vmem:[%s173 + $0x112] sm:$0xff]
  %v2703 = vld [vmem:[%s173 + $0x122] sm:$0xff]
  %v2704 = vld [vmem:[%s173 + $0x12a] sm:$0xff]
  %v2705 = vld [vmem:[%s173 + $0x13a] sm:$0xff]
  %v2706 = vld [vmem:[%s173 + $0x142] sm:$0xff]
  %v2707 = vld [vmem:[%s173 + $0x152] sm:$0xff]
  %v2708 = vld [vmem:[%s173 + $0x15a] sm:$0xff]
  %v2709 = vld [vmem:[%s173 + $0x16a] sm:$0xff]
  %v2710 = vld [vmem:[%s173 + $0x172] sm:$0xff]
  %v2711 = vld [vmem:[%s173 + $0x1b2] sm:$0xff]
  %v2712 = vld [vmem:[%s173 + $0x1ba] sm:$0xff]
  %v2713 = vld [vmem:[%s173 + $0x1ca] sm:$0xff]
  %v2714 = vld [vmem:[%s173 + $0x1d2] sm:$0xff]
  %v2715 = vld [vmem:[%s173 + $0x1e2] sm:$0xff]
  %v2716 = vld [vmem:[%s173 + $0x1ea] sm:$0xff]
  %v2717 = vld [vmem:[%s173 + $0x1fa] sm:$0xff]
  %v2718 = vld [vmem:[%s173 + $0x202] sm:$0xff]
  %v2719 = vld [vmem:[%s173 + $0x212] sm:$0xff]
  %v2720 = vld [vmem:[%s173 + $0x21a] sm:$0xff]
  %v2721 = vld [vmem:[%s173 + $0x22a] sm:$0xff]
  %v2722 = vld [vmem:[%s173 + $0x232] sm:$0xff]
  %v2723 = vld [vmem:[%s173 + $0x242] sm:$0xff]
  %v2724 = vld [vmem:[%s173 + $0x24a] sm:$0xff]
  %v2725 = vld [vmem:[%s173 + $0x25a] sm:$0xff]
  %v2726 = vld [vmem:[%s173 + $0x262] sm:$0xff]
  %v2727 = vld [vmem:[%s173 + $0x272] sm:$0xff]
  %v2728 = vld [vmem:[%s173 + $0x27a] sm:$0xff]
  %v2729 = vld [vmem:[%s173 + $0x28a] sm:$0xff]
  %v2730 = vld [vmem:[%s173 + $0x292] sm:$0xff]
  %v2731 = vld [vmem:[%s173 + $0x2a2] sm:$0xff]
  %v2732 = vld [vmem:[%s173 + $0x2aa] sm:$0xff]
  %v2733 = vld [vmem:[%s173 + $0x2ba] sm:$0xff]
  %v2734 = vld [vmem:[%s173 + $0x2c2] sm:$0xff]
  %v2735 = vld [vmem:[%s173 + $0x2d2] sm:$0xff]
  %v2736 = vld [vmem:[%s173 + $0x2da] sm:$0xff]
  %v2737 = vld [vmem:[%s173 + $0x2ea] sm:$0xff]
  %v2738 = vld [vmem:[%s173 + $0x2f2] sm:$0xff]
  %v2739 = vld [vmem:[%s173 + $0x302] sm:$0xff]
  %v2740 = vld [vmem:[%s173 + $0x30a] sm:$0xff]
  %v2741 = vld [vmem:[%s173 + $0x31a] sm:$0xff]
  %v2742 = vld [vmem:[%s173 + $0x322] sm:$0xff]
  %v2743 = vpack.c.bf16 %v2680, %v2679
  %v2744 = vpack.c.bf16 %v2682, %v2681
  %v2745 = vpack.c.bf16 %v2684, %v2683
  %v2746 = vpack.c.bf16 %v2686, %v2685
  %v2747 = vpack.c.bf16 %v2688, %v2687
  %v2748 = vpack.c.bf16 %v2690, %v2689
  %v2749 = vpack.c.bf16 %v2692, %v2691
  %v2750 = vpack.c.bf16 %v2694, %v2693
  %v2751 = vpack.c.bf16 %v2696, %v2695
  %v2752 = vpack.c.bf16 %v2698, %v2697
  %v2753 = vpack.c.bf16 %v2700, %v2699
  %v2754 = vpack.c.bf16 %v2702, %v2701
  %v2755 = vpack.c.bf16 %v2704, %v2703
  %v2756 = vpack.c.bf16 %v2706, %v2705
  %v2757 = vpack.c.bf16 %v2708, %v2707
  %v2758 = vpack.c.bf16 %v2710, %v2709
  %v2759 = vpack.c.bf16 %v2712, %v2711
  %v2760 = vpack.c.bf16 %v2714, %v2713
  %v2761 = vpack.c.bf16 %v2716, %v2715
  %v2762 = vpack.c.bf16 %v2718, %v2717
  %v2763 = vpack.c.bf16 %v2720, %v2719
  %v2764 = vpack.c.bf16 %v2722, %v2721
  %v2765 = vpack.c.bf16 %v2724, %v2723
  %v2766 = vpack.c.bf16 %v2726, %v2725
  %v2767 = vpack.c.bf16 %v2728, %v2727
  %v2768 = vpack.c.bf16 %v2730, %v2729
  %v2769 = vpack.c.bf16 %v2732, %v2731
  %v2770 = vpack.c.bf16 %v2734, %v2733
  %v2771 = vpack.c.bf16 %v2736, %v2735
  %v2772 = vpack.c.bf16 %v2738, %v2737
  %v2773 = vpack.c.bf16 %v2740, %v2739
  %v2774 = vpack.c.bf16 %v2742, %v2741
  %s2775 = scalar_lea.vmem %s1, 320
  %v2776 = vld [vmem:[%s2775] sm:$0xf]
  %v2777 = vld [vmem:[%s2775 + $0x4] sm:$0xf]
  %v2778 = vld [vmem:[%s2775 + $0x8] sm:$0xf]
  %v2779 = vld [vmem:[%s2775 + $0xc] sm:$0xf]
  %v2780 = vld [vmem:[%s2775 + $0x10] sm:$0xf]
  %v2781 = vld [vmem:[%s2775 + $0x14] sm:$0xf]
  %v2782 = vld [vmem:[%s2775 + $0x18] sm:$0xf]
  %v2783 = vld [vmem:[%s2775 + $0x1c] sm:$0xf]
  %v2784 = vld [vmem:[%s2775 + $0x20] sm:$0xf]
  %v2785 = vld [vmem:[%s2775 + $0x24] sm:$0xf]
  %v2786 = vld [vmem:[%s2775 + $0x28] sm:$0xf]
  %v2787 = vld [vmem:[%s2775 + $0x2c] sm:$0xf]
  %v2788 = vld [vmem:[%s2775 + $0x30] sm:$0xf]
  %v2789 = vld [vmem:[%s2775 + $0x34] sm:$0xf]
  %v2790 = vld [vmem:[%s2775 + $0x38] sm:$0xf]
  %v2791 = vld [vmem:[%s2775 + $0x3c] sm:$0xf]
  %v2808 = vunpack.c.l.b16 %v2776
  %v2809 = vunpack.c.l.b16 %v2777
  %v2810 = vunpack.c.l.b16 %v2778
  %v2811 = vunpack.c.l.b16 %v2779
  %v2812 = vunpack.c.l.b16 %v2780
  %v2813 = vunpack.c.l.b16 %v2781
  %v2814 = vunpack.c.l.b16 %v2782
  %v2815 = vunpack.c.l.b16 %v2783
  %v2816 = vunpack.c.l.b16 %v2784
  %v2817 = vunpack.c.l.b16 %v2785
  %v2818 = vunpack.c.l.b16 %v2786
  %v2819 = vunpack.c.l.b16 %v2787
  %v2820 = vunpack.c.l.b16 %v2788
  %v2821 = vunpack.c.l.b16 %v2789
  %v2822 = vunpack.c.l.b16 %v2790
  %v2823 = vunpack.c.l.b16 %v2791
  %v2824 = vpack.c.b16 %v2809, %v2808
  %v2825 = vpack.c.b16 %v2811, %v2810
  %v2826 = vpack.c.b16 %v2813, %v2812
  %v2827 = vpack.c.b16 %v2815, %v2814
  %v2828 = vpack.c.b16 %v2817, %v2816
  %v2829 = vpack.c.b16 %v2819, %v2818
  %v2830 = vpack.c.b16 %v2821, %v2820
  %v2831 = vpack.c.b16 %v2823, %v2822
  %2840 = vmatprep.subr.bf16.mxu0 0
  %2841 = vmatpush1.bf16.msra.mxu0 %v2824
  %2842 = vmatprep.subr.bf16.mxu0 0
  %2843 = vmatpush1.bf16.msra.mxu0 %v2825
  %2844 = vmatprep.subr.bf16.mxu0 0
  %2845 = vmatpush1.bf16.msra.mxu0 %v2826
  %2846 = vmatprep.subr.bf16.mxu0 0
  %2847 = vmatpush1.bf16.msra.mxu0 %v2827
  %2848 = vmatprep.subr.bf16.mxu0 0
  %2849 = vmatpush1.bf16.msra.mxu0 %v2828
  %2850 = vmatprep.subr.bf16.mxu0 0
  %2851 = vmatpush1.bf16.msra.mxu0 %v2829
  %2852 = vmatprep.subr.bf16.mxu0 0
  %2853 = vmatpush1.bf16.msra.mxu0 %v2830
  %2854 = vmatprep.subr.bf16.mxu0 0
  %2855 = vmatpush1.bf16.msra.mxu0 %v2831
  %2856 = vmatprep.subr.bf16.mxu0 0
  %2857 = vmatpush1.bf16.msra.mxu0 0
  %2858 = vmatprep.subr.bf16.mxu0 0
  %2859 = vmatpush1.bf16.msra.mxu0 0
  %2860 = vmatprep.subr.bf16.mxu0 0
  %2861 = vmatpush1.bf16.msra.mxu0 0
  %2862 = vmatprep.subr.bf16.mxu0 0
  %2863 = vmatpush1.bf16.msra.mxu0 0
  %2864 = vmatprep.subr.bf16.mxu0 0
  %2865 = vmatpush1.bf16.msra.mxu0 0
  %2866 = vmatprep.subr.bf16.mxu0 0
  %2867 = vmatpush1.bf16.msra.mxu0 0
  %2868 = vmatprep.subr.bf16.mxu0 0
  %2869 = vmatpush1.bf16.msra.mxu0 0
  %2870 = vmatprep.subr.bf16.mxu0 0
  %2871 = vmatpush1.bf16.msra.mxu0 0
  %2872 = vmatprep.mubr.bf16.mxu0 0
  %2873 = vmatmul.mubr.bf16.gmra.mrb[0].mxu0 %v2743
  %v2874 = vpop.f32.mrb[0].mxu0
  %v2875 = vadd.f32 0.0, %v2874
  %v2876 = vpop.f32.mrb[0].mxu0
  %v2877 = vpop.f32.mrb[0].mxu0
  %v2878 = vadd.f32 0.0, %v2877
  %v2879 = vpop.f32.mrb[0].mxu0
  %2880 = vmatprep.mubr.bf16.mxu0 0
  %2881 = vmatmul.mubr.bf16.gmra.mrb[0].mxu0 %v2744
  %v2882 = vpop.f32.mrb[0].mxu0
  %v2883 = vadd.f32 0.0, %v2882
  %v2884 = vpop.f32.mrb[0].mxu0
  %v2885 = vpop.f32.mrb[0].mxu0
  %v2886 = vadd.f32 0.0, %v2885
  %v2887 = vpop.f32.mrb[0].mxu0
  %2888 = vmatprep.mubr.bf16.mxu0 0
  %2889 = vmatmul.mubr.bf16.gmra.mrb[0].mxu0 %v2745
  %v2890 = vpop.f32.mrb[0].mxu0
  %v2891 = vadd.f32 0.0, %v2890
  %v2892 = vpop.f32.mrb[0].mxu0
  %v2893 = vpop.f32.mrb[0].mxu0
  %v2894 = vadd.f32 0.0, %v2893
  %v2895 = vpop.f32.mrb[0].mxu0
  %2896 = vmatprep.mubr.bf16.mxu0 0
  %2897 = vmatmul.mubr.bf16.gmra.mrb[0].mxu0 %v2746
  %v2898 = vpop.f32.mrb[0].mxu0
  %v2899 = vadd.f32 0.0, %v2898
  %v2900 = vpop.f32.mrb[0].mxu0
  %v2901 = vpop.f32.mrb[0].mxu0
  %v2902 = vadd.f32 0.0, %v2901
  %v2903 = vpop.f32.mrb[0].mxu0
  %2904 = vmatprep.mubr.bf16.mxu0 0
  %2905 = vmatmul.mubr.bf16.gmra.mrb[0].mxu0 %v2747
  %v2906 = vpop.f32.mrb[0].mxu0
  %v2907 = vadd.f32 0.0, %v2906
  %v2908 = vpop.f32.mrb[0].mxu0
  %v2909 = vpop.f32.mrb[0].mxu0
  %v2910 = vadd.f32 0.0, %v2909
  %v2911 = vpop.f32.mrb[0].mxu0
  %2912 = vmatprep.mubr.bf16.mxu0 0
  %2913 = vmatmul.mubr.bf16.gmra.mrb[0].mxu0 %v2748
  %v2914 = vpop.f32.mrb[0].mxu0
  %v2915 = vadd.f32 0.0, %v2914
  %v2916 = vpop.f32.mrb[0].mxu0
  %v2917 = vpop.f32.mrb[0].mxu0
  %v2918 = vadd.f32 0.0, %v2917
  %v2919 = vpop.f32.mrb[0].mxu0
  %2920 = vmatprep.mubr.bf16.mxu0 0
  %2921 = vmatmul.mubr.bf16.gmra.mrb[0].mxu0 %v2749
  %v2922 = vpop.f32.mrb[0].mxu0
  %v2923 = vadd.f32 0.0, %v2922
  %v2924 = vpop.f32.mrb[0].mxu0
  %v2925 = vpop.f32.mrb[0].mxu0
  %v2926 = vadd.f32 0.0, %v2925
  %v2927 = vpop.f32.mrb[0].mxu0
  %2928 = vmatprep.mubr.bf16.mxu0 0
  %2929 = vmatmul.mubr.bf16.gmra.mrb[0].mxu0 %v2750
  %v2930 = vpop.f32.mrb[0].mxu0
  %v2931 = vadd.f32 0.0, %v2930
  %v2932 = vpop.f32.mrb[0].mxu0
  %v2933 = vpop.f32.mrb[0].mxu0
  %v2934 = vadd.f32 0.0, %v2933
  %v2935 = vpop.f32.mrb[0].mxu0
  %2936 = vmatprep.mubr.bf16.mxu0 0
  %2937 = vmatmul.mubr.bf16.gmra.mrb[0].mxu0 %v2751
  %v2938 = vpop.f32.mrb[0].mxu0
  %v2939 = vadd.f32 0.0, %v2938
  %v2940 = vpop.f32.mrb[0].mxu0
  %v2941 = vpop.f32.mrb[0].mxu0
  %v2942 = vadd.f32 0.0, %v2941
  %v2943 = vpop.f32.mrb[0].mxu0
  %2944 = vmatprep.mubr.bf16.mxu0 0
  %2945 = vmatmul.mubr.bf16.gmra.mrb[0].mxu0 %v2752
  %v2946 = vpop.f32.mrb[0].mxu0
  %v2947 = vadd.f32 0.0, %v2946
  %v2948 = vpop.f32.mrb[0].mxu0
  %v2949 = vpop.f32.mrb[0].mxu0
  %v2950 = vadd.f32 0.0, %v2949
  %v2951 = vpop.f32.mrb[0].mxu0
  %2952 = vmatprep.mubr.bf16.mxu0 0
  %2953 = vmatmul.mubr.bf16.gmra.mrb[0].mxu0 %v2753
  %v2954 = vpop.f32.mrb[0].mxu0
  %v2955 = vadd.f32 0.0, %v2954
  %v2956 = vpop.f32.mrb[0].mxu0
  %v2957 = vpop.f32.mrb[0].mxu0
  %v2958 = vadd.f32 0.0, %v2957
  %v2959 = vpop.f32.mrb[0].mxu0
  %2960 = vmatprep.mubr.bf16.mxu0 0
  %2961 = vmatmul.mubr.bf16.gmra.mrb[0].mxu0 %v2754
  %v2962 = vpop.f32.mrb[0].mxu0
  %v2963 = vadd.f32 0.0, %v2962
  %v2964 = vpop.f32.mrb[0].mxu0
  %v2965 = vpop.f32.mrb[0].mxu0
  %v2966 = vadd.f32 0.0, %v2965
  %v2967 = vpop.f32.mrb[0].mxu0
  %2968 = vmatprep.mubr.bf16.mxu0 0
  %2969 = vmatmul.mubr.bf16.gmra.mrb[0].mxu0 %v2755
  %v2970 = vpop.f32.mrb[0].mxu0
  %v2971 = vadd.f32 0.0, %v2970
  %v2972 = vpop.f32.mrb[0].mxu0
  %v2973 = vpop.f32.mrb[0].mxu0
  %v2974 = vadd.f32 0.0, %v2973
  %v2975 = vpop.f32.mrb[0].mxu0
  %2976 = vmatprep.mubr.bf16.mxu0 0
  %2977 = vmatmul.mubr.bf16.gmra.mrb[0].mxu0 %v2756
  %v2978 = vpop.f32.mrb[0].mxu0
  %v2979 = vadd.f32 0.0, %v2978
  %v2980 = vpop.f32.mrb[0].mxu0
  %v2981 = vpop.f32.mrb[0].mxu0
  %v2982 = vadd.f32 0.0, %v2981
  %v2983 = vpop.f32.mrb[0].mxu0
  %2984 = vmatprep.mubr.bf16.mxu0 0
  %2985 = vmatmul.mubr.bf16.gmra.mrb[0].mxu0 %v2757
  %v2986 = vpop.f32.mrb[0].mxu0
  %v2987 = vadd.f32 0.0, %v2986
  %v2988 = vpop.f32.mrb[0].mxu0
  %v2989 = vpop.f32.mrb[0].mxu0
  %v2990 = vadd.f32 0.0, %v2989
  %v2991 = vpop.f32.mrb[0].mxu0
  %2992 = vmatprep.mubr.bf16.mxu0 0
  %2993 = vmatmul.mubr.bf16.gmra.mrb[0].mxu0 %v2758
  %v2994 = vpop.f32.mrb[0].mxu0
  %v2995 = vadd.f32 0.0, %v2994
  %v2996 = vpop.f32.mrb[0].mxu0
  %v2997 = vpop.f32.mrb[0].mxu0
  %v2998 = vadd.f32 0.0, %v2997
  %v2999 = vpop.f32.mrb[0].mxu0
  %3000 = vmatprep.mubr.bf16.mxu0 0
  %3001 = vmatmul.mubr.bf16.gmra.mrb[0].mxu0 %v2759
  %v3002 = vpop.f32.mrb[0].mxu0
  %v3003 = vadd.f32 0.0, %v3002
  %v3004 = vpop.f32.mrb[0].mxu0
  %v3005 = vpop.f32.mrb[0].mxu0
  %v3006 = vadd.f32 0.0, %v3005
  %v3007 = vpop.f32.mrb[0].mxu0
  %3008 = vmatprep.mubr.bf16.mxu0 0
  %3009 = vmatmul.mubr.bf16.gmra.mrb[0].mxu0 %v2760
  %v3010 = vpop.f32.mrb[0].mxu0
  %v3011 = vadd.f32 0.0, %v3010
  %v3012 = vpop.f32.mrb[0].mxu0
  %v3013 = vpop.f32.mrb[0].mxu0
  %v3014 = vadd.f32 0.0, %v3013
  %v3015 = vpop.f32.mrb[0].mxu0
  %3016 = vmatprep.mubr.bf16.mxu0 0
  %3017 = vmatmul.mubr.bf16.gmra.mrb[0].mxu0 %v2761
  %v3018 = vpop.f32.mrb[0].mxu0
  %v3019 = vadd.f32 0.0, %v3018
  %v3020 = vpop.f32.mrb[0].mxu0
  %v3021 = vpop.f32.mrb[0].mxu0
  %v3022 = vadd.f32 0.0, %v3021
  %v3023 = vpop.f32.mrb[0].mxu0
  %3024 = vmatprep.mubr.bf16.mxu0 0
  %3025 = vmatmul.mubr.bf16.gmra.mrb[0].mxu0 %v2762
  %v3026 = vpop.f32.mrb[0].mxu0
  %v3027 = vadd.f32 0.0, %v3026
  %v3028 = vpop.f32.mrb[0].mxu0
  %v3029 = vpop.f32.mrb[0].mxu0
  %v3030 = vadd.f32 0.0, %v3029
  %v3031 = vpop.f32.mrb[0].mxu0
  %3032 = vmatprep.mubr.bf16.mxu0 0
  %3033 = vmatmul.mubr.bf16.gmra.mrb[0].mxu0 %v2763
  %v3034 = vpop.f32.mrb[0].mxu0
  %v3035 = vadd.f32 0.0, %v3034
  %v3036 = vpop.f32.mrb[0].mxu0
  %v3037 = vpop.f32.mrb[0].mxu0
  %v3038 = vadd.f32 0.0, %v3037
  %v3039 = vpop.f32.mrb[0].mxu0
  %3040 = vmatprep.mubr.bf16.mxu0 0
  %3041 = vmatmul.mubr.bf16.gmra.mrb[0].mxu0 %v2764
  %v3042 = vpop.f32.mrb[0].mxu0
  %v3043 = vadd.f32 0.0, %v3042
  %v3044 = vpop.f32.mrb[0].mxu0
  %v3045 = vpop.f32.mrb[0].mxu0
  %v3046 = vadd.f32 0.0, %v3045
  %v3047 = vpop.f32.mrb[0].mxu0
  %3048 = vmatprep.mubr.bf16.mxu0 0
  %3049 = vmatmul.mubr.bf16.gmra.mrb[0].mxu0 %v2765
  %v3050 = vpop.f32.mrb[0].mxu0
  %v3051 = vadd.f32 0.0, %v3050
  %v3052 = vpop.f32.mrb[0].mxu0
  %v3053 = vpop.f32.mrb[0].mxu0
  %v3054 = vadd.f32 0.0, %v3053
  %v3055 = vpop.f32.mrb[0].mxu0
  %3056 = vmatprep.mubr.bf16.mxu0 0
  %3057 = vmatmul.mubr.bf16.gmra.mrb[0].mxu0 %v2766
  %v3058 = vpop.f32.mrb[0].mxu0
  %v3059 = vadd.f32 0.0, %v3058
  %v3060 = vpop.f32.mrb[0].mxu0
  %v3061 = vpop.f32.mrb[0].mxu0
  %v3062 = vadd.f32 0.0, %v3061
  %v3063 = vpop.f32.mrb[0].mxu0
  %3064 = vmatprep.mubr.bf16.mxu0 0
  %3065 = vmatmul.mubr.bf16.gmra.mrb[0].mxu0 %v2767
  %v3066 = vpop.f32.mrb[0].mxu0
  %v3067 = vadd.f32 0.0, %v3066
  %v3068 = vpop.f32.mrb[0].mxu0
  %v3069 = vpop.f32.mrb[0].mxu0
  %v3070 = vadd.f32 0.0, %v3069
  %v3071 = vpop.f32.mrb[0].mxu0
  %3072 = vmatprep.mubr.bf16.mxu0 0
  %3073 = vmatmul.mubr.bf16.gmra.mrb[0].mxu0 %v2768
  %v3074 = vpop.f32.mrb[0].mxu0
  %v3075 = vadd.f32 0.0, %v3074
  %v3076 = vpop.f32.mrb[0].mxu0
  %v3077 = vpop.f32.mrb[0].mxu0
  %v3078 = vadd.f32 0.0, %v3077
  %v3079 = vpop.f32.mrb[0].mxu0
  %3080 = vmatprep.mubr.bf16.mxu0 0
  %3081 = vmatmul.mubr.bf16.gmra.mrb[0].mxu0 %v2769
  %v3082 = vpop.f32.mrb[0].mxu0
  %v3083 = vadd.f32 0.0, %v3082
  %v3084 = vpop.f32.mrb[0].mxu0
  %v3085 = vpop.f32.mrb[0].mxu0
  %v3086 = vadd.f32 0.0, %v3085
  %v3087 = vpop.f32.mrb[0].mxu0
  %3088 = vmatprep.mubr.bf16.mxu0 0
  %3089 = vmatmul.mubr.bf16.gmra.mrb[0].mxu0 %v2770
  %v3090 = vpop.f32.mrb[0].mxu0
  %v3091 = vadd.f32 0.0, %v3090
  %v3092 = vpop.f32.mrb[0].mxu0
  %v3093 = vpop.f32.mrb[0].mxu0
  %v3094 = vadd.f32 0.0, %v3093
  %v3095 = vpop.f32.mrb[0].mxu0
  %3096 = vmatprep.mubr.bf16.mxu0 0
  %3097 = vmatmul.mubr.bf16.gmra.mrb[0].mxu0 %v2771
  %v3098 = vpop.f32.mrb[0].mxu0
  %v3099 = vadd.f32 0.0, %v3098
  %v3100 = vpop.f32.mrb[0].mxu0
  %v3101 = vpop.f32.mrb[0].mxu0
  %v3102 = vadd.f32 0.0, %v3101
  %v3103 = vpop.f32.mrb[0].mxu0
  %3104 = vmatprep.mubr.bf16.mxu0 0
  %3105 = vmatmul.mubr.bf16.gmra.mrb[0].mxu0 %v2772
  %v3106 = vpop.f32.mrb[0].mxu0
  %v3107 = vadd.f32 0.0, %v3106
  %v3108 = vpop.f32.mrb[0].mxu0
  %v3109 = vpop.f32.mrb[0].mxu0
  %v3110 = vadd.f32 0.0, %v3109
  %v3111 = vpop.f32.mrb[0].mxu0
  %3112 = vmatprep.mubr.bf16.mxu0 0
  %3113 = vmatmul.mubr.bf16.gmra.mrb[0].mxu0 %v2773
  %v3114 = vpop.f32.mrb[0].mxu0
  %v3115 = vadd.f32 0.0, %v3114
  %v3116 = vpop.f32.mrb[0].mxu0
  %v3117 = vpop.f32.mrb[0].mxu0
  %v3118 = vadd.f32 0.0, %v3117
  %v3119 = vpop.f32.mrb[0].mxu0
  %3120 = vmatprep.mubr.bf16.mxu0 0
  %3121 = vmatmul.mubr.bf16.gmra.mrb[0].mxu0 %v2774
  %v3122 = vpop.f32.mrb[0].mxu0
  %v3123 = vadd.f32 0.0, %v3122
  %v3124 = vpop.f32.mrb[0].mxu0
  %v3125 = vpop.f32.mrb[0].mxu0
  %v3126 = vadd.f32 0.0, %v3125
  %v3127 = vpop.f32.mrb[0].mxu0
  %3128 = vdwg.mxu0
  %v3129 = vadd.f32 %v2615, %v2875
  %v3130 = vadd.f32 %v2616, %v2878
  %v3131 = vadd.f32 %v2617, %v2883
  %v3132 = vadd.f32 %v2618, %v2886
  %v3133 = vadd.f32 %v2619, %v2891
  %v3134 = vadd.f32 %v2620, %v2894
  %v3135 = vadd.f32 %v2621, %v2899
  %v3136 = vadd.f32 %v2622, %v2902
  %v3137 = vadd.f32 %v2623, %v2907
  %v3138 = vadd.f32 %v2624, %v2910
  %v3139 = vadd.f32 %v2625, %v2915
  %v3140 = vadd.f32 %v2626, %v2918
  %v3141 = vadd.f32 %v2627, %v2923
  %v3142 = vadd.f32 %v2628, %v2926
  %v3143 = vadd.f32 %v2629, %v2931
  %v3144 = vadd.f32 %v2630, %v2934
  %v3145 = vadd.f32 %v2631, %v2939
  %v3146 = vadd.f32 %v2632, %v2942
  %v3147 = vadd.f32 %v2633, %v2947
  %v3148 = vadd.f32 %v2634, %v2950
  %v3149 = vadd.f32 %v2635, %v2955
  %v3150 = vadd.f32 %v2636, %v2958
  %v3151 = vadd.f32 %v2637, %v2963
  %v3152 = vadd.f32 %v2638, %v2966
  %v3153 = vadd.f32 %v2639, %v2971
  %v3154 = vadd.f32 %v2640, %v2974
  %v3155 = vadd.f32 %v2641, %v2979
  %v3156 = vadd.f32 %v2642, %v2982
  %v3157 = vadd.f32 %v2643, %v2987
  %v3158 = vadd.f32 %v2644, %v2990
  %v3159 = vadd.f32 %v2645, %v2995
  %v3160 = vadd.f32 %v2646, %v2998
  %v3161 = vadd.f32 %v2647, %v3003
  %v3162 = vadd.f32 %v2648, %v3006
  %v3163 = vadd.f32 %v2649, %v3011
  %v3164 = vadd.f32 %v2650, %v3014
  %v3165 = vadd.f32 %v2651, %v3019
  %v3166 = vadd.f32 %v2652, %v3022
  %v3167 = vadd.f32 %v2653, %v3027
  %v3168 = vadd.f32 %v2654, %v3030
  %v3169 = vadd.f32 %v2655, %v3035
  %v3170 = vadd.f32 %v2656, %v3038
  %v3171 = vadd.f32 %v2657, %v3043
  %v3172 = vadd.f32 %v2658, %v3046
  %v3173 = vadd.f32 %v2659, %v3051
  %v3174 = vadd.f32 %v2660, %v3054
  %v3175 = vadd.f32 %v2661, %v3059
  %v3176 = vadd.f32 %v2662, %v3062
  %v3177 = vadd.f32 %v2663, %v3067
  %v3178 = vadd.f32 %v2664, %v3070
  %v3179 = vadd.f32 %v2665, %v3075
  %v3180 = vadd.f32 %v2666, %v3078
  %v3181 = vadd.f32 %v2667, %v3083
  %v3182 = vadd.f32 %v2668, %v3086
  %v3183 = vadd.f32 %v2669, %v3091
  %v3184 = vadd.f32 %v2670, %v3094
  %v3185 = vadd.f32 %v2671, %v3099
  %v3186 = vadd.f32 %v2672, %v3102
  %v3187 = vadd.f32 %v2673, %v3107
  %v3188 = vadd.f32 %v2674, %v3110
  %v3189 = vadd.f32 %v2675, %v3115
  %v3190 = vadd.f32 %v2676, %v3118
  %v3191 = vadd.f32 %v2677, %v3123
  %v3192 = vadd.f32 %v2678, %v3126
  %s3193 = scalar_lea.vmem [#allocation2], 48
  %v3194 = vld [vmem:[%s3193] sm:$0xff]
  %v3195 = vld [vmem:[%s3193 + $0x8] sm:$0xff]
  %v3196 = vld [vmem:[%s3193 + $0x18] sm:$0xff]
  %v3197 = vld [vmem:[%s3193 + $0x20] sm:$0xff]
  %v3198 = vld [vmem:[%s3193 + $0x30] sm:$0xff]
  %v3199 = vld [vmem:[%s3193 + $0x38] sm:$0xff]
  %v3200 = vld [vmem:[%s3193 + $0x48] sm:$0xff]
  %v3201 = vld [vmem:[%s3193 + $0x50] sm:$0xff]
  %v3202 = vld [vmem:[%s3193 + $0x60] sm:$0xff]
  %v3203 = vld [vmem:[%s3193 + $0x68] sm:$0xff]
  %v3204 = vld [vmem:[%s3193 + $0x78] sm:$0xff]
  %v3205 = vld [vmem:[%s3193 + $0x80] sm:$0xff]
  %v3206 = vld [vmem:[%s3193 + $0x90] sm:$0xff]
  %v3207 = vld [vmem:[%s3193 + $0x98] sm:$0xff]
  %v3208 = vld [vmem:[%s3193 + $0xa8] sm:$0xff]
  %v3209 = vld [vmem:[%s3193 + $0xb0] sm:$0xff]
  %v3210 = vld [vmem:[%s3193 + $0xc0] sm:$0xff]
  %v3211 = vld [vmem:[%s3193 + $0xc8] sm:$0xff]
  %v3212 = vld [vmem:[%s3193 + $0xd8] sm:$0xff]
  %v3213 = vld [vmem:[%s3193 + $0xe0] sm:$0xff]
  %v3214 = vld [vmem:[%s3193 + $0xf0] sm:$0xff]
  %v3215 = vld [vmem:[%s3193 + $0xf8] sm:$0xff]
  %v3216 = vld [vmem:[%s3193 + $0x108] sm:$0xff]
  %v3217 = vld [vmem:[%s3193 + $0x110] sm:$0xff]
  %v3218 = vld [vmem:[%s3193 + $0x120] sm:$0xff]
  %v3219 = vld [vmem:[%s3193 + $0x128] sm:$0xff]
  %v3220 = vld [vmem:[%s3193 + $0x138] sm:$0xff]
  %v3221 = vld [vmem:[%s3193 + $0x140] sm:$0xff]
  %v3222 = vld [vmem:[%s3193 + $0x150] sm:$0xff]
  %v3223 = vld [vmem:[%s3193 + $0x158] sm:$0xff]
  %v3224 = vld [vmem:[%s3193 + $0x168] sm:$0xff]
  %v3225 = vld [vmem:[%s3193 + $0x170] sm:$0xff]
  %v3226 = vld [vmem:[%s3193 + $0x1b0] sm:$0xff]
  %v3227 = vld [vmem:[%s3193 + $0x1b8] sm:$0xff]
  %v3228 = vld [vmem:[%s3193 + $0x1c8] sm:$0xff]
  %v3229 = vld [vmem:[%s3193 + $0x1d0] sm:$0xff]
  %v3230 = vld [vmem:[%s3193 + $0x1e0] sm:$0xff]
  %v3231 = vld [vmem:[%s3193 + $0x1e8] sm:$0xff]
  %v3232 = vld [vmem:[%s3193 + $0x1f8] sm:$0xff]
  %v3233 = vld [vmem:[%s3193 + $0x200] sm:$0xff]
  %v3234 = vld [vmem:[%s3193 + $0x210] sm:$0xff]
  %v3235 = vld [vmem:[%s3193 + $0x218] sm:$0xff]
  %v3236 = vld [vmem:[%s3193 + $0x228] sm:$0xff]
  %v3237 = vld [vmem:[%s3193 + $0x230] sm:$0xff]
  %v3238 = vld [vmem:[%s3193 + $0x240] sm:$0xff]
  %v3239 = vld [vmem:[%s3193 + $0x248] sm:$0xff]
  %v3240 = vld [vmem:[%s3193 + $0x258] sm:$0xff]
  %v3241 = vld [vmem:[%s3193 + $0x260] sm:$0xff]
  %v3242 = vld [vmem:[%s3193 + $0x270] sm:$0xff]
  %v3243 = vld [vmem:[%s3193 + $0x278] sm:$0xff]
  %v3244 = vld [vmem:[%s3193 + $0x288] sm:$0xff]
  %v3245 = vld [vmem:[%s3193 + $0x290] sm:$0xff]
  %v3246 = vld [vmem:[%s3193 + $0x2a0] sm:$0xff]
  %v3247 = vld [vmem:[%s3193 + $0x2a8] sm:$0xff]
  %v3248 = vld [vmem:[%s3193 + $0x2b8] sm:$0xff]
  %v3249 = vld [vmem:[%s3193 + $0x2c0] sm:$0xff]
  %v3250 = vld [vmem:[%s3193 + $0x2d0] sm:$0xff]
  %v3251 = vld [vmem:[%s3193 + $0x2d8] sm:$0xff]
  %v3252 = vld [vmem:[%s3193 + $0x2e8] sm:$0xff]
  %v3253 = vld [vmem:[%s3193 + $0x2f0] sm:$0xff]
  %v3254 = vld [vmem:[%s3193 + $0x300] sm:$0xff]
  %v3255 = vld [vmem:[%s3193 + $0x308] sm:$0xff]
  %v3256 = vld [vmem:[%s3193 + $0x318] sm:$0xff]
  %v3257 = vld [vmem:[%s3193 + $0x320] sm:$0xff]
  %v3258 = vpack.c.bf16 %v3195, %v3194
  %v3259 = vpack.c.bf16 %v3197, %v3196
  %v3260 = vpack.c.bf16 %v3199, %v3198
  %v3261 = vpack.c.bf16 %v3201, %v3200
  %v3262 = vpack.c.bf16 %v3203, %v3202
  %v3263 = vpack.c.bf16 %v3205, %v3204
  %v3264 = vpack.c.bf16 %v3207, %v3206
  %v3265 = vpack.c.bf16 %v3209, %v3208
  %v3266 = vpack.c.bf16 %v3211, %v3210
  %v3267 = vpack.c.bf16 %v3213, %v3212
  %v3268 = vpack.c.bf16 %v3215, %v3214
  %v3269 = vpack.c.bf16 %v3217, %v3216
  %v3270 = vpack.c.bf16 %v3219, %v3218
  %v3271 = vpack.c.bf16 %v3221, %v3220
  %v3272 = vpack.c.bf16 %v3223, %v3222
  %v3273 = vpack.c.bf16 %v3225, %v3224
  %v3274 = vpack.c.bf16 %v3227, %v3226
  %v3275 = vpack.c.bf16 %v3229, %v3228
  %v3276 = vpack.c.bf16 %v3231, %v3230
  %v3277 = vpack.c.bf16 %v3233, %v3232
  %v3278 = vpack.c.bf16 %v3235, %v3234
  %v3279 = vpack.c.bf16 %v3237, %v3236
  %v3280 = vpack.c.bf16 %v3239, %v3238
  %v3281 = vpack.c.bf16 %v3241, %v3240
  %v3282 = vpack.c.bf16 %v3243, %v3242
  %v3283 = vpack.c.bf16 %v3245, %v3244
  %v3284 = vpack.c.bf16 %v3247, %v3246
  %v3285 = vpack.c.bf16 %v3249, %v3248
  %v3286 = vpack.c.bf16 %v3251, %v3250
  %v3287 = vpack.c.bf16 %v3253, %v3252
  %v3288 = vpack.c.bf16 %v3255, %v3254
  %v3289 = vpack.c.bf16 %v3257, %v3256
  %s3290 = scalar_lea.vmem %s1, 384
  %v3291 = vld [vmem:[%s3290] sm:$0xf]
  %v3292 = vld [vmem:[%s3290 + $0x4] sm:$0xf]
  %v3293 = vld [vmem:[%s3290 + $0x8] sm:$0xf]
  %v3294 = vld [vmem:[%s3290 + $0xc] sm:$0xf]
  %v3295 = vld [vmem:[%s3290 + $0x10] sm:$0xf]
  %v3296 = vld [vmem:[%s3290 + $0x14] sm:$0xf]
  %v3297 = vld [vmem:[%s3290 + $0x18] sm:$0xf]
  %v3298 = vld [vmem:[%s3290 + $0x1c] sm:$0xf]
  %v3299 = vld [vmem:[%s3290 + $0x20] sm:$0xf]
  %v3300 = vld [vmem:[%s3290 + $0x24] sm:$0xf]
  %v3301 = vld [vmem:[%s3290 + $0x28] sm:$0xf]
  %v3302 = vld [vmem:[%s3290 + $0x2c] sm:$0xf]
  %v3303 = vld [vmem:[%s3290 + $0x30] sm:$0xf]
  %v3304 = vld [vmem:[%s3290 + $0x34] sm:$0xf]
  %v3305 = vld [vmem:[%s3290 + $0x38] sm:$0xf]
  %v3306 = vld [vmem:[%s3290 + $0x3c] sm:$0xf]
  %v3323 = vunpack.c.l.b16 %v3291
  %v3324 = vunpack.c.l.b16 %v3292
  %v3325 = vunpack.c.l.b16 %v3293
  %v3326 = vunpack.c.l.b16 %v3294
  %v3327 = vunpack.c.l.b16 %v3295
  %v3328 = vunpack.c.l.b16 %v3296
  %v3329 = vunpack.c.l.b16 %v3297
  %v3330 = vunpack.c.l.b16 %v3298
  %v3331 = vunpack.c.l.b16 %v3299
  %v3332 = vunpack.c.l.b16 %v3300
  %v3333 = vunpack.c.l.b16 %v3301
  %v3334 = vunpack.c.l.b16 %v3302
  %v3335 = vunpack.c.l.b16 %v3303
  %v3336 = vunpack.c.l.b16 %v3304
  %v3337 = vunpack.c.l.b16 %v3305
  %v3338 = vunpack.c.l.b16 %v3306
  %v3339 = vpack.c.b16 %v3324, %v3323
  %v3340 = vpack.c.b16 %v3326, %v3325
  %v3341 = vpack.c.b16 %v3328, %v3327
  %v3342 = vpack.c.b16 %v3330, %v3329
  %v3343 = vpack.c.b16 %v3332, %v3331
  %v3344 = vpack.c.b16 %v3334, %v3333
  %v3345 = vpack.c.b16 %v3336, %v3335
  %v3346 = vpack.c.b16 %v3338, %v3337
  %3355 = vmatprep.subr.bf16.mxu0 0
  %3356 = vmatpush1.bf16.msra.mxu0 %v3339
  %3357 = vmatprep.subr.bf16.mxu0 0
  %3358 = vmatpush1.bf16.msra.mxu0 %v3340
  %3359 = vmatprep.subr.bf16.mxu0 0
  %3360 = vmatpush1.bf16.msra.mxu0 %v3341
  %3361 = vmatprep.subr.bf16.mxu0 0
  %3362 = vmatpush1.bf16.msra.mxu0 %v3342
  %3363 = vmatprep.subr.bf16.mxu0 0
  %3364 = vmatpush1.bf16.msra.mxu0 %v3343
  %3365 = vmatprep.subr.bf16.mxu0 0
  %3366 = vmatpush1.bf16.msra.mxu0 %v3344
  %3367 = vmatprep.subr.bf16.mxu0 0
  %3368 = vmatpush1.bf16.msra.mxu0 %v3345
  %3369 = vmatprep.subr.bf16.mxu0 0
  %3370 = vmatpush1.bf16.msra.mxu0 %v3346
  %3371 = vmatprep.subr.bf16.mxu0 0
  %3372 = vmatpush1.bf16.msra.mxu0 0
  %3373 = vmatprep.subr.bf16.mxu0 0
  %3374 = vmatpush1.bf16.msra.mxu0 0
  %3375 = vmatprep.subr.bf16.mxu0 0
  %3376 = vmatpush1.bf16.msra.mxu0 0
  %3377 = vmatprep.subr.bf16.mxu0 0
  %3378 = vmatpush1.bf16.msra.mxu0 0
  %3379 = vmatprep.subr.bf16.mxu0 0
  %3380 = vmatpush1.bf16.msra.mxu0 0
  %3381 = vmatprep.subr.bf16.mxu0 0
  %3382 = vmatpush1.bf16.msra.mxu0 0
  %3383 = vmatprep.subr.bf16.mxu0 0
  %3384 = vmatpush1.bf16.msra.mxu0 0
  %3385 = vmatprep.subr.bf16.mxu0 0
  %3386 = vmatpush1.bf16.msra.mxu0 0
  %3387 = vmatprep.mubr.bf16.mxu0 0
  %3388 = vmatmul.mubr.bf16.gmra.mrb[0].mxu0 %v3258
  %v3389 = vpop.f32.mrb[0].mxu0
  %v3390 = vadd.f32 0.0, %v3389
  %v3391 = vpop.f32.mrb[0].mxu0
  %v3392 = vpop.f32.mrb[0].mxu0
  %v3393 = vadd.f32 0.0, %v3392
  %v3394 = vpop.f32.mrb[0].mxu0
  %3395 = vmatprep.mubr.bf16.mxu0 0
  %3396 = vmatmul.mubr.bf16.gmra.mrb[0].mxu0 %v3259
  %v3397 = vpop.f32.mrb[0].mxu0
  %v3398 = vadd.f32 0.0, %v3397
  %v3399 = vpop.f32.mrb[0].mxu0
  %v3400 = vpop.f32.mrb[0].mxu0
  %v3401 = vadd.f32 0.0, %v3400
  %v3402 = vpop.f32.mrb[0].mxu0
  %3403 = vmatprep.mubr.bf16.mxu0 0
  %3404 = vmatmul.mubr.bf16.gmra.mrb[0].mxu0 %v3260
  %v3405 = vpop.f32.mrb[0].mxu0
  %v3406 = vadd.f32 0.0, %v3405
  %v3407 = vpop.f32.mrb[0].mxu0
  %v3408 = vpop.f32.mrb[0].mxu0
  %v3409 = vadd.f32 0.0, %v3408
  %v3410 = vpop.f32.mrb[0].mxu0
  %3411 = vmatprep.mubr.bf16.mxu0 0
  %3412 = vmatmul.mubr.bf16.gmra.mrb[0].mxu0 %v3261
  %v3413 = vpop.f32.mrb[0].mxu0
  %v3414 = vadd.f32 0.0, %v3413
  %v3415 = vpop.f32.mrb[0].mxu0
  %v3416 = vpop.f32.mrb[0].mxu0
  %v3417 = vadd.f32 0.0, %v3416
  %v3418 = vpop.f32.mrb[0].mxu0
  %3419 = vmatprep.mubr.bf16.mxu0 0
  %3420 = vmatmul.mubr.bf16.gmra.mrb[0].mxu0 %v3262
  %v3421 = vpop.f32.mrb[0].mxu0
  %v3422 = vadd.f32 0.0, %v3421
  %v3423 = vpop.f32.mrb[0].mxu0
  %v3424 = vpop.f32.mrb[0].mxu0
  %v3425 = vadd.f32 0.0, %v3424
  %v3426 = vpop.f32.mrb[0].mxu0
  %3427 = vmatprep.mubr.bf16.mxu0 0
  %3428 = vmatmul.mubr.bf16.gmra.mrb[0].mxu0 %v3263
  %v3429 = vpop.f32.mrb[0].mxu0
  %v3430 = vadd.f32 0.0, %v3429
  %v3431 = vpop.f32.mrb[0].mxu0
  %v3432 = vpop.f32.mrb[0].mxu0
  %v3433 = vadd.f32 0.0, %v3432
  %v3434 = vpop.f32.mrb[0].mxu0
  %3435 = vmatprep.mubr.bf16.mxu0 0
  %3436 = vmatmul.mubr.bf16.gmra.mrb[0].mxu0 %v3264
  %v3437 = vpop.f32.mrb[0].mxu0
  %v3438 = vadd.f32 0.0, %v3437
  %v3439 = vpop.f32.mrb[0].mxu0
  %v3440 = vpop.f32.mrb[0].mxu0
  %v3441 = vadd.f32 0.0, %v3440
  %v3442 = vpop.f32.mrb[0].mxu0
  %3443 = vmatprep.mubr.bf16.mxu0 0
  %3444 = vmatmul.mubr.bf16.gmra.mrb[0].mxu0 %v3265
  %v3445 = vpop.f32.mrb[0].mxu0
  %v3446 = vadd.f32 0.0, %v3445
  %v3447 = vpop.f32.mrb[0].mxu0
  %v3448 = vpop.f32.mrb[0].mxu0
  %v3449 = vadd.f32 0.0, %v3448
  %v3450 = vpop.f32.mrb[0].mxu0
  %3451 = vmatprep.mubr.bf16.mxu0 0
  %3452 = vmatmul.mubr.bf16.gmra.mrb[0].mxu0 %v3266
  %v3453 = vpop.f32.mrb[0].mxu0
  %v3454 = vadd.f32 0.0, %v3453
  %v3455 = vpop.f32.mrb[0].mxu0
  %v3456 = vpop.f32.mrb[0].mxu0
  %v3457 = vadd.f32 0.0, %v3456
  %v3458 = vpop.f32.mrb[0].mxu0
  %3459 = vmatprep.mubr.bf16.mxu0 0
  %3460 = vmatmul.mubr.bf16.gmra.mrb[0].mxu0 %v3267
  %v3461 = vpop.f32.mrb[0].mxu0
  %v3462 = vadd.f32 0.0, %v3461
  %v3463 = vpop.f32.mrb[0].mxu0
  %v3464 = vpop.f32.mrb[0].mxu0
  %v3465 = vadd.f32 0.0, %v3464
  %v3466 = vpop.f32.mrb[0].mxu0
  %3467 = vmatprep.mubr.bf16.mxu0 0
  %3468 = vmatmul.mubr.bf16.gmra.mrb[0].mxu0 %v3268
  %v3469 = vpop.f32.mrb[0].mxu0
  %v3470 = vadd.f32 0.0, %v3469
  %v3471 = vpop.f32.mrb[0].mxu0
  %v3472 = vpop.f32.mrb[0].mxu0
  %v3473 = vadd.f32 0.0, %v3472
  %v3474 = vpop.f32.mrb[0].mxu0
  %3475 = vmatprep.mubr.bf16.mxu0 0
  %3476 = vmatmul.mubr.bf16.gmra.mrb[0].mxu0 %v3269
  %v3477 = vpop.f32.mrb[0].mxu0
  %v3478 = vadd.f32 0.0, %v3477
  %v3479 = vpop.f32.mrb[0].mxu0
  %v3480 = vpop.f32.mrb[0].mxu0
  %v3481 = vadd.f32 0.0, %v3480
  %v3482 = vpop.f32.mrb[0].mxu0
  %3483 = vmatprep.mubr.bf16.mxu0 0
  %3484 = vmatmul.mubr.bf16.gmra.mrb[0].mxu0 %v3270
  %v3485 = vpop.f32.mrb[0].mxu0
  %v3486 = vadd.f32 0.0, %v3485
  %v3487 = vpop.f32.mrb[0].mxu0
  %v3488 = vpop.f32.mrb[0].mxu0
  %v3489 = vadd.f32 0.0, %v3488
  %v3490 = vpop.f32.mrb[0].mxu0
  %3491 = vmatprep.mubr.bf16.mxu0 0
  %3492 = vmatmul.mubr.bf16.gmra.mrb[0].mxu0 %v3271
  %v3493 = vpop.f32.mrb[0].mxu0
  %v3494 = vadd.f32 0.0, %v3493
  %v3495 = vpop.f32.mrb[0].mxu0
  %v3496 = vpop.f32.mrb[0].mxu0
  %v3497 = vadd.f32 0.0, %v3496
  %v3498 = vpop.f32.mrb[0].mxu0
  %3499 = vmatprep.mubr.bf16.mxu0 0
  %3500 = vmatmul.mubr.bf16.gmra.mrb[0].mxu0 %v3272
  %v3501 = vpop.f32.mrb[0].mxu0
  %v3502 = vadd.f32 0.0, %v3501
  %v3503 = vpop.f32.mrb[0].mxu0
  %v3504 = vpop.f32.mrb[0].mxu0
  %v3505 = vadd.f32 0.0, %v3504
  %v3506 = vpop.f32.mrb[0].mxu0
  %3507 = vmatprep.mubr.bf16.mxu0 0
  %3508 = vmatmul.mubr.bf16.gmra.mrb[0].mxu0 %v3273
  %v3509 = vpop.f32.mrb[0].mxu0
  %v3510 = vadd.f32 0.0, %v3509
  %v3511 = vpop.f32.mrb[0].mxu0
  %v3512 = vpop.f32.mrb[0].mxu0
  %v3513 = vadd.f32 0.0, %v3512
  %v3514 = vpop.f32.mrb[0].mxu0
  %3515 = vmatprep.mubr.bf16.mxu0 0
  %3516 = vmatmul.mubr.bf16.gmra.mrb[0].mxu0 %v3274
  %v3517 = vpop.f32.mrb[0].mxu0
  %v3518 = vadd.f32 0.0, %v3517
  %v3519 = vpop.f32.mrb[0].mxu0
  %v3520 = vpop.f32.mrb[0].mxu0
  %v3521 = vadd.f32 0.0, %v3520
  %v3522 = vpop.f32.mrb[0].mxu0
  %3523 = vmatprep.mubr.bf16.mxu0 0
  %3524 = vmatmul.mubr.bf16.gmra.mrb[0].mxu0 %v3275
  %v3525 = vpop.f32.mrb[0].mxu0
  %v3526 = vadd.f32 0.0, %v3525
  %v3527 = vpop.f32.mrb[0].mxu0
  %v3528 = vpop.f32.mrb[0].mxu0
  %v3529 = vadd.f32 0.0, %v3528
  %v3530 = vpop.f32.mrb[0].mxu0
  %3531 = vmatprep.mubr.bf16.mxu0 0
  %3532 = vmatmul.mubr.bf16.gmra.mrb[0].mxu0 %v3276
  %v3533 = vpop.f32.mrb[0].mxu0
  %v3534 = vadd.f32 0.0, %v3533
  %v3535 = vpop.f32.mrb[0].mxu0
  %v3536 = vpop.f32.mrb[0].mxu0
  %v3537 = vadd.f32 0.0, %v3536
  %v3538 = vpop.f32.mrb[0].mxu0
  %3539 = vmatprep.mubr.bf16.mxu0 0
  %3540 = vmatmul.mubr.bf16.gmra.mrb[0].mxu0 %v3277
  %v3541 = vpop.f32.mrb[0].mxu0
  %v3542 = vadd.f32 0.0, %v3541
  %v3543 = vpop.f32.mrb[0].mxu0
  %v3544 = vpop.f32.mrb[0].mxu0
  %v3545 = vadd.f32 0.0, %v3544
  %v3546 = vpop.f32.mrb[0].mxu0
  %3547 = vmatprep.mubr.bf16.mxu0 0
  %3548 = vmatmul.mubr.bf16.gmra.mrb[0].mxu0 %v3278
  %v3549 = vpop.f32.mrb[0].mxu0
  %v3550 = vadd.f32 0.0, %v3549
  %v3551 = vpop.f32.mrb[0].mxu0
  %v3552 = vpop.f32.mrb[0].mxu0
  %v3553 = vadd.f32 0.0, %v3552
  %v3554 = vpop.f32.mrb[0].mxu0
  %3555 = vmatprep.mubr.bf16.mxu0 0
  %3556 = vmatmul.mubr.bf16.gmra.mrb[0].mxu0 %v3279
  %v3557 = vpop.f32.mrb[0].mxu0
  %v3558 = vadd.f32 0.0, %v3557
  %v3559 = vpop.f32.mrb[0].mxu0
  %v3560 = vpop.f32.mrb[0].mxu0
  %v3561 = vadd.f32 0.0, %v3560
  %v3562 = vpop.f32.mrb[0].mxu0
  %3563 = vmatprep.mubr.bf16.mxu0 0
  %3564 = vmatmul.mubr.bf16.gmra.mrb[0].mxu0 %v3280
  %v3565 = vpop.f32.mrb[0].mxu0
  %v3566 = vadd.f32 0.0, %v3565
  %v3567 = vpop.f32.mrb[0].mxu0
  %v3568 = vpop.f32.mrb[0].mxu0
  %v3569 = vadd.f32 0.0, %v3568
  %v3570 = vpop.f32.mrb[0].mxu0
  %3571 = vmatprep.mubr.bf16.mxu0 0
  %3572 = vmatmul.mubr.bf16.gmra.mrb[0].mxu0 %v3281
  %v3573 = vpop.f32.mrb[0].mxu0
  %v3574 = vadd.f32 0.0, %v3573
  %v3575 = vpop.f32.mrb[0].mxu0
  %v3576 = vpop.f32.mrb[0].mxu0
  %v3577 = vadd.f32 0.0, %v3576
  %v3578 = vpop.f32.mrb[0].mxu0
  %3579 = vmatprep.mubr.bf16.mxu0 0
  %3580 = vmatmul.mubr.bf16.gmra.mrb[0].mxu0 %v3282
  %v3581 = vpop.f32.mrb[0].mxu0
  %v3582 = vadd.f32 0.0, %v3581
  %v3583 = vpop.f32.mrb[0].mxu0
  %v3584 = vpop.f32.mrb[0].mxu0
  %v3585 = vadd.f32 0.0, %v3584
  %v3586 = vpop.f32.mrb[0].mxu0
  %3587 = vmatprep.mubr.bf16.mxu0 0
  %3588 = vmatmul.mubr.bf16.gmra.mrb[0].mxu0 %v3283
  %v3589 = vpop.f32.mrb[0].mxu0
  %v3590 = vadd.f32 0.0, %v3589
  %v3591 = vpop.f32.mrb[0].mxu0
  %v3592 = vpop.f32.mrb[0].mxu0
  %v3593 = vadd.f32 0.0, %v3592
  %v3594 = vpop.f32.mrb[0].mxu0
  %3595 = vmatprep.mubr.bf16.mxu0 0
  %3596 = vmatmul.mubr.bf16.gmra.mrb[0].mxu0 %v3284
  %v3597 = vpop.f32.mrb[0].mxu0
  %v3598 = vadd.f32 0.0, %v3597
  %v3599 = vpop.f32.mrb[0].mxu0
  %v3600 = vpop.f32.mrb[0].mxu0
  %v3601 = vadd.f32 0.0, %v3600
  %v3602 = vpop.f32.mrb[0].mxu0
  %3603 = vmatprep.mubr.bf16.mxu0 0
  %3604 = vmatmul.mubr.bf16.gmra.mrb[0].mxu0 %v3285
  %v3605 = vpop.f32.mrb[0].mxu0
  %v3606 = vadd.f32 0.0, %v3605
  %v3607 = vpop.f32.mrb[0].mxu0
  %v3608 = vpop.f32.mrb[0].mxu0
  %v3609 = vadd.f32 0.0, %v3608
  %v3610 = vpop.f32.mrb[0].mxu0
  %3611 = vmatprep.mubr.bf16.mxu0 0
  %3612 = vmatmul.mubr.bf16.gmra.mrb[0].mxu0 %v3286
  %v3613 = vpop.f32.mrb[0].mxu0
  %v3614 = vadd.f32 0.0, %v3613
  %v3615 = vpop.f32.mrb[0].mxu0
  %v3616 = vpop.f32.mrb[0].mxu0
  %v3617 = vadd.f32 0.0, %v3616
  %v3618 = vpop.f32.mrb[0].mxu0
  %3619 = vmatprep.mubr.bf16.mxu0 0
  %3620 = vmatmul.mubr.bf16.gmra.mrb[0].mxu0 %v3287
  %v3621 = vpop.f32.mrb[0].mxu0
  %v3622 = vadd.f32 0.0, %v3621
  %v3623 = vpop.f32.mrb[0].mxu0
  %v3624 = vpop.f32.mrb[0].mxu0
  %v3625 = vadd.f32 0.0, %v3624
  %v3626 = vpop.f32.mrb[0].mxu0
  %3627 = vmatprep.mubr.bf16.mxu0 0
  %3628 = vmatmul.mubr.bf16.gmra.mrb[0].mxu0 %v3288
  %v3629 = vpop.f32.mrb[0].mxu0
  %v3630 = vadd.f32 0.0, %v3629
  %v3631 = vpop.f32.mrb[0].mxu0
  %v3632 = vpop.f32.mrb[0].mxu0
  %v3633 = vadd.f32 0.0, %v3632
  %v3634 = vpop.f32.mrb[0].mxu0
  %3635 = vmatprep.mubr.bf16.mxu0 0
  %3636 = vmatmul.mubr.bf16.gmra.mrb[0].mxu0 %v3289
  %v3637 = vpop.f32.mrb[0].mxu0
  %v3638 = vadd.f32 0.0, %v3637
  %v3639 = vpop.f32.mrb[0].mxu0
  %v3640 = vpop.f32.mrb[0].mxu0
  %v3641 = vadd.f32 0.0, %v3640
  %v3642 = vpop.f32.mrb[0].mxu0
  %3643 = vdwg.mxu0
  %v3644 = vadd.f32 %v3129, %v3390
  %v3645 = vadd.f32 %v3130, %v3393
  %v3646 = vadd.f32 %v3131, %v3398
  %v3647 = vadd.f32 %v3132, %v3401
  %v3648 = vadd.f32 %v3133, %v3406
  %v3649 = vadd.f32 %v3134, %v3409
  %v3650 = vadd.f32 %v3135, %v3414
  %v3651 = vadd.f32 %v3136, %v3417
  %v3652 = vadd.f32 %v3137, %v3422
  %v3653 = vadd.f32 %v3138, %v3425
  %v3654 = vadd.f32 %v3139, %v3430
  %v3655 = vadd.f32 %v3140, %v3433
  %v3656 = vadd.f32 %v3141, %v3438
  %v3657 = vadd.f32 %v3142, %v3441
  %v3658 = vadd.f32 %v3143, %v3446
  %v3659 = vadd.f32 %v3144, %v3449
  %v3660 = vadd.f32 %v3145, %v3454
  %v3661 = vadd.f32 %v3146, %v3457
  %v3662 = vadd.f32 %v3147, %v3462
  %v3663 = vadd.f32 %v3148, %v3465
  %v3664 = vadd.f32 %v3149, %v3470
  %v3665 = vadd.f32 %v3150, %v3473
  %v3666 = vadd.f32 %v3151, %v3478
  %v3667 = vadd.f32 %v3152, %v3481
  %v3668 = vadd.f32 %v3153, %v3486
  %v3669 = vadd.f32 %v3154, %v3489
  %v3670 = vadd.f32 %v3155, %v3494
  %v3671 = vadd.f32 %v3156, %v3497
  %v3672 = vadd.f32 %v3157, %v3502
  %v3673 = vadd.f32 %v3158, %v3505
  %v3674 = vadd.f32 %v3159, %v3510
  %v3675 = vadd.f32 %v3160, %v3513
  %v3676 = vadd.f32 %v3161, %v3518
  %v3677 = vadd.f32 %v3162, %v3521
  %v3678 = vadd.f32 %v3163, %v3526
  %v3679 = vadd.f32 %v3164, %v3529
  %v3680 = vadd.f32 %v3165, %v3534
  %v3681 = vadd.f32 %v3166, %v3537
  %v3682 = vadd.f32 %v3167, %v3542
  %v3683 = vadd.f32 %v3168, %v3545
  %v3684 = vadd.f32 %v3169, %v3550
  %v3685 = vadd.f32 %v3170, %v3553
  %v3686 = vadd.f32 %v3171, %v3558
  %v3687 = vadd.f32 %v3172, %v3561
  %v3688 = vadd.f32 %v3173, %v3566
  %v3689 = vadd.f32 %v3174, %v3569
  %v3690 = vadd.f32 %v3175, %v3574
  %v3691 = vadd.f32 %v3176, %v3577
  %v3692 = vadd.f32 %v3177, %v3582
  %v3693 = vadd.f32 %v3178, %v3585
  %v3694 = vadd.f32 %v3179, %v3590
  %v3695 = vadd.f32 %v3180, %v3593
  %v3696 = vadd.f32 %v3181, %v3598
  %v3697 = vadd.f32 %v3182, %v3601
  %v3698 = vadd.f32 %v3183, %v3606
  %v3699 = vadd.f32 %v3184, %v3609
  %v3700 = vadd.f32 %v3185, %v3614
  %v3701 = vadd.f32 %v3186, %v3617
  %v3702 = vadd.f32 %v3187, %v3622
  %v3703 = vadd.f32 %v3188, %v3625
  %v3704 = vadd.f32 %v3189, %v3630
  %v3705 = vadd.f32 %v3190, %v3633
  %v3706 = vadd.f32 %v3191, %v3638
  %v3707 = vadd.f32 %v3192, %v3641
  %v3708 = vld [vmem:[%s3193 + $0x1] sm:$0xff]
  %v3709 = vld [vmem:[%s3193 + $0x9] sm:$0xff]
  %v3710 = vld [vmem:[%s3193 + $0x19] sm:$0xff]
  %v3711 = vld [vmem:[%s3193 + $0x21] sm:$0xff]
  %v3712 = vld [vmem:[%s3193 + $0x31] sm:$0xff]
  %v3713 = vld [vmem:[%s3193 + $0x39] sm:$0xff]
  %v3714 = vld [vmem:[%s3193 + $0x49] sm:$0xff]
  %v3715 = vld [vmem:[%s3193 + $0x51] sm:$0xff]
  %v3716 = vld [vmem:[%s3193 + $0x61] sm:$0xff]
  %v3717 = vld [vmem:[%s3193 + $0x69] sm:$0xff]
  %v3718 = vld [vmem:[%s3193 + $0x79] sm:$0xff]
  %v3719 = vld [vmem:[%s3193 + $0x81] sm:$0xff]
  %v3720 = vld [vmem:[%s3193 + $0x91] sm:$0xff]
  %v3721 = vld [vmem:[%s3193 + $0x99] sm:$0xff]
  %v3722 = vld [vmem:[%s3193 + $0xa9] sm:$0xff]
  %v3723 = vld [vmem:[%s3193 + $0xb1] sm:$0xff]
  %v3724 = vld [vmem:[%s3193 + $0xc1] sm:$0xff]
  %v3725 = vld [vmem:[%s3193 + $0xc9] sm:$0xff]
  %v3726 = vld [vmem:[%s3193 + $0xd9] sm:$0xff]
  %v3727 = vld [vmem:[%s3193 + $0xe1] sm:$0xff]
  %v3728 = vld [vmem:[%s3193 + $0xf1] sm:$0xff]
  %v3729 = vld [vmem:[%s3193 + $0xf9] sm:$0xff]
  %v3730 = vld [vmem:[%s3193 + $0x109] sm:$0xff]
  %v3731 = vld [vmem:[%s3193 + $0x111] sm:$0xff]
  %v3732 = vld [vmem:[%s3193 + $0x121] sm:$0xff]
  %v3733 = vld [vmem:[%s3193 + $0x129] sm:$0xff]
  %v3734 = vld [vmem:[%s3193 + $0x139] sm:$0xff]
  %v3735 = vld [vmem:[%s3193 + $0x141] sm:$0xff]
  %v3736 = vld [vmem:[%s3193 + $0x151] sm:$0xff]
  %v3737 = vld [vmem:[%s3193 + $0x159] sm:$0xff]
  %v3738 = vld [vmem:[%s3193 + $0x169] sm:$0xff]
  %v3739 = vld [vmem:[%s3193 + $0x171] sm:$0xff]
  %v3740 = vld [vmem:[%s3193 + $0x1b1] sm:$0xff]
  %v3741 = vld [vmem:[%s3193 + $0x1b9] sm:$0xff]
  %v3742 = vld [vmem:[%s3193 + $0x1c9] sm:$0xff]
  %v3743 = vld [vmem:[%s3193 + $0x1d1] sm:$0xff]
  %v3744 = vld [vmem:[%s3193 + $0x1e1] sm:$0xff]
  %v3745 = vld [vmem:[%s3193 + $0x1e9] sm:$0xff]
  %v3746 = vld [vmem:[%s3193 + $0x1f9] sm:$0xff]
  %v3747 = vld [vmem:[%s3193 + $0x201] sm:$0xff]
  %v3748 = vld [vmem:[%s3193 + $0x211] sm:$0xff]
  %v3749 = vld [vmem:[%s3193 + $0x219] sm:$0xff]
  %v3750 = vld [vmem:[%s3193 + $0x229] sm:$0xff]
  %v3751 = vld [vmem:[%s3193 + $0x231] sm:$0xff]
  %v3752 = vld [vmem:[%s3193 + $0x241] sm:$0xff]
  %v3753 = vld [vmem:[%s3193 + $0x249] sm:$0xff]
  %v3754 = vld [vmem:[%s3193 + $0x259] sm:$0xff]
  %v3755 = vld [vmem:[%s3193 + $0x261] sm:$0xff]
  %v3756 = vld [vmem:[%s3193 + $0x271] sm:$0xff]
  %v3757 = vld [vmem:[%s3193 + $0x279] sm:$0xff]
  %v3758 = vld [vmem:[%s3193 + $0x289] sm:$0xff]
  %v3759 = vld [vmem:[%s3193 + $0x291] sm:$0xff]
  %v3760 = vld [vmem:[%s3193 + $0x2a1] sm:$0xff]
  %v3761 = vld [vmem:[%s3193 + $0x2a9] sm:$0xff]
  %v3762 = vld [vmem:[%s3193 + $0x2b9] sm:$0xff]
  %v3763 = vld [vmem:[%s3193 + $0x2c1] sm:$0xff]
  %v3764 = vld [vmem:[%s3193 + $0x2d1] sm:$0xff]
  %v3765 = vld [vmem:[%s3193 + $0x2d9] sm:$0xff]
  %v3766 = vld [vmem:[%s3193 + $0x2e9] sm:$0xff]
  %v3767 = vld [vmem:[%s3193 + $0x2f1] sm:$0xff]
  %v3768 = vld [vmem:[%s3193 + $0x301] sm:$0xff]
  %v3769 = vld [vmem:[%s3193 + $0x309] sm:$0xff]
  %v3770 = vld [vmem:[%s3193 + $0x319] sm:$0xff]
  %v3771 = vld [vmem:[%s3193 + $0x321] sm:$0xff]
  %v3772 = vpack.c.bf16 %v3709, %v3708
  %v3773 = vpack.c.bf16 %v3711, %v3710
  %v3774 = vpack.c.bf16 %v3713, %v3712
  %v3775 = vpack.c.bf16 %v3715, %v3714
  %v3776 = vpack.c.bf16 %v3717, %v3716
  %v3777 = vpack.c.bf16 %v3719, %v3718
  %v3778 = vpack.c.bf16 %v3721, %v3720
  %v3779 = vpack.c.bf16 %v3723, %v3722
  %v3780 = vpack.c.bf16 %v3725, %v3724
  %v3781 = vpack.c.bf16 %v3727, %v3726
  %v3782 = vpack.c.bf16 %v3729, %v3728
  %v3783 = vpack.c.bf16 %v3731, %v3730
  %v3784 = vpack.c.bf16 %v3733, %v3732
  %v3785 = vpack.c.bf16 %v3735, %v3734
  %v3786 = vpack.c.bf16 %v3737, %v3736
  %v3787 = vpack.c.bf16 %v3739, %v3738
  %v3788 = vpack.c.bf16 %v3741, %v3740
  %v3789 = vpack.c.bf16 %v3743, %v3742
  %v3790 = vpack.c.bf16 %v3745, %v3744
  %v3791 = vpack.c.bf16 %v3747, %v3746
  %v3792 = vpack.c.bf16 %v3749, %v3748
  %v3793 = vpack.c.bf16 %v3751, %v3750
  %v3794 = vpack.c.bf16 %v3753, %v3752
  %v3795 = vpack.c.bf16 %v3755, %v3754
  %v3796 = vpack.c.bf16 %v3757, %v3756
  %v3797 = vpack.c.bf16 %v3759, %v3758
  %v3798 = vpack.c.bf16 %v3761, %v3760
  %v3799 = vpack.c.bf16 %v3763, %v3762
  %v3800 = vpack.c.bf16 %v3765, %v3764
  %v3801 = vpack.c.bf16 %v3767, %v3766
  %v3802 = vpack.c.bf16 %v3769, %v3768
  %v3803 = vpack.c.bf16 %v3771, %v3770
  %s3804 = scalar_lea.vmem %s1, 448
  %v3805 = vld [vmem:[%s3804] sm:$0xf]
  %v3806 = vld [vmem:[%s3804 + $0x4] sm:$0xf]
  %v3807 = vld [vmem:[%s3804 + $0x8] sm:$0xf]
  %v3808 = vld [vmem:[%s3804 + $0xc] sm:$0xf]
  %v3809 = vld [vmem:[%s3804 + $0x10] sm:$0xf]
  %v3810 = vld [vmem:[%s3804 + $0x14] sm:$0xf]
  %v3811 = vld [vmem:[%s3804 + $0x18] sm:$0xf]
  %v3812 = vld [vmem:[%s3804 + $0x1c] sm:$0xf]
  %v3813 = vld [vmem:[%s3804 + $0x20] sm:$0xf]
  %v3814 = vld [vmem:[%s3804 + $0x24] sm:$0xf]
  %v3815 = vld [vmem:[%s3804 + $0x28] sm:$0xf]
  %v3816 = vld [vmem:[%s3804 + $0x2c] sm:$0xf]
  %v3817 = vld [vmem:[%s3804 + $0x30] sm:$0xf]
  %v3818 = vld [vmem:[%s3804 + $0x34] sm:$0xf]
  %v3819 = vld [vmem:[%s3804 + $0x38] sm:$0xf]
  %v3820 = vld [vmem:[%s3804 + $0x3c] sm:$0xf]
  %v3837 = vunpack.c.l.b16 %v3805
  %v3838 = vunpack.c.l.b16 %v3806
  %v3839 = vunpack.c.l.b16 %v3807
  %v3840 = vunpack.c.l.b16 %v3808
  %v3841 = vunpack.c.l.b16 %v3809
  %v3842 = vunpack.c.l.b16 %v3810
  %v3843 = vunpack.c.l.b16 %v3811
  %v3844 = vunpack.c.l.b16 %v3812
  %v3845 = vunpack.c.l.b16 %v3813
  %v3846 = vunpack.c.l.b16 %v3814
  %v3847 = vunpack.c.l.b16 %v3815
  %v3848 = vunpack.c.l.b16 %v3816
  %v3849 = vunpack.c.l.b16 %v3817
  %v3850 = vunpack.c.l.b16 %v3818
  %v3851 = vunpack.c.l.b16 %v3819
  %v3852 = vunpack.c.l.b16 %v3820
  %v3853 = vpack.c.b16 %v3838, %v3837
  %v3854 = vpack.c.b16 %v3840, %v3839
  %v3855 = vpack.c.b16 %v3842, %v3841
  %v3856 = vpack.c.b16 %v3844, %v3843
  %v3857 = vpack.c.b16 %v3846, %v3845
  %v3858 = vpack.c.b16 %v3848, %v3847
  %v3859 = vpack.c.b16 %v3850, %v3849
  %v3860 = vpack.c.b16 %v3852, %v3851
  %3869 = vmatprep.subr.bf16.mxu0 0
  %3870 = vmatpush1.bf16.msra.mxu0 %v3853
  %3871 = vmatprep.subr.bf16.mxu0 0
  %3872 = vmatpush1.bf16.msra.mxu0 %v3854
  %3873 = vmatprep.subr.bf16.mxu0 0
  %3874 = vmatpush1.bf16.msra.mxu0 %v3855
  %3875 = vmatprep.subr.bf16.mxu0 0
  %3876 = vmatpush1.bf16.msra.mxu0 %v3856
  %3877 = vmatprep.subr.bf16.mxu0 0
  %3878 = vmatpush1.bf16.msra.mxu0 %v3857
  %3879 = vmatprep.subr.bf16.mxu0 0
  %3880 = vmatpush1.bf16.msra.mxu0 %v3858
  %3881 = vmatprep.subr.bf16.mxu0 0
  %3882 = vmatpush1.bf16.msra.mxu0 %v3859
  %3883 = vmatprep.subr.bf16.mxu0 0
  %3884 = vmatpush1.bf16.msra.mxu0 %v3860
  %3885 = vmatprep.subr.bf16.mxu0 0
  %3886 = vmatpush1.bf16.msra.mxu0 0
  %3887 = vmatprep.subr.bf16.mxu0 0
  %3888 = vmatpush1.bf16.msra.mxu0 0
  %3889 = vmatprep.subr.bf16.mxu0 0
  %3890 = vmatpush1.bf16.msra.mxu0 0
  %3891 = vmatprep.subr.bf16.mxu0 0
  %3892 = vmatpush1.bf16.msra.mxu0 0
  %3893 = vmatprep.subr.bf16.mxu0 0
  %3894 = vmatpush1.bf16.msra.mxu0 0
  %3895 = vmatprep.subr.bf16.mxu0 0
  %3896 = vmatpush1.bf16.msra.mxu0 0
  %3897 = vmatprep.subr.bf16.mxu0 0
  %3898 = vmatpush1.bf16.msra.mxu0 0
  %3899 = vmatprep.subr.bf16.mxu0 0
  %3900 = vmatpush1.bf16.msra.mxu0 0
  %3901 = vmatprep.mubr.bf16.mxu0 0
  %3902 = vmatmul.mubr.bf16.gmra.mrb[0].mxu0 %v3772
  %v3903 = vpop.f32.mrb[0].mxu0
  %v3904 = vadd.f32 0.0, %v3903
  %v3905 = vpop.f32.mrb[0].mxu0
  %v3906 = vpop.f32.mrb[0].mxu0
  %v3907 = vadd.f32 0.0, %v3906
  %v3908 = vpop.f32.mrb[0].mxu0
  %3909 = vmatprep.mubr.bf16.mxu0 0
  %3910 = vmatmul.mubr.bf16.gmra.mrb[0].mxu0 %v3773
  %v3911 = vpop.f32.mrb[0].mxu0
  %v3912 = vadd.f32 0.0, %v3911
  %v3913 = vpop.f32.mrb[0].mxu0
  %v3914 = vpop.f32.mrb[0].mxu0
  %v3915 = vadd.f32 0.0, %v3914
  %v3916 = vpop.f32.mrb[0].mxu0
  %3917 = vmatprep.mubr.bf16.mxu0 0
  %3918 = vmatmul.mubr.bf16.gmra.mrb[0].mxu0 %v3774
  %v3919 = vpop.f32.mrb[0].mxu0
  %v3920 = vadd.f32 0.0, %v3919
  %v3921 = vpop.f32.mrb[0].mxu0
  %v3922 = vpop.f32.mrb[0].mxu0
  %v3923 = vadd.f32 0.0, %v3922
  %v3924 = vpop.f32.mrb[0].mxu0
  %3925 = vmatprep.mubr.bf16.mxu0 0
  %3926 = vmatmul.mubr.bf16.gmra.mrb[0].mxu0 %v3775
  %v3927 = vpop.f32.mrb[0].mxu0
  %v3928 = vadd.f32 0.0, %v3927
  %v3929 = vpop.f32.mrb[0].mxu0
  %v3930 = vpop.f32.mrb[0].mxu0
  %v3931 = vadd.f32 0.0, %v3930
  %v3932 = vpop.f32.mrb[0].mxu0
  %3933 = vmatprep.mubr.bf16.mxu0 0
  %3934 = vmatmul.mubr.bf16.gmra.mrb[0].mxu0 %v3776
  %v3935 = vpop.f32.mrb[0].mxu0
  %v3936 = vadd.f32 0.0, %v3935
  %v3937 = vpop.f32.mrb[0].mxu0
  %v3938 = vpop.f32.mrb[0].mxu0
  %v3939 = vadd.f32 0.0, %v3938
  %v3940 = vpop.f32.mrb[0].mxu0
  %3941 = vmatprep.mubr.bf16.mxu0 0
  %3942 = vmatmul.mubr.bf16.gmra.mrb[0].mxu0 %v3777
  %v3943 = vpop.f32.mrb[0].mxu0
  %v3944 = vadd.f32 0.0, %v3943
  %v3945 = vpop.f32.mrb[0].mxu0
  %v3946 = vpop.f32.mrb[0].mxu0
  %v3947 = vadd.f32 0.0, %v3946
  %v3948 = vpop.f32.mrb[0].mxu0
  %3949 = vmatprep.mubr.bf16.mxu0 0
  %3950 = vmatmul.mubr.bf16.gmra.mrb[0].mxu0 %v3778
  %v3951 = vpop.f32.mrb[0].mxu0
  %v3952 = vadd.f32 0.0, %v3951
  %v3953 = vpop.f32.mrb[0].mxu0
  %v3954 = vpop.f32.mrb[0].mxu0
  %v3955 = vadd.f32 0.0, %v3954
  %v3956 = vpop.f32.mrb[0].mxu0
  %3957 = vmatprep.mubr.bf16.mxu0 0
  %3958 = vmatmul.mubr.bf16.gmra.mrb[0].mxu0 %v3779
  %v3959 = vpop.f32.mrb[0].mxu0
  %v3960 = vadd.f32 0.0, %v3959
  %v3961 = vpop.f32.mrb[0].mxu0
  %v3962 = vpop.f32.mrb[0].mxu0
  %v3963 = vadd.f32 0.0, %v3962
  %v3964 = vpop.f32.mrb[0].mxu0
  %3965 = vmatprep.mubr.bf16.mxu0 0
  %3966 = vmatmul.mubr.bf16.gmra.mrb[0].mxu0 %v3780
  %v3967 = vpop.f32.mrb[0].mxu0
  %v3968 = vadd.f32 0.0, %v3967
  %v3969 = vpop.f32.mrb[0].mxu0
  %v3970 = vpop.f32.mrb[0].mxu0
  %v3971 = vadd.f32 0.0, %v3970
  %v3972 = vpop.f32.mrb[0].mxu0
  %3973 = vmatprep.mubr.bf16.mxu0 0
  %3974 = vmatmul.mubr.bf16.gmra.mrb[0].mxu0 %v3781
  %v3975 = vpop.f32.mrb[0].mxu0
  %v3976 = vadd.f32 0.0, %v3975
  %v3977 = vpop.f32.mrb[0].mxu0
  %v3978 = vpop.f32.mrb[0].mxu0
  %v3979 = vadd.f32 0.0, %v3978
  %v3980 = vpop.f32.mrb[0].mxu0
  %3981 = vmatprep.mubr.bf16.mxu0 0
  %3982 = vmatmul.mubr.bf16.gmra.mrb[0].mxu0 %v3782
  %v3983 = vpop.f32.mrb[0].mxu0
  %v3984 = vadd.f32 0.0, %v3983
  %v3985 = vpop.f32.mrb[0].mxu0
  %v3986 = vpop.f32.mrb[0].mxu0
  %v3987 = vadd.f32 0.0, %v3986
  %v3988 = vpop.f32.mrb[0].mxu0
  %3989 = vmatprep.mubr.bf16.mxu0 0
  %3990 = vmatmul.mubr.bf16.gmra.mrb[0].mxu0 %v3783
  %v3991 = vpop.f32.mrb[0].mxu0
  %v3992 = vadd.f32 0.0, %v3991
  %v3993 = vpop.f32.mrb[0].mxu0
  %v3994 = vpop.f32.mrb[0].mxu0
  %v3995 = vadd.f32 0.0, %v3994
  %v3996 = vpop.f32.mrb[0].mxu0
  %3997 = vmatprep.mubr.bf16.mxu0 0
  %3998 = vmatmul.mubr.bf16.gmra.mrb[0].mxu0 %v3784
  %v3999 = vpop.f32.mrb[0].mxu0
  %v4000 = vadd.f32 0.0, %v3999
  %v4001 = vpop.f32.mrb[0].mxu0
  %v4002 = vpop.f32.mrb[0].mxu0
  %v4003 = vadd.f32 0.0, %v4002
  %v4004 = vpop.f32.mrb[0].mxu0
  %4005 = vmatprep.mubr.bf16.mxu0 0
  %4006 = vmatmul.mubr.bf16.gmra.mrb[0].mxu0 %v3785
  %v4007 = vpop.f32.mrb[0].mxu0
  %v4008 = vadd.f32 0.0, %v4007
  %v4009 = vpop.f32.mrb[0].mxu0
  %v4010 = vpop.f32.mrb[0].mxu0
  %v4011 = vadd.f32 0.0, %v4010
  %v4012 = vpop.f32.mrb[0].mxu0
  %4013 = vmatprep.mubr.bf16.mxu0 0
  %4014 = vmatmul.mubr.bf16.gmra.mrb[0].mxu0 %v3786
  %v4015 = vpop.f32.mrb[0].mxu0
  %v4016 = vadd.f32 0.0, %v4015
  %v4017 = vpop.f32.mrb[0].mxu0
  %v4018 = vpop.f32.mrb[0].mxu0
  %v4019 = vadd.f32 0.0, %v4018
  %v4020 = vpop.f32.mrb[0].mxu0
  %4021 = vmatprep.mubr.bf16.mxu0 0
  %4022 = vmatmul.mubr.bf16.gmra.mrb[0].mxu0 %v3787
  %v4023 = vpop.f32.mrb[0].mxu0
  %v4024 = vadd.f32 0.0, %v4023
  %v4025 = vpop.f32.mrb[0].mxu0
  %v4026 = vpop.f32.mrb[0].mxu0
  %v4027 = vadd.f32 0.0, %v4026
  %v4028 = vpop.f32.mrb[0].mxu0
  %4029 = vmatprep.mubr.bf16.mxu0 0
  %4030 = vmatmul.mubr.bf16.gmra.mrb[0].mxu0 %v3788
  %v4031 = vpop.f32.mrb[0].mxu0
  %v4032 = vadd.f32 0.0, %v4031
  %v4033 = vpop.f32.mrb[0].mxu0
  %v4034 = vpop.f32.mrb[0].mxu0
  %v4035 = vadd.f32 0.0, %v4034
  %v4036 = vpop.f32.mrb[0].mxu0
  %4037 = vmatprep.mubr.bf16.mxu0 0
  %4038 = vmatmul.mubr.bf16.gmra.mrb[0].mxu0 %v3789
  %v4039 = vpop.f32.mrb[0].mxu0
  %v4040 = vadd.f32 0.0, %v4039
  %v4041 = vpop.f32.mrb[0].mxu0
  %v4042 = vpop.f32.mrb[0].mxu0
  %v4043 = vadd.f32 0.0, %v4042
  %v4044 = vpop.f32.mrb[0].mxu0
  %4045 = vmatprep.mubr.bf16.mxu0 0
  %4046 = vmatmul.mubr.bf16.gmra.mrb[0].mxu0 %v3790
  %v4047 = vpop.f32.mrb[0].mxu0
  %v4048 = vadd.f32 0.0, %v4047
  %v4049 = vpop.f32.mrb[0].mxu0
  %v4050 = vpop.f32.mrb[0].mxu0
  %v4051 = vadd.f32 0.0, %v4050
  %v4052 = vpop.f32.mrb[0].mxu0
  %4053 = vmatprep.mubr.bf16.mxu0 0
  %4054 = vmatmul.mubr.bf16.gmra.mrb[0].mxu0 %v3791
  %v4055 = vpop.f32.mrb[0].mxu0
  %v4056 = vadd.f32 0.0, %v4055
  %v4057 = vpop.f32.mrb[0].mxu0
  %v4058 = vpop.f32.mrb[0].mxu0
  %v4059 = vadd.f32 0.0, %v4058
  %v4060 = vpop.f32.mrb[0].mxu0
  %4061 = vmatprep.mubr.bf16.mxu0 0
  %4062 = vmatmul.mubr.bf16.gmra.mrb[0].mxu0 %v3792
  %v4063 = vpop.f32.mrb[0].mxu0
  %v4064 = vadd.f32 0.0, %v4063
  %v4065 = vpop.f32.mrb[0].mxu0
  %v4066 = vpop.f32.mrb[0].mxu0
  %v4067 = vadd.f32 0.0, %v4066
  %v4068 = vpop.f32.mrb[0].mxu0
  %4069 = vmatprep.mubr.bf16.mxu0 0
  %4070 = vmatmul.mubr.bf16.gmra.mrb[0].mxu0 %v3793
  %v4071 = vpop.f32.mrb[0].mxu0
  %v4072 = vadd.f32 0.0, %v4071
  %v4073 = vpop.f32.mrb[0].mxu0
  %v4074 = vpop.f32.mrb[0].mxu0
  %v4075 = vadd.f32 0.0, %v4074
  %v4076 = vpop.f32.mrb[0].mxu0
  %4077 = vmatprep.mubr.bf16.mxu0 0
  %4078 = vmatmul.mubr.bf16.gmra.mrb[0].mxu0 %v3794
  %v4079 = vpop.f32.mrb[0].mxu0
  %v4080 = vadd.f32 0.0, %v4079
  %v4081 = vpop.f32.mrb[0].mxu0
  %v4082 = vpop.f32.mrb[0].mxu0
  %v4083 = vadd.f32 0.0, %v4082
  %v4084 = vpop.f32.mrb[0].mxu0
  %4085 = vmatprep.mubr.bf16.mxu0 0
  %4086 = vmatmul.mubr.bf16.gmra.mrb[0].mxu0 %v3795
  %v4087 = vpop.f32.mrb[0].mxu0
  %v4088 = vadd.f32 0.0, %v4087
  %v4089 = vpop.f32.mrb[0].mxu0
  %v4090 = vpop.f32.mrb[0].mxu0
  %v4091 = vadd.f32 0.0, %v4090
  %v4092 = vpop.f32.mrb[0].mxu0
  %4093 = vmatprep.mubr.bf16.mxu0 0
  %4094 = vmatmul.mubr.bf16.gmra.mrb[0].mxu0 %v3796
  %v4095 = vpop.f32.mrb[0].mxu0
  %v4096 = vadd.f32 0.0, %v4095
  %v4097 = vpop.f32.mrb[0].mxu0
  %v4098 = vpop.f32.mrb[0].mxu0
  %v4099 = vadd.f32 0.0, %v4098
  %v4100 = vpop.f32.mrb[0].mxu0
  %4101 = vmatprep.mubr.bf16.mxu0 0
  %4102 = vmatmul.mubr.bf16.gmra.mrb[0].mxu0 %v3797
  %v4103 = vpop.f32.mrb[0].mxu0
  %v4104 = vadd.f32 0.0, %v4103
  %v4105 = vpop.f32.mrb[0].mxu0
  %v4106 = vpop.f32.mrb[0].mxu0
  %v4107 = vadd.f32 0.0, %v4106
  %v4108 = vpop.f32.mrb[0].mxu0
  %4109 = vmatprep.mubr.bf16.mxu0 0
  %4110 = vmatmul.mubr.bf16.gmra.mrb[0].mxu0 %v3798
  %v4111 = vpop.f32.mrb[0].mxu0
  %v4112 = vadd.f32 0.0, %v4111
  %v4113 = vpop.f32.mrb[0].mxu0
  %v4114 = vpop.f32.mrb[0].mxu0
  %v4115 = vadd.f32 0.0, %v4114
  %v4116 = vpop.f32.mrb[0].mxu0
  %4117 = vmatprep.mubr.bf16.mxu0 0
  %4118 = vmatmul.mubr.bf16.gmra.mrb[0].mxu0 %v3799
  %v4119 = vpop.f32.mrb[0].mxu0
  %v4120 = vadd.f32 0.0, %v4119
  %v4121 = vpop.f32.mrb[0].mxu0
  %v4122 = vpop.f32.mrb[0].mxu0
  %v4123 = vadd.f32 0.0, %v4122
  %v4124 = vpop.f32.mrb[0].mxu0
  %4125 = vmatprep.mubr.bf16.mxu0 0
  %4126 = vmatmul.mubr.bf16.gmra.mrb[0].mxu0 %v3800
  %v4127 = vpop.f32.mrb[0].mxu0
  %v4128 = vadd.f32 0.0, %v4127
  %v4129 = vpop.f32.mrb[0].mxu0
  %v4130 = vpop.f32.mrb[0].mxu0
  %v4131 = vadd.f32 0.0, %v4130
  %v4132 = vpop.f32.mrb[0].mxu0
  %4133 = vmatprep.mubr.bf16.mxu0 0
  %4134 = vmatmul.mubr.bf16.gmra.mrb[0].mxu0 %v3801
  %v4135 = vpop.f32.mrb[0].mxu0
  %v4136 = vadd.f32 0.0, %v4135
  %v4137 = vpop.f32.mrb[0].mxu0
  %v4138 = vpop.f32.mrb[0].mxu0
  %v4139 = vadd.f32 0.0, %v4138
  %v4140 = vpop.f32.mrb[0].mxu0
  %4141 = vmatprep.mubr.bf16.mxu0 0
  %4142 = vmatmul.mubr.bf16.gmra.mrb[0].mxu0 %v3802
  %v4143 = vpop.f32.mrb[0].mxu0
  %v4144 = vadd.f32 0.0, %v4143
  %v4145 = vpop.f32.mrb[0].mxu0
  %v4146 = vpop.f32.mrb[0].mxu0
  %v4147 = vadd.f32 0.0, %v4146
  %v4148 = vpop.f32.mrb[0].mxu0
  %4149 = vmatprep.mubr.bf16.mxu0 0
  %4150 = vmatmul.mubr.bf16.gmra.mrb[0].mxu0 %v3803
  %v4151 = vpop.f32.mrb[0].mxu0
  %v4152 = vadd.f32 0.0, %v4151
  %v4153 = vpop.f32.mrb[0].mxu0
  %v4154 = vpop.f32.mrb[0].mxu0
  %v4155 = vadd.f32 0.0, %v4154
  %v4156 = vpop.f32.mrb[0].mxu0
  %4157 = vdwg.mxu0
  %v4158 = vadd.f32 %v3644, %v3904
  %v4159 = vadd.f32 %v3645, %v3907
  %v4160 = vadd.f32 %v3646, %v3912
  %v4161 = vadd.f32 %v3647, %v3915
  %v4162 = vadd.f32 %v3648, %v3920
  %v4163 = vadd.f32 %v3649, %v3923
  %v4164 = vadd.f32 %v3650, %v3928
  %v4165 = vadd.f32 %v3651, %v3931
  %v4166 = vadd.f32 %v3652, %v3936
  %v4167 = vadd.f32 %v3653, %v3939
  %v4168 = vadd.f32 %v3654, %v3944
  %v4169 = vadd.f32 %v3655, %v3947
  %v4170 = vadd.f32 %v3656, %v3952
  %v4171 = vadd.f32 %v3657, %v3955
  %v4172 = vadd.f32 %v3658, %v3960
  %v4173 = vadd.f32 %v3659, %v3963
  %v4174 = vadd.f32 %v3660, %v3968
  %v4175 = vadd.f32 %v3661, %v3971
  %v4176 = vadd.f32 %v3662, %v3976
  %v4177 = vadd.f32 %v3663, %v3979
  %v4178 = vadd.f32 %v3664, %v3984
  %v4179 = vadd.f32 %v3665, %v3987
  %v4180 = vadd.f32 %v3666, %v3992
  %v4181 = vadd.f32 %v3667, %v3995
  %v4182 = vadd.f32 %v3668, %v4000
  %v4183 = vadd.f32 %v3669, %v4003
  %v4184 = vadd.f32 %v3670, %v4008
  %v4185 = vadd.f32 %v3671, %v4011
  %v4186 = vadd.f32 %v3672, %v4016
  %v4187 = vadd.f32 %v3673, %v4019
  %v4188 = vadd.f32 %v3674, %v4024
  %v4189 = vadd.f32 %v3675, %v4027
  %v4190 = vadd.f32 %v3676, %v4032
  %v4191 = vadd.f32 %v3677, %v4035
  %v4192 = vadd.f32 %v3678, %v4040
  %v4193 = vadd.f32 %v3679, %v4043
  %v4194 = vadd.f32 %v3680, %v4048
  %v4195 = vadd.f32 %v3681, %v4051
  %v4196 = vadd.f32 %v3682, %v4056
  %v4197 = vadd.f32 %v3683, %v4059
  %v4198 = vadd.f32 %v3684, %v4064
  %v4199 = vadd.f32 %v3685, %v4067
  %v4200 = vadd.f32 %v3686, %v4072
  %v4201 = vadd.f32 %v3687, %v4075
  %v4202 = vadd.f32 %v3688, %v4080
  %v4203 = vadd.f32 %v3689, %v4083
  %v4204 = vadd.f32 %v3690, %v4088
  %v4205 = vadd.f32 %v3691, %v4091
  %v4206 = vadd.f32 %v3692, %v4096
  %v4207 = vadd.f32 %v3693, %v4099
  %v4208 = vadd.f32 %v3694, %v4104
  %v4209 = vadd.f32 %v3695, %v4107
  %v4210 = vadd.f32 %v3696, %v4112
  %v4211 = vadd.f32 %v3697, %v4115
  %v4212 = vadd.f32 %v3698, %v4120
  %v4213 = vadd.f32 %v3699, %v4123
  %v4214 = vadd.f32 %v3700, %v4128
  %v4215 = vadd.f32 %v3701, %v4131
  %v4216 = vadd.f32 %v3702, %v4136
  %v4217 = vadd.f32 %v3703, %v4139
  %v4218 = vadd.f32 %v3704, %v4144
  %v4219 = vadd.f32 %v3705, %v4147
  %v4220 = vadd.f32 %v3706, %v4152
  %v4221 = vadd.f32 %v3707, %v4155
  %v4222 = vld [vmem:[%s3193 + $0x2] sm:$0xff]
  %v4223 = vld [vmem:[%s3193 + $0xa] sm:$0xff]
  %v4224 = vld [vmem:[%s3193 + $0x1a] sm:$0xff]
  %v4225 = vld [vmem:[%s3193 + $0x22] sm:$0xff]
  %v4226 = vld [vmem:[%s3193 + $0x32] sm:$0xff]
  %v4227 = vld [vmem:[%s3193 + $0x3a] sm:$0xff]
  %v4228 = vld [vmem:[%s3193 + $0x4a] sm:$0xff]
  %v4229 = vld [vmem:[%s3193 + $0x52] sm:$0xff]
  %v4230 = vld [vmem:[%s3193 + $0x62] sm:$0xff]
  %v4231 = vld [vmem:[%s3193 + $0x6a] sm:$0xff]
  %v4232 = vld [vmem:[%s3193 + $0x7a] sm:$0xff]
  %v4233 = vld [vmem:[%s3193 + $0x82] sm:$0xff]
  %v4234 = vld [vmem:[%s3193 + $0x92] sm:$0xff]
  %v4235 = vld [vmem:[%s3193 + $0x9a] sm:$0xff]
  %v4236 = vld [vmem:[%s3193 + $0xaa] sm:$0xff]
  %v4237 = vld [vmem:[%s3193 + $0xb2] sm:$0xff]
  %v4238 = vld [vmem:[%s3193 + $0xc2] sm:$0xff]
  %v4239 = vld [vmem:[%s3193 + $0xca] sm:$0xff]
  %v4240 = vld [vmem:[%s3193 + $0xda] sm:$0xff]
  %v4241 = vld [vmem:[%s3193 + $0xe2] sm:$0xff]
  %v4242 = vld [vmem:[%s3193 + $0xf2] sm:$0xff]
  %v4243 = vld [vmem:[%s3193 + $0xfa] sm:$0xff]
  %v4244 = vld [vmem:[%s3193 + $0x10a] sm:$0xff]
  %v4245 = vld [vmem:[%s3193 + $0x112] sm:$0xff]
  %v4246 = vld [vmem:[%s3193 + $0x122] sm:$0xff]
  %v4247 = vld [vmem:[%s3193 + $0x12a] sm:$0xff]
  %v4248 = vld [vmem:[%s3193 + $0x13a] sm:$0xff]
  %v4249 = vld [vmem:[%s3193 + $0x142] sm:$0xff]
  %v4250 = vld [vmem:[%s3193 + $0x152] sm:$0xff]
  %v4251 = vld [vmem:[%s3193 + $0x15a] sm:$0xff]
  %v4252 = vld [vmem:[%s3193 + $0x16a] sm:$0xff]
  %v4253 = vld [vmem:[%s3193 + $0x172] sm:$0xff]
  %v4254 = vld [vmem:[%s3193 + $0x1b2] sm:$0xff]
  %v4255 = vld [vmem:[%s3193 + $0x1ba] sm:$0xff]
  %v4256 = vld [vmem:[%s3193 + $0x1ca] sm:$0xff]
  %v4257 = vld [vmem:[%s3193 + $0x1d2] sm:$0xff]
  %v4258 = vld [vmem:[%s3193 + $0x1e2] sm:$0xff]
  %v4259 = vld [vmem:[%s3193 + $0x1ea] sm:$0xff]
  %v4260 = vld [vmem:[%s3193 + $0x1fa] sm:$0xff]
  %v4261 = vld [vmem:[%s3193 + $0x202] sm:$0xff]
  %v4262 = vld [vmem:[%s3193 + $0x212] sm:$0xff]
  %v4263 = vld [vmem:[%s3193 + $0x21a] sm:$0xff]
  %v4264 = vld [vmem:[%s3193 + $0x22a] sm:$0xff]
  %v4265 = vld [vmem:[%s3193 + $0x232] sm:$0xff]
  %v4266 = vld [vmem:[%s3193 + $0x242] sm:$0xff]
  %v4267 = vld [vmem:[%s3193 + $0x24a] sm:$0xff]
  %v4268 = vld [vmem:[%s3193 + $0x25a] sm:$0xff]
  %v4269 = vld [vmem:[%s3193 + $0x262] sm:$0xff]
  %v4270 = vld [vmem:[%s3193 + $0x272] sm:$0xff]
  %v4271 = vld [vmem:[%s3193 + $0x27a] sm:$0xff]
  %v4272 = vld [vmem:[%s3193 + $0x28a] sm:$0xff]
  %v4273 = vld [vmem:[%s3193 + $0x292] sm:$0xff]
  %v4274 = vld [vmem:[%s3193 + $0x2a2] sm:$0xff]
  %v4275 = vld [vmem:[%s3193 + $0x2aa] sm:$0xff]
  %v4276 = vld [vmem:[%s3193 + $0x2ba] sm:$0xff]
  %v4277 = vld [vmem:[%s3193 + $0x2c2] sm:$0xff]
  %v4278 = vld [vmem:[%s3193 + $0x2d2] sm:$0xff]
  %v4279 = vld [vmem:[%s3193 + $0x2da] sm:$0xff]
  %v4280 = vld [vmem:[%s3193 + $0x2ea] sm:$0xff]
  %v4281 = vld [vmem:[%s3193 + $0x2f2] sm:$0xff]
  %v4282 = vld [vmem:[%s3193 + $0x302] sm:$0xff]
  %v4283 = vld [vmem:[%s3193 + $0x30a] sm:$0xff]
  %v4284 = vld [vmem:[%s3193 + $0x31a] sm:$0xff]
  %v4285 = vld [vmem:[%s3193 + $0x322] sm:$0xff]
  %v4286 = vpack.c.bf16 %v4223, %v4222
  %v4287 = vpack.c.bf16 %v4225, %v4224
  %v4288 = vpack.c.bf16 %v4227, %v4226
  %v4289 = vpack.c.bf16 %v4229, %v4228
  %v4290 = vpack.c.bf16 %v4231, %v4230
  %v4291 = vpack.c.bf16 %v4233, %v4232
  %v4292 = vpack.c.bf16 %v4235, %v4234
  %v4293 = vpack.c.bf16 %v4237, %v4236
  %v4294 = vpack.c.bf16 %v4239, %v4238
  %v4295 = vpack.c.bf16 %v4241, %v4240
  %v4296 = vpack.c.bf16 %v4243, %v4242
  %v4297 = vpack.c.bf16 %v4245, %v4244
  %v4298 = vpack.c.bf16 %v4247, %v4246
  %v4299 = vpack.c.bf16 %v4249, %v4248
  %v4300 = vpack.c.bf16 %v4251, %v4250
  %v4301 = vpack.c.bf16 %v4253, %v4252
  %v4302 = vpack.c.bf16 %v4255, %v4254
  %v4303 = vpack.c.bf16 %v4257, %v4256
  %v4304 = vpack.c.bf16 %v4259, %v4258
  %v4305 = vpack.c.bf16 %v4261, %v4260
  %v4306 = vpack.c.bf16 %v4263, %v4262
  %v4307 = vpack.c.bf16 %v4265, %v4264
  %v4308 = vpack.c.bf16 %v4267, %v4266
  %v4309 = vpack.c.bf16 %v4269, %v4268
  %v4310 = vpack.c.bf16 %v4271, %v4270
  %v4311 = vpack.c.bf16 %v4273, %v4272
  %v4312 = vpack.c.bf16 %v4275, %v4274
  %v4313 = vpack.c.bf16 %v4277, %v4276
  %v4314 = vpack.c.bf16 %v4279, %v4278
  %v4315 = vpack.c.bf16 %v4281, %v4280
  %v4316 = vpack.c.bf16 %v4283, %v4282
  %v4317 = vpack.c.bf16 %v4285, %v4284
  %s4318 = scalar_lea.vmem %s1, 512
  %v4319 = vld [vmem:[%s4318] sm:$0xf]
  %v4320 = vld [vmem:[%s4318 + $0x4] sm:$0xf]
  %v4321 = vld [vmem:[%s4318 + $0x8] sm:$0xf]
  %v4322 = vld [vmem:[%s4318 + $0xc] sm:$0xf]
  %v4323 = vld [vmem:[%s4318 + $0x10] sm:$0xf]
  %v4324 = vld [vmem:[%s4318 + $0x14] sm:$0xf]
  %v4325 = vld [vmem:[%s4318 + $0x18] sm:$0xf]
  %v4326 = vld [vmem:[%s4318 + $0x1c] sm:$0xf]
  %v4327 = vld [vmem:[%s4318 + $0x20] sm:$0xf]
  %v4328 = vld [vmem:[%s4318 + $0x24] sm:$0xf]
  %v4329 = vld [vmem:[%s4318 + $0x28] sm:$0xf]
  %v4330 = vld [vmem:[%s4318 + $0x2c] sm:$0xf]
  %v4331 = vld [vmem:[%s4318 + $0x30] sm:$0xf]
  %v4332 = vld [vmem:[%s4318 + $0x34] sm:$0xf]
  %v4333 = vld [vmem:[%s4318 + $0x38] sm:$0xf]
  %v4334 = vld [vmem:[%s4318 + $0x3c] sm:$0xf]
  %v4351 = vunpack.c.l.b16 %v4319
  %v4352 = vunpack.c.l.b16 %v4320
  %v4353 = vunpack.c.l.b16 %v4321
  %v4354 = vunpack.c.l.b16 %v4322
  %v4355 = vunpack.c.l.b16 %v4323
  %v4356 = vunpack.c.l.b16 %v4324
  %v4357 = vunpack.c.l.b16 %v4325
  %v4358 = vunpack.c.l.b16 %v4326
  %v4359 = vunpack.c.l.b16 %v4327
  %v4360 = vunpack.c.l.b16 %v4328
  %v4361 = vunpack.c.l.b16 %v4329
  %v4362 = vunpack.c.l.b16 %v4330
  %v4363 = vunpack.c.l.b16 %v4331
  %v4364 = vunpack.c.l.b16 %v4332
  %v4365 = vunpack.c.l.b16 %v4333
  %v4366 = vunpack.c.l.b16 %v4334
  %v4367 = vpack.c.b16 %v4352, %v4351
  %v4368 = vpack.c.b16 %v4354, %v4353
  %v4369 = vpack.c.b16 %v4356, %v4355
  %v4370 = vpack.c.b16 %v4358, %v4357
  %v4371 = vpack.c.b16 %v4360, %v4359
  %v4372 = vpack.c.b16 %v4362, %v4361
  %v4373 = vpack.c.b16 %v4364, %v4363
  %v4374 = vpack.c.b16 %v4366, %v4365
  %4383 = vmatprep.subr.bf16.mxu0 0
  %4384 = vmatpush1.bf16.msra.mxu0 %v4367
  %4385 = vmatprep.subr.bf16.mxu0 0
  %4386 = vmatpush1.bf16.msra.mxu0 %v4368
  %4387 = vmatprep.subr.bf16.mxu0 0
  %4388 = vmatpush1.bf16.msra.mxu0 %v4369
  %4389 = vmatprep.subr.bf16.mxu0 0
  %4390 = vmatpush1.bf16.msra.mxu0 %v4370
  %4391 = vmatprep.subr.bf16.mxu0 0
  %4392 = vmatpush1.bf16.msra.mxu0 %v4371
  %4393 = vmatprep.subr.bf16.mxu0 0
  %4394 = vmatpush1.bf16.msra.mxu0 %v4372
  %4395 = vmatprep.subr.bf16.mxu0 0
  %4396 = vmatpush1.bf16.msra.mxu0 %v4373
  %4397 = vmatprep.subr.bf16.mxu0 0
  %4398 = vmatpush1.bf16.msra.mxu0 %v4374
  %4399 = vmatprep.subr.bf16.mxu0 0
  %4400 = vmatpush1.bf16.msra.mxu0 0
  %4401 = vmatprep.subr.bf16.mxu0 0
  %4402 = vmatpush1.bf16.msra.mxu0 0
  %4403 = vmatprep.subr.bf16.mxu0 0
  %4404 = vmatpush1.bf16.msra.mxu0 0
  %4405 = vmatprep.subr.bf16.mxu0 0
  %4406 = vmatpush1.bf16.msra.mxu0 0
  %4407 = vmatprep.subr.bf16.mxu0 0
  %4408 = vmatpush1.bf16.msra.mxu0 0
  %4409 = vmatprep.subr.bf16.mxu0 0
  %4410 = vmatpush1.bf16.msra.mxu0 0
  %4411 = vmatprep.subr.bf16.mxu0 0
  %4412 = vmatpush1.bf16.msra.mxu0 0
  %4413 = vmatprep.subr.bf16.mxu0 0
  %4414 = vmatpush1.bf16.msra.mxu0 0
  %4415 = vmatprep.mubr.bf16.mxu0 0
  %4416 = vmatmul.mubr.bf16.gmra.mrb[0].mxu0 %v4286
  %v4417 = vpop.f32.mrb[0].mxu0
  %v4418 = vadd.f32 0.0, %v4417
  %v4419 = vpop.f32.mrb[0].mxu0
  %v4420 = vpop.f32.mrb[0].mxu0
  %v4421 = vadd.f32 0.0, %v4420
  %v4422 = vpop.f32.mrb[0].mxu0
  %4423 = vmatprep.mubr.bf16.mxu0 0
  %4424 = vmatmul.mubr.bf16.gmra.mrb[0].mxu0 %v4287
  %v4425 = vpop.f32.mrb[0].mxu0
  %v4426 = vadd.f32 0.0, %v4425
  %v4427 = vpop.f32.mrb[0].mxu0
  %v4428 = vpop.f32.mrb[0].mxu0
  %v4429 = vadd.f32 0.0, %v4428
  %v4430 = vpop.f32.mrb[0].mxu0
  %4431 = vmatprep.mubr.bf16.mxu0 0
  %4432 = vmatmul.mubr.bf16.gmra.mrb[0].mxu0 %v4288
  %v4433 = vpop.f32.mrb[0].mxu0
  %v4434 = vadd.f32 0.0, %v4433
  %v4435 = vpop.f32.mrb[0].mxu0
  %v4436 = vpop.f32.mrb[0].mxu0
  %v4437 = vadd.f32 0.0, %v4436
  %v4438 = vpop.f32.mrb[0].mxu0
  %4439 = vmatprep.mubr.bf16.mxu0 0
  %4440 = vmatmul.mubr.bf16.gmra.mrb[0].mxu0 %v4289
  %v4441 = vpop.f32.mrb[0].mxu0
  %v4442 = vadd.f32 0.0, %v4441
  %v4443 = vpop.f32.mrb[0].mxu0
  %v4444 = vpop.f32.mrb[0].mxu0
  %v4445 = vadd.f32 0.0, %v4444
  %v4446 = vpop.f32.mrb[0].mxu0
  %4447 = vmatprep.mubr.bf16.mxu0 0
  %4448 = vmatmul.mubr.bf16.gmra.mrb[0].mxu0 %v4290
  %v4449 = vpop.f32.mrb[0].mxu0
  %v4450 = vadd.f32 0.0, %v4449
  %v4451 = vpop.f32.mrb[0].mxu0
  %v4452 = vpop.f32.mrb[0].mxu0
  %v4453 = vadd.f32 0.0, %v4452
  %v4454 = vpop.f32.mrb[0].mxu0
  %4455 = vmatprep.mubr.bf16.mxu0 0
  %4456 = vmatmul.mubr.bf16.gmra.mrb[0].mxu0 %v4291
  %v4457 = vpop.f32.mrb[0].mxu0
  %v4458 = vadd.f32 0.0, %v4457
  %v4459 = vpop.f32.mrb[0].mxu0
  %v4460 = vpop.f32.mrb[0].mxu0
  %v4461 = vadd.f32 0.0, %v4460
  %v4462 = vpop.f32.mrb[0].mxu0
  %4463 = vmatprep.mubr.bf16.mxu0 0
  %4464 = vmatmul.mubr.bf16.gmra.mrb[0].mxu0 %v4292
  %v4465 = vpop.f32.mrb[0].mxu0
  %v4466 = vadd.f32 0.0, %v4465
  %v4467 = vpop.f32.mrb[0].mxu0
  %v4468 = vpop.f32.mrb[0].mxu0
  %v4469 = vadd.f32 0.0, %v4468
  %v4470 = vpop.f32.mrb[0].mxu0
  %4471 = vmatprep.mubr.bf16.mxu0 0
  %4472 = vmatmul.mubr.bf16.gmra.mrb[0].mxu0 %v4293
  %v4473 = vpop.f32.mrb[0].mxu0
  %v4474 = vadd.f32 0.0, %v4473
  %v4475 = vpop.f32.mrb[0].mxu0
  %v4476 = vpop.f32.mrb[0].mxu0
  %v4477 = vadd.f32 0.0, %v4476
  %v4478 = vpop.f32.mrb[0].mxu0
  %4479 = vmatprep.mubr.bf16.mxu0 0
  %4480 = vmatmul.mubr.bf16.gmra.mrb[0].mxu0 %v4294
  %v4481 = vpop.f32.mrb[0].mxu0
  %v4482 = vadd.f32 0.0, %v4481
  %v4483 = vpop.f32.mrb[0].mxu0
  %v4484 = vpop.f32.mrb[0].mxu0
  %v4485 = vadd.f32 0.0, %v4484
  %v4486 = vpop.f32.mrb[0].mxu0
  %4487 = vmatprep.mubr.bf16.mxu0 0
  %4488 = vmatmul.mubr.bf16.gmra.mrb[0].mxu0 %v4295
  %v4489 = vpop.f32.mrb[0].mxu0
  %v4490 = vadd.f32 0.0, %v4489
  %v4491 = vpop.f32.mrb[0].mxu0
  %v4492 = vpop.f32.mrb[0].mxu0
  %v4493 = vadd.f32 0.0, %v4492
  %v4494 = vpop.f32.mrb[0].mxu0
  %4495 = vmatprep.mubr.bf16.mxu0 0
  %4496 = vmatmul.mubr.bf16.gmra.mrb[0].mxu0 %v4296
  %v4497 = vpop.f32.mrb[0].mxu0
  %v4498 = vadd.f32 0.0, %v4497
  %v4499 = vpop.f32.mrb[0].mxu0
  %v4500 = vpop.f32.mrb[0].mxu0
  %v4501 = vadd.f32 0.0, %v4500
  %v4502 = vpop.f32.mrb[0].mxu0
  %4503 = vmatprep.mubr.bf16.mxu0 0
  %4504 = vmatmul.mubr.bf16.gmra.mrb[0].mxu0 %v4297
  %v4505 = vpop.f32.mrb[0].mxu0
  %v4506 = vadd.f32 0.0, %v4505
  %v4507 = vpop.f32.mrb[0].mxu0
  %v4508 = vpop.f32.mrb[0].mxu0
  %v4509 = vadd.f32 0.0, %v4508
  %v4510 = vpop.f32.mrb[0].mxu0
  %4511 = vmatprep.mubr.bf16.mxu0 0
  %4512 = vmatmul.mubr.bf16.gmra.mrb[0].mxu0 %v4298
  %v4513 = vpop.f32.mrb[0].mxu0
  %v4514 = vadd.f32 0.0, %v4513
  %v4515 = vpop.f32.mrb[0].mxu0
  %v4516 = vpop.f32.mrb[0].mxu0
  %v4517 = vadd.f32 0.0, %v4516
  %v4518 = vpop.f32.mrb[0].mxu0
  %4519 = vmatprep.mubr.bf16.mxu0 0
  %4520 = vmatmul.mubr.bf16.gmra.mrb[0].mxu0 %v4299
  %v4521 = vpop.f32.mrb[0].mxu0
  %v4522 = vadd.f32 0.0, %v4521
  %v4523 = vpop.f32.mrb[0].mxu0
  %v4524 = vpop.f32.mrb[0].mxu0
  %v4525 = vadd.f32 0.0, %v4524
  %v4526 = vpop.f32.mrb[0].mxu0
  %4527 = vmatprep.mubr.bf16.mxu0 0
  %4528 = vmatmul.mubr.bf16.gmra.mrb[0].mxu0 %v4300
  %v4529 = vpop.f32.mrb[0].mxu0
  %v4530 = vadd.f32 0.0, %v4529
  %v4531 = vpop.f32.mrb[0].mxu0
  %v4532 = vpop.f32.mrb[0].mxu0
  %v4533 = vadd.f32 0.0, %v4532
  %v4534 = vpop.f32.mrb[0].mxu0
  %4535 = vmatprep.mubr.bf16.mxu0 0
  %4536 = vmatmul.mubr.bf16.gmra.mrb[0].mxu0 %v4301
  %v4537 = vpop.f32.mrb[0].mxu0
  %v4538 = vadd.f32 0.0, %v4537
  %v4539 = vpop.f32.mrb[0].mxu0
  %v4540 = vpop.f32.mrb[0].mxu0
  %v4541 = vadd.f32 0.0, %v4540
  %v4542 = vpop.f32.mrb[0].mxu0
  %4543 = vmatprep.mubr.bf16.mxu0 0
  %4544 = vmatmul.mubr.bf16.gmra.mrb[0].mxu0 %v4302
  %v4545 = vpop.f32.mrb[0].mxu0
  %v4546 = vadd.f32 0.0, %v4545
  %v4547 = vpop.f32.mrb[0].mxu0
  %v4548 = vpop.f32.mrb[0].mxu0
  %v4549 = vadd.f32 0.0, %v4548
  %v4550 = vpop.f32.mrb[0].mxu0
  %4551 = vmatprep.mubr.bf16.mxu0 0
  %4552 = vmatmul.mubr.bf16.gmra.mrb[0].mxu0 %v4303
  %v4553 = vpop.f32.mrb[0].mxu0
  %v4554 = vadd.f32 0.0, %v4553
  %v4555 = vpop.f32.mrb[0].mxu0
  %v4556 = vpop.f32.mrb[0].mxu0
  %v4557 = vadd.f32 0.0, %v4556
  %v4558 = vpop.f32.mrb[0].mxu0
  %4559 = vmatprep.mubr.bf16.mxu0 0
  %4560 = vmatmul.mubr.bf16.gmra.mrb[0].mxu0 %v4304
  %v4561 = vpop.f32.mrb[0].mxu0
  %v4562 = vadd.f32 0.0, %v4561
  %v4563 = vpop.f32.mrb[0].mxu0
  %v4564 = vpop.f32.mrb[0].mxu0
  %v4565 = vadd.f32 0.0, %v4564
  %v4566 = vpop.f32.mrb[0].mxu0
  %4567 = vmatprep.mubr.bf16.mxu0 0
  %4568 = vmatmul.mubr.bf16.gmra.mrb[0].mxu0 %v4305
  %v4569 = vpop.f32.mrb[0].mxu0
  %v4570 = vadd.f32 0.0, %v4569
  %v4571 = vpop.f32.mrb[0].mxu0
  %v4572 = vpop.f32.mrb[0].mxu0
  %v4573 = vadd.f32 0.0, %v4572
  %v4574 = vpop.f32.mrb[0].mxu0
  %4575 = vmatprep.mubr.bf16.mxu0 0
  %4576 = vmatmul.mubr.bf16.gmra.mrb[0].mxu0 %v4306
  %v4577 = vpop.f32.mrb[0].mxu0
  %v4578 = vadd.f32 0.0, %v4577
  %v4579 = vpop.f32.mrb[0].mxu0
  %v4580 = vpop.f32.mrb[0].mxu0
  %v4581 = vadd.f32 0.0, %v4580
  %v4582 = vpop.f32.mrb[0].mxu0
  %4583 = vmatprep.mubr.bf16.mxu0 0
  %4584 = vmatmul.mubr.bf16.gmra.mrb[0].mxu0 %v4307
  %v4585 = vpop.f32.mrb[0].mxu0
  %v4586 = vadd.f32 0.0, %v4585
  %v4587 = vpop.f32.mrb[0].mxu0
  %v4588 = vpop.f32.mrb[0].mxu0
  %v4589 = vadd.f32 0.0, %v4588
  %v4590 = vpop.f32.mrb[0].mxu0
  %4591 = vmatprep.mubr.bf16.mxu0 0
  %4592 = vmatmul.mubr.bf16.gmra.mrb[0].mxu0 %v4308
  %v4593 = vpop.f32.mrb[0].mxu0
  %v4594 = vadd.f32 0.0, %v4593
  %v4595 = vpop.f32.mrb[0].mxu0
  %v4596 = vpop.f32.mrb[0].mxu0
  %v4597 = vadd.f32 0.0, %v4596
  %v4598 = vpop.f32.mrb[0].mxu0
  %4599 = vmatprep.mubr.bf16.mxu0 0
  %4600 = vmatmul.mubr.bf16.gmra.mrb[0].mxu0 %v4309
  %v4601 = vpop.f32.mrb[0].mxu0
  %v4602 = vadd.f32 0.0, %v4601
  %v4603 = vpop.f32.mrb[0].mxu0
  %v4604 = vpop.f32.mrb[0].mxu0
  %v4605 = vadd.f32 0.0, %v4604
  %v4606 = vpop.f32.mrb[0].mxu0
  %4607 = vmatprep.mubr.bf16.mxu0 0
  %4608 = vmatmul.mubr.bf16.gmra.mrb[0].mxu0 %v4310
  %v4609 = vpop.f32.mrb[0].mxu0
  %v4610 = vadd.f32 0.0, %v4609
  %v4611 = vpop.f32.mrb[0].mxu0
  %v4612 = vpop.f32.mrb[0].mxu0
  %v4613 = vadd.f32 0.0, %v4612
  %v4614 = vpop.f32.mrb[0].mxu0
  %4615 = vmatprep.mubr.bf16.mxu0 0
  %4616 = vmatmul.mubr.bf16.gmra.mrb[0].mxu0 %v4311
  %v4617 = vpop.f32.mrb[0].mxu0
  %v4618 = vadd.f32 0.0, %v4617
  %v4619 = vpop.f32.mrb[0].mxu0
  %v4620 = vpop.f32.mrb[0].mxu0
  %v4621 = vadd.f32 0.0, %v4620
  %v4622 = vpop.f32.mrb[0].mxu0
  %4623 = vmatprep.mubr.bf16.mxu0 0
  %4624 = vmatmul.mubr.bf16.gmra.mrb[0].mxu0 %v4312
  %v4625 = vpop.f32.mrb[0].mxu0
  %v4626 = vadd.f32 0.0, %v4625
  %v4627 = vpop.f32.mrb[0].mxu0
  %v4628 = vpop.f32.mrb[0].mxu0
  %v4629 = vadd.f32 0.0, %v4628
  %v4630 = vpop.f32.mrb[0].mxu0
  %4631 = vmatprep.mubr.bf16.mxu0 0
  %4632 = vmatmul.mubr.bf16.gmra.mrb[0].mxu0 %v4313
  %v4633 = vpop.f32.mrb[0].mxu0
  %v4634 = vadd.f32 0.0, %v4633
  %v4635 = vpop.f32.mrb[0].mxu0
  %v4636 = vpop.f32.mrb[0].mxu0
  %v4637 = vadd.f32 0.0, %v4636
  %v4638 = vpop.f32.mrb[0].mxu0
  %4639 = vmatprep.mubr.bf16.mxu0 0
  %4640 = vmatmul.mubr.bf16.gmra.mrb[0].mxu0 %v4314
  %v4641 = vpop.f32.mrb[0].mxu0
  %v4642 = vadd.f32 0.0, %v4641
  %v4643 = vpop.f32.mrb[0].mxu0
  %v4644 = vpop.f32.mrb[0].mxu0
  %v4645 = vadd.f32 0.0, %v4644
  %v4646 = vpop.f32.mrb[0].mxu0
  %4647 = vmatprep.mubr.bf16.mxu0 0
  %4648 = vmatmul.mubr.bf16.gmra.mrb[0].mxu0 %v4315
  %v4649 = vpop.f32.mrb[0].mxu0
  %v4650 = vadd.f32 0.0, %v4649
  %v4651 = vpop.f32.mrb[0].mxu0
  %v4652 = vpop.f32.mrb[0].mxu0
  %v4653 = vadd.f32 0.0, %v4652
  %v4654 = vpop.f32.mrb[0].mxu0
  %4655 = vmatprep.mubr.bf16.mxu0 0
  %4656 = vmatmul.mubr.bf16.gmra.mrb[0].mxu0 %v4316
  %v4657 = vpop.f32.mrb[0].mxu0
  %v4658 = vadd.f32 0.0, %v4657
  %v4659 = vpop.f32.mrb[0].mxu0
  %v4660 = vpop.f32.mrb[0].mxu0
  %v4661 = vadd.f32 0.0, %v4660
  %v4662 = vpop.f32.mrb[0].mxu0
  %4663 = vmatprep.mubr.bf16.mxu0 0
  %4664 = vmatmul.mubr.bf16.gmra.mrb[0].mxu0 %v4317
  %v4665 = vpop.f32.mrb[0].mxu0
  %v4666 = vadd.f32 0.0, %v4665
  %v4667 = vpop.f32.mrb[0].mxu0
  %v4668 = vpop.f32.mrb[0].mxu0
  %v4669 = vadd.f32 0.0, %v4668
  %v4670 = vpop.f32.mrb[0].mxu0
  %4671 = vdwg.mxu0
  %v4672 = vadd.f32 %v4158, %v4418
  %v4673 = vadd.f32 %v4159, %v4421
  %v4674 = vadd.f32 %v4160, %v4426
  %v4675 = vadd.f32 %v4161, %v4429
  %v4676 = vadd.f32 %v4162, %v4434
  %v4677 = vadd.f32 %v4163, %v4437
  %v4678 = vadd.f32 %v4164, %v4442
  %v4679 = vadd.f32 %v4165, %v4445
  %v4680 = vadd.f32 %v4166, %v4450
  %v4681 = vadd.f32 %v4167, %v4453
  %v4682 = vadd.f32 %v4168, %v4458
  %v4683 = vadd.f32 %v4169, %v4461
  %v4684 = vadd.f32 %v4170, %v4466
  %v4685 = vadd.f32 %v4171, %v4469
  %v4686 = vadd.f32 %v4172, %v4474
  %v4687 = vadd.f32 %v4173, %v4477
  %v4688 = vadd.f32 %v4174, %v4482
  %v4689 = vadd.f32 %v4175, %v4485
  %v4690 = vadd.f32 %v4176, %v4490
  %v4691 = vadd.f32 %v4177, %v4493
  %v4692 = vadd.f32 %v4178, %v4498
  %v4693 = vadd.f32 %v4179, %v4501
  %v4694 = vadd.f32 %v4180, %v4506
  %v4695 = vadd.f32 %v4181, %v4509
  %v4696 = vadd.f32 %v4182, %v4514
  %v4697 = vadd.f32 %v4183, %v4517
  %v4698 = vadd.f32 %v4184, %v4522
  %v4699 = vadd.f32 %v4185, %v4525
  %v4700 = vadd.f32 %v4186, %v4530
  %v4701 = vadd.f32 %v4187, %v4533
  %v4702 = vadd.f32 %v4188, %v4538
  %v4703 = vadd.f32 %v4189, %v4541
  %v4704 = vadd.f32 %v4190, %v4546
  %v4705 = vadd.f32 %v4191, %v4549
  %v4706 = vadd.f32 %v4192, %v4554
  %v4707 = vadd.f32 %v4193, %v4557
  %v4708 = vadd.f32 %v4194, %v4562
  %v4709 = vadd.f32 %v4195, %v4565
  %v4710 = vadd.f32 %v4196, %v4570
  %v4711 = vadd.f32 %v4197, %v4573
  %v4712 = vadd.f32 %v4198, %v4578
  %v4713 = vadd.f32 %v4199, %v4581
  %v4714 = vadd.f32 %v4200, %v4586
  %v4715 = vadd.f32 %v4201, %v4589
  %v4716 = vadd.f32 %v4202, %v4594
  %v4717 = vadd.f32 %v4203, %v4597
  %v4718 = vadd.f32 %v4204, %v4602
  %v4719 = vadd.f32 %v4205, %v4605
  %v4720 = vadd.f32 %v4206, %v4610
  %v4721 = vadd.f32 %v4207, %v4613
  %v4722 = vadd.f32 %v4208, %v4618
  %v4723 = vadd.f32 %v4209, %v4621
  %v4724 = vadd.f32 %v4210, %v4626
  %v4725 = vadd.f32 %v4211, %v4629
  %v4726 = vadd.f32 %v4212, %v4634
  %v4727 = vadd.f32 %v4213, %v4637
  %v4728 = vadd.f32 %v4214, %v4642
  %v4729 = vadd.f32 %v4215, %v4645
  %v4730 = vadd.f32 %v4216, %v4650
  %v4731 = vadd.f32 %v4217, %v4653
  %v4732 = vadd.f32 %v4218, %v4658
  %v4733 = vadd.f32 %v4219, %v4661
  %v4734 = vadd.f32 %v4220, %v4666
  %v4735 = vadd.f32 %v4221, %v4669
  %v4736 = vlaneseq
  %v4737 = vshrl.u32 %v4736, 7
  %v4738 = vsub.s32 0, %v4737
  %v4739 = vrot.slane %v22, %v4738
  %v4740 = vadd.f32 %v4672, %v4739
  %v4741 = vadd.f32 %v4673, %v4739
  %v4742 = vadd.f32 %v4674, %v4739
  %v4743 = vadd.f32 %v4675, %v4739
  %v4744 = vadd.f32 %v4676, %v4739
  %v4745 = vadd.f32 %v4677, %v4739
  %v4746 = vadd.f32 %v4678, %v4739
  %v4747 = vadd.f32 %v4679, %v4739
  %v4748 = vadd.f32 %v4680, %v4739
  %v4749 = vadd.f32 %v4681, %v4739
  %v4750 = vadd.f32 %v4682, %v4739
  %v4751 = vadd.f32 %v4683, %v4739
  %v4752 = vadd.f32 %v4684, %v4739
  %v4753 = vadd.f32 %v4685, %v4739
  %v4754 = vadd.f32 %v4686, %v4739
  %v4755 = vadd.f32 %v4687, %v4739
  %v4756 = vadd.f32 %v4688, %v4739
  %v4757 = vadd.f32 %v4689, %v4739
  %v4758 = vadd.f32 %v4690, %v4739
  %v4759 = vadd.f32 %v4691, %v4739
  %v4760 = vadd.f32 %v4692, %v4739
  %v4761 = vadd.f32 %v4693, %v4739
  %v4762 = vadd.f32 %v4694, %v4739
  %v4763 = vadd.f32 %v4695, %v4739
  %v4764 = vadd.f32 %v4696, %v4739
  %v4765 = vadd.f32 %v4697, %v4739
  %v4766 = vadd.f32 %v4698, %v4739
  %v4767 = vadd.f32 %v4699, %v4739
  %v4768 = vadd.f32 %v4700, %v4739
  %v4769 = vadd.f32 %v4701, %v4739
  %v4770 = vadd.f32 %v4702, %v4739
  %v4771 = vadd.f32 %v4703, %v4739
  %v4772 = vadd.f32 %v4704, %v4739
  %v4773 = vadd.f32 %v4705, %v4739
  %v4774 = vadd.f32 %v4706, %v4739
  %v4775 = vadd.f32 %v4707, %v4739
  %v4776 = vadd.f32 %v4708, %v4739
  %v4777 = vadd.f32 %v4709, %v4739
  %v4778 = vadd.f32 %v4710, %v4739
  %v4779 = vadd.f32 %v4711, %v4739
  %v4780 = vadd.f32 %v4712, %v4739
  %v4781 = vadd.f32 %v4713, %v4739
  %v4782 = vadd.f32 %v4714, %v4739
  %v4783 = vadd.f32 %v4715, %v4739
  %v4784 = vadd.f32 %v4716, %v4739
  %v4785 = vadd.f32 %v4717, %v4739
  %v4786 = vadd.f32 %v4718, %v4739
  %v4787 = vadd.f32 %v4719, %v4739
  %v4788 = vadd.f32 %v4720, %v4739
  %v4789 = vadd.f32 %v4721, %v4739
  %v4790 = vadd.f32 %v4722, %v4739
  %v4791 = vadd.f32 %v4723, %v4739
  %v4792 = vadd.f32 %v4724, %v4739
  %v4793 = vadd.f32 %v4725, %v4739
  %v4794 = vadd.f32 %v4726, %v4739
  %v4795 = vadd.f32 %v4727, %v4739
  %v4796 = vadd.f32 %v4728, %v4739
  %v4797 = vadd.f32 %v4729, %v4739
  %v4798 = vadd.f32 %v4730, %v4739
  %v4799 = vadd.f32 %v4731, %v4739
  %v4800 = vadd.f32 %v4732, %v4739
  %v4801 = vadd.f32 %v4733, %v4739
  %v4802 = vadd.f32 %v4734, %v4739
  %v4803 = vadd.f32 %v4735, %v4739
  %v4804 = vadd.f32 %v4740, %v4741
  %v4805 = vadd.f32 %v4804, %v4742
  %v4806 = vadd.f32 %v4805, %v4743
  %v4807 = vadd.f32 %v4806, %v4744
  %v4808 = vadd.f32 %v4807, %v4745
  %v4809 = vadd.f32 %v4808, %v4746
  %v4810 = vadd.f32 %v4809, %v4747
  %v4811 = vadd.f32 %v4810, %v4748
  %v4812 = vadd.f32 %v4811, %v4749
  %v4813 = vadd.f32 %v4812, %v4750
  %v4814 = vadd.f32 %v4813, %v4751
  %v4815 = vadd.f32 %v4814, %v4752
  %v4816 = vadd.f32 %v4815, %v4753
  %v4817 = vadd.f32 %v4816, %v4754
  %v4818 = vadd.f32 %v4817, %v4755
  %v4819 = vadd.f32 %v4818, %v4756
  %v4820 = vadd.f32 %v4819, %v4757
  %v4821 = vadd.f32 %v4820, %v4758
  %v4822 = vadd.f32 %v4821, %v4759
  %v4823 = vadd.f32 %v4822, %v4760
  %v4824 = vadd.f32 %v4823, %v4761
  %v4825 = vadd.f32 %v4824, %v4762
  %v4826 = vadd.f32 %v4825, %v4763
  %v4827 = vadd.f32 %v4826, %v4764
  %v4828 = vadd.f32 %v4827, %v4765
  %v4829 = vadd.f32 %v4828, %v4766
  %v4830 = vadd.f32 %v4829, %v4767
  %v4831 = vadd.f32 %v4830, %v4768
  %v4832 = vadd.f32 %v4831, %v4769
  %v4833 = vadd.f32 %v4832, %v4770
  %v4834 = vadd.f32 %v4833, %v4771
  %v4835 = vadd.f32 %v4834, %v4772
  %v4836 = vadd.f32 %v4835, %v4773
  %v4837 = vadd.f32 %v4836, %v4774
  %v4838 = vadd.f32 %v4837, %v4775
  %v4839 = vadd.f32 %v4838, %v4776
  %v4840 = vadd.f32 %v4839, %v4777
  %v4841 = vadd.f32 %v4840, %v4778
  %v4842 = vadd.f32 %v4841, %v4779
  %v4843 = vadd.f32 %v4842, %v4780
  %v4844 = vadd.f32 %v4843, %v4781
  %v4845 = vadd.f32 %v4844, %v4782
  %v4846 = vadd.f32 %v4845, %v4783
  %v4847 = vadd.f32 %v4846, %v4784
  %v4848 = vadd.f32 %v4847, %v4785
  %v4849 = vadd.f32 %v4848, %v4786
  %v4850 = vadd.f32 %v4849, %v4787
  %v4851 = vadd.f32 %v4850, %v4788
  %v4852 = vadd.f32 %v4851, %v4789
  %v4853 = vadd.f32 %v4852, %v4790
  %v4854 = vadd.f32 %v4853, %v4791
  %v4855 = vadd.f32 %v4854, %v4792
  %v4856 = vadd.f32 %v4855, %v4793
  %v4857 = vadd.f32 %v4856, %v4794
  %v4858 = vadd.f32 %v4857, %v4795
  %v4859 = vadd.f32 %v4858, %v4796
  %v4860 = vadd.f32 %v4859, %v4797
  %v4861 = vadd.f32 %v4860, %v4798
  %v4862 = vadd.f32 %v4861, %v4799
  %v4863 = vadd.f32 %v4862, %v4800
  %v4864 = vadd.f32 %v4863, %v4801
  %v4865 = vadd.f32 %v4864, %v4802
  %v4866 = vadd.f32 %v4865, %v4803
  %v4867 = vrot.slane %v4866, 4
  %v4868 = vadd.f32 %v4866, %v4867
  %v4869 = vrot.slane %v4868, 2
  %v4870 = vadd.f32 %v4868, %v4869
  %v4871 = vrot.slane %v4870, 1
  %v4872 = vadd.f32 %v4870, %v4871
  %v4873 = vmul.f32 %v4740, %v4740
  %v4874 = vmul.f32 %v4741, %v4741
  %v4875 = vmul.f32 %v4742, %v4742
  %v4876 = vmul.f32 %v4743, %v4743
  %v4877 = vmul.f32 %v4744, %v4744
  %v4878 = vmul.f32 %v4745, %v4745
  %v4879 = vmul.f32 %v4746, %v4746
  %v4880 = vmul.f32 %v4747, %v4747
  %v4881 = vmul.f32 %v4748, %v4748
  %v4882 = vmul.f32 %v4749, %v4749
  %v4883 = vmul.f32 %v4750, %v4750
  %v4884 = vmul.f32 %v4751, %v4751
  %v4885 = vmul.f32 %v4752, %v4752
  %v4886 = vmul.f32 %v4753, %v4753
  %v4887 = vmul.f32 %v4754, %v4754
  %v4888 = vmul.f32 %v4755, %v4755
  %v4889 = vmul.f32 %v4756, %v4756
  %v4890 = vmul.f32 %v4757, %v4757
  %v4891 = vmul.f32 %v4758, %v4758
  %v4892 = vmul.f32 %v4759, %v4759
  %v4893 = vmul.f32 %v4760, %v4760
  %v4894 = vmul.f32 %v4761, %v4761
  %v4895 = vmul.f32 %v4762, %v4762
  %v4896 = vmul.f32 %v4763, %v4763
  %v4897 = vmul.f32 %v4764, %v4764
  %v4898 = vmul.f32 %v4765, %v4765
  %v4899 = vmul.f32 %v4766, %v4766
  %v4900 = vmul.f32 %v4767, %v4767
  %v4901 = vmul.f32 %v4768, %v4768
  %v4902 = vmul.f32 %v4769, %v4769
  %v4903 = vmul.f32 %v4770, %v4770
  %v4904 = vmul.f32 %v4771, %v4771
  %v4905 = vmul.f32 %v4772, %v4772
  %v4906 = vmul.f32 %v4773, %v4773
  %v4907 = vmul.f32 %v4774, %v4774
  %v4908 = vmul.f32 %v4775, %v4775
  %v4909 = vmul.f32 %v4776, %v4776
  %v4910 = vmul.f32 %v4777, %v4777
  %v4911 = vmul.f32 %v4778, %v4778
  %v4912 = vmul.f32 %v4779, %v4779
  %v4913 = vmul.f32 %v4780, %v4780
  %v4914 = vmul.f32 %v4781, %v4781
  %v4915 = vmul.f32 %v4782, %v4782
  %v4916 = vmul.f32 %v4783, %v4783
  %v4917 = vmul.f32 %v4784, %v4784
  %v4918 = vmul.f32 %v4785, %v4785
  %v4919 = vmul.f32 %v4786, %v4786
  %v4920 = vmul.f32 %v4787, %v4787
  %v4921 = vmul.f32 %v4788, %v4788
  %v4922 = vmul.f32 %v4789, %v4789
  %v4923 = vmul.f32 %v4790, %v4790
  %v4924 = vmul.f32 %v4791, %v4791
  %v4925 = vmul.f32 %v4792, %v4792
  %v4926 = vmul.f32 %v4793, %v4793
  %v4927 = vmul.f32 %v4794, %v4794
  %v4928 = vmul.f32 %v4795, %v4795
  %v4929 = vmul.f32 %v4796, %v4796
  %v4930 = vmul.f32 %v4797, %v4797
  %v4931 = vmul.f32 %v4798, %v4798
  %v4932 = vmul.f32 %v4799, %v4799
  %v4933 = vmul.f32 %v4800, %v4800
  %v4934 = vmul.f32 %v4801, %v4801
  %v4935 = vmul.f32 %v4802, %v4802
  %v4936 = vmul.f32 %v4803, %v4803
  %v4937 = vadd.f32 %v4873, %v4874
  %v4938 = vadd.f32 %v4937, %v4875
  %v4939 = vadd.f32 %v4938, %v4876
  %v4940 = vadd.f32 %v4939, %v4877
  %v4941 = vadd.f32 %v4940, %v4878
  %v4942 = vadd.f32 %v4941, %v4879
  %v4943 = vadd.f32 %v4942, %v4880
  %v4944 = vadd.f32 %v4943, %v4881
  %v4945 = vadd.f32 %v4944, %v4882
  %v4946 = vadd.f32 %v4945, %v4883
  %v4947 = vadd.f32 %v4946, %v4884
  %v4948 = vadd.f32 %v4947, %v4885
  %v4949 = vadd.f32 %v4948, %v4886
  %v4950 = vadd.f32 %v4949, %v4887
  %v4951 = vadd.f32 %v4950, %v4888
  %v4952 = vadd.f32 %v4951, %v4889
  %v4953 = vadd.f32 %v4952, %v4890
  %v4954 = vadd.f32 %v4953, %v4891
  %v4955 = vadd.f32 %v4954, %v4892
  %v4956 = vadd.f32 %v4955, %v4893
  %v4957 = vadd.f32 %v4956, %v4894
  %v4958 = vadd.f32 %v4957, %v4895
  %v4959 = vadd.f32 %v4958, %v4896
  %v4960 = vadd.f32 %v4959, %v4897
  %v4961 = vadd.f32 %v4960, %v4898
  %v4962 = vadd.f32 %v4961, %v4899
  %v4963 = vadd.f32 %v4962, %v4900
  %v4964 = vadd.f32 %v4963, %v4901
  %v4965 = vadd.f32 %v4964, %v4902
  %v4966 = vadd.f32 %v4965, %v4903
  %v4967 = vadd.f32 %v4966, %v4904
  %v4968 = vadd.f32 %v4967, %v4905
  %v4969 = vadd.f32 %v4968, %v4906
  %v4970 = vadd.f32 %v4969, %v4907
  %v4971 = vadd.f32 %v4970, %v4908
  %v4972 = vadd.f32 %v4971, %v4909
  %v4973 = vadd.f32 %v4972, %v4910
  %v4974 = vadd.f32 %v4973, %v4911
  %v4975 = vadd.f32 %v4974, %v4912
  %v4976 = vadd.f32 %v4975, %v4913
  %v4977 = vadd.f32 %v4976, %v4914
  %v4978 = vadd.f32 %v4977, %v4915
  %v4979 = vadd.f32 %v4978, %v4916
  %v4980 = vadd.f32 %v4979, %v4917
  %v4981 = vadd.f32 %v4980, %v4918
  %v4982 = vadd.f32 %v4981, %v4919
  %v4983 = vadd.f32 %v4982, %v4920
  %v4984 = vadd.f32 %v4983, %v4921
  %v4985 = vadd.f32 %v4984, %v4922
  %v4986 = vadd.f32 %v4985, %v4923
  %v4987 = vadd.f32 %v4986, %v4924
  %v4988 = vadd.f32 %v4987, %v4925
  %v4989 = vadd.f32 %v4988, %v4926
  %v4990 = vadd.f32 %v4989, %v4927
  %v4991 = vadd.f32 %v4990, %v4928
  %v4992 = vadd.f32 %v4991, %v4929
  %v4993 = vadd.f32 %v4992, %v4930
  %v4994 = vadd.f32 %v4993, %v4931
  %v4995 = vadd.f32 %v4994, %v4932
  %v4996 = vadd.f32 %v4995, %v4933
  %v4997 = vadd.f32 %v4996, %v4934
  %v4998 = vadd.f32 %v4997, %v4935
  %v4999 = vadd.f32 %v4998, %v4936
  %v5000 = vrot.slane %v4999, 4
  %v5001 = vadd.f32 %v4999, %v5000
  %v5002 = vrot.slane %v5001, 2
  %v5003 = vadd.f32 %v5001, %v5002
  %v5004 = vrot.slane %v5003, 1
  %v5005 = vadd.f32 %v5003, %v5004
  %v5006 = vmul.f32 %v4872, 0.001953125
  %v5007 = vmul.f32 %v5005, 0.001953125
  %v5008 = vmul.f32 %v5006, %v5006
  %v5009 = vsub.f32 %v5007, %v5008
  %v5010 = vadd.f32 %v5009, 1e-05
  %v5011 = vrsqrt.pop %v5010
  %v5012 = vmul.f32 %v22, %v5011
  %v5013 = vmul.f32 %v5006, %v5012
  %v5015 = vrot.slane %v5013, 7
  %v5017 = vsub.f32 %v22, %v5015
  %v5018 = vlaneseq
  %v5019 = vshrl.u32 %v5018, 7
  %v5020 = vsub.s32 1, %v5019
  %v5021 = vrot.slane %v5012, %v5020
  %v5022 = vmul.f32 %v4740, %v5021
  %v5023 = vmul.f32 %v4741, %v5021
  %v5024 = vmul.f32 %v4742, %v5021
  %v5025 = vmul.f32 %v4743, %v5021
  %v5026 = vmul.f32 %v4744, %v5021
  %v5027 = vmul.f32 %v4745, %v5021
  %v5028 = vmul.f32 %v4746, %v5021
  %v5029 = vmul.f32 %v4747, %v5021
  %v5030 = vmul.f32 %v4748, %v5021
  %v5031 = vmul.f32 %v4749, %v5021
  %v5032 = vmul.f32 %v4750, %v5021
  %v5033 = vmul.f32 %v4751, %v5021
  %v5034 = vmul.f32 %v4752, %v5021
  %v5035 = vmul.f32 %v4753, %v5021
  %v5036 = vmul.f32 %v4754, %v5021
  %v5037 = vmul.f32 %v4755, %v5021
  %v5038 = vmul.f32 %v4756, %v5021
  %v5039 = vmul.f32 %v4757, %v5021
  %v5040 = vmul.f32 %v4758, %v5021
  %v5041 = vmul.f32 %v4759, %v5021
  %v5042 = vmul.f32 %v4760, %v5021
  %v5043 = vmul.f32 %v4761, %v5021
  %v5044 = vmul.f32 %v4762, %v5021
  %v5045 = vmul.f32 %v4763, %v5021
  %v5046 = vmul.f32 %v4764, %v5021
  %v5047 = vmul.f32 %v4765, %v5021
  %v5048 = vmul.f32 %v4766, %v5021
  %v5049 = vmul.f32 %v4767, %v5021
  %v5050 = vmul.f32 %v4768, %v5021
  %v5051 = vmul.f32 %v4769, %v5021
  %v5052 = vmul.f32 %v4770, %v5021
  %v5053 = vmul.f32 %v4771, %v5021
  %v5054 = vmul.f32 %v4772, %v5021
  %v5055 = vmul.f32 %v4773, %v5021
  %v5056 = vmul.f32 %v4774, %v5021
  %v5057 = vmul.f32 %v4775, %v5021
  %v5058 = vmul.f32 %v4776, %v5021
  %v5059 = vmul.f32 %v4777, %v5021
  %v5060 = vmul.f32 %v4778, %v5021
  %v5061 = vmul.f32 %v4779, %v5021
  %v5062 = vmul.f32 %v4780, %v5021
  %v5063 = vmul.f32 %v4781, %v5021
  %v5064 = vmul.f32 %v4782, %v5021
  %v5065 = vmul.f32 %v4783, %v5021
  %v5066 = vmul.f32 %v4784, %v5021
  %v5067 = vmul.f32 %v4785, %v5021
  %v5068 = vmul.f32 %v4786, %v5021
  %v5069 = vmul.f32 %v4787, %v5021
  %v5070 = vmul.f32 %v4788, %v5021
  %v5071 = vmul.f32 %v4789, %v5021
  %v5072 = vmul.f32 %v4790, %v5021
  %v5073 = vmul.f32 %v4791, %v5021
  %v5074 = vmul.f32 %v4792, %v5021
  %v5075 = vmul.f32 %v4793, %v5021
  %v5076 = vmul.f32 %v4794, %v5021
  %v5077 = vmul.f32 %v4795, %v5021
  %v5078 = vmul.f32 %v4796, %v5021
  %v5079 = vmul.f32 %v4797, %v5021
  %v5080 = vmul.f32 %v4798, %v5021
  %v5081 = vmul.f32 %v4799, %v5021
  %v5082 = vmul.f32 %v4800, %v5021
  %v5083 = vmul.f32 %v4801, %v5021
  %v5084 = vmul.f32 %v4802, %v5021
  %v5085 = vmul.f32 %v4803, %v5021
  %v5086 = vlaneseq
  %v5087 = vshrl.u32 %v5086, 7
  %v5088 = vsub.s32 2, %v5087
  %v5089 = vrot.slane %v5017, %v5088
  %v5090 = vadd.f32 %v5022, %v5089
  %v5091 = vadd.f32 %v5023, %v5089
  %v5092 = vadd.f32 %v5024, %v5089
  %v5093 = vadd.f32 %v5025, %v5089
  %v5094 = vadd.f32 %v5026, %v5089
  %v5095 = vadd.f32 %v5027, %v5089
  %v5096 = vadd.f32 %v5028, %v5089
  %v5097 = vadd.f32 %v5029, %v5089
  %v5098 = vadd.f32 %v5030, %v5089
  %v5099 = vadd.f32 %v5031, %v5089
  %v5100 = vadd.f32 %v5032, %v5089
  %v5101 = vadd.f32 %v5033, %v5089
  %v5102 = vadd.f32 %v5034, %v5089
  %v5103 = vadd.f32 %v5035, %v5089
  %v5104 = vadd.f32 %v5036, %v5089
  %v5105 = vadd.f32 %v5037, %v5089
  %v5106 = vadd.f32 %v5038, %v5089
  %v5107 = vadd.f32 %v5039, %v5089
  %v5108 = vadd.f32 %v5040, %v5089
  %v5109 = vadd.f32 %v5041, %v5089
  %v5110 = vadd.f32 %v5042, %v5089
  %v5111 = vadd.f32 %v5043, %v5089
  %v5112 = vadd.f32 %v5044, %v5089
  %v5113 = vadd.f32 %v5045, %v5089
  %v5114 = vadd.f32 %v5046, %v5089
  %v5115 = vadd.f32 %v5047, %v5089
  %v5116 = vadd.f32 %v5048, %v5089
  %v5117 = vadd.f32 %v5049, %v5089
  %v5118 = vadd.f32 %v5050, %v5089
  %v5119 = vadd.f32 %v5051, %v5089
  %v5120 = vadd.f32 %v5052, %v5089
  %v5121 = vadd.f32 %v5053, %v5089
  %v5122 = vadd.f32 %v5054, %v5089
  %v5123 = vadd.f32 %v5055, %v5089
  %v5124 = vadd.f32 %v5056, %v5089
  %v5125 = vadd.f32 %v5057, %v5089
  %v5126 = vadd.f32 %v5058, %v5089
  %v5127 = vadd.f32 %v5059, %v5089
  %v5128 = vadd.f32 %v5060, %v5089
  %v5129 = vadd.f32 %v5061, %v5089
  %v5130 = vadd.f32 %v5062, %v5089
  %v5131 = vadd.f32 %v5063, %v5089
  %v5132 = vadd.f32 %v5064, %v5089
  %v5133 = vadd.f32 %v5065, %v5089
  %v5134 = vadd.f32 %v5066, %v5089
  %v5135 = vadd.f32 %v5067, %v5089
  %v5136 = vadd.f32 %v5068, %v5089
  %v5137 = vadd.f32 %v5069, %v5089
  %v5138 = vadd.f32 %v5070, %v5089
  %v5139 = vadd.f32 %v5071, %v5089
  %v5140 = vadd.f32 %v5072, %v5089
  %v5141 = vadd.f32 %v5073, %v5089
  %v5142 = vadd.f32 %v5074, %v5089
  %v5143 = vadd.f32 %v5075, %v5089
  %v5144 = vadd.f32 %v5076, %v5089
  %v5145 = vadd.f32 %v5077, %v5089
  %v5146 = vadd.f32 %v5078, %v5089
  %v5147 = vadd.f32 %v5079, %v5089
  %v5148 = vadd.f32 %v5080, %v5089
  %v5149 = vadd.f32 %v5081, %v5089
  %v5150 = vadd.f32 %v5082, %v5089
  %v5151 = vadd.f32 %v5083, %v5089
  %v5152 = vadd.f32 %v5084, %v5089
  %v5153 = vadd.f32 %v5085, %v5089
  %vm5154 = vcmp.gt.f32.partialorder %v5090, 0.0
  %vm5155 = vcmp.gt.f32.partialorder %v5091, 0.0
  %vm5156 = vcmp.gt.f32.partialorder %v5092, 0.0
  %vm5157 = vcmp.gt.f32.partialorder %v5093, 0.0
  %vm5158 = vcmp.gt.f32.partialorder %v5094, 0.0
  %vm5159 = vcmp.gt.f32.partialorder %v5095, 0.0
  %vm5160 = vcmp.gt.f32.partialorder %v5096, 0.0
  %vm5161 = vcmp.gt.f32.partialorder %v5097, 0.0
  %vm5162 = vcmp.gt.f32.partialorder %v5098, 0.0
  %vm5163 = vcmp.gt.f32.partialorder %v5099, 0.0
  %vm5164 = vcmp.gt.f32.partialorder %v5100, 0.0
  %vm5165 = vcmp.gt.f32.partialorder %v5101, 0.0
  %vm5166 = vcmp.gt.f32.partialorder %v5102, 0.0
  %vm5167 = vcmp.gt.f32.partialorder %v5103, 0.0
  %vm5168 = vcmp.gt.f32.partialorder %v5104, 0.0
  %vm5169 = vcmp.gt.f32.partialorder %v5105, 0.0
  %vm5170 = vcmp.gt.f32.partialorder %v5106, 0.0
  %vm5171 = vcmp.gt.f32.partialorder %v5107, 0.0
  %vm5172 = vcmp.gt.f32.partialorder %v5108, 0.0
  %vm5173 = vcmp.gt.f32.partialorder %v5109, 0.0
  %vm5174 = vcmp.gt.f32.partialorder %v5110, 0.0
  %vm5175 = vcmp.gt.f32.partialorder %v5111, 0.0
  %vm5176 = vcmp.gt.f32.partialorder %v5112, 0.0
  %vm5177 = vcmp.gt.f32.partialorder %v5113, 0.0
  %vm5178 = vcmp.gt.f32.partialorder %v5114, 0.0
  %vm5179 = vcmp.gt.f32.partialorder %v5115, 0.0
  %vm5180 = vcmp.gt.f32.partialorder %v5116, 0.0
  %vm5181 = vcmp.gt.f32.partialorder %v5117, 0.0
  %vm5182 = vcmp.gt.f32.partialorder %v5118, 0.0
  %vm5183 = vcmp.gt.f32.partialorder %v5119, 0.0
  %vm5184 = vcmp.gt.f32.partialorder %v5120, 0.0
  %vm5185 = vcmp.gt.f32.partialorder %v5121, 0.0
  %vm5186 = vcmp.gt.f32.partialorder %v5122, 0.0
  %vm5187 = vcmp.gt.f32.partialorder %v5123, 0.0
  %vm5188 = vcmp.gt.f32.partialorder %v5124, 0.0
  %vm5189 = vcmp.gt.f32.partialorder %v5125, 0.0
  %vm5190 = vcmp.gt.f32.partialorder %v5126, 0.0
  %vm5191 = vcmp.gt.f32.partialorder %v5127, 0.0
  %vm5192 = vcmp.gt.f32.partialorder %v5128, 0.0
  %vm5193 = vcmp.gt.f32.partialorder %v5129, 0.0
  %vm5194 = vcmp.gt.f32.partialorder %v5130, 0.0
  %vm5195 = vcmp.gt.f32.partialorder %v5131, 0.0
  %vm5196 = vcmp.gt.f32.partialorder %v5132, 0.0
  %vm5197 = vcmp.gt.f32.partialorder %v5133, 0.0
  %vm5198 = vcmp.gt.f32.partialorder %v5134, 0.0
  %vm5199 = vcmp.gt.f32.partialorder %v5135, 0.0
  %vm5200 = vcmp.gt.f32.partialorder %v5136, 0.0
  %vm5201 = vcmp.gt.f32.partialorder %v5137, 0.0
  %vm5202 = vcmp.gt.f32.partialorder %v5138, 0.0
  %vm5203 = vcmp.gt.f32.partialorder %v5139, 0.0
  %vm5204 = vcmp.gt.f32.partialorder %v5140, 0.0
  %vm5205 = vcmp.gt.f32.partialorder %v5141, 0.0
  %vm5206 = vcmp.gt.f32.partialorder %v5142, 0.0
  %vm5207 = vcmp.gt.f32.partialorder %v5143, 0.0
  %vm5208 = vcmp.gt.f32.partialorder %v5144, 0.0
  %vm5209 = vcmp.gt.f32.partialorder %v5145, 0.0
  %vm5210 = vcmp.gt.f32.partialorder %v5146, 0.0
  %vm5211 = vcmp.gt.f32.partialorder %v5147, 0.0
  %vm5212 = vcmp.gt.f32.partialorder %v5148, 0.0
  %vm5213 = vcmp.gt.f32.partialorder %v5149, 0.0
  %vm5214 = vcmp.gt.f32.partialorder %v5150, 0.0
  %vm5215 = vcmp.gt.f32.partialorder %v5151, 0.0
  %vm5216 = vcmp.gt.f32.partialorder %v5152, 0.0
  %vm5217 = vcmp.gt.f32.partialorder %v5153, 0.0
  %v5218 = vstv %s23
  %v5219 = vmul.f32 %v5218, %v5090
  %v5220 = vmul.f32 %v5218, %v5091
  %v5221 = vmul.f32 %v5218, %v5092
  %v5222 = vmul.f32 %v5218, %v5093
  %v5223 = vmul.f32 %v5218, %v5094
  %v5224 = vmul.f32 %v5218, %v5095
  %v5225 = vmul.f32 %v5218, %v5096
  %v5226 = vmul.f32 %v5218, %v5097
  %v5227 = vmul.f32 %v5218, %v5098
  %v5228 = vmul.f32 %v5218, %v5099
  %v5229 = vmul.f32 %v5218, %v5100
  %v5230 = vmul.f32 %v5218, %v5101
  %v5231 = vmul.f32 %v5218, %v5102
  %v5232 = vmul.f32 %v5218, %v5103
  %v5233 = vmul.f32 %v5218, %v5104
  %v5234 = vmul.f32 %v5218, %v5105
  %v5235 = vmul.f32 %v5218, %v5106
  %v5236 = vmul.f32 %v5218, %v5107
  %v5237 = vmul.f32 %v5218, %v5108
  %v5238 = vmul.f32 %v5218, %v5109
  %v5239 = vmul.f32 %v5218, %v5110
  %v5240 = vmul.f32 %v5218, %v5111
  %v5241 = vmul.f32 %v5218, %v5112
  %v5242 = vmul.f32 %v5218, %v5113
  %v5243 = vmul.f32 %v5218, %v5114
  %v5244 = vmul.f32 %v5218, %v5115
  %v5245 = vmul.f32 %v5218, %v5116
  %v5246 = vmul.f32 %v5218, %v5117
  %v5247 = vmul.f32 %v5218, %v5118
  %v5248 = vmul.f32 %v5218, %v5119
  %v5249 = vmul.f32 %v5218, %v5120
  %v5250 = vmul.f32 %v5218, %v5121
  %v5251 = vmul.f32 %v5218, %v5122
  %v5252 = vmul.f32 %v5218, %v5123
  %v5253 = vmul.f32 %v5218, %v5124
  %v5254 = vmul.f32 %v5218, %v5125
  %v5255 = vmul.f32 %v5218, %v5126
  %v5256 = vmul.f32 %v5218, %v5127
  %v5257 = vmul.f32 %v5218, %v5128
  %v5258 = vmul.f32 %v5218, %v5129
  %v5259 = vmul.f32 %v5218, %v5130
  %v5260 = vmul.f32 %v5218, %v5131
  %v5261 = vmul.f32 %v5218, %v5132
  %v5262 = vmul.f32 %v5218, %v5133
  %v5263 = vmul.f32 %v5218, %v5134
  %v5264 = vmul.f32 %v5218, %v5135
  %v5265 = vmul.f32 %v5218, %v5136
  %v5266 = vmul.f32 %v5218, %v5137
  %v5267 = vmul.f32 %v5218, %v5138
  %v5268 = vmul.f32 %v5218, %v5139
  %v5269 = vmul.f32 %v5218, %v5140
  %v5270 = vmul.f32 %v5218, %v5141
  %v5271 = vmul.f32 %v5218, %v5142
  %v5272 = vmul.f32 %v5218, %v5143
  %v5273 = vmul.f32 %v5218, %v5144
  %v5274 = vmul.f32 %v5218, %v5145
  %v5275 = vmul.f32 %v5218, %v5146
  %v5276 = vmul.f32 %v5218, %v5147
  %v5277 = vmul.f32 %v5218, %v5148
  %v5278 = vmul.f32 %v5218, %v5149
  %v5279 = vmul.f32 %v5218, %v5150
  %v5280 = vmul.f32 %v5218, %v5151
  %v5281 = vmul.f32 %v5218, %v5152
  %v5282 = vmul.f32 %v5218, %v5153
  %v5283 = vsel %vm5154, %v5090, %v5219
  %v5284 = vsel %vm5155, %v5091, %v5220
  %v5285 = vsel %vm5156, %v5092, %v5221
  %v5286 = vsel %vm5157, %v5093, %v5222
  %v5287 = vsel %vm5158, %v5094, %v5223
  %v5288 = vsel %vm5159, %v5095, %v5224
  %v5289 = vsel %vm5160, %v5096, %v5225
  %v5290 = vsel %vm5161, %v5097, %v5226
  %v5291 = vsel %vm5162, %v5098, %v5227
  %v5292 = vsel %vm5163, %v5099, %v5228
  %v5293 = vsel %vm5164, %v5100, %v5229
  %v5294 = vsel %vm5165, %v5101, %v5230
  %v5295 = vsel %vm5166, %v5102, %v5231
  %v5296 = vsel %vm5167, %v5103, %v5232
  %v5297 = vsel %vm5168, %v5104, %v5233
  %v5298 = vsel %vm5169, %v5105, %v5234
  %v5299 = vsel %vm5170, %v5106, %v5235
  %v5300 = vsel %vm5171, %v5107, %v5236
  %v5301 = vsel %vm5172, %v5108, %v5237
  %v5302 = vsel %vm5173, %v5109, %v5238
  %v5303 = vsel %vm5174, %v5110, %v5239
  %v5304 = vsel %vm5175, %v5111, %v5240
  %v5305 = vsel %vm5176, %v5112, %v5241
  %v5306 = vsel %vm5177, %v5113, %v5242
  %v5307 = vsel %vm5178, %v5114, %v5243
  %v5308 = vsel %vm5179, %v5115, %v5244
  %v5309 = vsel %vm5180, %v5116, %v5245
  %v5310 = vsel %vm5181, %v5117, %v5246
  %v5311 = vsel %vm5182, %v5118, %v5247
  %v5312 = vsel %vm5183, %v5119, %v5248
  %v5313 = vsel %vm5184, %v5120, %v5249
  %v5314 = vsel %vm5185, %v5121, %v5250
  %v5315 = vsel %vm5186, %v5122, %v5251
  %v5316 = vsel %vm5187, %v5123, %v5252
  %v5317 = vsel %vm5188, %v5124, %v5253
  %v5318 = vsel %vm5189, %v5125, %v5254
  %v5319 = vsel %vm5190, %v5126, %v5255
  %v5320 = vsel %vm5191, %v5127, %v5256
  %v5321 = vsel %vm5192, %v5128, %v5257
  %v5322 = vsel %vm5193, %v5129, %v5258
  %v5323 = vsel %vm5194, %v5130, %v5259
  %v5324 = vsel %vm5195, %v5131, %v5260
  %v5325 = vsel %vm5196, %v5132, %v5261
  %v5326 = vsel %vm5197, %v5133, %v5262
  %v5327 = vsel %vm5198, %v5134, %v5263
  %v5328 = vsel %vm5199, %v5135, %v5264
  %v5329 = vsel %vm5200, %v5136, %v5265
  %v5330 = vsel %vm5201, %v5137, %v5266
  %v5331 = vsel %vm5202, %v5138, %v5267
  %v5332 = vsel %vm5203, %v5139, %v5268
  %v5333 = vsel %vm5204, %v5140, %v5269
  %v5334 = vsel %vm5205, %v5141, %v5270
  %v5335 = vsel %vm5206, %v5142, %v5271
  %v5336 = vsel %vm5207, %v5143, %v5272
  %v5337 = vsel %vm5208, %v5144, %v5273
  %v5338 = vsel %vm5209, %v5145, %v5274
  %v5339 = vsel %vm5210, %v5146, %v5275
  %v5340 = vsel %vm5211, %v5147, %v5276
  %v5341 = vsel %vm5212, %v5148, %v5277
  %v5342 = vsel %vm5213, %v5149, %v5278
  %v5343 = vsel %vm5214, %v5150, %v5279
  %v5344 = vsel %vm5215, %v5151, %v5280
  %v5345 = vsel %vm5216, %v5152, %v5281
  %v5346 = vsel %vm5217, %v5153, %v5282
  %5347 = vst [vmem:[%s173 + $0x1] sm:$0xff] %v5283
  %5348 = vst [vmem:[%s173 + $0x9] sm:$0xff] %v5284
  %5349 = vst [vmem:[%s173 + $0x19] sm:$0xff] %v5285
  %5350 = vst [vmem:[%s173 + $0x21] sm:$0xff] %v5286
  %5351 = vst [vmem:[%s173 + $0x31] sm:$0xff] %v5287
  %5352 = vst [vmem:[%s173 + $0x39] sm:$0xff] %v5288
  %5353 = vst [vmem:[%s173 + $0x49] sm:$0xff] %v5289
  %5354 = vst [vmem:[%s173 + $0x51] sm:$0xff] %v5290
  %5355 = vst [vmem:[%s173 + $0x61] sm:$0xff] %v5291
  %5356 = vst [vmem:[%s173 + $0x69] sm:$0xff] %v5292
  %5357 = vst [vmem:[%s173 + $0x79] sm:$0xff] %v5293
  %5358 = vst [vmem:[%s173 + $0x81] sm:$0xff] %v5294
  %5359 = vst [vmem:[%s173 + $0x91] sm:$0xff] %v5295
  %5360 = vst [vmem:[%s173 + $0x99] sm:$0xff] %v5296
  %5361 = vst [vmem:[%s173 + $0xa9] sm:$0xff] %v5297
  %5362 = vst [vmem:[%s173 + $0xb1] sm:$0xff] %v5298
  %5363 = vst [vmem:[%s173 + $0xc1] sm:$0xff] %v5299
  %5364 = vst [vmem:[%s173 + $0xc9] sm:$0xff] %v5300
  %5365 = vst [vmem:[%s173 + $0xd9] sm:$0xff] %v5301
  %5366 = vst [vmem:[%s173 + $0xe1] sm:$0xff] %v5302
  %5367 = vst [vmem:[%s173 + $0xf1] sm:$0xff] %v5303
  %5368 = vst [vmem:[%s173 + $0xf9] sm:$0xff] %v5304
  %5369 = vst [vmem:[%s173 + $0x109] sm:$0xff] %v5305
  %5370 = vst [vmem:[%s173 + $0x111] sm:$0xff] %v5306
  %5371 = vst [vmem:[%s173 + $0x121] sm:$0xff] %v5307
  %5372 = vst [vmem:[%s173 + $0x129] sm:$0xff] %v5308
  %5373 = vst [vmem:[%s173 + $0x139] sm:$0xff] %v5309
  %5374 = vst [vmem:[%s173 + $0x141] sm:$0xff] %v5310
  %5375 = vst [vmem:[%s173 + $0x151] sm:$0xff] %v5311
  %5376 = vst [vmem:[%s173 + $0x159] sm:$0xff] %v5312
  %5377 = vst [vmem:[%s173 + $0x169] sm:$0xff] %v5313
  %5378 = vst [vmem:[%s173 + $0x171] sm:$0xff] %v5314
  %5379 = vst [vmem:[%s173 + $0x1b1] sm:$0xff] %v5315
  %5380 = vst [vmem:[%s173 + $0x1b9] sm:$0xff] %v5316
  %5381 = vst [vmem:[%s173 + $0x1c9] sm:$0xff] %v5317
  %5382 = vst [vmem:[%s173 + $0x1d1] sm:$0xff] %v5318
  %5383 = vst [vmem:[%s173 + $0x1e1] sm:$0xff] %v5319
  %5384 = vst [vmem:[%s173 + $0x1e9] sm:$0xff] %v5320
  %5385 = vst [vmem:[%s173 + $0x1f9] sm:$0xff] %v5321
  %5386 = vst [vmem:[%s173 + $0x201] sm:$0xff] %v5322
  %5387 = vst [vmem:[%s173 + $0x211] sm:$0xff] %v5323
  %5388 = vst [vmem:[%s173 + $0x219] sm:$0xff] %v5324
  %5389 = vst [vmem:[%s173 + $0x229] sm:$0xff] %v5325
  %5390 = vst [vmem:[%s173 + $0x231] sm:$0xff] %v5326
  %5391 = vst [vmem:[%s173 + $0x241] sm:$0xff] %v5327
  %5392 = vst [vmem:[%s173 + $0x249] sm:$0xff] %v5328
  %5393 = vst [vmem:[%s173 + $0x259] sm:$0xff] %v5329
  %5394 = vst [vmem:[%s173 + $0x261] sm:$0xff] %v5330
  %5395 = vst [vmem:[%s173 + $0x271] sm:$0xff] %v5331
  %5396 = vst [vmem:[%s173 + $0x279] sm:$0xff] %v5332
  %5397 = vst [vmem:[%s173 + $0x289] sm:$0xff] %v5333
  %5398 = vst [vmem:[%s173 + $0x291] sm:$0xff] %v5334
  %5399 = vst [vmem:[%s173 + $0x2a1] sm:$0xff] %v5335
  %5400 = vst [vmem:[%s173 + $0x2a9] sm:$0xff] %v5336
  %5401 = vst [vmem:[%s173 + $0x2b9] sm:$0xff] %v5337
  %5402 = vst [vmem:[%s173 + $0x2c1] sm:$0xff] %v5338
  %5403 = vst [vmem:[%s173 + $0x2d1] sm:$0xff] %v5339
  %5404 = vst [vmem:[%s173 + $0x2d9] sm:$0xff] %v5340
  %5405 = vst [vmem:[%s173 + $0x2e9] sm:$0xff] %v5341
  %5406 = vst [vmem:[%s173 + $0x2f1] sm:$0xff] %v5342
  %5407 = vst [vmem:[%s173 + $0x301] sm:$0xff] %v5343
  %5408 = vst [vmem:[%s173 + $0x309] sm:$0xff] %v5344
  %5409 = vst [vmem:[%s173 + $0x319] sm:$0xff] %v5345
  %5410 = vst [vmem:[%s173 + $0x321] sm:$0xff] %v5346
  %v5411 = vld [vmem:[#allocation2] sm:$0xff]
  %v5412 = vld [vmem:[#allocation2 + $0x8] sm:$0xff]
  %v5413 = vld [vmem:[#allocation2 + $0x18] sm:$0xff]
  %v5414 = vld [vmem:[#allocation2 + $0x20] sm:$0xff]
  %v5415 = vld [vmem:[#allocation2 + $0x30] sm:$0xff]
  %v5416 = vld [vmem:[#allocation2 + $0x38] sm:$0xff]
  %v5417 = vld [vmem:[#allocation2 + $0x48] sm:$0xff]
  %v5418 = vld [vmem:[#allocation2 + $0x50] sm:$0xff]
  %v5419 = vld [vmem:[#allocation2 + $0x60] sm:$0xff]
  %v5420 = vld [vmem:[#allocation2 + $0x68] sm:$0xff]
  %v5421 = vld [vmem:[#allocation2 + $0x78] sm:$0xff]
  %v5422 = vld [vmem:[#allocation2 + $0x80] sm:$0xff]
  %v5423 = vld [vmem:[#allocation2 + $0x90] sm:$0xff]
  %v5424 = vld [vmem:[#allocation2 + $0x98] sm:$0xff]
  %v5425 = vld [vmem:[#allocation2 + $0xa8] sm:$0xff]
  %v5426 = vld [vmem:[#allocation2 + $0xb0] sm:$0xff]
  %v5427 = vld [vmem:[#allocation2 + $0xc0] sm:$0xff]
  %v5428 = vld [vmem:[#allocation2 + $0xc8] sm:$0xff]
  %v5429 = vld [vmem:[#allocation2 + $0xd8] sm:$0xff]
  %v5430 = vld [vmem:[#allocation2 + $0xe0] sm:$0xff]
  %v5431 = vld [vmem:[#allocation2 + $0xf0] sm:$0xff]
  %v5432 = vld [vmem:[#allocation2 + $0xf8] sm:$0xff]
  %v5433 = vld [vmem:[#allocation2 + $0x108] sm:$0xff]
  %v5434 = vld [vmem:[#allocation2 + $0x110] sm:$0xff]
  %v5435 = vld [vmem:[#allocation2 + $0x120] sm:$0xff]
  %v5436 = vld [vmem:[#allocation2 + $0x128] sm:$0xff]
  %v5437 = vld [vmem:[#allocation2 + $0x138] sm:$0xff]
  %v5438 = vld [vmem:[#allocation2 + $0x140] sm:$0xff]
  %v5439 = vld [vmem:[#allocation2 + $0x150] sm:$0xff]
  %v5440 = vld [vmem:[#allocation2 + $0x158] sm:$0xff]
  %v5441 = vld [vmem:[#allocation2 + $0x168] sm:$0xff]
  %v5442 = vld [vmem:[#allocation2 + $0x170] sm:$0xff]
  %v5443 = vld [vmem:[#allocation2 + $0x1b0] sm:$0xff]
  %v5444 = vld [vmem:[#allocation2 + $0x1b8] sm:$0xff]
  %v5445 = vld [vmem:[#allocation2 + $0x1c8] sm:$0xff]
  %v5446 = vld [vmem:[#allocation2 + $0x1d0] sm:$0xff]
  %v5447 = vld [vmem:[#allocation2 + $0x1e0] sm:$0xff]
  %v5448 = vld [vmem:[#allocation2 + $0x1e8] sm:$0xff]
  %v5449 = vld [vmem:[#allocation2 + $0x1f8] sm:$0xff]
  %v5450 = vld [vmem:[#allocation2 + $0x200] sm:$0xff]
  %v5451 = vld [vmem:[#allocation2 + $0x210] sm:$0xff]
  %v5452 = vld [vmem:[#allocation2 + $0x218] sm:$0xff]
  %v5453 = vld [vmem:[#allocation2 + $0x228] sm:$0xff]
  %v5454 = vld [vmem:[#allocation2 + $0x230] sm:$0xff]
  %v5455 = vld [vmem:[#allocation2 + $0x240] sm:$0xff]
  %v5456 = vld [vmem:[#allocation2 + $0x248] sm:$0xff]
  %v5457 = vld [vmem:[#allocation2 + $0x258] sm:$0xff]
  %v5458 = vld [vmem:[#allocation2 + $0x260] sm:$0xff]
  %v5459 = vld [vmem:[#allocation2 + $0x270] sm:$0xff]
  %v5460 = vld [vmem:[#allocation2 + $0x278] sm:$0xff]
  %v5461 = vld [vmem:[#allocation2 + $0x288] sm:$0xff]
  %v5462 = vld [vmem:[#allocation2 + $0x290] sm:$0xff]
  %v5463 = vld [vmem:[#allocation2 + $0x2a0] sm:$0xff]
  %v5464 = vld [vmem:[#allocation2 + $0x2a8] sm:$0xff]
  %v5465 = vld [vmem:[#allocation2 + $0x2b8] sm:$0xff]
  %v5466 = vld [vmem:[#allocation2 + $0x2c0] sm:$0xff]
  %v5467 = vld [vmem:[#allocation2 + $0x2d0] sm:$0xff]
  %v5468 = vld [vmem:[#allocation2 + $0x2d8] sm:$0xff]
  %v5469 = vld [vmem:[#allocation2 + $0x2e8] sm:$0xff]
  %v5470 = vld [vmem:[#allocation2 + $0x2f0] sm:$0xff]
  %v5471 = vld [vmem:[#allocation2 + $0x300] sm:$0xff]
  %v5472 = vld [vmem:[#allocation2 + $0x308] sm:$0xff]
  %v5473 = vld [vmem:[#allocation2 + $0x318] sm:$0xff]
  %v5474 = vld [vmem:[#allocation2 + $0x320] sm:$0xff]
  %v5475 = vpack.c.bf16 %v5412, %v5411
  %v5476 = vpack.c.bf16 %v5414, %v5413
  %v5477 = vpack.c.bf16 %v5416, %v5415
  %v5478 = vpack.c.bf16 %v5418, %v5417
  %v5479 = vpack.c.bf16 %v5420, %v5419
  %v5480 = vpack.c.bf16 %v5422, %v5421
  %v5481 = vpack.c.bf16 %v5424, %v5423
  %v5482 = vpack.c.bf16 %v5426, %v5425
  %v5483 = vpack.c.bf16 %v5428, %v5427
  %v5484 = vpack.c.bf16 %v5430, %v5429
  %v5485 = vpack.c.bf16 %v5432, %v5431
  %v5486 = vpack.c.bf16 %v5434, %v5433
  %v5487 = vpack.c.bf16 %v5436, %v5435
  %v5488 = vpack.c.bf16 %v5438, %v5437
  %v5489 = vpack.c.bf16 %v5440, %v5439
  %v5490 = vpack.c.bf16 %v5442, %v5441
  %v5491 = vpack.c.bf16 %v5444, %v5443
  %v5492 = vpack.c.bf16 %v5446, %v5445
  %v5493 = vpack.c.bf16 %v5448, %v5447
  %v5494 = vpack.c.bf16 %v5450, %v5449
  %v5495 = vpack.c.bf16 %v5452, %v5451
  %v5496 = vpack.c.bf16 %v5454, %v5453
  %v5497 = vpack.c.bf16 %v5456, %v5455
  %v5498 = vpack.c.bf16 %v5458, %v5457
  %v5499 = vpack.c.bf16 %v5460, %v5459
  %v5500 = vpack.c.bf16 %v5462, %v5461
  %v5501 = vpack.c.bf16 %v5464, %v5463
  %v5502 = vpack.c.bf16 %v5466, %v5465
  %v5503 = vpack.c.bf16 %v5468, %v5467
  %v5504 = vpack.c.bf16 %v5470, %v5469
  %v5505 = vpack.c.bf16 %v5472, %v5471
  %v5506 = vpack.c.bf16 %v5474, %v5473
  %v5507 = vld [vmem:[%s2] sm:$0xf]
  %v5508 = vld [vmem:[%s2 + $0x4] sm:$0xf]
  %v5509 = vld [vmem:[%s2 + $0x8] sm:$0xf]
  %v5510 = vld [vmem:[%s2 + $0xc] sm:$0xf]
  %v5511 = vld [vmem:[%s2 + $0x10] sm:$0xf]
  %v5512 = vld [vmem:[%s2 + $0x14] sm:$0xf]
  %v5513 = vld [vmem:[%s2 + $0x18] sm:$0xf]
  %v5514 = vld [vmem:[%s2 + $0x1c] sm:$0xf]
  %v5515 = vld [vmem:[%s2 + $0x20] sm:$0xf]
  %v5516 = vld [vmem:[%s2 + $0x24] sm:$0xf]
  %v5517 = vld [vmem:[%s2 + $0x28] sm:$0xf]
  %v5518 = vld [vmem:[%s2 + $0x2c] sm:$0xf]
  %v5519 = vld [vmem:[%s2 + $0x30] sm:$0xf]
  %v5520 = vld [vmem:[%s2 + $0x34] sm:$0xf]
  %v5521 = vld [vmem:[%s2 + $0x38] sm:$0xf]
  %v5522 = vld [vmem:[%s2 + $0x3c] sm:$0xf]
  %v5523 = vld [vmem:[#allocation2 + $0x1] sm:$0xff]
  %v5524 = vld [vmem:[#allocation2 + $0x9] sm:$0xff]
  %v5525 = vld [vmem:[#allocation2 + $0x19] sm:$0xff]
  %v5526 = vld [vmem:[#allocation2 + $0x21] sm:$0xff]
  %v5527 = vld [vmem:[#allocation2 + $0x31] sm:$0xff]
  %v5528 = vld [vmem:[#allocation2 + $0x39] sm:$0xff]
  %v5529 = vld [vmem:[#allocation2 + $0x49] sm:$0xff]
  %v5530 = vld [vmem:[#allocation2 + $0x51] sm:$0xff]
  %v5531 = vld [vmem:[#allocation2 + $0x61] sm:$0xff]
  %v5532 = vld [vmem:[#allocation2 + $0x69] sm:$0xff]
  %v5533 = vld [vmem:[#allocation2 + $0x79] sm:$0xff]
  %v5534 = vld [vmem:[#allocation2 + $0x81] sm:$0xff]
  %v5535 = vld [vmem:[#allocation2 + $0x91] sm:$0xff]
  %v5536 = vld [vmem:[#allocation2 + $0x99] sm:$0xff]
  %v5537 = vld [vmem:[#allocation2 + $0xa9] sm:$0xff]
  %v5538 = vld [vmem:[#allocation2 + $0xb1] sm:$0xff]
  %v5539 = vld [vmem:[#allocation2 + $0xc1] sm:$0xff]
  %v5540 = vld [vmem:[#allocation2 + $0xc9] sm:$0xff]
  %v5541 = vld [vmem:[#allocation2 + $0xd9] sm:$0xff]
  %v5542 = vld [vmem:[#allocation2 + $0xe1] sm:$0xff]
  %v5543 = vld [vmem:[#allocation2 + $0xf1] sm:$0xff]
  %v5544 = vld [vmem:[#allocation2 + $0xf9] sm:$0xff]
  %v5545 = vld [vmem:[#allocation2 + $0x109] sm:$0xff]
  %v5546 = vld [vmem:[#allocation2 + $0x111] sm:$0xff]
  %v5547 = vld [vmem:[#allocation2 + $0x121] sm:$0xff]
  %v5548 = vld [vmem:[#allocation2 + $0x129] sm:$0xff]
  %v5549 = vld [vmem:[#allocation2 + $0x139] sm:$0xff]
  %v5550 = vld [vmem:[#allocation2 + $0x141] sm:$0xff]
  %v5551 = vld [vmem:[#allocation2 + $0x151] sm:$0xff]
  %v5552 = vld [vmem:[#allocation2 + $0x159] sm:$0xff]
  %v5553 = vld [vmem:[#allocation2 + $0x169] sm:$0xff]
  %v5554 = vld [vmem:[#allocation2 + $0x171] sm:$0xff]
  %v5555 = vld [vmem:[#allocation2 + $0x1b1] sm:$0xff]
  %v5556 = vld [vmem:[#allocation2 + $0x1b9] sm:$0xff]
  %v5557 = vld [vmem:[#allocation2 + $0x1c9] sm:$0xff]
  %v5558 = vld [vmem:[#allocation2 + $0x1d1] sm:$0xff]
  %v5559 = vld [vmem:[#allocation2 + $0x1e1] sm:$0xff]
  %v5560 = vld [vmem:[#allocation2 + $0x1e9] sm:$0xff]
  %v5561 = vld [vmem:[#allocation2 + $0x1f9] sm:$0xff]
  %v5562 = vld [vmem:[#allocation2 + $0x201] sm:$0xff]
  %v5563 = vld [vmem:[#allocation2 + $0x211] sm:$0xff]
  %v5564 = vld [vmem:[#allocation2 + $0x219] sm:$0xff]
  %v5565 = vld [vmem:[#allocation2 + $0x229] sm:$0xff]
  %v5566 = vld [vmem:[#allocation2 + $0x231] sm:$0xff]
  %v5567 = vld [vmem:[#allocation2 + $0x241] sm:$0xff]
  %v5568 = vld [vmem:[#allocation2 + $0x249] sm:$0xff]
  %v5569 = vld [vmem:[#allocation2 + $0x259] sm:$0xff]
  %v5570 = vld [vmem:[#allocation2 + $0x261] sm:$0xff]
  %v5571 = vld [vmem:[#allocation2 + $0x271] sm:$0xff]
  %v5572 = vld [vmem:[#allocation2 + $0x279] sm:$0xff]
  %v5573 = vld [vmem:[#allocation2 + $0x289] sm:$0xff]
  %v5574 = vld [vmem:[#allocation2 + $0x291] sm:$0xff]
  %v5575 = vld [vmem:[#allocation2 + $0x2a1] sm:$0xff]
  %v5576 = vld [vmem:[#allocation2 + $0x2a9] sm:$0xff]
  %v5577 = vld [vmem:[#allocation2 + $0x2b9] sm:$0xff]
  %v5578 = vld [vmem:[#allocation2 + $0x2c1] sm:$0xff]
  %v5579 = vld [vmem:[#allocation2 + $0x2d1] sm:$0xff]
  %v5580 = vld [vmem:[#allocation2 + $0x2d9] sm:$0xff]
  %v5581 = vld [vmem:[#allocation2 + $0x2e9] sm:$0xff]
  %v5582 = vld [vmem:[#allocation2 + $0x2f1] sm:$0xff]
  %v5583 = vld [vmem:[#allocation2 + $0x301] sm:$0xff]
  %v5584 = vld [vmem:[#allocation2 + $0x309] sm:$0xff]
  %v5585 = vld [vmem:[#allocation2 + $0x319] sm:$0xff]
  %v5586 = vld [vmem:[#allocation2 + $0x321] sm:$0xff]
  %v5587 = vpack.c.bf16 %v5524, %v5523
  %v5588 = vpack.c.bf16 %v5526, %v5525
  %v5589 = vpack.c.bf16 %v5528, %v5527
  %v5590 = vpack.c.bf16 %v5530, %v5529
  %v5591 = vpack.c.bf16 %v5532, %v5531
  %v5592 = vpack.c.bf16 %v5534, %v5533
  %v5593 = vpack.c.bf16 %v5536, %v5535
  %v5594 = vpack.c.bf16 %v5538, %v5537
  %v5595 = vpack.c.bf16 %v5540, %v5539
  %v5596 = vpack.c.bf16 %v5542, %v5541
  %v5597 = vpack.c.bf16 %v5544, %v5543
  %v5598 = vpack.c.bf16 %v5546, %v5545
  %v5599 = vpack.c.bf16 %v5548, %v5547
  %v5600 = vpack.c.bf16 %v5550, %v5549
  %v5601 = vpack.c.bf16 %v5552, %v5551
  %v5602 = vpack.c.bf16 %v5554, %v5553
  %v5603 = vpack.c.bf16 %v5556, %v5555
  %v5604 = vpack.c.bf16 %v5558, %v5557
  %v5605 = vpack.c.bf16 %v5560, %v5559
  %v5606 = vpack.c.bf16 %v5562, %v5561
  %v5607 = vpack.c.bf16 %v5564, %v5563
  %v5608 = vpack.c.bf16 %v5566, %v5565
  %v5609 = vpack.c.bf16 %v5568, %v5567
  %v5610 = vpack.c.bf16 %v5570, %v5569
  %v5611 = vpack.c.bf16 %v5572, %v5571
  %v5612 = vpack.c.bf16 %v5574, %v5573
  %v5613 = vpack.c.bf16 %v5576, %v5575
  %v5614 = vpack.c.bf16 %v5578, %v5577
  %v5615 = vpack.c.bf16 %v5580, %v5579
  %v5616 = vpack.c.bf16 %v5582, %v5581
  %v5617 = vpack.c.bf16 %v5584, %v5583
  %v5618 = vpack.c.bf16 %v5586, %v5585
  %s5619 = scalar_lea.vmem %s2, 64
  %v5620 = vld [vmem:[%s5619] sm:$0xf]
  %v5621 = vld [vmem:[%s5619 + $0x4] sm:$0xf]
  %v5622 = vld [vmem:[%s5619 + $0x8] sm:$0xf]
  %v5623 = vld [vmem:[%s5619 + $0xc] sm:$0xf]
  %v5624 = vld [vmem:[%s5619 + $0x10] sm:$0xf]
  %v5625 = vld [vmem:[%s5619 + $0x14] sm:$0xf]
  %v5626 = vld [vmem:[%s5619 + $0x18] sm:$0xf]
  %v5627 = vld [vmem:[%s5619 + $0x1c] sm:$0xf]
  %v5628 = vld [vmem:[%s5619 + $0x20] sm:$0xf]
  %v5629 = vld [vmem:[%s5619 + $0x24] sm:$0xf]
  %v5630 = vld [vmem:[%s5619 + $0x28] sm:$0xf]
  %v5631 = vld [vmem:[%s5619 + $0x2c] sm:$0xf]
  %v5632 = vld [vmem:[%s5619 + $0x30] sm:$0xf]
  %v5633 = vld [vmem:[%s5619 + $0x34] sm:$0xf]
  %v5634 = vld [vmem:[%s5619 + $0x38] sm:$0xf]
  %v5635 = vld [vmem:[%s5619 + $0x3c] sm:$0xf]
  %v5652 = vunpack.c.l.b16 %v5620
  %v5653 = vunpack.c.l.b16 %v5621
  %v5654 = vunpack.c.l.b16 %v5622
  %v5655 = vunpack.c.l.b16 %v5623
  %v5656 = vunpack.c.l.b16 %v5624
  %v5657 = vunpack.c.l.b16 %v5625
  %v5658 = vunpack.c.l.b16 %v5626
  %v5659 = vunpack.c.l.b16 %v5627
  %v5660 = vunpack.c.l.b16 %v5628
  %v5661 = vunpack.c.l.b16 %v5629
  %v5662 = vunpack.c.l.b16 %v5630
  %v5663 = vunpack.c.l.b16 %v5631
  %v5664 = vunpack.c.l.b16 %v5632
  %v5665 = vunpack.c.l.b16 %v5633
  %v5666 = vunpack.c.l.b16 %v5634
  %v5667 = vunpack.c.l.b16 %v5635
  %v5668 = vpack.c.b16 %v5653, %v5652
  %v5669 = vpack.c.b16 %v5655, %v5654
  %v5670 = vpack.c.b16 %v5657, %v5656
  %v5671 = vpack.c.b16 %v5659, %v5658
  %v5672 = vpack.c.b16 %v5661, %v5660
  %v5673 = vpack.c.b16 %v5663, %v5662
  %v5674 = vpack.c.b16 %v5665, %v5664
  %v5675 = vpack.c.b16 %v5667, %v5666
  %5684 = vmatprep.subr.bf16.mxu0 0
  %5685 = vmatpush1.bf16.msra.mxu0 %v5668
  %5686 = vmatprep.subr.bf16.mxu0 0
  %5687 = vmatpush1.bf16.msra.mxu0 %v5669
  %5688 = vmatprep.subr.bf16.mxu0 0
  %5689 = vmatpush1.bf16.msra.mxu0 %v5670
  %5690 = vmatprep.subr.bf16.mxu0 0
  %5691 = vmatpush1.bf16.msra.mxu0 %v5671
  %5692 = vmatprep.subr.bf16.mxu0 0
  %5693 = vmatpush1.bf16.msra.mxu0 %v5672
  %5694 = vmatprep.subr.bf16.mxu0 0
  %5695 = vmatpush1.bf16.msra.mxu0 %v5673
  %5696 = vmatprep.subr.bf16.mxu0 0
  %5697 = vmatpush1.bf16.msra.mxu0 %v5674
  %5698 = vmatprep.subr.bf16.mxu0 0
  %5699 = vmatpush1.bf16.msra.mxu0 %v5675
  %5700 = vmatprep.subr.bf16.mxu0 0
  %5701 = vmatpush1.bf16.msra.mxu0 0
  %5702 = vmatprep.subr.bf16.mxu0 0
  %5703 = vmatpush1.bf16.msra.mxu0 0
  %5704 = vmatprep.subr.bf16.mxu0 0
  %5705 = vmatpush1.bf16.msra.mxu0 0
  %5706 = vmatprep.subr.bf16.mxu0 0
  %5707 = vmatpush1.bf16.msra.mxu0 0
  %5708 = vmatprep.subr.bf16.mxu0 0
  %5709 = vmatpush1.bf16.msra.mxu0 0
  %5710 = vmatprep.subr.bf16.mxu0 0
  %5711 = vmatpush1.bf16.msra.mxu0 0
  %5712 = vmatprep.subr.bf16.mxu0 0
  %5713 = vmatpush1.bf16.msra.mxu0 0
  %5714 = vmatprep.subr.bf16.mxu0 0
  %5715 = vmatpush1.bf16.msra.mxu0 0
  %5716 = vmatprep.mubr.bf16.mxu0 0
  %5717 = vmatmul.mubr.bf16.gmra.mrb[0].mxu0 %v5587
  %v5718 = vpop.f32.mrb[0].mxu0
  %v5719 = vadd.f32 0.0, %v5718
  %v5720 = vpop.f32.mrb[0].mxu0
  %v5721 = vpop.f32.mrb[0].mxu0
  %v5722 = vadd.f32 0.0, %v5721
  %v5723 = vpop.f32.mrb[0].mxu0
  %5724 = vmatprep.mubr.bf16.mxu0 0
  %5725 = vmatmul.mubr.bf16.gmra.mrb[0].mxu0 %v5588
  %v5726 = vpop.f32.mrb[0].mxu0
  %v5727 = vadd.f32 0.0, %v5726
  %v5728 = vpop.f32.mrb[0].mxu0
  %v5729 = vpop.f32.mrb[0].mxu0
  %v5730 = vadd.f32 0.0, %v5729
  %v5731 = vpop.f32.mrb[0].mxu0
  %5732 = vmatprep.mubr.bf16.mxu0 0
  %5733 = vmatmul.mubr.bf16.gmra.mrb[0].mxu0 %v5589
  %v5734 = vpop.f32.mrb[0].mxu0
  %v5735 = vadd.f32 0.0, %v5734
  %v5736 = vpop.f32.mrb[0].mxu0
  %v5737 = vpop.f32.mrb[0].mxu0
  %v5738 = vadd.f32 0.0, %v5737
  %v5739 = vpop.f32.mrb[0].mxu0
  %5740 = vmatprep.mubr.bf16.mxu0 0
  %5741 = vmatmul.mubr.bf16.gmra.mrb[0].mxu0 %v5590
  %v5742 = vpop.f32.mrb[0].mxu0
  %v5743 = vadd.f32 0.0, %v5742
  %v5744 = vpop.f32.mrb[0].mxu0
  %v5745 = vpop.f32.mrb[0].mxu0
  %v5746 = vadd.f32 0.0, %v5745
  %v5747 = vpop.f32.mrb[0].mxu0
  %5748 = vmatprep.mubr.bf16.mxu0 0
  %5749 = vmatmul.mubr.bf16.gmra.mrb[0].mxu0 %v5591
  %v5750 = vpop.f32.mrb[0].mxu0
  %v5751 = vadd.f32 0.0, %v5750
  %v5752 = vpop.f32.mrb[0].mxu0
  %v5753 = vpop.f32.mrb[0].mxu0
  %v5754 = vadd.f32 0.0, %v5753
  %v5755 = vpop.f32.mrb[0].mxu0
  %5756 = vmatprep.mubr.bf16.mxu0 0
  %5757 = vmatmul.mubr.bf16.gmra.mrb[0].mxu0 %v5592
  %v5758 = vpop.f32.mrb[0].mxu0
  %v5759 = vadd.f32 0.0, %v5758
  %v5760 = vpop.f32.mrb[0].mxu0
  %v5761 = vpop.f32.mrb[0].mxu0
  %v5762 = vadd.f32 0.0, %v5761
  %v5763 = vpop.f32.mrb[0].mxu0
  %5764 = vmatprep.mubr.bf16.mxu0 0
  %5765 = vmatmul.mubr.bf16.gmra.mrb[0].mxu0 %v5593
  %v5766 = vpop.f32.mrb[0].mxu0
  %v5767 = vadd.f32 0.0, %v5766
  %v5768 = vpop.f32.mrb[0].mxu0
  %v5769 = vpop.f32.mrb[0].mxu0
  %v5770 = vadd.f32 0.0, %v5769
  %v5771 = vpop.f32.mrb[0].mxu0
  %5772 = vmatprep.mubr.bf16.mxu0 0
  %5773 = vmatmul.mubr.bf16.gmra.mrb[0].mxu0 %v5594
  %v5774 = vpop.f32.mrb[0].mxu0
  %v5775 = vadd.f32 0.0, %v5774
  %v5776 = vpop.f32.mrb[0].mxu0
  %v5777 = vpop.f32.mrb[0].mxu0
  %v5778 = vadd.f32 0.0, %v5777
  %v5779 = vpop.f32.mrb[0].mxu0
  %5780 = vmatprep.mubr.bf16.mxu0 0
  %5781 = vmatmul.mubr.bf16.gmra.mrb[0].mxu0 %v5595
  %v5782 = vpop.f32.mrb[0].mxu0
  %v5783 = vadd.f32 0.0, %v5782
  %v5784 = vpop.f32.mrb[0].mxu0
  %v5785 = vpop.f32.mrb[0].mxu0
  %v5786 = vadd.f32 0.0, %v5785
  %v5787 = vpop.f32.mrb[0].mxu0
  %5788 = vmatprep.mubr.bf16.mxu0 0
  %5789 = vmatmul.mubr.bf16.gmra.mrb[0].mxu0 %v5596
  %v5790 = vpop.f32.mrb[0].mxu0
  %v5791 = vadd.f32 0.0, %v5790
  %v5792 = vpop.f32.mrb[0].mxu0
  %v5793 = vpop.f32.mrb[0].mxu0
  %v5794 = vadd.f32 0.0, %v5793
  %v5795 = vpop.f32.mrb[0].mxu0
  %5796 = vmatprep.mubr.bf16.mxu0 0
  %5797 = vmatmul.mubr.bf16.gmra.mrb[0].mxu0 %v5597
  %v5798 = vpop.f32.mrb[0].mxu0
  %v5799 = vadd.f32 0.0, %v5798
  %v5800 = vpop.f32.mrb[0].mxu0
  %v5801 = vpop.f32.mrb[0].mxu0
  %v5802 = vadd.f32 0.0, %v5801
  %v5803 = vpop.f32.mrb[0].mxu0
  %5804 = vmatprep.mubr.bf16.mxu0 0
  %5805 = vmatmul.mubr.bf16.gmra.mrb[0].mxu0 %v5598
  %v5806 = vpop.f32.mrb[0].mxu0
  %v5807 = vadd.f32 0.0, %v5806
  %v5808 = vpop.f32.mrb[0].mxu0
  %v5809 = vpop.f32.mrb[0].mxu0
  %v5810 = vadd.f32 0.0, %v5809
  %v5811 = vpop.f32.mrb[0].mxu0
  %5812 = vmatprep.mubr.bf16.mxu0 0
  %5813 = vmatmul.mubr.bf16.gmra.mrb[0].mxu0 %v5599
  %v5814 = vpop.f32.mrb[0].mxu0
  %v5815 = vadd.f32 0.0, %v5814
  %v5816 = vpop.f32.mrb[0].mxu0
  %v5817 = vpop.f32.mrb[0].mxu0
  %v5818 = vadd.f32 0.0, %v5817
  %v5819 = vpop.f32.mrb[0].mxu0
  %5820 = vmatprep.mubr.bf16.mxu0 0
  %5821 = vmatmul.mubr.bf16.gmra.mrb[0].mxu0 %v5600
  %v5822 = vpop.f32.mrb[0].mxu0
  %v5823 = vadd.f32 0.0, %v5822
  %v5824 = vpop.f32.mrb[0].mxu0
  %v5825 = vpop.f32.mrb[0].mxu0
  %v5826 = vadd.f32 0.0, %v5825
  %v5827 = vpop.f32.mrb[0].mxu0
  %5828 = vmatprep.mubr.bf16.mxu0 0
  %5829 = vmatmul.mubr.bf16.gmra.mrb[0].mxu0 %v5601
  %v5830 = vpop.f32.mrb[0].mxu0
  %v5831 = vadd.f32 0.0, %v5830
  %v5832 = vpop.f32.mrb[0].mxu0
  %v5833 = vpop.f32.mrb[0].mxu0
  %v5834 = vadd.f32 0.0, %v5833
  %v5835 = vpop.f32.mrb[0].mxu0
  %5836 = vmatprep.mubr.bf16.mxu0 0
  %5837 = vmatmul.mubr.bf16.gmra.mrb[0].mxu0 %v5602
  %v5838 = vpop.f32.mrb[0].mxu0
  %v5839 = vadd.f32 0.0, %v5838
  %v5840 = vpop.f32.mrb[0].mxu0
  %v5841 = vpop.f32.mrb[0].mxu0
  %v5842 = vadd.f32 0.0, %v5841
  %v5843 = vpop.f32.mrb[0].mxu0
  %5844 = vmatprep.mubr.bf16.mxu0 0
  %5845 = vmatmul.mubr.bf16.gmra.mrb[0].mxu0 %v5603
  %v5846 = vpop.f32.mrb[0].mxu0
  %v5847 = vadd.f32 0.0, %v5846
  %v5848 = vpop.f32.mrb[0].mxu0
  %v5849 = vpop.f32.mrb[0].mxu0
  %v5850 = vadd.f32 0.0, %v5849
  %v5851 = vpop.f32.mrb[0].mxu0
  %5852 = vmatprep.mubr.bf16.mxu0 0
  %5853 = vmatmul.mubr.bf16.gmra.mrb[0].mxu0 %v5604
  %v5854 = vpop.f32.mrb[0].mxu0
  %v5855 = vadd.f32 0.0, %v5854
  %v5856 = vpop.f32.mrb[0].mxu0
  %v5857 = vpop.f32.mrb[0].mxu0
  %v5858 = vadd.f32 0.0, %v5857
  %v5859 = vpop.f32.mrb[0].mxu0
  %5860 = vmatprep.mubr.bf16.mxu0 0
  %5861 = vmatmul.mubr.bf16.gmra.mrb[0].mxu0 %v5605
  %v5862 = vpop.f32.mrb[0].mxu0
  %v5863 = vadd.f32 0.0, %v5862
  %v5864 = vpop.f32.mrb[0].mxu0
  %v5865 = vpop.f32.mrb[0].mxu0
  %v5866 = vadd.f32 0.0, %v5865
  %v5867 = vpop.f32.mrb[0].mxu0
  %5868 = vmatprep.mubr.bf16.mxu0 0
  %5869 = vmatmul.mubr.bf16.gmra.mrb[0].mxu0 %v5606
  %v5870 = vpop.f32.mrb[0].mxu0
  %v5871 = vadd.f32 0.0, %v5870
  %v5872 = vpop.f32.mrb[0].mxu0
  %v5873 = vpop.f32.mrb[0].mxu0
  %v5874 = vadd.f32 0.0, %v5873
  %v5875 = vpop.f32.mrb[0].mxu0
  %5876 = vmatprep.mubr.bf16.mxu0 0
  %5877 = vmatmul.mubr.bf16.gmra.mrb[0].mxu0 %v5607
  %v5878 = vpop.f32.mrb[0].mxu0
  %v5879 = vadd.f32 0.0, %v5878
  %v5880 = vpop.f32.mrb[0].mxu0
  %v5881 = vpop.f32.mrb[0].mxu0
  %v5882 = vadd.f32 0.0, %v5881
  %v5883 = vpop.f32.mrb[0].mxu0
  %5884 = vmatprep.mubr.bf16.mxu0 0
  %5885 = vmatmul.mubr.bf16.gmra.mrb[0].mxu0 %v5608
  %v5886 = vpop.f32.mrb[0].mxu0
  %v5887 = vadd.f32 0.0, %v5886
  %v5888 = vpop.f32.mrb[0].mxu0
  %v5889 = vpop.f32.mrb[0].mxu0
  %v5890 = vadd.f32 0.0, %v5889
  %v5891 = vpop.f32.mrb[0].mxu0
  %5892 = vmatprep.mubr.bf16.mxu0 0
  %5893 = vmatmul.mubr.bf16.gmra.mrb[0].mxu0 %v5609
  %v5894 = vpop.f32.mrb[0].mxu0
  %v5895 = vadd.f32 0.0, %v5894
  %v5896 = vpop.f32.mrb[0].mxu0
  %v5897 = vpop.f32.mrb[0].mxu0
  %v5898 = vadd.f32 0.0, %v5897
  %v5899 = vpop.f32.mrb[0].mxu0
  %5900 = vmatprep.mubr.bf16.mxu0 0
  %5901 = vmatmul.mubr.bf16.gmra.mrb[0].mxu0 %v5610
  %v5902 = vpop.f32.mrb[0].mxu0
  %v5903 = vadd.f32 0.0, %v5902
  %v5904 = vpop.f32.mrb[0].mxu0
  %v5905 = vpop.f32.mrb[0].mxu0
  %v5906 = vadd.f32 0.0, %v5905
  %v5907 = vpop.f32.mrb[0].mxu0
  %5908 = vmatprep.mubr.bf16.mxu0 0
  %5909 = vmatmul.mubr.bf16.gmra.mrb[0].mxu0 %v5611
  %v5910 = vpop.f32.mrb[0].mxu0
  %v5911 = vadd.f32 0.0, %v5910
  %v5912 = vpop.f32.mrb[0].mxu0
  %v5913 = vpop.f32.mrb[0].mxu0
  %v5914 = vadd.f32 0.0, %v5913
  %v5915 = vpop.f32.mrb[0].mxu0
  %5916 = vmatprep.mubr.bf16.mxu0 0
  %5917 = vmatmul.mubr.bf16.gmra.mrb[0].mxu0 %v5612
  %v5918 = vpop.f32.mrb[0].mxu0
  %v5919 = vadd.f32 0.0, %v5918
  %v5920 = vpop.f32.mrb[0].mxu0
  %v5921 = vpop.f32.mrb[0].mxu0
  %v5922 = vadd.f32 0.0, %v5921
  %v5923 = vpop.f32.mrb[0].mxu0
  %5924 = vmatprep.mubr.bf16.mxu0 0
  %5925 = vmatmul.mubr.bf16.gmra.mrb[0].mxu0 %v5613
  %v5926 = vpop.f32.mrb[0].mxu0
  %v5927 = vadd.f32 0.0, %v5926
  %v5928 = vpop.f32.mrb[0].mxu0
  %v5929 = vpop.f32.mrb[0].mxu0
  %v5930 = vadd.f32 0.0, %v5929
  %v5931 = vpop.f32.mrb[0].mxu0
  %5932 = vmatprep.mubr.bf16.mxu0 0
  %5933 = vmatmul.mubr.bf16.gmra.mrb[0].mxu0 %v5614
  %v5934 = vpop.f32.mrb[0].mxu0
  %v5935 = vadd.f32 0.0, %v5934
  %v5936 = vpop.f32.mrb[0].mxu0
  %v5937 = vpop.f32.mrb[0].mxu0
  %v5938 = vadd.f32 0.0, %v5937
  %v5939 = vpop.f32.mrb[0].mxu0
  %5940 = vmatprep.mubr.bf16.mxu0 0
  %5941 = vmatmul.mubr.bf16.gmra.mrb[0].mxu0 %v5615
  %v5942 = vpop.f32.mrb[0].mxu0
  %v5943 = vadd.f32 0.0, %v5942
  %v5944 = vpop.f32.mrb[0].mxu0
  %v5945 = vpop.f32.mrb[0].mxu0
  %v5946 = vadd.f32 0.0, %v5945
  %v5947 = vpop.f32.mrb[0].mxu0
  %5948 = vmatprep.mubr.bf16.mxu0 0
  %5949 = vmatmul.mubr.bf16.gmra.mrb[0].mxu0 %v5616
  %v5950 = vpop.f32.mrb[0].mxu0
  %v5951 = vadd.f32 0.0, %v5950
  %v5952 = vpop.f32.mrb[0].mxu0
  %v5953 = vpop.f32.mrb[0].mxu0
  %v5954 = vadd.f32 0.0, %v5953
  %v5955 = vpop.f32.mrb[0].mxu0
  %5956 = vmatprep.mubr.bf16.mxu0 0
  %5957 = vmatmul.mubr.bf16.gmra.mrb[0].mxu0 %v5617
  %v5958 = vpop.f32.mrb[0].mxu0
  %v5959 = vadd.f32 0.0, %v5958
  %v5960 = vpop.f32.mrb[0].mxu0
  %v5961 = vpop.f32.mrb[0].mxu0
  %v5962 = vadd.f32 0.0, %v5961
  %v5963 = vpop.f32.mrb[0].mxu0
  %5964 = vmatprep.mubr.bf16.mxu0 0
  %5965 = vmatmul.mubr.bf16.gmra.mrb[0].mxu0 %v5618
  %v5966 = vpop.f32.mrb[0].mxu0
  %v5967 = vadd.f32 0.0, %v5966
  %v5968 = vpop.f32.mrb[0].mxu0
  %v5969 = vpop.f32.mrb[0].mxu0
  %v5970 = vadd.f32 0.0, %v5969
  %v5971 = vpop.f32.mrb[0].mxu0
  %5972 = vdwg.mxu0
  %v5989 = vunpack.c.l.b16 %v5507
  %v5990 = vunpack.c.l.b16 %v5508
  %v5991 = vunpack.c.l.b16 %v5509
  %v5992 = vunpack.c.l.b16 %v5510
  %v5993 = vunpack.c.l.b16 %v5511
  %v5994 = vunpack.c.l.b16 %v5512
  %v5995 = vunpack.c.l.b16 %v5513
  %v5996 = vunpack.c.l.b16 %v5514
  %v5997 = vunpack.c.l.b16 %v5515
  %v5998 = vunpack.c.l.b16 %v5516
  %v5999 = vunpack.c.l.b16 %v5517
  %v6000 = vunpack.c.l.b16 %v5518
  %v6001 = vunpack.c.l.b16 %v5519
  %v6002 = vunpack.c.l.b16 %v5520
  %v6003 = vunpack.c.l.b16 %v5521
  %v6004 = vunpack.c.l.b16 %v5522
  %v6005 = vpack.c.b16 %v5990, %v5989
  %v6006 = vpack.c.b16 %v5992, %v5991
  %v6007 = vpack.c.b16 %v5994, %v5993
  %v6008 = vpack.c.b16 %v5996, %v5995
  %v6009 = vpack.c.b16 %v5998, %v5997
  %v6010 = vpack.c.b16 %v6000, %v5999
  %v6011 = vpack.c.b16 %v6002, %v6001
  %v6012 = vpack.c.b16 %v6004, %v6003
  %6021 = vmatprep.subr.bf16.mxu0 0
  %6022 = vmatpush1.bf16.msra.mxu0 %v6005
  %6023 = vmatprep.subr.bf16.mxu0 0
  %6024 = vmatpush1.bf16.msra.mxu0 %v6006
  %6025 = vmatprep.subr.bf16.mxu0 0
  %6026 = vmatpush1.bf16.msra.mxu0 %v6007
  %6027 = vmatprep.subr.bf16.mxu0 0
  %6028 = vmatpush1.bf16.msra.mxu0 %v6008
  %6029 = vmatprep.subr.bf16.mxu0 0
  %6030 = vmatpush1.bf16.msra.mxu0 %v6009
  %6031 = vmatprep.subr.bf16.mxu0 0
  %6032 = vmatpush1.bf16.msra.mxu0 %v6010
  %6033 = vmatprep.subr.bf16.mxu0 0
  %6034 = vmatpush1.bf16.msra.mxu0 %v6011
  %6035 = vmatprep.subr.bf16.mxu0 0
  %6036 = vmatpush1.bf16.msra.mxu0 %v6012
  %6037 = vmatprep.subr.bf16.mxu0 0
  %6038 = vmatpush1.bf16.msra.mxu0 0
  %6039 = vmatprep.subr.bf16.mxu0 0
  %6040 = vmatpush1.bf16.msra.mxu0 0
  %6041 = vmatprep.subr.bf16.mxu0 0
  %6042 = vmatpush1.bf16.msra.mxu0 0
  %6043 = vmatprep.subr.bf16.mxu0 0
  %6044 = vmatpush1.bf16.msra.mxu0 0
  %6045 = vmatprep.subr.bf16.mxu0 0
  %6046 = vmatpush1.bf16.msra.mxu0 0
  %6047 = vmatprep.subr.bf16.mxu0 0
  %6048 = vmatpush1.bf16.msra.mxu0 0
  %6049 = vmatprep.subr.bf16.mxu0 0
  %6050 = vmatpush1.bf16.msra.mxu0 0
  %6051 = vmatprep.subr.bf16.mxu0 0
  %6052 = vmatpush1.bf16.msra.mxu0 0
  %6053 = vmatprep.mubr.bf16.mxu0 0
  %6054 = vmatmul.mubr.bf16.gmra.mrb[0].mxu0 %v5475
  %v6055 = vpop.f32.mrb[0].mxu0
  %v6056 = vadd.f32 %v5719, %v6055
  %v6057 = vpop.f32.mrb[0].mxu0
  %v6058 = vpop.f32.mrb[0].mxu0
  %v6059 = vadd.f32 %v5722, %v6058
  %v6060 = vpop.f32.mrb[0].mxu0
  %6061 = vmatprep.mubr.bf16.mxu0 0
  %6062 = vmatmul.mubr.bf16.gmra.mrb[0].mxu0 %v5476
  %v6063 = vpop.f32.mrb[0].mxu0
  %v6064 = vadd.f32 %v5727, %v6063
  %v6065 = vpop.f32.mrb[0].mxu0
  %v6066 = vpop.f32.mrb[0].mxu0
  %v6067 = vadd.f32 %v5730, %v6066
  %v6068 = vpop.f32.mrb[0].mxu0
  %6069 = vmatprep.mubr.bf16.mxu0 0
  %6070 = vmatmul.mubr.bf16.gmra.mrb[0].mxu0 %v5477
  %v6071 = vpop.f32.mrb[0].mxu0
  %v6072 = vadd.f32 %v5735, %v6071
  %v6073 = vpop.f32.mrb[0].mxu0
  %v6074 = vpop.f32.mrb[0].mxu0
  %v6075 = vadd.f32 %v5738, %v6074
  %v6076 = vpop.f32.mrb[0].mxu0
  %6077 = vmatprep.mubr.bf16.mxu0 0
  %6078 = vmatmul.mubr.bf16.gmra.mrb[0].mxu0 %v5478
  %v6079 = vpop.f32.mrb[0].mxu0
  %v6080 = vadd.f32 %v5743, %v6079
  %v6081 = vpop.f32.mrb[0].mxu0
  %v6082 = vpop.f32.mrb[0].mxu0
  %v6083 = vadd.f32 %v5746, %v6082
  %v6084 = vpop.f32.mrb[0].mxu0
  %6085 = vmatprep.mubr.bf16.mxu0 0
  %6086 = vmatmul.mubr.bf16.gmra.mrb[0].mxu0 %v5479
  %v6087 = vpop.f32.mrb[0].mxu0
  %v6088 = vadd.f32 %v5751, %v6087
  %v6089 = vpop.f32.mrb[0].mxu0
  %v6090 = vpop.f32.mrb[0].mxu0
  %v6091 = vadd.f32 %v5754, %v6090
  %v6092 = vpop.f32.mrb[0].mxu0
  %6093 = vmatprep.mubr.bf16.mxu0 0
  %6094 = vmatmul.mubr.bf16.gmra.mrb[0].mxu0 %v5480
  %v6095 = vpop.f32.mrb[0].mxu0
  %v6096 = vadd.f32 %v5759, %v6095
  %v6097 = vpop.f32.mrb[0].mxu0
  %v6098 = vpop.f32.mrb[0].mxu0
  %v6099 = vadd.f32 %v5762, %v6098
  %v6100 = vpop.f32.mrb[0].mxu0
  %6101 = vmatprep.mubr.bf16.mxu0 0
  %6102 = vmatmul.mubr.bf16.gmra.mrb[0].mxu0 %v5481
  %v6103 = vpop.f32.mrb[0].mxu0
  %v6104 = vadd.f32 %v5767, %v6103
  %v6105 = vpop.f32.mrb[0].mxu0
  %v6106 = vpop.f32.mrb[0].mxu0
  %v6107 = vadd.f32 %v5770, %v6106
  %v6108 = vpop.f32.mrb[0].mxu0
  %6109 = vmatprep.mubr.bf16.mxu0 0
  %6110 = vmatmul.mubr.bf16.gmra.mrb[0].mxu0 %v5482
  %v6111 = vpop.f32.mrb[0].mxu0
  %v6112 = vadd.f32 %v5775, %v6111
  %v6113 = vpop.f32.mrb[0].mxu0
  %v6114 = vpop.f32.mrb[0].mxu0
  %v6115 = vadd.f32 %v5778, %v6114
  %v6116 = vpop.f32.mrb[0].mxu0
  %6117 = vmatprep.mubr.bf16.mxu0 0
  %6118 = vmatmul.mubr.bf16.gmra.mrb[0].mxu0 %v5483
  %v6119 = vpop.f32.mrb[0].mxu0
  %v6120 = vadd.f32 %v5783, %v6119
  %v6121 = vpop.f32.mrb[0].mxu0
  %v6122 = vpop.f32.mrb[0].mxu0
  %v6123 = vadd.f32 %v5786, %v6122
  %v6124 = vpop.f32.mrb[0].mxu0
  %6125 = vmatprep.mubr.bf16.mxu0 0
  %6126 = vmatmul.mubr.bf16.gmra.mrb[0].mxu0 %v5484
  %v6127 = vpop.f32.mrb[0].mxu0
  %v6128 = vadd.f32 %v5791, %v6127
  %v6129 = vpop.f32.mrb[0].mxu0
  %v6130 = vpop.f32.mrb[0].mxu0
  %v6131 = vadd.f32 %v5794, %v6130
  %v6132 = vpop.f32.mrb[0].mxu0
  %6133 = vmatprep.mubr.bf16.mxu0 0
  %6134 = vmatmul.mubr.bf16.gmra.mrb[0].mxu0 %v5485
  %v6135 = vpop.f32.mrb[0].mxu0
  %v6136 = vadd.f32 %v5799, %v6135
  %v6137 = vpop.f32.mrb[0].mxu0
  %v6138 = vpop.f32.mrb[0].mxu0
  %v6139 = vadd.f32 %v5802, %v6138
  %v6140 = vpop.f32.mrb[0].mxu0
  %6141 = vmatprep.mubr.bf16.mxu0 0
  %6142 = vmatmul.mubr.bf16.gmra.mrb[0].mxu0 %v5486
  %v6143 = vpop.f32.mrb[0].mxu0
  %v6144 = vadd.f32 %v5807, %v6143
  %v6145 = vpop.f32.mrb[0].mxu0
  %v6146 = vpop.f32.mrb[0].mxu0
  %v6147 = vadd.f32 %v5810, %v6146
  %v6148 = vpop.f32.mrb[0].mxu0
  %6149 = vmatprep.mubr.bf16.mxu0 0
  %6150 = vmatmul.mubr.bf16.gmra.mrb[0].mxu0 %v5487
  %v6151 = vpop.f32.mrb[0].mxu0
  %v6152 = vadd.f32 %v5815, %v6151
  %v6153 = vpop.f32.mrb[0].mxu0
  %v6154 = vpop.f32.mrb[0].mxu0
  %v6155 = vadd.f32 %v5818, %v6154
  %v6156 = vpop.f32.mrb[0].mxu0
  %6157 = vmatprep.mubr.bf16.mxu0 0
  %6158 = vmatmul.mubr.bf16.gmra.mrb[0].mxu0 %v5488
  %v6159 = vpop.f32.mrb[0].mxu0
  %v6160 = vadd.f32 %v5823, %v6159
  %v6161 = vpop.f32.mrb[0].mxu0
  %v6162 = vpop.f32.mrb[0].mxu0
  %v6163 = vadd.f32 %v5826, %v6162
  %v6164 = vpop.f32.mrb[0].mxu0
  %6165 = vmatprep.mubr.bf16.mxu0 0
  %6166 = vmatmul.mubr.bf16.gmra.mrb[0].mxu0 %v5489
  %v6167 = vpop.f32.mrb[0].mxu0
  %v6168 = vadd.f32 %v5831, %v6167
  %v6169 = vpop.f32.mrb[0].mxu0
  %v6170 = vpop.f32.mrb[0].mxu0
  %v6171 = vadd.f32 %v5834, %v6170
  %v6172 = vpop.f32.mrb[0].mxu0
  %6173 = vmatprep.mubr.bf16.mxu0 0
  %6174 = vmatmul.mubr.bf16.gmra.mrb[0].mxu0 %v5490
  %v6175 = vpop.f32.mrb[0].mxu0
  %v6176 = vadd.f32 %v5839, %v6175
  %v6177 = vpop.f32.mrb[0].mxu0
  %v6178 = vpop.f32.mrb[0].mxu0
  %v6179 = vadd.f32 %v5842, %v6178
  %v6180 = vpop.f32.mrb[0].mxu0
  %6181 = vmatprep.mubr.bf16.mxu0 0
  %6182 = vmatmul.mubr.bf16.gmra.mrb[0].mxu0 %v5491
  %v6183 = vpop.f32.mrb[0].mxu0
  %v6184 = vadd.f32 %v5847, %v6183
  %v6185 = vpop.f32.mrb[0].mxu0
  %v6186 = vpop.f32.mrb[0].mxu0
  %v6187 = vadd.f32 %v5850, %v6186
  %v6188 = vpop.f32.mrb[0].mxu0
  %6189 = vmatprep.mubr.bf16.mxu0 0
  %6190 = vmatmul.mubr.bf16.gmra.mrb[0].mxu0 %v5492
  %v6191 = vpop.f32.mrb[0].mxu0
  %v6192 = vadd.f32 %v5855, %v6191
  %v6193 = vpop.f32.mrb[0].mxu0
  %v6194 = vpop.f32.mrb[0].mxu0
  %v6195 = vadd.f32 %v5858, %v6194
  %v6196 = vpop.f32.mrb[0].mxu0
  %6197 = vmatprep.mubr.bf16.mxu0 0
  %6198 = vmatmul.mubr.bf16.gmra.mrb[0].mxu0 %v5493
  %v6199 = vpop.f32.mrb[0].mxu0
  %v6200 = vadd.f32 %v5863, %v6199
  %v6201 = vpop.f32.mrb[0].mxu0
  %v6202 = vpop.f32.mrb[0].mxu0
  %v6203 = vadd.f32 %v5866, %v6202
  %v6204 = vpop.f32.mrb[0].mxu0
  %6205 = vmatprep.mubr.bf16.mxu0 0
  %6206 = vmatmul.mubr.bf16.gmra.mrb[0].mxu0 %v5494
  %v6207 = vpop.f32.mrb[0].mxu0
  %v6208 = vadd.f32 %v5871, %v6207
  %v6209 = vpop.f32.mrb[0].mxu0
  %v6210 = vpop.f32.mrb[0].mxu0
  %v6211 = vadd.f32 %v5874, %v6210
  %v6212 = vpop.f32.mrb[0].mxu0
  %6213 = vmatprep.mubr.bf16.mxu0 0
  %6214 = vmatmul.mubr.bf16.gmra.mrb[0].mxu0 %v5495
  %v6215 = vpop.f32.mrb[0].mxu0
  %v6216 = vadd.f32 %v5879, %v6215
  %v6217 = vpop.f32.mrb[0].mxu0
  %v6218 = vpop.f32.mrb[0].mxu0
  %v6219 = vadd.f32 %v5882, %v6218
  %v6220 = vpop.f32.mrb[0].mxu0
  %6221 = vmatprep.mubr.bf16.mxu0 0
  %6222 = vmatmul.mubr.bf16.gmra.mrb[0].mxu0 %v5496
  %v6223 = vpop.f32.mrb[0].mxu0
  %v6224 = vadd.f32 %v5887, %v6223
  %v6225 = vpop.f32.mrb[0].mxu0
  %v6226 = vpop.f32.mrb[0].mxu0
  %v6227 = vadd.f32 %v5890, %v6226
  %v6228 = vpop.f32.mrb[0].mxu0
  %6229 = vmatprep.mubr.bf16.mxu0 0
  %6230 = vmatmul.mubr.bf16.gmra.mrb[0].mxu0 %v5497
  %v6231 = vpop.f32.mrb[0].mxu0
  %v6232 = vadd.f32 %v5895, %v6231
  %v6233 = vpop.f32.mrb[0].mxu0
  %v6234 = vpop.f32.mrb[0].mxu0
  %v6235 = vadd.f32 %v5898, %v6234
  %v6236 = vpop.f32.mrb[0].mxu0
  %6237 = vmatprep.mubr.bf16.mxu0 0
  %6238 = vmatmul.mubr.bf16.gmra.mrb[0].mxu0 %v5498
  %v6239 = vpop.f32.mrb[0].mxu0
  %v6240 = vadd.f32 %v5903, %v6239
  %v6241 = vpop.f32.mrb[0].mxu0
  %v6242 = vpop.f32.mrb[0].mxu0
  %v6243 = vadd.f32 %v5906, %v6242
  %v6244 = vpop.f32.mrb[0].mxu0
  %6245 = vmatprep.mubr.bf16.mxu0 0
  %6246 = vmatmul.mubr.bf16.gmra.mrb[0].mxu0 %v5499
  %v6247 = vpop.f32.mrb[0].mxu0
  %v6248 = vadd.f32 %v5911, %v6247
  %v6249 = vpop.f32.mrb[0].mxu0
  %v6250 = vpop.f32.mrb[0].mxu0
  %v6251 = vadd.f32 %v5914, %v6250
  %v6252 = vpop.f32.mrb[0].mxu0
  %6253 = vmatprep.mubr.bf16.mxu0 0
  %6254 = vmatmul.mubr.bf16.gmra.mrb[0].mxu0 %v5500
  %v6255 = vpop.f32.mrb[0].mxu0
  %v6256 = vadd.f32 %v5919, %v6255
  %v6257 = vpop.f32.mrb[0].mxu0
  %v6258 = vpop.f32.mrb[0].mxu0
  %v6259 = vadd.f32 %v5922, %v6258
  %v6260 = vpop.f32.mrb[0].mxu0
  %6261 = vmatprep.mubr.bf16.mxu0 0
  %6262 = vmatmul.mubr.bf16.gmra.mrb[0].mxu0 %v5501
  %v6263 = vpop.f32.mrb[0].mxu0
  %v6264 = vadd.f32 %v5927, %v6263
  %v6265 = vpop.f32.mrb[0].mxu0
  %v6266 = vpop.f32.mrb[0].mxu0
  %v6267 = vadd.f32 %v5930, %v6266
  %v6268 = vpop.f32.mrb[0].mxu0
  %6269 = vmatprep.mubr.bf16.mxu0 0
  %6270 = vmatmul.mubr.bf16.gmra.mrb[0].mxu0 %v5502
  %v6271 = vpop.f32.mrb[0].mxu0
  %v6272 = vadd.f32 %v5935, %v6271
  %v6273 = vpop.f32.mrb[0].mxu0
  %v6274 = vpop.f32.mrb[0].mxu0
  %v6275 = vadd.f32 %v5938, %v6274
  %v6276 = vpop.f32.mrb[0].mxu0
  %6277 = vmatprep.mubr.bf16.mxu0 0
  %6278 = vmatmul.mubr.bf16.gmra.mrb[0].mxu0 %v5503
  %v6279 = vpop.f32.mrb[0].mxu0
  %v6280 = vadd.f32 %v5943, %v6279
  %v6281 = vpop.f32.mrb[0].mxu0
  %v6282 = vpop.f32.mrb[0].mxu0
  %v6283 = vadd.f32 %v5946, %v6282
  %v6284 = vpop.f32.mrb[0].mxu0
  %6285 = vmatprep.mubr.bf16.mxu0 0
  %6286 = vmatmul.mubr.bf16.gmra.mrb[0].mxu0 %v5504
  %v6287 = vpop.f32.mrb[0].mxu0
  %v6288 = vadd.f32 %v5951, %v6287
  %v6289 = vpop.f32.mrb[0].mxu0
  %v6290 = vpop.f32.mrb[0].mxu0
  %v6291 = vadd.f32 %v5954, %v6290
  %v6292 = vpop.f32.mrb[0].mxu0
  %6293 = vmatprep.mubr.bf16.mxu0 0
  %6294 = vmatmul.mubr.bf16.gmra.mrb[0].mxu0 %v5505
  %v6295 = vpop.f32.mrb[0].mxu0
  %v6296 = vadd.f32 %v5959, %v6295
  %v6297 = vpop.f32.mrb[0].mxu0
  %v6298 = vpop.f32.mrb[0].mxu0
  %v6299 = vadd.f32 %v5962, %v6298
  %v6300 = vpop.f32.mrb[0].mxu0
  %6301 = vmatprep.mubr.bf16.mxu0 0
  %6302 = vmatmul.mubr.bf16.gmra.mrb[0].mxu0 %v5506
  %v6303 = vpop.f32.mrb[0].mxu0
  %v6304 = vadd.f32 %v5967, %v6303
  %v6305 = vpop.f32.mrb[0].mxu0
  %v6306 = vpop.f32.mrb[0].mxu0
  %v6307 = vadd.f32 %v5970, %v6306
  %v6308 = vpop.f32.mrb[0].mxu0
  %6309 = vdwg.mxu0
  %v6310 = vld [vmem:[#allocation2 + $0x2] sm:$0xff]
  %v6311 = vld [vmem:[#allocation2 + $0xa] sm:$0xff]
  %v6312 = vld [vmem:[#allocation2 + $0x1a] sm:$0xff]
  %v6313 = vld [vmem:[#allocation2 + $0x22] sm:$0xff]
  %v6314 = vld [vmem:[#allocation2 + $0x32] sm:$0xff]
  %v6315 = vld [vmem:[#allocation2 + $0x3a] sm:$0xff]
  %v6316 = vld [vmem:[#allocation2 + $0x4a] sm:$0xff]
  %v6317 = vld [vmem:[#allocation2 + $0x52] sm:$0xff]
  %v6318 = vld [vmem:[#allocation2 + $0x62] sm:$0xff]
  %v6319 = vld [vmem:[#allocation2 + $0x6a] sm:$0xff]
  %v6320 = vld [vmem:[#allocation2 + $0x7a] sm:$0xff]
  %v6321 = vld [vmem:[#allocation2 + $0x82] sm:$0xff]
  %v6322 = vld [vmem:[#allocation2 + $0x92] sm:$0xff]
  %v6323 = vld [vmem:[#allocation2 + $0x9a] sm:$0xff]
  %v6324 = vld [vmem:[#allocation2 + $0xaa] sm:$0xff]
  %v6325 = vld [vmem:[#allocation2 + $0xb2] sm:$0xff]
  %v6326 = vld [vmem:[#allocation2 + $0xc2] sm:$0xff]
  %v6327 = vld [vmem:[#allocation2 + $0xca] sm:$0xff]
  %v6328 = vld [vmem:[#allocation2 + $0xda] sm:$0xff]
  %v6329 = vld [vmem:[#allocation2 + $0xe2] sm:$0xff]
  %v6330 = vld [vmem:[#allocation2 + $0xf2] sm:$0xff]
  %v6331 = vld [vmem:[#allocation2 + $0xfa] sm:$0xff]
  %v6332 = vld [vmem:[#allocation2 + $0x10a] sm:$0xff]
  %v6333 = vld [vmem:[#allocation2 + $0x112] sm:$0xff]
  %v6334 = vld [vmem:[#allocation2 + $0x122] sm:$0xff]
  %v6335 = vld [vmem:[#allocation2 + $0x12a] sm:$0xff]
  %v6336 = vld [vmem:[#allocation2 + $0x13a] sm:$0xff]
  %v6337 = vld [vmem:[#allocation2 + $0x142] sm:$0xff]
  %v6338 = vld [vmem:[#allocation2 + $0x152] sm:$0xff]
  %v6339 = vld [vmem:[#allocation2 + $0x15a] sm:$0xff]
  %v6340 = vld [vmem:[#allocation2 + $0x16a] sm:$0xff]
  %v6341 = vld [vmem:[#allocation2 + $0x172] sm:$0xff]
  %v6342 = vld [vmem:[#allocation2 + $0x1b2] sm:$0xff]
  %v6343 = vld [vmem:[#allocation2 + $0x1ba] sm:$0xff]
  %v6344 = vld [vmem:[#allocation2 + $0x1ca] sm:$0xff]
  %v6345 = vld [vmem:[#allocation2 + $0x1d2] sm:$0xff]
  %v6346 = vld [vmem:[#allocation2 + $0x1e2] sm:$0xff]
  %v6347 = vld [vmem:[#allocation2 + $0x1ea] sm:$0xff]
  %v6348 = vld [vmem:[#allocation2 + $0x1fa] sm:$0xff]
  %v6349 = vld [vmem:[#allocation2 + $0x202] sm:$0xff]
  %v6350 = vld [vmem:[#allocation2 + $0x212] sm:$0xff]
  %v6351 = vld [vmem:[#allocation2 + $0x21a] sm:$0xff]
  %v6352 = vld [vmem:[#allocation2 + $0x22a] sm:$0xff]
  %v6353 = vld [vmem:[#allocation2 + $0x232] sm:$0xff]
  %v6354 = vld [vmem:[#allocation2 + $0x242] sm:$0xff]
  %v6355 = vld [vmem:[#allocation2 + $0x24a] sm:$0xff]
  %v6356 = vld [vmem:[#allocation2 + $0x25a] sm:$0xff]
  %v6357 = vld [vmem:[#allocation2 + $0x262] sm:$0xff]
  %v6358 = vld [vmem:[#allocation2 + $0x272] sm:$0xff]
  %v6359 = vld [vmem:[#allocation2 + $0x27a] sm:$0xff]
  %v6360 = vld [vmem:[#allocation2 + $0x28a] sm:$0xff]
  %v6361 = vld [vmem:[#allocation2 + $0x292] sm:$0xff]
  %v6362 = vld [vmem:[#allocation2 + $0x2a2] sm:$0xff]
  %v6363 = vld [vmem:[#allocation2 + $0x2aa] sm:$0xff]
  %v6364 = vld [vmem:[#allocation2 + $0x2ba] sm:$0xff]
  %v6365 = vld [vmem:[#allocation2 + $0x2c2] sm:$0xff]
  %v6366 = vld [vmem:[#allocation2 + $0x2d2] sm:$0xff]
  %v6367 = vld [vmem:[#allocation2 + $0x2da] sm:$0xff]
  %v6368 = vld [vmem:[#allocation2 + $0x2ea] sm:$0xff]
  %v6369 = vld [vmem:[#allocation2 + $0x2f2] sm:$0xff]
  %v6370 = vld [vmem:[#allocation2 + $0x302] sm:$0xff]
  %v6371 = vld [vmem:[#allocation2 + $0x30a] sm:$0xff]
  %v6372 = vld [vmem:[#allocation2 + $0x31a] sm:$0xff]
  %v6373 = vld [vmem:[#allocation2 + $0x322] sm:$0xff]
  %v6374 = vpack.c.bf16 %v6311, %v6310
  %v6375 = vpack.c.bf16 %v6313, %v6312
  %v6376 = vpack.c.bf16 %v6315, %v6314
  %v6377 = vpack.c.bf16 %v6317, %v6316
  %v6378 = vpack.c.bf16 %v6319, %v6318
  %v6379 = vpack.c.bf16 %v6321, %v6320
  %v6380 = vpack.c.bf16 %v6323, %v6322
  %v6381 = vpack.c.bf16 %v6325, %v6324
  %v6382 = vpack.c.bf16 %v6327, %v6326
  %v6383 = vpack.c.bf16 %v6329, %v6328
  %v6384 = vpack.c.bf16 %v6331, %v6330
  %v6385 = vpack.c.bf16 %v6333, %v6332
  %v6386 = vpack.c.bf16 %v6335, %v6334
  %v6387 = vpack.c.bf16 %v6337, %v6336
  %v6388 = vpack.c.bf16 %v6339, %v6338
  %v6389 = vpack.c.bf16 %v6341, %v6340
  %v6390 = vpack.c.bf16 %v6343, %v6342
  %v6391 = vpack.c.bf16 %v6345, %v6344
  %v6392 = vpack.c.bf16 %v6347, %v6346
  %v6393 = vpack.c.bf16 %v6349, %v6348
  %v6394 = vpack.c.bf16 %v6351, %v6350
  %v6395 = vpack.c.bf16 %v6353, %v6352
  %v6396 = vpack.c.bf16 %v6355, %v6354
  %v6397 = vpack.c.bf16 %v6357, %v6356
  %v6398 = vpack.c.bf16 %v6359, %v6358
  %v6399 = vpack.c.bf16 %v6361, %v6360
  %v6400 = vpack.c.bf16 %v6363, %v6362
  %v6401 = vpack.c.bf16 %v6365, %v6364
  %v6402 = vpack.c.bf16 %v6367, %v6366
  %v6403 = vpack.c.bf16 %v6369, %v6368
  %v6404 = vpack.c.bf16 %v6371, %v6370
  %v6405 = vpack.c.bf16 %v6373, %v6372
  %s6406 = scalar_lea.vmem %s2, 128
  %v6407 = vld [vmem:[%s6406] sm:$0xf]
  %v6408 = vld [vmem:[%s6406 + $0x4] sm:$0xf]
  %v6409 = vld [vmem:[%s6406 + $0x8] sm:$0xf]
  %v6410 = vld [vmem:[%s6406 + $0xc] sm:$0xf]
  %v6411 = vld [vmem:[%s6406 + $0x10] sm:$0xf]
  %v6412 = vld [vmem:[%s6406 + $0x14] sm:$0xf]
  %v6413 = vld [vmem:[%s6406 + $0x18] sm:$0xf]
  %v6414 = vld [vmem:[%s6406 + $0x1c] sm:$0xf]
  %v6415 = vld [vmem:[%s6406 + $0x20] sm:$0xf]
  %v6416 = vld [vmem:[%s6406 + $0x24] sm:$0xf]
  %v6417 = vld [vmem:[%s6406 + $0x28] sm:$0xf]
  %v6418 = vld [vmem:[%s6406 + $0x2c] sm:$0xf]
  %v6419 = vld [vmem:[%s6406 + $0x30] sm:$0xf]
  %v6420 = vld [vmem:[%s6406 + $0x34] sm:$0xf]
  %v6421 = vld [vmem:[%s6406 + $0x38] sm:$0xf]
  %v6422 = vld [vmem:[%s6406 + $0x3c] sm:$0xf]
  %v6439 = vunpack.c.l.b16 %v6407
  %v6440 = vunpack.c.l.b16 %v6408
  %v6441 = vunpack.c.l.b16 %v6409
  %v6442 = vunpack.c.l.b16 %v6410
  %v6443 = vunpack.c.l.b16 %v6411
  %v6444 = vunpack.c.l.b16 %v6412
  %v6445 = vunpack.c.l.b16 %v6413
  %v6446 = vunpack.c.l.b16 %v6414
  %v6447 = vunpack.c.l.b16 %v6415
  %v6448 = vunpack.c.l.b16 %v6416
  %v6449 = vunpack.c.l.b16 %v6417
  %v6450 = vunpack.c.l.b16 %v6418
  %v6451 = vunpack.c.l.b16 %v6419
  %v6452 = vunpack.c.l.b16 %v6420
  %v6453 = vunpack.c.l.b16 %v6421
  %v6454 = vunpack.c.l.b16 %v6422
  %v6455 = vpack.c.b16 %v6440, %v6439
  %v6456 = vpack.c.b16 %v6442, %v6441
  %v6457 = vpack.c.b16 %v6444, %v6443
  %v6458 = vpack.c.b16 %v6446, %v6445
  %v6459 = vpack.c.b16 %v6448, %v6447
  %v6460 = vpack.c.b16 %v6450, %v6449
  %v6461 = vpack.c.b16 %v6452, %v6451
  %v6462 = vpack.c.b16 %v6454, %v6453
  %6471 = vmatprep.subr.bf16.mxu0 0
  %6472 = vmatpush1.bf16.msra.mxu0 %v6455
  %6473 = vmatprep.subr.bf16.mxu0 0
  %6474 = vmatpush1.bf16.msra.mxu0 %v6456
  %6475 = vmatprep.subr.bf16.mxu0 0
  %6476 = vmatpush1.bf16.msra.mxu0 %v6457
  %6477 = vmatprep.subr.bf16.mxu0 0
  %6478 = vmatpush1.bf16.msra.mxu0 %v6458
  %6479 = vmatprep.subr.bf16.mxu0 0
  %6480 = vmatpush1.bf16.msra.mxu0 %v6459
  %6481 = vmatprep.subr.bf16.mxu0 0
  %6482 = vmatpush1.bf16.msra.mxu0 %v6460
  %6483 = vmatprep.subr.bf16.mxu0 0
  %6484 = vmatpush1.bf16.msra.mxu0 %v6461
  %6485 = vmatprep.subr.bf16.mxu0 0
  %6486 = vmatpush1.bf16.msra.mxu0 %v6462
  %6487 = vmatprep.subr.bf16.mxu0 0
  %6488 = vmatpush1.bf16.msra.mxu0 0
  %6489 = vmatprep.subr.bf16.mxu0 0
  %6490 = vmatpush1.bf16.msra.mxu0 0
  %6491 = vmatprep.subr.bf16.mxu0 0
  %6492 = vmatpush1.bf16.msra.mxu0 0
  %6493 = vmatprep.subr.bf16.mxu0 0
  %6494 = vmatpush1.bf16.msra.mxu0 0
  %6495 = vmatprep.subr.bf16.mxu0 0
  %6496 = vmatpush1.bf16.msra.mxu0 0
  %6497 = vmatprep.subr.bf16.mxu0 0
  %6498 = vmatpush1.bf16.msra.mxu0 0
  %6499 = vmatprep.subr.bf16.mxu0 0
  %6500 = vmatpush1.bf16.msra.mxu0 0
  %6501 = vmatprep.subr.bf16.mxu0 0
  %6502 = vmatpush1.bf16.msra.mxu0 0
  %6503 = vmatprep.mubr.bf16.mxu0 0
  %6504 = vmatmul.mubr.bf16.gmra.mrb[0].mxu0 %v6374
  %v6505 = vpop.f32.mrb[0].mxu0
  %v6506 = vadd.f32 0.0, %v6505
  %v6507 = vpop.f32.mrb[0].mxu0
  %v6508 = vpop.f32.mrb[0].mxu0
  %v6509 = vadd.f32 0.0, %v6508
  %v6510 = vpop.f32.mrb[0].mxu0
  %6511 = vmatprep.mubr.bf16.mxu0 0
  %6512 = vmatmul.mubr.bf16.gmra.mrb[0].mxu0 %v6375
  %v6513 = vpop.f32.mrb[0].mxu0
  %v6514 = vadd.f32 0.0, %v6513
  %v6515 = vpop.f32.mrb[0].mxu0
  %v6516 = vpop.f32.mrb[0].mxu0
  %v6517 = vadd.f32 0.0, %v6516
  %v6518 = vpop.f32.mrb[0].mxu0
  %6519 = vmatprep.mubr.bf16.mxu0 0
  %6520 = vmatmul.mubr.bf16.gmra.mrb[0].mxu0 %v6376
  %v6521 = vpop.f32.mrb[0].mxu0
  %v6522 = vadd.f32 0.0, %v6521
  %v6523 = vpop.f32.mrb[0].mxu0
  %v6524 = vpop.f32.mrb[0].mxu0
  %v6525 = vadd.f32 0.0, %v6524
  %v6526 = vpop.f32.mrb[0].mxu0
  %6527 = vmatprep.mubr.bf16.mxu0 0
  %6528 = vmatmul.mubr.bf16.gmra.mrb[0].mxu0 %v6377
  %v6529 = vpop.f32.mrb[0].mxu0
  %v6530 = vadd.f32 0.0, %v6529
  %v6531 = vpop.f32.mrb[0].mxu0
  %v6532 = vpop.f32.mrb[0].mxu0
  %v6533 = vadd.f32 0.0, %v6532
  %v6534 = vpop.f32.mrb[0].mxu0
  %6535 = vmatprep.mubr.bf16.mxu0 0
  %6536 = vmatmul.mubr.bf16.gmra.mrb[0].mxu0 %v6378
  %v6537 = vpop.f32.mrb[0].mxu0
  %v6538 = vadd.f32 0.0, %v6537
  %v6539 = vpop.f32.mrb[0].mxu0
  %v6540 = vpop.f32.mrb[0].mxu0
  %v6541 = vadd.f32 0.0, %v6540
  %v6542 = vpop.f32.mrb[0].mxu0
  %6543 = vmatprep.mubr.bf16.mxu0 0
  %6544 = vmatmul.mubr.bf16.gmra.mrb[0].mxu0 %v6379
  %v6545 = vpop.f32.mrb[0].mxu0
  %v6546 = vadd.f32 0.0, %v6545
  %v6547 = vpop.f32.mrb[0].mxu0
  %v6548 = vpop.f32.mrb[0].mxu0
  %v6549 = vadd.f32 0.0, %v6548
  %v6550 = vpop.f32.mrb[0].mxu0
  %6551 = vmatprep.mubr.bf16.mxu0 0
  %6552 = vmatmul.mubr.bf16.gmra.mrb[0].mxu0 %v6380
  %v6553 = vpop.f32.mrb[0].mxu0
  %v6554 = vadd.f32 0.0, %v6553
  %v6555 = vpop.f32.mrb[0].mxu0
  %v6556 = vpop.f32.mrb[0].mxu0
  %v6557 = vadd.f32 0.0, %v6556
  %v6558 = vpop.f32.mrb[0].mxu0
  %6559 = vmatprep.mubr.bf16.mxu0 0
  %6560 = vmatmul.mubr.bf16.gmra.mrb[0].mxu0 %v6381
  %v6561 = vpop.f32.mrb[0].mxu0
  %v6562 = vadd.f32 0.0, %v6561
  %v6563 = vpop.f32.mrb[0].mxu0
  %v6564 = vpop.f32.mrb[0].mxu0
  %v6565 = vadd.f32 0.0, %v6564
  %v6566 = vpop.f32.mrb[0].mxu0
  %6567 = vmatprep.mubr.bf16.mxu0 0
  %6568 = vmatmul.mubr.bf16.gmra.mrb[0].mxu0 %v6382
  %v6569 = vpop.f32.mrb[0].mxu0
  %v6570 = vadd.f32 0.0, %v6569
  %v6571 = vpop.f32.mrb[0].mxu0
  %v6572 = vpop.f32.mrb[0].mxu0
  %v6573 = vadd.f32 0.0, %v6572
  %v6574 = vpop.f32.mrb[0].mxu0
  %6575 = vmatprep.mubr.bf16.mxu0 0
  %6576 = vmatmul.mubr.bf16.gmra.mrb[0].mxu0 %v6383
  %v6577 = vpop.f32.mrb[0].mxu0
  %v6578 = vadd.f32 0.0, %v6577
  %v6579 = vpop.f32.mrb[0].mxu0
  %v6580 = vpop.f32.mrb[0].mxu0
  %v6581 = vadd.f32 0.0, %v6580
  %v6582 = vpop.f32.mrb[0].mxu0
  %6583 = vmatprep.mubr.bf16.mxu0 0
  %6584 = vmatmul.mubr.bf16.gmra.mrb[0].mxu0 %v6384
  %v6585 = vpop.f32.mrb[0].mxu0
  %v6586 = vadd.f32 0.0, %v6585
  %v6587 = vpop.f32.mrb[0].mxu0
  %v6588 = vpop.f32.mrb[0].mxu0
  %v6589 = vadd.f32 0.0, %v6588
  %v6590 = vpop.f32.mrb[0].mxu0
  %6591 = vmatprep.mubr.bf16.mxu0 0
  %6592 = vmatmul.mubr.bf16.gmra.mrb[0].mxu0 %v6385
  %v6593 = vpop.f32.mrb[0].mxu0
  %v6594 = vadd.f32 0.0, %v6593
  %v6595 = vpop.f32.mrb[0].mxu0
  %v6596 = vpop.f32.mrb[0].mxu0
  %v6597 = vadd.f32 0.0, %v6596
  %v6598 = vpop.f32.mrb[0].mxu0
  %6599 = vmatprep.mubr.bf16.mxu0 0
  %6600 = vmatmul.mubr.bf16.gmra.mrb[0].mxu0 %v6386
  %v6601 = vpop.f32.mrb[0].mxu0
  %v6602 = vadd.f32 0.0, %v6601
  %v6603 = vpop.f32.mrb[0].mxu0
  %v6604 = vpop.f32.mrb[0].mxu0
  %v6605 = vadd.f32 0.0, %v6604
  %v6606 = vpop.f32.mrb[0].mxu0
  %6607 = vmatprep.mubr.bf16.mxu0 0
  %6608 = vmatmul.mubr.bf16.gmra.mrb[0].mxu0 %v6387
  %v6609 = vpop.f32.mrb[0].mxu0
  %v6610 = vadd.f32 0.0, %v6609
  %v6611 = vpop.f32.mrb[0].mxu0
  %v6612 = vpop.f32.mrb[0].mxu0
  %v6613 = vadd.f32 0.0, %v6612
  %v6614 = vpop.f32.mrb[0].mxu0
  %6615 = vmatprep.mubr.bf16.mxu0 0
  %6616 = vmatmul.mubr.bf16.gmra.mrb[0].mxu0 %v6388
  %v6617 = vpop.f32.mrb[0].mxu0
  %v6618 = vadd.f32 0.0, %v6617
  %v6619 = vpop.f32.mrb[0].mxu0
  %v6620 = vpop.f32.mrb[0].mxu0
  %v6621 = vadd.f32 0.0, %v6620
  %v6622 = vpop.f32.mrb[0].mxu0
  %6623 = vmatprep.mubr.bf16.mxu0 0
  %6624 = vmatmul.mubr.bf16.gmra.mrb[0].mxu0 %v6389
  %v6625 = vpop.f32.mrb[0].mxu0
  %v6626 = vadd.f32 0.0, %v6625
  %v6627 = vpop.f32.mrb[0].mxu0
  %v6628 = vpop.f32.mrb[0].mxu0
  %v6629 = vadd.f32 0.0, %v6628
  %v6630 = vpop.f32.mrb[0].mxu0
  %6631 = vmatprep.mubr.bf16.mxu0 0
  %6632 = vmatmul.mubr.bf16.gmra.mrb[0].mxu0 %v6390
  %v6633 = vpop.f32.mrb[0].mxu0
  %v6634 = vadd.f32 0.0, %v6633
  %v6635 = vpop.f32.mrb[0].mxu0
  %v6636 = vpop.f32.mrb[0].mxu0
  %v6637 = vadd.f32 0.0, %v6636
  %v6638 = vpop.f32.mrb[0].mxu0
  %6639 = vmatprep.mubr.bf16.mxu0 0
  %6640 = vmatmul.mubr.bf16.gmra.mrb[0].mxu0 %v6391
  %v6641 = vpop.f32.mrb[0].mxu0
  %v6642 = vadd.f32 0.0, %v6641
  %v6643 = vpop.f32.mrb[0].mxu0
  %v6644 = vpop.f32.mrb[0].mxu0
  %v6645 = vadd.f32 0.0, %v6644
  %v6646 = vpop.f32.mrb[0].mxu0
  %6647 = vmatprep.mubr.bf16.mxu0 0
  %6648 = vmatmul.mubr.bf16.gmra.mrb[0].mxu0 %v6392
  %v6649 = vpop.f32.mrb[0].mxu0
  %v6650 = vadd.f32 0.0, %v6649
  %v6651 = vpop.f32.mrb[0].mxu0
  %v6652 = vpop.f32.mrb[0].mxu0
  %v6653 = vadd.f32 0.0, %v6652
  %v6654 = vpop.f32.mrb[0].mxu0
  %6655 = vmatprep.mubr.bf16.mxu0 0
  %6656 = vmatmul.mubr.bf16.gmra.mrb[0].mxu0 %v6393
  %v6657 = vpop.f32.mrb[0].mxu0
  %v6658 = vadd.f32 0.0, %v6657
  %v6659 = vpop.f32.mrb[0].mxu0
  %v6660 = vpop.f32.mrb[0].mxu0
  %v6661 = vadd.f32 0.0, %v6660
  %v6662 = vpop.f32.mrb[0].mxu0
  %6663 = vmatprep.mubr.bf16.mxu0 0
  %6664 = vmatmul.mubr.bf16.gmra.mrb[0].mxu0 %v6394
  %v6665 = vpop.f32.mrb[0].mxu0
  %v6666 = vadd.f32 0.0, %v6665
  %v6667 = vpop.f32.mrb[0].mxu0
  %v6668 = vpop.f32.mrb[0].mxu0
  %v6669 = vadd.f32 0.0, %v6668
  %v6670 = vpop.f32.mrb[0].mxu0
  %6671 = vmatprep.mubr.bf16.mxu0 0
  %6672 = vmatmul.mubr.bf16.gmra.mrb[0].mxu0 %v6395
  %v6673 = vpop.f32.mrb[0].mxu0
  %v6674 = vadd.f32 0.0, %v6673
  %v6675 = vpop.f32.mrb[0].mxu0
  %v6676 = vpop.f32.mrb[0].mxu0
  %v6677 = vadd.f32 0.0, %v6676
  %v6678 = vpop.f32.mrb[0].mxu0
  %6679 = vmatprep.mubr.bf16.mxu0 0
  %6680 = vmatmul.mubr.bf16.gmra.mrb[0].mxu0 %v6396
  %v6681 = vpop.f32.mrb[0].mxu0
  %v6682 = vadd.f32 0.0, %v6681
  %v6683 = vpop.f32.mrb[0].mxu0
  %v6684 = vpop.f32.mrb[0].mxu0
  %v6685 = vadd.f32 0.0, %v6684
  %v6686 = vpop.f32.mrb[0].mxu0
  %6687 = vmatprep.mubr.bf16.mxu0 0
  %6688 = vmatmul.mubr.bf16.gmra.mrb[0].mxu0 %v6397
  %v6689 = vpop.f32.mrb[0].mxu0
  %v6690 = vadd.f32 0.0, %v6689
  %v6691 = vpop.f32.mrb[0].mxu0
  %v6692 = vpop.f32.mrb[0].mxu0
  %v6693 = vadd.f32 0.0, %v6692
  %v6694 = vpop.f32.mrb[0].mxu0
  %6695 = vmatprep.mubr.bf16.mxu0 0
  %6696 = vmatmul.mubr.bf16.gmra.mrb[0].mxu0 %v6398
  %v6697 = vpop.f32.mrb[0].mxu0
  %v6698 = vadd.f32 0.0, %v6697
  %v6699 = vpop.f32.mrb[0].mxu0
  %v6700 = vpop.f32.mrb[0].mxu0
  %v6701 = vadd.f32 0.0, %v6700
  %v6702 = vpop.f32.mrb[0].mxu0
  %6703 = vmatprep.mubr.bf16.mxu0 0
  %6704 = vmatmul.mubr.bf16.gmra.mrb[0].mxu0 %v6399
  %v6705 = vpop.f32.mrb[0].mxu0
  %v6706 = vadd.f32 0.0, %v6705
  %v6707 = vpop.f32.mrb[0].mxu0
  %v6708 = vpop.f32.mrb[0].mxu0
  %v6709 = vadd.f32 0.0, %v6708
  %v6710 = vpop.f32.mrb[0].mxu0
  %6711 = vmatprep.mubr.bf16.mxu0 0
  %6712 = vmatmul.mubr.bf16.gmra.mrb[0].mxu0 %v6400
  %v6713 = vpop.f32.mrb[0].mxu0
  %v6714 = vadd.f32 0.0, %v6713
  %v6715 = vpop.f32.mrb[0].mxu0
  %v6716 = vpop.f32.mrb[0].mxu0
  %v6717 = vadd.f32 0.0, %v6716
  %v6718 = vpop.f32.mrb[0].mxu0
  %6719 = vmatprep.mubr.bf16.mxu0 0
  %6720 = vmatmul.mubr.bf16.gmra.mrb[0].mxu0 %v6401
  %v6721 = vpop.f32.mrb[0].mxu0
  %v6722 = vadd.f32 0.0, %v6721
  %v6723 = vpop.f32.mrb[0].mxu0
  %v6724 = vpop.f32.mrb[0].mxu0
  %v6725 = vadd.f32 0.0, %v6724
  %v6726 = vpop.f32.mrb[0].mxu0
  %6727 = vmatprep.mubr.bf16.mxu0 0
  %6728 = vmatmul.mubr.bf16.gmra.mrb[0].mxu0 %v6402
  %v6729 = vpop.f32.mrb[0].mxu0
  %v6730 = vadd.f32 0.0, %v6729
  %v6731 = vpop.f32.mrb[0].mxu0
  %v6732 = vpop.f32.mrb[0].mxu0
  %v6733 = vadd.f32 0.0, %v6732
  %v6734 = vpop.f32.mrb[0].mxu0
  %6735 = vmatprep.mubr.bf16.mxu0 0
  %6736 = vmatmul.mubr.bf16.gmra.mrb[0].mxu0 %v6403
  %v6737 = vpop.f32.mrb[0].mxu0
  %v6738 = vadd.f32 0.0, %v6737
  %v6739 = vpop.f32.mrb[0].mxu0
  %v6740 = vpop.f32.mrb[0].mxu0
  %v6741 = vadd.f32 0.0, %v6740
  %v6742 = vpop.f32.mrb[0].mxu0
  %6743 = vmatprep.mubr.bf16.mxu0 0
  %6744 = vmatmul.mubr.bf16.gmra.mrb[0].mxu0 %v6404
  %v6745 = vpop.f32.mrb[0].mxu0
  %v6746 = vadd.f32 0.0, %v6745
  %v6747 = vpop.f32.mrb[0].mxu0
  %v6748 = vpop.f32.mrb[0].mxu0
  %v6749 = vadd.f32 0.0, %v6748
  %v6750 = vpop.f32.mrb[0].mxu0
  %6751 = vmatprep.mubr.bf16.mxu0 0
  %6752 = vmatmul.mubr.bf16.gmra.mrb[0].mxu0 %v6405
  %v6753 = vpop.f32.mrb[0].mxu0
  %v6754 = vadd.f32 0.0, %v6753
  %v6755 = vpop.f32.mrb[0].mxu0
  %v6756 = vpop.f32.mrb[0].mxu0
  %v6757 = vadd.f32 0.0, %v6756
  %v6758 = vpop.f32.mrb[0].mxu0
  %6759 = vdwg.mxu0
  %v6760 = vadd.f32 %v6056, %v6506
  %v6761 = vadd.f32 %v6059, %v6509
  %v6762 = vadd.f32 %v6064, %v6514
  %v6763 = vadd.f32 %v6067, %v6517
  %v6764 = vadd.f32 %v6072, %v6522
  %v6765 = vadd.f32 %v6075, %v6525
  %v6766 = vadd.f32 %v6080, %v6530
  %v6767 = vadd.f32 %v6083, %v6533
  %v6768 = vadd.f32 %v6088, %v6538
  %v6769 = vadd.f32 %v6091, %v6541
  %v6770 = vadd.f32 %v6096, %v6546
  %v6771 = vadd.f32 %v6099, %v6549
  %v6772 = vadd.f32 %v6104, %v6554
  %v6773 = vadd.f32 %v6107, %v6557
  %v6774 = vadd.f32 %v6112, %v6562
  %v6775 = vadd.f32 %v6115, %v6565
  %v6776 = vadd.f32 %v6120, %v6570
  %v6777 = vadd.f32 %v6123, %v6573
  %v6778 = vadd.f32 %v6128, %v6578
  %v6779 = vadd.f32 %v6131, %v6581
  %v6780 = vadd.f32 %v6136, %v6586
  %v6781 = vadd.f32 %v6139, %v6589
  %v6782 = vadd.f32 %v6144, %v6594
  %v6783 = vadd.f32 %v6147, %v6597
  %v6784 = vadd.f32 %v6152, %v6602
  %v6785 = vadd.f32 %v6155, %v6605
  %v6786 = vadd.f32 %v6160, %v6610
  %v6787 = vadd.f32 %v6163, %v6613
  %v6788 = vadd.f32 %v6168, %v6618
  %v6789 = vadd.f32 %v6171, %v6621
  %v6790 = vadd.f32 %v6176, %v6626
  %v6791 = vadd.f32 %v6179, %v6629
  %v6792 = vadd.f32 %v6184, %v6634
  %v6793 = vadd.f32 %v6187, %v6637
  %v6794 = vadd.f32 %v6192, %v6642
  %v6795 = vadd.f32 %v6195, %v6645
  %v6796 = vadd.f32 %v6200, %v6650
  %v6797 = vadd.f32 %v6203, %v6653
  %v6798 = vadd.f32 %v6208, %v6658
  %v6799 = vadd.f32 %v6211, %v6661
  %v6800 = vadd.f32 %v6216, %v6666
  %v6801 = vadd.f32 %v6219, %v6669
  %v6802 = vadd.f32 %v6224, %v6674
  %v6803 = vadd.f32 %v6227, %v6677
  %v6804 = vadd.f32 %v6232, %v6682
  %v6805 = vadd.f32 %v6235, %v6685
  %v6806 = vadd.f32 %v6240, %v6690
  %v6807 = vadd.f32 %v6243, %v6693
  %v6808 = vadd.f32 %v6248, %v6698
  %v6809 = vadd.f32 %v6251, %v6701
  %v6810 = vadd.f32 %v6256, %v6706
  %v6811 = vadd.f32 %v6259, %v6709
  %v6812 = vadd.f32 %v6264, %v6714
  %v6813 = vadd.f32 %v6267, %v6717
  %v6814 = vadd.f32 %v6272, %v6722
  %v6815 = vadd.f32 %v6275, %v6725
  %v6816 = vadd.f32 %v6280, %v6730
  %v6817 = vadd.f32 %v6283, %v6733
  %v6818 = vadd.f32 %v6288, %v6738
  %v6819 = vadd.f32 %v6291, %v6741
  %v6820 = vadd.f32 %v6296, %v6746
  %v6821 = vadd.f32 %v6299, %v6749
  %v6822 = vadd.f32 %v6304, %v6754
  %v6823 = vadd.f32 %v6307, %v6757
  %v6824 = vld [vmem:[%s173] sm:$0xff]
  %v6825 = vld [vmem:[%s173 + $0x8] sm:$0xff]
  %v6826 = vld [vmem:[%s173 + $0x18] sm:$0xff]
  %v6827 = vld [vmem:[%s173 + $0x20] sm:$0xff]
  %v6828 = vld [vmem:[%s173 + $0x30] sm:$0xff]
  %v6829 = vld [vmem:[%s173 + $0x38] sm:$0xff]
  %v6830 = vld [vmem:[%s173 + $0x48] sm:$0xff]
  %v6831 = vld [vmem:[%s173 + $0x50] sm:$0xff]
  %v6832 = vld [vmem:[%s173 + $0x60] sm:$0xff]
  %v6833 = vld [vmem:[%s173 + $0x68] sm:$0xff]
  %v6834 = vld [vmem:[%s173 + $0x78] sm:$0xff]
  %v6835 = vld [vmem:[%s173 + $0x80] sm:$0xff]
  %v6836 = vld [vmem:[%s173 + $0x90] sm:$0xff]
  %v6837 = vld [vmem:[%s173 + $0x98] sm:$0xff]
  %v6838 = vld [vmem:[%s173 + $0xa8] sm:$0xff]
  %v6839 = vld [vmem:[%s173 + $0xb0] sm:$0xff]
  %v6840 = vld [vmem:[%s173 + $0xc0] sm:$0xff]
  %v6841 = vld [vmem:[%s173 + $0xc8] sm:$0xff]
  %v6842 = vld [vmem:[%s173 + $0xd8] sm:$0xff]
  %v6843 = vld [vmem:[%s173 + $0xe0] sm:$0xff]
  %v6844 = vld [vmem:[%s173 + $0xf0] sm:$0xff]
  %v6845 = vld [vmem:[%s173 + $0xf8] sm:$0xff]
  %v6846 = vld [vmem:[%s173 + $0x108] sm:$0xff]
  %v6847 = vld [vmem:[%s173 + $0x110] sm:$0xff]
  %v6848 = vld [vmem:[%s173 + $0x120] sm:$0xff]
  %v6849 = vld [vmem:[%s173 + $0x128] sm:$0xff]
  %v6850 = vld [vmem:[%s173 + $0x138] sm:$0xff]
  %v6851 = vld [vmem:[%s173 + $0x140] sm:$0xff]
  %v6852 = vld [vmem:[%s173 + $0x150] sm:$0xff]
  %v6853 = vld [vmem:[%s173 + $0x158] sm:$0xff]
  %v6854 = vld [vmem:[%s173 + $0x168] sm:$0xff]
  %v6855 = vld [vmem:[%s173 + $0x170] sm:$0xff]
  %v6856 = vld [vmem:[%s173 + $0x1b0] sm:$0xff]
  %v6857 = vld [vmem:[%s173 + $0x1b8] sm:$0xff]
  %v6858 = vld [vmem:[%s173 + $0x1c8] sm:$0xff]
  %v6859 = vld [vmem:[%s173 + $0x1d0] sm:$0xff]
  %v6860 = vld [vmem:[%s173 + $0x1e0] sm:$0xff]
  %v6861 = vld [vmem:[%s173 + $0x1e8] sm:$0xff]
  %v6862 = vld [vmem:[%s173 + $0x1f8] sm:$0xff]
  %v6863 = vld [vmem:[%s173 + $0x200] sm:$0xff]
  %v6864 = vld [vmem:[%s173 + $0x210] sm:$0xff]
  %v6865 = vld [vmem:[%s173 + $0x218] sm:$0xff]
  %v6866 = vld [vmem:[%s173 + $0x228] sm:$0xff]
  %v6867 = vld [vmem:[%s173 + $0x230] sm:$0xff]
  %v6868 = vld [vmem:[%s173 + $0x240] sm:$0xff]
  %v6869 = vld [vmem:[%s173 + $0x248] sm:$0xff]
  %v6870 = vld [vmem:[%s173 + $0x258] sm:$0xff]
  %v6871 = vld [vmem:[%s173 + $0x260] sm:$0xff]
  %v6872 = vld [vmem:[%s173 + $0x270] sm:$0xff]
  %v6873 = vld [vmem:[%s173 + $0x278] sm:$0xff]
  %v6874 = vld [vmem:[%s173 + $0x288] sm:$0xff]
  %v6875 = vld [vmem:[%s173 + $0x290] sm:$0xff]
  %v6876 = vld [vmem:[%s173 + $0x2a0] sm:$0xff]
  %v6877 = vld [vmem:[%s173 + $0x2a8] sm:$0xff]
  %v6878 = vld [vmem:[%s173 + $0x2b8] sm:$0xff]
  %v6879 = vld [vmem:[%s173 + $0x2c0] sm:$0xff]
  %v6880 = vld [vmem:[%s173 + $0x2d0] sm:$0xff]
  %v6881 = vld [vmem:[%s173 + $0x2d8] sm:$0xff]
  %v6882 = vld [vmem:[%s173 + $0x2e8] sm:$0xff]
  %v6883 = vld [vmem:[%s173 + $0x2f0] sm:$0xff]
  %v6884 = vld [vmem:[%s173 + $0x300] sm:$0xff]
  %v6885 = vld [vmem:[%s173 + $0x308] sm:$0xff]
  %v6886 = vld [vmem:[%s173 + $0x318] sm:$0xff]
  %v6887 = vld [vmem:[%s173 + $0x320] sm:$0xff]
  %v6888 = vpack.c.bf16 %v6825, %v6824
  %v6889 = vpack.c.bf16 %v6827, %v6826
  %v6890 = vpack.c.bf16 %v6829, %v6828
  %v6891 = vpack.c.bf16 %v6831, %v6830
  %v6892 = vpack.c.bf16 %v6833, %v6832
  %v6893 = vpack.c.bf16 %v6835, %v6834
  %v6894 = vpack.c.bf16 %v6837, %v6836
  %v6895 = vpack.c.bf16 %v6839, %v6838
  %v6896 = vpack.c.bf16 %v6841, %v6840
  %v6897 = vpack.c.bf16 %v6843, %v6842
  %v6898 = vpack.c.bf16 %v6845, %v6844
  %v6899 = vpack.c.bf16 %v6847, %v6846
  %v6900 = vpack.c.bf16 %v6849, %v6848
  %v6901 = vpack.c.bf16 %v6851, %v6850
  %v6902 = vpack.c.bf16 %v6853, %v6852
  %v6903 = vpack.c.bf16 %v6855, %v6854
  %v6904 = vpack.c.bf16 %v6857, %v6856
  %v6905 = vpack.c.bf16 %v6859, %v6858
  %v6906 = vpack.c.bf16 %v6861, %v6860
  %v6907 = vpack.c.bf16 %v6863, %v6862
  %v6908 = vpack.c.bf16 %v6865, %v6864
  %v6909 = vpack.c.bf16 %v6867, %v6866
  %v6910 = vpack.c.bf16 %v6869, %v6868
  %v6911 = vpack.c.bf16 %v6871, %v6870
  %v6912 = vpack.c.bf16 %v6873, %v6872
  %v6913 = vpack.c.bf16 %v6875, %v6874
  %v6914 = vpack.c.bf16 %v6877, %v6876
  %v6915 = vpack.c.bf16 %v6879, %v6878
  %v6916 = vpack.c.bf16 %v6881, %v6880
  %v6917 = vpack.c.bf16 %v6883, %v6882
  %v6918 = vpack.c.bf16 %v6885, %v6884
  %v6919 = vpack.c.bf16 %v6887, %v6886
  %s6920 = scalar_lea.vmem %s2, 192
  %v6921 = vld [vmem:[%s6920] sm:$0xf]
  %v6922 = vld [vmem:[%s6920 + $0x4] sm:$0xf]
  %v6923 = vld [vmem:[%s6920 + $0x8] sm:$0xf]
  %v6924 = vld [vmem:[%s6920 + $0xc] sm:$0xf]
  %v6925 = vld [vmem:[%s6920 + $0x10] sm:$0xf]
  %v6926 = vld [vmem:[%s6920 + $0x14] sm:$0xf]
  %v6927 = vld [vmem:[%s6920 + $0x18] sm:$0xf]
  %v6928 = vld [vmem:[%s6920 + $0x1c] sm:$0xf]
  %v6929 = vld [vmem:[%s6920 + $0x20] sm:$0xf]
  %v6930 = vld [vmem:[%s6920 + $0x24] sm:$0xf]
  %v6931 = vld [vmem:[%s6920 + $0x28] sm:$0xf]
  %v6932 = vld [vmem:[%s6920 + $0x2c] sm:$0xf]
  %v6933 = vld [vmem:[%s6920 + $0x30] sm:$0xf]
  %v6934 = vld [vmem:[%s6920 + $0x34] sm:$0xf]
  %v6935 = vld [vmem:[%s6920 + $0x38] sm:$0xf]
  %v6936 = vld [vmem:[%s6920 + $0x3c] sm:$0xf]
  %v6953 = vunpack.c.l.b16 %v6921
  %v6954 = vunpack.c.l.b16 %v6922
  %v6955 = vunpack.c.l.b16 %v6923
  %v6956 = vunpack.c.l.b16 %v6924
  %v6957 = vunpack.c.l.b16 %v6925
  %v6958 = vunpack.c.l.b16 %v6926
  %v6959 = vunpack.c.l.b16 %v6927
  %v6960 = vunpack.c.l.b16 %v6928
  %v6961 = vunpack.c.l.b16 %v6929
  %v6962 = vunpack.c.l.b16 %v6930
  %v6963 = vunpack.c.l.b16 %v6931
  %v6964 = vunpack.c.l.b16 %v6932
  %v6965 = vunpack.c.l.b16 %v6933
  %v6966 = vunpack.c.l.b16 %v6934
  %v6967 = vunpack.c.l.b16 %v6935
  %v6968 = vunpack.c.l.b16 %v6936
  %v6969 = vpack.c.b16 %v6954, %v6953
  %v6970 = vpack.c.b16 %v6956, %v6955
  %v6971 = vpack.c.b16 %v6958, %v6957
  %v6972 = vpack.c.b16 %v6960, %v6959
  %v6973 = vpack.c.b16 %v6962, %v6961
  %v6974 = vpack.c.b16 %v6964, %v6963
  %v6975 = vpack.c.b16 %v6966, %v6965
  %v6976 = vpack.c.b16 %v6968, %v6967
  %6985 = vmatprep.subr.bf16.mxu0 0
  %6986 = vmatpush1.bf16.msra.mxu0 %v6969
  %6987 = vmatprep.subr.bf16.mxu0 0
  %6988 = vmatpush1.bf16.msra.mxu0 %v6970
  %6989 = vmatprep.subr.bf16.mxu0 0
  %6990 = vmatpush1.bf16.msra.mxu0 %v6971
  %6991 = vmatprep.subr.bf16.mxu0 0
  %6992 = vmatpush1.bf16.msra.mxu0 %v6972
  %6993 = vmatprep.subr.bf16.mxu0 0
  %6994 = vmatpush1.bf16.msra.mxu0 %v6973
  %6995 = vmatprep.subr.bf16.mxu0 0
  %6996 = vmatpush1.bf16.msra.mxu0 %v6974
  %6997 = vmatprep.subr.bf16.mxu0 0
  %6998 = vmatpush1.bf16.msra.mxu0 %v6975
  %6999 = vmatprep.subr.bf16.mxu0 0
  %7000 = vmatpush1.bf16.msra.mxu0 %v6976
  %7001 = vmatprep.subr.bf16.mxu0 0
  %7002 = vmatpush1.bf16.msra.mxu0 0
  %7003 = vmatprep.subr.bf16.mxu0 0
  %7004 = vmatpush1.bf16.msra.mxu0 0
  %7005 = vmatprep.subr.bf16.mxu0 0
  %7006 = vmatpush1.bf16.msra.mxu0 0
  %7007 = vmatprep.subr.bf16.mxu0 0
  %7008 = vmatpush1.bf16.msra.mxu0 0
  %7009 = vmatprep.subr.bf16.mxu0 0
  %7010 = vmatpush1.bf16.msra.mxu0 0
  %7011 = vmatprep.subr.bf16.mxu0 0
  %7012 = vmatpush1.bf16.msra.mxu0 0
  %7013 = vmatprep.subr.bf16.mxu0 0
  %7014 = vmatpush1.bf16.msra.mxu0 0
  %7015 = vmatprep.subr.bf16.mxu0 0
  %7016 = vmatpush1.bf16.msra.mxu0 0
  %7017 = vmatprep.mubr.bf16.mxu0 0
  %7018 = vmatmul.mubr.bf16.gmra.mrb[0].mxu0 %v6888
  %v7019 = vpop.f32.mrb[0].mxu0
  %v7020 = vadd.f32 0.0, %v7019
  %v7021 = vpop.f32.mrb[0].mxu0
  %v7022 = vpop.f32.mrb[0].mxu0
  %v7023 = vadd.f32 0.0, %v7022
  %v7024 = vpop.f32.mrb[0].mxu0
  %7025 = vmatprep.mubr.bf16.mxu0 0
  %7026 = vmatmul.mubr.bf16.gmra.mrb[0].mxu0 %v6889
  %v7027 = vpop.f32.mrb[0].mxu0
  %v7028 = vadd.f32 0.0, %v7027
  %v7029 = vpop.f32.mrb[0].mxu0
  %v7030 = vpop.f32.mrb[0].mxu0
  %v7031 = vadd.f32 0.0, %v7030
  %v7032 = vpop.f32.mrb[0].mxu0
  %7033 = vmatprep.mubr.bf16.mxu0 0
  %7034 = vmatmul.mubr.bf16.gmra.mrb[0].mxu0 %v6890
  %v7035 = vpop.f32.mrb[0].mxu0
  %v7036 = vadd.f32 0.0, %v7035
  %v7037 = vpop.f32.mrb[0].mxu0
  %v7038 = vpop.f32.mrb[0].mxu0
  %v7039 = vadd.f32 0.0, %v7038
  %v7040 = vpop.f32.mrb[0].mxu0
  %7041 = vmatprep.mubr.bf16.mxu0 0
  %7042 = vmatmul.mubr.bf16.gmra.mrb[0].mxu0 %v6891
  %v7043 = vpop.f32.mrb[0].mxu0
  %v7044 = vadd.f32 0.0, %v7043
  %v7045 = vpop.f32.mrb[0].mxu0
  %v7046 = vpop.f32.mrb[0].mxu0
  %v7047 = vadd.f32 0.0, %v7046
  %v7048 = vpop.f32.mrb[0].mxu0
  %7049 = vmatprep.mubr.bf16.mxu0 0
  %7050 = vmatmul.mubr.bf16.gmra.mrb[0].mxu0 %v6892
  %v7051 = vpop.f32.mrb[0].mxu0
  %v7052 = vadd.f32 0.0, %v7051
  %v7053 = vpop.f32.mrb[0].mxu0
  %v7054 = vpop.f32.mrb[0].mxu0
  %v7055 = vadd.f32 0.0, %v7054
  %v7056 = vpop.f32.mrb[0].mxu0
  %7057 = vmatprep.mubr.bf16.mxu0 0
  %7058 = vmatmul.mubr.bf16.gmra.mrb[0].mxu0 %v6893
  %v7059 = vpop.f32.mrb[0].mxu0
  %v7060 = vadd.f32 0.0, %v7059
  %v7061 = vpop.f32.mrb[0].mxu0
  %v7062 = vpop.f32.mrb[0].mxu0
  %v7063 = vadd.f32 0.0, %v7062
  %v7064 = vpop.f32.mrb[0].mxu0
  %7065 = vmatprep.mubr.bf16.mxu0 0
  %7066 = vmatmul.mubr.bf16.gmra.mrb[0].mxu0 %v6894
  %v7067 = vpop.f32.mrb[0].mxu0
  %v7068 = vadd.f32 0.0, %v7067
  %v7069 = vpop.f32.mrb[0].mxu0
  %v7070 = vpop.f32.mrb[0].mxu0
  %v7071 = vadd.f32 0.0, %v7070
  %v7072 = vpop.f32.mrb[0].mxu0
  %7073 = vmatprep.mubr.bf16.mxu0 0
  %7074 = vmatmul.mubr.bf16.gmra.mrb[0].mxu0 %v6895
  %v7075 = vpop.f32.mrb[0].mxu0
  %v7076 = vadd.f32 0.0, %v7075
  %v7077 = vpop.f32.mrb[0].mxu0
  %v7078 = vpop.f32.mrb[0].mxu0
  %v7079 = vadd.f32 0.0, %v7078
  %v7080 = vpop.f32.mrb[0].mxu0
  %7081 = vmatprep.mubr.bf16.mxu0 0
  %7082 = vmatmul.mubr.bf16.gmra.mrb[0].mxu0 %v6896
  %v7083 = vpop.f32.mrb[0].mxu0
  %v7084 = vadd.f32 0.0, %v7083
  %v7085 = vpop.f32.mrb[0].mxu0
  %v7086 = vpop.f32.mrb[0].mxu0
  %v7087 = vadd.f32 0.0, %v7086
  %v7088 = vpop.f32.mrb[0].mxu0
  %7089 = vmatprep.mubr.bf16.mxu0 0
  %7090 = vmatmul.mubr.bf16.gmra.mrb[0].mxu0 %v6897
  %v7091 = vpop.f32.mrb[0].mxu0
  %v7092 = vadd.f32 0.0, %v7091
  %v7093 = vpop.f32.mrb[0].mxu0
  %v7094 = vpop.f32.mrb[0].mxu0
  %v7095 = vadd.f32 0.0, %v7094
  %v7096 = vpop.f32.mrb[0].mxu0
  %7097 = vmatprep.mubr.bf16.mxu0 0
  %7098 = vmatmul.mubr.bf16.gmra.mrb[0].mxu0 %v6898
  %v7099 = vpop.f32.mrb[0].mxu0
  %v7100 = vadd.f32 0.0, %v7099
  %v7101 = vpop.f32.mrb[0].mxu0
  %v7102 = vpop.f32.mrb[0].mxu0
  %v7103 = vadd.f32 0.0, %v7102
  %v7104 = vpop.f32.mrb[0].mxu0
  %7105 = vmatprep.mubr.bf16.mxu0 0
  %7106 = vmatmul.mubr.bf16.gmra.mrb[0].mxu0 %v6899
  %v7107 = vpop.f32.mrb[0].mxu0
  %v7108 = vadd.f32 0.0, %v7107
  %v7109 = vpop.f32.mrb[0].mxu0
  %v7110 = vpop.f32.mrb[0].mxu0
  %v7111 = vadd.f32 0.0, %v7110
  %v7112 = vpop.f32.mrb[0].mxu0
  %7113 = vmatprep.mubr.bf16.mxu0 0
  %7114 = vmatmul.mubr.bf16.gmra.mrb[0].mxu0 %v6900
  %v7115 = vpop.f32.mrb[0].mxu0
  %v7116 = vadd.f32 0.0, %v7115
  %v7117 = vpop.f32.mrb[0].mxu0
  %v7118 = vpop.f32.mrb[0].mxu0
  %v7119 = vadd.f32 0.0, %v7118
  %v7120 = vpop.f32.mrb[0].mxu0
  %7121 = vmatprep.mubr.bf16.mxu0 0
  %7122 = vmatmul.mubr.bf16.gmra.mrb[0].mxu0 %v6901
  %v7123 = vpop.f32.mrb[0].mxu0
  %v7124 = vadd.f32 0.0, %v7123
  %v7125 = vpop.f32.mrb[0].mxu0
  %v7126 = vpop.f32.mrb[0].mxu0
  %v7127 = vadd.f32 0.0, %v7126
  %v7128 = vpop.f32.mrb[0].mxu0
  %7129 = vmatprep.mubr.bf16.mxu0 0
  %7130 = vmatmul.mubr.bf16.gmra.mrb[0].mxu0 %v6902
  %v7131 = vpop.f32.mrb[0].mxu0
  %v7132 = vadd.f32 0.0, %v7131
  %v7133 = vpop.f32.mrb[0].mxu0
  %v7134 = vpop.f32.mrb[0].mxu0
  %v7135 = vadd.f32 0.0, %v7134
  %v7136 = vpop.f32.mrb[0].mxu0
  %7137 = vmatprep.mubr.bf16.mxu0 0
  %7138 = vmatmul.mubr.bf16.gmra.mrb[0].mxu0 %v6903
  %v7139 = vpop.f32.mrb[0].mxu0
  %v7140 = vadd.f32 0.0, %v7139
  %v7141 = vpop.f32.mrb[0].mxu0
  %v7142 = vpop.f32.mrb[0].mxu0
  %v7143 = vadd.f32 0.0, %v7142
  %v7144 = vpop.f32.mrb[0].mxu0
  %7145 = vmatprep.mubr.bf16.mxu0 0
  %7146 = vmatmul.mubr.bf16.gmra.mrb[0].mxu0 %v6904
  %v7147 = vpop.f32.mrb[0].mxu0
  %v7148 = vadd.f32 0.0, %v7147
  %v7149 = vpop.f32.mrb[0].mxu0
  %v7150 = vpop.f32.mrb[0].mxu0
  %v7151 = vadd.f32 0.0, %v7150
  %v7152 = vpop.f32.mrb[0].mxu0
  %7153 = vmatprep.mubr.bf16.mxu0 0
  %7154 = vmatmul.mubr.bf16.gmra.mrb[0].mxu0 %v6905
  %v7155 = vpop.f32.mrb[0].mxu0
  %v7156 = vadd.f32 0.0, %v7155
  %v7157 = vpop.f32.mrb[0].mxu0
  %v7158 = vpop.f32.mrb[0].mxu0
  %v7159 = vadd.f32 0.0, %v7158
  %v7160 = vpop.f32.mrb[0].mxu0
  %7161 = vmatprep.mubr.bf16.mxu0 0
  %7162 = vmatmul.mubr.bf16.gmra.mrb[0].mxu0 %v6906
  %v7163 = vpop.f32.mrb[0].mxu0
  %v7164 = vadd.f32 0.0, %v7163
  %v7165 = vpop.f32.mrb[0].mxu0
  %v7166 = vpop.f32.mrb[0].mxu0
  %v7167 = vadd.f32 0.0, %v7166
  %v7168 = vpop.f32.mrb[0].mxu0
  %7169 = vmatprep.mubr.bf16.mxu0 0
  %7170 = vmatmul.mubr.bf16.gmra.mrb[0].mxu0 %v6907
  %v7171 = vpop.f32.mrb[0].mxu0
  %v7172 = vadd.f32 0.0, %v7171
  %v7173 = vpop.f32.mrb[0].mxu0
  %v7174 = vpop.f32.mrb[0].mxu0
  %v7175 = vadd.f32 0.0, %v7174
  %v7176 = vpop.f32.mrb[0].mxu0
  %7177 = vmatprep.mubr.bf16.mxu0 0
  %7178 = vmatmul.mubr.bf16.gmra.mrb[0].mxu0 %v6908
  %v7179 = vpop.f32.mrb[0].mxu0
  %v7180 = vadd.f32 0.0, %v7179
  %v7181 = vpop.f32.mrb[0].mxu0
  %v7182 = vpop.f32.mrb[0].mxu0
  %v7183 = vadd.f32 0.0, %v7182
  %v7184 = vpop.f32.mrb[0].mxu0
  %7185 = vmatprep.mubr.bf16.mxu0 0
  %7186 = vmatmul.mubr.bf16.gmra.mrb[0].mxu0 %v6909
  %v7187 = vpop.f32.mrb[0].mxu0
  %v7188 = vadd.f32 0.0, %v7187
  %v7189 = vpop.f32.mrb[0].mxu0
  %v7190 = vpop.f32.mrb[0].mxu0
  %v7191 = vadd.f32 0.0, %v7190
  %v7192 = vpop.f32.mrb[0].mxu0
  %7193 = vmatprep.mubr.bf16.mxu0 0
  %7194 = vmatmul.mubr.bf16.gmra.mrb[0].mxu0 %v6910
  %v7195 = vpop.f32.mrb[0].mxu0
  %v7196 = vadd.f32 0.0, %v7195
  %v7197 = vpop.f32.mrb[0].mxu0
  %v7198 = vpop.f32.mrb[0].mxu0
  %v7199 = vadd.f32 0.0, %v7198
  %v7200 = vpop.f32.mrb[0].mxu0
  %7201 = vmatprep.mubr.bf16.mxu0 0
  %7202 = vmatmul.mubr.bf16.gmra.mrb[0].mxu0 %v6911
  %v7203 = vpop.f32.mrb[0].mxu0
  %v7204 = vadd.f32 0.0, %v7203
  %v7205 = vpop.f32.mrb[0].mxu0
  %v7206 = vpop.f32.mrb[0].mxu0
  %v7207 = vadd.f32 0.0, %v7206
  %v7208 = vpop.f32.mrb[0].mxu0
  %7209 = vmatprep.mubr.bf16.mxu0 0
  %7210 = vmatmul.mubr.bf16.gmra.mrb[0].mxu0 %v6912
  %v7211 = vpop.f32.mrb[0].mxu0
  %v7212 = vadd.f32 0.0, %v7211
  %v7213 = vpop.f32.mrb[0].mxu0
  %v7214 = vpop.f32.mrb[0].mxu0
  %v7215 = vadd.f32 0.0, %v7214
  %v7216 = vpop.f32.mrb[0].mxu0
  %7217 = vmatprep.mubr.bf16.mxu0 0
  %7218 = vmatmul.mubr.bf16.gmra.mrb[0].mxu0 %v6913
  %v7219 = vpop.f32.mrb[0].mxu0
  %v7220 = vadd.f32 0.0, %v7219
  %v7221 = vpop.f32.mrb[0].mxu0
  %v7222 = vpop.f32.mrb[0].mxu0
  %v7223 = vadd.f32 0.0, %v7222
  %v7224 = vpop.f32.mrb[0].mxu0
  %7225 = vmatprep.mubr.bf16.mxu0 0
  %7226 = vmatmul.mubr.bf16.gmra.mrb[0].mxu0 %v6914
  %v7227 = vpop.f32.mrb[0].mxu0
  %v7228 = vadd.f32 0.0, %v7227
  %v7229 = vpop.f32.mrb[0].mxu0
  %v7230 = vpop.f32.mrb[0].mxu0
  %v7231 = vadd.f32 0.0, %v7230
  %v7232 = vpop.f32.mrb[0].mxu0
  %7233 = vmatprep.mubr.bf16.mxu0 0
  %7234 = vmatmul.mubr.bf16.gmra.mrb[0].mxu0 %v6915
  %v7235 = vpop.f32.mrb[0].mxu0
  %v7236 = vadd.f32 0.0, %v7235
  %v7237 = vpop.f32.mrb[0].mxu0
  %v7238 = vpop.f32.mrb[0].mxu0
  %v7239 = vadd.f32 0.0, %v7238
  %v7240 = vpop.f32.mrb[0].mxu0
  %7241 = vmatprep.mubr.bf16.mxu0 0
  %7242 = vmatmul.mubr.bf16.gmra.mrb[0].mxu0 %v6916
  %v7243 = vpop.f32.mrb[0].mxu0
  %v7244 = vadd.f32 0.0, %v7243
  %v7245 = vpop.f32.mrb[0].mxu0
  %v7246 = vpop.f32.mrb[0].mxu0
  %v7247 = vadd.f32 0.0, %v7246
  %v7248 = vpop.f32.mrb[0].mxu0
  %7249 = vmatprep.mubr.bf16.mxu0 0
  %7250 = vmatmul.mubr.bf16.gmra.mrb[0].mxu0 %v6917
  %v7251 = vpop.f32.mrb[0].mxu0
  %v7252 = vadd.f32 0.0, %v7251
  %v7253 = vpop.f32.mrb[0].mxu0
  %v7254 = vpop.f32.mrb[0].mxu0
  %v7255 = vadd.f32 0.0, %v7254
  %v7256 = vpop.f32.mrb[0].mxu0
  %7257 = vmatprep.mubr.bf16.mxu0 0
  %7258 = vmatmul.mubr.bf16.gmra.mrb[0].mxu0 %v6918
  %v7259 = vpop.f32.mrb[0].mxu0
  %v7260 = vadd.f32 0.0, %v7259
  %v7261 = vpop.f32.mrb[0].mxu0
  %v7262 = vpop.f32.mrb[0].mxu0
  %v7263 = vadd.f32 0.0, %v7262
  %v7264 = vpop.f32.mrb[0].mxu0
  %7265 = vmatprep.mubr.bf16.mxu0 0
  %7266 = vmatmul.mubr.bf16.gmra.mrb[0].mxu0 %v6919
  %v7267 = vpop.f32.mrb[0].mxu0
  %v7268 = vadd.f32 0.0, %v7267
  %v7269 = vpop.f32.mrb[0].mxu0
  %v7270 = vpop.f32.mrb[0].mxu0
  %v7271 = vadd.f32 0.0, %v7270
  %v7272 = vpop.f32.mrb[0].mxu0
  %7273 = vdwg.mxu0
  %v7274 = vadd.f32 %v6760, %v7020
  %v7275 = vadd.f32 %v6761, %v7023
  %v7276 = vadd.f32 %v6762, %v7028
  %v7277 = vadd.f32 %v6763, %v7031
  %v7278 = vadd.f32 %v6764, %v7036
  %v7279 = vadd.f32 %v6765, %v7039
  %v7280 = vadd.f32 %v6766, %v7044
  %v7281 = vadd.f32 %v6767, %v7047
  %v7282 = vadd.f32 %v6768, %v7052
  %v7283 = vadd.f32 %v6769, %v7055
  %v7284 = vadd.f32 %v6770, %v7060
  %v7285 = vadd.f32 %v6771, %v7063
  %v7286 = vadd.f32 %v6772, %v7068
  %v7287 = vadd.f32 %v6773, %v7071
  %v7288 = vadd.f32 %v6774, %v7076
  %v7289 = vadd.f32 %v6775, %v7079
  %v7290 = vadd.f32 %v6776, %v7084
  %v7291 = vadd.f32 %v6777, %v7087
  %v7292 = vadd.f32 %v6778, %v7092
  %v7293 = vadd.f32 %v6779, %v7095
  %v7294 = vadd.f32 %v6780, %v7100
  %v7295 = vadd.f32 %v6781, %v7103
  %v7296 = vadd.f32 %v6782, %v7108
  %v7297 = vadd.f32 %v6783, %v7111
  %v7298 = vadd.f32 %v6784, %v7116
  %v7299 = vadd.f32 %v6785, %v7119
  %v7300 = vadd.f32 %v6786, %v7124
  %v7301 = vadd.f32 %v6787, %v7127
  %v7302 = vadd.f32 %v6788, %v7132
  %v7303 = vadd.f32 %v6789, %v7135
  %v7304 = vadd.f32 %v6790, %v7140
  %v7305 = vadd.f32 %v6791, %v7143
  %v7306 = vadd.f32 %v6792, %v7148
  %v7307 = vadd.f32 %v6793, %v7151
  %v7308 = vadd.f32 %v6794, %v7156
  %v7309 = vadd.f32 %v6795, %v7159
  %v7310 = vadd.f32 %v6796, %v7164
  %v7311 = vadd.f32 %v6797, %v7167
  %v7312 = vadd.f32 %v6798, %v7172
  %v7313 = vadd.f32 %v6799, %v7175
  %v7314 = vadd.f32 %v6800, %v7180
  %v7315 = vadd.f32 %v6801, %v7183
  %v7316 = vadd.f32 %v6802, %v7188
  %v7317 = vadd.f32 %v6803, %v7191
  %v7318 = vadd.f32 %v6804, %v7196
  %v7319 = vadd.f32 %v6805, %v7199
  %v7320 = vadd.f32 %v6806, %v7204
  %v7321 = vadd.f32 %v6807, %v7207
  %v7322 = vadd.f32 %v6808, %v7212
  %v7323 = vadd.f32 %v6809, %v7215
  %v7324 = vadd.f32 %v6810, %v7220
  %v7325 = vadd.f32 %v6811, %v7223
  %v7326 = vadd.f32 %v6812, %v7228
  %v7327 = vadd.f32 %v6813, %v7231
  %v7328 = vadd.f32 %v6814, %v7236
  %v7329 = vadd.f32 %v6815, %v7239
  %v7330 = vadd.f32 %v6816, %v7244
  %v7331 = vadd.f32 %v6817, %v7247
  %v7332 = vadd.f32 %v6818, %v7252
  %v7333 = vadd.f32 %v6819, %v7255
  %v7334 = vadd.f32 %v6820, %v7260
  %v7335 = vadd.f32 %v6821, %v7263
  %v7336 = vadd.f32 %v6822, %v7268
  %v7337 = vadd.f32 %v6823, %v7271
  %v7338 = vld [vmem:[%s173 + $0x1] sm:$0xff]
  %v7339 = vld [vmem:[%s173 + $0x9] sm:$0xff]
  %v7340 = vld [vmem:[%s173 + $0x19] sm:$0xff]
  %v7341 = vld [vmem:[%s173 + $0x21] sm:$0xff]
  %v7342 = vld [vmem:[%s173 + $0x31] sm:$0xff]
  %v7343 = vld [vmem:[%s173 + $0x39] sm:$0xff]
  %v7344 = vld [vmem:[%s173 + $0x49] sm:$0xff]
  %v7345 = vld [vmem:[%s173 + $0x51] sm:$0xff]
  %v7346 = vld [vmem:[%s173 + $0x61] sm:$0xff]
  %v7347 = vld [vmem:[%s173 + $0x69] sm:$0xff]
  %v7348 = vld [vmem:[%s173 + $0x79] sm:$0xff]
  %v7349 = vld [vmem:[%s173 + $0x81] sm:$0xff]
  %v7350 = vld [vmem:[%s173 + $0x91] sm:$0xff]
  %v7351 = vld [vmem:[%s173 + $0x99] sm:$0xff]
  %v7352 = vld [vmem:[%s173 + $0xa9] sm:$0xff]
  %v7353 = vld [vmem:[%s173 + $0xb1] sm:$0xff]
  %v7354 = vld [vmem:[%s173 + $0xc1] sm:$0xff]
  %v7355 = vld [vmem:[%s173 + $0xc9] sm:$0xff]
  %v7356 = vld [vmem:[%s173 + $0xd9] sm:$0xff]
  %v7357 = vld [vmem:[%s173 + $0xe1] sm:$0xff]
  %v7358 = vld [vmem:[%s173 + $0xf1] sm:$0xff]
  %v7359 = vld [vmem:[%s173 + $0xf9] sm:$0xff]
  %v7360 = vld [vmem:[%s173 + $0x109] sm:$0xff]
  %v7361 = vld [vmem:[%s173 + $0x111] sm:$0xff]
  %v7362 = vld [vmem:[%s173 + $0x121] sm:$0xff]
  %v7363 = vld [vmem:[%s173 + $0x129] sm:$0xff]
  %v7364 = vld [vmem:[%s173 + $0x139] sm:$0xff]
  %v7365 = vld [vmem:[%s173 + $0x141] sm:$0xff]
  %v7366 = vld [vmem:[%s173 + $0x151] sm:$0xff]
  %v7367 = vld [vmem:[%s173 + $0x159] sm:$0xff]
  %v7368 = vld [vmem:[%s173 + $0x169] sm:$0xff]
  %v7369 = vld [vmem:[%s173 + $0x171] sm:$0xff]
  %v7370 = vld [vmem:[%s173 + $0x1b1] sm:$0xff]
  %v7371 = vld [vmem:[%s173 + $0x1b9] sm:$0xff]
  %v7372 = vld [vmem:[%s173 + $0x1c9] sm:$0xff]
  %v7373 = vld [vmem:[%s173 + $0x1d1] sm:$0xff]
  %v7374 = vld [vmem:[%s173 + $0x1e1] sm:$0xff]
  %v7375 = vld [vmem:[%s173 + $0x1e9] sm:$0xff]
  %v7376 = vld [vmem:[%s173 + $0x1f9] sm:$0xff]
  %v7377 = vld [vmem:[%s173 + $0x201] sm:$0xff]
  %v7378 = vld [vmem:[%s173 + $0x211] sm:$0xff]
  %v7379 = vld [vmem:[%s173 + $0x219] sm:$0xff]
  %v7380 = vld [vmem:[%s173 + $0x229] sm:$0xff]
  %v7381 = vld [vmem:[%s173 + $0x231] sm:$0xff]
  %v7382 = vld [vmem:[%s173 + $0x241] sm:$0xff]
  %v7383 = vld [vmem:[%s173 + $0x249] sm:$0xff]
  %v7384 = vld [vmem:[%s173 + $0x259] sm:$0xff]
  %v7385 = vld [vmem:[%s173 + $0x261] sm:$0xff]
  %v7386 = vld [vmem:[%s173 + $0x271] sm:$0xff]
  %v7387 = vld [vmem:[%s173 + $0x279] sm:$0xff]
  %v7388 = vld [vmem:[%s173 + $0x289] sm:$0xff]
  %v7389 = vld [vmem:[%s173 + $0x291] sm:$0xff]
  %v7390 = vld [vmem:[%s173 + $0x2a1] sm:$0xff]
  %v7391 = vld [vmem:[%s173 + $0x2a9] sm:$0xff]
  %v7392 = vld [vmem:[%s173 + $0x2b9] sm:$0xff]
  %v7393 = vld [vmem:[%s173 + $0x2c1] sm:$0xff]
  %v7394 = vld [vmem:[%s173 + $0x2d1] sm:$0xff]
  %v7395 = vld [vmem:[%s173 + $0x2d9] sm:$0xff]
  %v7396 = vld [vmem:[%s173 + $0x2e9] sm:$0xff]
  %v7397 = vld [vmem:[%s173 + $0x2f1] sm:$0xff]
  %v7398 = vld [vmem:[%s173 + $0x301] sm:$0xff]
  %v7399 = vld [vmem:[%s173 + $0x309] sm:$0xff]
  %v7400 = vld [vmem:[%s173 + $0x319] sm:$0xff]
  %v7401 = vld [vmem:[%s173 + $0x321] sm:$0xff]
  %v7402 = vpack.c.bf16 %v7339, %v7338
  %v7403 = vpack.c.bf16 %v7341, %v7340
  %v7404 = vpack.c.bf16 %v7343, %v7342
  %v7405 = vpack.c.bf16 %v7345, %v7344
  %v7406 = vpack.c.bf16 %v7347, %v7346
  %v7407 = vpack.c.bf16 %v7349, %v7348
  %v7408 = vpack.c.bf16 %v7351, %v7350
  %v7409 = vpack.c.bf16 %v7353, %v7352
  %v7410 = vpack.c.bf16 %v7355, %v7354
  %v7411 = vpack.c.bf16 %v7357, %v7356
  %v7412 = vpack.c.bf16 %v7359, %v7358
  %v7413 = vpack.c.bf16 %v7361, %v7360
  %v7414 = vpack.c.bf16 %v7363, %v7362
  %v7415 = vpack.c.bf16 %v7365, %v7364
  %v7416 = vpack.c.bf16 %v7367, %v7366
  %v7417 = vpack.c.bf16 %v7369, %v7368
  %v7418 = vpack.c.bf16 %v7371, %v7370
  %v7419 = vpack.c.bf16 %v7373, %v7372
  %v7420 = vpack.c.bf16 %v7375, %v7374
  %v7421 = vpack.c.bf16 %v7377, %v7376
  %v7422 = vpack.c.bf16 %v7379, %v7378
  %v7423 = vpack.c.bf16 %v7381, %v7380
  %v7424 = vpack.c.bf16 %v7383, %v7382
  %v7425 = vpack.c.bf16 %v7385, %v7384
  %v7426 = vpack.c.bf16 %v7387, %v7386
  %v7427 = vpack.c.bf16 %v7389, %v7388
  %v7428 = vpack.c.bf16 %v7391, %v7390
  %v7429 = vpack.c.bf16 %v7393, %v7392
  %v7430 = vpack.c.bf16 %v7395, %v7394
  %v7431 = vpack.c.bf16 %v7397, %v7396
  %v7432 = vpack.c.bf16 %v7399, %v7398
  %v7433 = vpack.c.bf16 %v7401, %v7400
  %s7434 = scalar_lea.vmem %s2, 256
  %v7435 = vld [vmem:[%s7434] sm:$0xf]
  %v7436 = vld [vmem:[%s7434 + $0x4] sm:$0xf]
  %v7437 = vld [vmem:[%s7434 + $0x8] sm:$0xf]
  %v7438 = vld [vmem:[%s7434 + $0xc] sm:$0xf]
  %v7439 = vld [vmem:[%s7434 + $0x10] sm:$0xf]
  %v7440 = vld [vmem:[%s7434 + $0x14] sm:$0xf]
  %v7441 = vld [vmem:[%s7434 + $0x18] sm:$0xf]
  %v7442 = vld [vmem:[%s7434 + $0x1c] sm:$0xf]
  %v7443 = vld [vmem:[%s7434 + $0x20] sm:$0xf]
  %v7444 = vld [vmem:[%s7434 + $0x24] sm:$0xf]
  %v7445 = vld [vmem:[%s7434 + $0x28] sm:$0xf]
  %v7446 = vld [vmem:[%s7434 + $0x2c] sm:$0xf]
  %v7447 = vld [vmem:[%s7434 + $0x30] sm:$0xf]
  %v7448 = vld [vmem:[%s7434 + $0x34] sm:$0xf]
  %v7449 = vld [vmem:[%s7434 + $0x38] sm:$0xf]
  %v7450 = vld [vmem:[%s7434 + $0x3c] sm:$0xf]
  %v7467 = vunpack.c.l.b16 %v7435
  %v7468 = vunpack.c.l.b16 %v7436
  %v7469 = vunpack.c.l.b16 %v7437
  %v7470 = vunpack.c.l.b16 %v7438
  %v7471 = vunpack.c.l.b16 %v7439
  %v7472 = vunpack.c.l.b16 %v7440
  %v7473 = vunpack.c.l.b16 %v7441
  %v7474 = vunpack.c.l.b16 %v7442
  %v7475 = vunpack.c.l.b16 %v7443
  %v7476 = vunpack.c.l.b16 %v7444
  %v7477 = vunpack.c.l.b16 %v7445
  %v7478 = vunpack.c.l.b16 %v7446
  %v7479 = vunpack.c.l.b16 %v7447
  %v7480 = vunpack.c.l.b16 %v7448
  %v7481 = vunpack.c.l.b16 %v7449
  %v7482 = vunpack.c.l.b16 %v7450
  %v7483 = vpack.c.b16 %v7468, %v7467
  %v7484 = vpack.c.b16 %v7470, %v7469
  %v7485 = vpack.c.b16 %v7472, %v7471
  %v7486 = vpack.c.b16 %v7474, %v7473
  %v7487 = vpack.c.b16 %v7476, %v7475
  %v7488 = vpack.c.b16 %v7478, %v7477
  %v7489 = vpack.c.b16 %v7480, %v7479
  %v7490 = vpack.c.b16 %v7482, %v7481
  %7499 = vmatprep.subr.bf16.mxu0 0
  %7500 = vmatpush1.bf16.msra.mxu0 %v7483
  %7501 = vmatprep.subr.bf16.mxu0 0
  %7502 = vmatpush1.bf16.msra.mxu0 %v7484
  %7503 = vmatprep.subr.bf16.mxu0 0
  %7504 = vmatpush1.bf16.msra.mxu0 %v7485
  %7505 = vmatprep.subr.bf16.mxu0 0
  %7506 = vmatpush1.bf16.msra.mxu0 %v7486
  %7507 = vmatprep.subr.bf16.mxu0 0
  %7508 = vmatpush1.bf16.msra.mxu0 %v7487
  %7509 = vmatprep.subr.bf16.mxu0 0
  %7510 = vmatpush1.bf16.msra.mxu0 %v7488
  %7511 = vmatprep.subr.bf16.mxu0 0
  %7512 = vmatpush1.bf16.msra.mxu0 %v7489
  %7513 = vmatprep.subr.bf16.mxu0 0
  %7514 = vmatpush1.bf16.msra.mxu0 %v7490
  %7515 = vmatprep.subr.bf16.mxu0 0
  %7516 = vmatpush1.bf16.msra.mxu0 0
  %7517 = vmatprep.subr.bf16.mxu0 0
  %7518 = vmatpush1.bf16.msra.mxu0 0
  %7519 = vmatprep.subr.bf16.mxu0 0
  %7520 = vmatpush1.bf16.msra.mxu0 0
  %7521 = vmatprep.subr.bf16.mxu0 0
  %7522 = vmatpush1.bf16.msra.mxu0 0
  %7523 = vmatprep.subr.bf16.mxu0 0
  %7524 = vmatpush1.bf16.msra.mxu0 0
  %7525 = vmatprep.subr.bf16.mxu0 0
  %7526 = vmatpush1.bf16.msra.mxu0 0
  %7527 = vmatprep.subr.bf16.mxu0 0
  %7528 = vmatpush1.bf16.msra.mxu0 0
  %7529 = vmatprep.subr.bf16.mxu0 0
  %7530 = vmatpush1.bf16.msra.mxu0 0
  %7531 = vmatprep.mubr.bf16.mxu0 0
  %7532 = vmatmul.mubr.bf16.gmra.mrb[0].mxu0 %v7402
  %v7533 = vpop.f32.mrb[0].mxu0
  %v7534 = vadd.f32 0.0, %v7533
  %v7535 = vpop.f32.mrb[0].mxu0
  %v7536 = vpop.f32.mrb[0].mxu0
  %v7537 = vadd.f32 0.0, %v7536
  %v7538 = vpop.f32.mrb[0].mxu0
  %7539 = vmatprep.mubr.bf16.mxu0 0
  %7540 = vmatmul.mubr.bf16.gmra.mrb[0].mxu0 %v7403
  %v7541 = vpop.f32.mrb[0].mxu0
  %v7542 = vadd.f32 0.0, %v7541
  %v7543 = vpop.f32.mrb[0].mxu0
  %v7544 = vpop.f32.mrb[0].mxu0
  %v7545 = vadd.f32 0.0, %v7544
  %v7546 = vpop.f32.mrb[0].mxu0
  %7547 = vmatprep.mubr.bf16.mxu0 0
  %7548 = vmatmul.mubr.bf16.gmra.mrb[0].mxu0 %v7404
  %v7549 = vpop.f32.mrb[0].mxu0
  %v7550 = vadd.f32 0.0, %v7549
  %v7551 = vpop.f32.mrb[0].mxu0
  %v7552 = vpop.f32.mrb[0].mxu0
  %v7553 = vadd.f32 0.0, %v7552
  %v7554 = vpop.f32.mrb[0].mxu0
  %7555 = vmatprep.mubr.bf16.mxu0 0
  %7556 = vmatmul.mubr.bf16.gmra.mrb[0].mxu0 %v7405
  %v7557 = vpop.f32.mrb[0].mxu0
  %v7558 = vadd.f32 0.0, %v7557
  %v7559 = vpop.f32.mrb[0].mxu0
  %v7560 = vpop.f32.mrb[0].mxu0
  %v7561 = vadd.f32 0.0, %v7560
  %v7562 = vpop.f32.mrb[0].mxu0
  %7563 = vmatprep.mubr.bf16.mxu0 0
  %7564 = vmatmul.mubr.bf16.gmra.mrb[0].mxu0 %v7406
  %v7565 = vpop.f32.mrb[0].mxu0
  %v7566 = vadd.f32 0.0, %v7565
  %v7567 = vpop.f32.mrb[0].mxu0
  %v7568 = vpop.f32.mrb[0].mxu0
  %v7569 = vadd.f32 0.0, %v7568
  %v7570 = vpop.f32.mrb[0].mxu0
  %7571 = vmatprep.mubr.bf16.mxu0 0
  %7572 = vmatmul.mubr.bf16.gmra.mrb[0].mxu0 %v7407
  %v7573 = vpop.f32.mrb[0].mxu0
  %v7574 = vadd.f32 0.0, %v7573
  %v7575 = vpop.f32.mrb[0].mxu0
  %v7576 = vpop.f32.mrb[0].mxu0
  %v7577 = vadd.f32 0.0, %v7576
  %v7578 = vpop.f32.mrb[0].mxu0
  %7579 = vmatprep.mubr.bf16.mxu0 0
  %7580 = vmatmul.mubr.bf16.gmra.mrb[0].mxu0 %v7408
  %v7581 = vpop.f32.mrb[0].mxu0
  %v7582 = vadd.f32 0.0, %v7581
  %v7583 = vpop.f32.mrb[0].mxu0
  %v7584 = vpop.f32.mrb[0].mxu0
  %v7585 = vadd.f32 0.0, %v7584
  %v7586 = vpop.f32.mrb[0].mxu0
  %7587 = vmatprep.mubr.bf16.mxu0 0
  %7588 = vmatmul.mubr.bf16.gmra.mrb[0].mxu0 %v7409
  %v7589 = vpop.f32.mrb[0].mxu0
  %v7590 = vadd.f32 0.0, %v7589
  %v7591 = vpop.f32.mrb[0].mxu0
  %v7592 = vpop.f32.mrb[0].mxu0
  %v7593 = vadd.f32 0.0, %v7592
  %v7594 = vpop.f32.mrb[0].mxu0
  %7595 = vmatprep.mubr.bf16.mxu0 0
  %7596 = vmatmul.mubr.bf16.gmra.mrb[0].mxu0 %v7410
  %v7597 = vpop.f32.mrb[0].mxu0
  %v7598 = vadd.f32 0.0, %v7597
  %v7599 = vpop.f32.mrb[0].mxu0
  %v7600 = vpop.f32.mrb[0].mxu0
  %v7601 = vadd.f32 0.0, %v7600
  %v7602 = vpop.f32.mrb[0].mxu0
  %7603 = vmatprep.mubr.bf16.mxu0 0
  %7604 = vmatmul.mubr.bf16.gmra.mrb[0].mxu0 %v7411
  %v7605 = vpop.f32.mrb[0].mxu0
  %v7606 = vadd.f32 0.0, %v7605
  %v7607 = vpop.f32.mrb[0].mxu0
  %v7608 = vpop.f32.mrb[0].mxu0
  %v7609 = vadd.f32 0.0, %v7608
  %v7610 = vpop.f32.mrb[0].mxu0
  %7611 = vmatprep.mubr.bf16.mxu0 0
  %7612 = vmatmul.mubr.bf16.gmra.mrb[0].mxu0 %v7412
  %v7613 = vpop.f32.mrb[0].mxu0
  %v7614 = vadd.f32 0.0, %v7613
  %v7615 = vpop.f32.mrb[0].mxu0
  %v7616 = vpop.f32.mrb[0].mxu0
  %v7617 = vadd.f32 0.0, %v7616
  %v7618 = vpop.f32.mrb[0].mxu0
  %7619 = vmatprep.mubr.bf16.mxu0 0
  %7620 = vmatmul.mubr.bf16.gmra.mrb[0].mxu0 %v7413
  %v7621 = vpop.f32.mrb[0].mxu0
  %v7622 = vadd.f32 0.0, %v7621
  %v7623 = vpop.f32.mrb[0].mxu0
  %v7624 = vpop.f32.mrb[0].mxu0
  %v7625 = vadd.f32 0.0, %v7624
  %v7626 = vpop.f32.mrb[0].mxu0
  %7627 = vmatprep.mubr.bf16.mxu0 0
  %7628 = vmatmul.mubr.bf16.gmra.mrb[0].mxu0 %v7414
  %v7629 = vpop.f32.mrb[0].mxu0
  %v7630 = vadd.f32 0.0, %v7629
  %v7631 = vpop.f32.mrb[0].mxu0
  %v7632 = vpop.f32.mrb[0].mxu0
  %v7633 = vadd.f32 0.0, %v7632
  %v7634 = vpop.f32.mrb[0].mxu0
  %7635 = vmatprep.mubr.bf16.mxu0 0
  %7636 = vmatmul.mubr.bf16.gmra.mrb[0].mxu0 %v7415
  %v7637 = vpop.f32.mrb[0].mxu0
  %v7638 = vadd.f32 0.0, %v7637
  %v7639 = vpop.f32.mrb[0].mxu0
  %v7640 = vpop.f32.mrb[0].mxu0
  %v7641 = vadd.f32 0.0, %v7640
  %v7642 = vpop.f32.mrb[0].mxu0
  %7643 = vmatprep.mubr.bf16.mxu0 0
  %7644 = vmatmul.mubr.bf16.gmra.mrb[0].mxu0 %v7416
  %v7645 = vpop.f32.mrb[0].mxu0
  %v7646 = vadd.f32 0.0, %v7645
  %v7647 = vpop.f32.mrb[0].mxu0
  %v7648 = vpop.f32.mrb[0].mxu0
  %v7649 = vadd.f32 0.0, %v7648
  %v7650 = vpop.f32.mrb[0].mxu0
  %7651 = vmatprep.mubr.bf16.mxu0 0
  %7652 = vmatmul.mubr.bf16.gmra.mrb[0].mxu0 %v7417
  %v7653 = vpop.f32.mrb[0].mxu0
  %v7654 = vadd.f32 0.0, %v7653
  %v7655 = vpop.f32.mrb[0].mxu0
  %v7656 = vpop.f32.mrb[0].mxu0
  %v7657 = vadd.f32 0.0, %v7656
  %v7658 = vpop.f32.mrb[0].mxu0
  %7659 = vmatprep.mubr.bf16.mxu0 0
  %7660 = vmatmul.mubr.bf16.gmra.mrb[0].mxu0 %v7418
  %v7661 = vpop.f32.mrb[0].mxu0
  %v7662 = vadd.f32 0.0, %v7661
  %v7663 = vpop.f32.mrb[0].mxu0
  %v7664 = vpop.f32.mrb[0].mxu0
  %v7665 = vadd.f32 0.0, %v7664
  %v7666 = vpop.f32.mrb[0].mxu0
  %7667 = vmatprep.mubr.bf16.mxu0 0
  %7668 = vmatmul.mubr.bf16.gmra.mrb[0].mxu0 %v7419
  %v7669 = vpop.f32.mrb[0].mxu0
  %v7670 = vadd.f32 0.0, %v7669
  %v7671 = vpop.f32.mrb[0].mxu0
  %v7672 = vpop.f32.mrb[0].mxu0
  %v7673 = vadd.f32 0.0, %v7672
  %v7674 = vpop.f32.mrb[0].mxu0
  %7675 = vmatprep.mubr.bf16.mxu0 0
  %7676 = vmatmul.mubr.bf16.gmra.mrb[0].mxu0 %v7420
  %v7677 = vpop.f32.mrb[0].mxu0
  %v7678 = vadd.f32 0.0, %v7677
  %v7679 = vpop.f32.mrb[0].mxu0
  %v7680 = vpop.f32.mrb[0].mxu0
  %v7681 = vadd.f32 0.0, %v7680
  %v7682 = vpop.f32.mrb[0].mxu0
  %7683 = vmatprep.mubr.bf16.mxu0 0
  %7684 = vmatmul.mubr.bf16.gmra.mrb[0].mxu0 %v7421
  %v7685 = vpop.f32.mrb[0].mxu0
  %v7686 = vadd.f32 0.0, %v7685
  %v7687 = vpop.f32.mrb[0].mxu0
  %v7688 = vpop.f32.mrb[0].mxu0
  %v7689 = vadd.f32 0.0, %v7688
  %v7690 = vpop.f32.mrb[0].mxu0
  %7691 = vmatprep.mubr.bf16.mxu0 0
  %7692 = vmatmul.mubr.bf16.gmra.mrb[0].mxu0 %v7422
  %v7693 = vpop.f32.mrb[0].mxu0
  %v7694 = vadd.f32 0.0, %v7693
  %v7695 = vpop.f32.mrb[0].mxu0
  %v7696 = vpop.f32.mrb[0].mxu0
  %v7697 = vadd.f32 0.0, %v7696
  %v7698 = vpop.f32.mrb[0].mxu0
  %7699 = vmatprep.mubr.bf16.mxu0 0
  %7700 = vmatmul.mubr.bf16.gmra.mrb[0].mxu0 %v7423
  %v7701 = vpop.f32.mrb[0].mxu0
  %v7702 = vadd.f32 0.0, %v7701
  %v7703 = vpop.f32.mrb[0].mxu0
  %v7704 = vpop.f32.mrb[0].mxu0
  %v7705 = vadd.f32 0.0, %v7704
  %v7706 = vpop.f32.mrb[0].mxu0
  %7707 = vmatprep.mubr.bf16.mxu0 0
  %7708 = vmatmul.mubr.bf16.gmra.mrb[0].mxu0 %v7424
  %v7709 = vpop.f32.mrb[0].mxu0
  %v7710 = vadd.f32 0.0, %v7709
  %v7711 = vpop.f32.mrb[0].mxu0
  %v7712 = vpop.f32.mrb[0].mxu0
  %v7713 = vadd.f32 0.0, %v7712
  %v7714 = vpop.f32.mrb[0].mxu0
  %7715 = vmatprep.mubr.bf16.mxu0 0
  %7716 = vmatmul.mubr.bf16.gmra.mrb[0].mxu0 %v7425
  %v7717 = vpop.f32.mrb[0].mxu0
  %v7718 = vadd.f32 0.0, %v7717
  %v7719 = vpop.f32.mrb[0].mxu0
  %v7720 = vpop.f32.mrb[0].mxu0
  %v7721 = vadd.f32 0.0, %v7720
  %v7722 = vpop.f32.mrb[0].mxu0
  %7723 = vmatprep.mubr.bf16.mxu0 0
  %7724 = vmatmul.mubr.bf16.gmra.mrb[0].mxu0 %v7426
  %v7725 = vpop.f32.mrb[0].mxu0
  %v7726 = vadd.f32 0.0, %v7725
  %v7727 = vpop.f32.mrb[0].mxu0
  %v7728 = vpop.f32.mrb[0].mxu0
  %v7729 = vadd.f32 0.0, %v7728
  %v7730 = vpop.f32.mrb[0].mxu0
  %7731 = vmatprep.mubr.bf16.mxu0 0
  %7732 = vmatmul.mubr.bf16.gmra.mrb[0].mxu0 %v7427
  %v7733 = vpop.f32.mrb[0].mxu0
  %v7734 = vadd.f32 0.0, %v7733
  %v7735 = vpop.f32.mrb[0].mxu0
  %v7736 = vpop.f32.mrb[0].mxu0
  %v7737 = vadd.f32 0.0, %v7736
  %v7738 = vpop.f32.mrb[0].mxu0
  %7739 = vmatprep.mubr.bf16.mxu0 0
  %7740 = vmatmul.mubr.bf16.gmra.mrb[0].mxu0 %v7428
  %v7741 = vpop.f32.mrb[0].mxu0
  %v7742 = vadd.f32 0.0, %v7741
  %v7743 = vpop.f32.mrb[0].mxu0
  %v7744 = vpop.f32.mrb[0].mxu0
  %v7745 = vadd.f32 0.0, %v7744
  %v7746 = vpop.f32.mrb[0].mxu0
  %7747 = vmatprep.mubr.bf16.mxu0 0
  %7748 = vmatmul.mubr.bf16.gmra.mrb[0].mxu0 %v7429
  %v7749 = vpop.f32.mrb[0].mxu0
  %v7750 = vadd.f32 0.0, %v7749
  %v7751 = vpop.f32.mrb[0].mxu0
  %v7752 = vpop.f32.mrb[0].mxu0
  %v7753 = vadd.f32 0.0, %v7752
  %v7754 = vpop.f32.mrb[0].mxu0
  %7755 = vmatprep.mubr.bf16.mxu0 0
  %7756 = vmatmul.mubr.bf16.gmra.mrb[0].mxu0 %v7430
  %v7757 = vpop.f32.mrb[0].mxu0
  %v7758 = vadd.f32 0.0, %v7757
  %v7759 = vpop.f32.mrb[0].mxu0
  %v7760 = vpop.f32.mrb[0].mxu0
  %v7761 = vadd.f32 0.0, %v7760
  %v7762 = vpop.f32.mrb[0].mxu0
  %7763 = vmatprep.mubr.bf16.mxu0 0
  %7764 = vmatmul.mubr.bf16.gmra.mrb[0].mxu0 %v7431
  %v7765 = vpop.f32.mrb[0].mxu0
  %v7766 = vadd.f32 0.0, %v7765
  %v7767 = vpop.f32.mrb[0].mxu0
  %v7768 = vpop.f32.mrb[0].mxu0
  %v7769 = vadd.f32 0.0, %v7768
  %v7770 = vpop.f32.mrb[0].mxu0
  %7771 = vmatprep.mubr.bf16.mxu0 0
  %7772 = vmatmul.mubr.bf16.gmra.mrb[0].mxu0 %v7432
  %v7773 = vpop.f32.mrb[0].mxu0
  %v7774 = vadd.f32 0.0, %v7773
  %v7775 = vpop.f32.mrb[0].mxu0
  %v7776 = vpop.f32.mrb[0].mxu0
  %v7777 = vadd.f32 0.0, %v7776
  %v7778 = vpop.f32.mrb[0].mxu0
  %7779 = vmatprep.mubr.bf16.mxu0 0
  %7780 = vmatmul.mubr.bf16.gmra.mrb[0].mxu0 %v7433
  %v7781 = vpop.f32.mrb[0].mxu0
  %v7782 = vadd.f32 0.0, %v7781
  %v7783 = vpop.f32.mrb[0].mxu0
  %v7784 = vpop.f32.mrb[0].mxu0
  %v7785 = vadd.f32 0.0, %v7784
  %v7786 = vpop.f32.mrb[0].mxu0
  %7787 = vdwg.mxu0
  %v7788 = vadd.f32 %v7274, %v7534
  %v7789 = vadd.f32 %v7275, %v7537
  %v7790 = vadd.f32 %v7276, %v7542
  %v7791 = vadd.f32 %v7277, %v7545
  %v7792 = vadd.f32 %v7278, %v7550
  %v7793 = vadd.f32 %v7279, %v7553
  %v7794 = vadd.f32 %v7280, %v7558
  %v7795 = vadd.f32 %v7281, %v7561
  %v7796 = vadd.f32 %v7282, %v7566
  %v7797 = vadd.f32 %v7283, %v7569
  %v7798 = vadd.f32 %v7284, %v7574
  %v7799 = vadd.f32 %v7285, %v7577
  %v7800 = vadd.f32 %v7286, %v7582
  %v7801 = vadd.f32 %v7287, %v7585
  %v7802 = vadd.f32 %v7288, %v7590
  %v7803 = vadd.f32 %v7289, %v7593
  %v7804 = vadd.f32 %v7290, %v7598
  %v7805 = vadd.f32 %v7291, %v7601
  %v7806 = vadd.f32 %v7292, %v7606
  %v7807 = vadd.f32 %v7293, %v7609
  %v7808 = vadd.f32 %v7294, %v7614
  %v7809 = vadd.f32 %v7295, %v7617
  %v7810 = vadd.f32 %v7296, %v7622
  %v7811 = vadd.f32 %v7297, %v7625
  %v7812 = vadd.f32 %v7298, %v7630
  %v7813 = vadd.f32 %v7299, %v7633
  %v7814 = vadd.f32 %v7300, %v7638
  %v7815 = vadd.f32 %v7301, %v7641
  %v7816 = vadd.f32 %v7302, %v7646
  %v7817 = vadd.f32 %v7303, %v7649
  %v7818 = vadd.f32 %v7304, %v7654
  %v7819 = vadd.f32 %v7305, %v7657
  %v7820 = vadd.f32 %v7306, %v7662
  %v7821 = vadd.f32 %v7307, %v7665
  %v7822 = vadd.f32 %v7308, %v7670
  %v7823 = vadd.f32 %v7309, %v7673
  %v7824 = vadd.f32 %v7310, %v7678
  %v7825 = vadd.f32 %v7311, %v7681
  %v7826 = vadd.f32 %v7312, %v7686
  %v7827 = vadd.f32 %v7313, %v7689
  %v7828 = vadd.f32 %v7314, %v7694
  %v7829 = vadd.f32 %v7315, %v7697
  %v7830 = vadd.f32 %v7316, %v7702
  %v7831 = vadd.f32 %v7317, %v7705
  %v7832 = vadd.f32 %v7318, %v7710
  %v7833 = vadd.f32 %v7319, %v7713
  %v7834 = vadd.f32 %v7320, %v7718
  %v7835 = vadd.f32 %v7321, %v7721
  %v7836 = vadd.f32 %v7322, %v7726
  %v7837 = vadd.f32 %v7323, %v7729
  %v7838 = vadd.f32 %v7324, %v7734
  %v7839 = vadd.f32 %v7325, %v7737
  %v7840 = vadd.f32 %v7326, %v7742
  %v7841 = vadd.f32 %v7327, %v7745
  %v7842 = vadd.f32 %v7328, %v7750
  %v7843 = vadd.f32 %v7329, %v7753
  %v7844 = vadd.f32 %v7330, %v7758
  %v7845 = vadd.f32 %v7331, %v7761
  %v7846 = vadd.f32 %v7332, %v7766
  %v7847 = vadd.f32 %v7333, %v7769
  %v7848 = vadd.f32 %v7334, %v7774
  %v7849 = vadd.f32 %v7335, %v7777
  %v7850 = vadd.f32 %v7336, %v7782
  %v7851 = vadd.f32 %v7337, %v7785
  %v7852 = vld [vmem:[%s173 + $0x2] sm:$0xff]
  %v7853 = vld [vmem:[%s173 + $0xa] sm:$0xff]
  %v7854 = vld [vmem:[%s173 + $0x1a] sm:$0xff]
  %v7855 = vld [vmem:[%s173 + $0x22] sm:$0xff]
  %v7856 = vld [vmem:[%s173 + $0x32] sm:$0xff]
  %v7857 = vld [vmem:[%s173 + $0x3a] sm:$0xff]
  %v7858 = vld [vmem:[%s173 + $0x4a] sm:$0xff]
  %v7859 = vld [vmem:[%s173 + $0x52] sm:$0xff]
  %v7860 = vld [vmem:[%s173 + $0x62] sm:$0xff]
  %v7861 = vld [vmem:[%s173 + $0x6a] sm:$0xff]
  %v7862 = vld [vmem:[%s173 + $0x7a] sm:$0xff]
  %v7863 = vld [vmem:[%s173 + $0x82] sm:$0xff]
  %v7864 = vld [vmem:[%s173 + $0x92] sm:$0xff]
  %v7865 = vld [vmem:[%s173 + $0x9a] sm:$0xff]
  %v7866 = vld [vmem:[%s173 + $0xaa] sm:$0xff]
  %v7867 = vld [vmem:[%s173 + $0xb2] sm:$0xff]
  %v7868 = vld [vmem:[%s173 + $0xc2] sm:$0xff]
  %v7869 = vld [vmem:[%s173 + $0xca] sm:$0xff]
  %v7870 = vld [vmem:[%s173 + $0xda] sm:$0xff]
  %v7871 = vld [vmem:[%s173 + $0xe2] sm:$0xff]
  %v7872 = vld [vmem:[%s173 + $0xf2] sm:$0xff]
  %v7873 = vld [vmem:[%s173 + $0xfa] sm:$0xff]
  %v7874 = vld [vmem:[%s173 + $0x10a] sm:$0xff]
  %v7875 = vld [vmem:[%s173 + $0x112] sm:$0xff]
  %v7876 = vld [vmem:[%s173 + $0x122] sm:$0xff]
  %v7877 = vld [vmem:[%s173 + $0x12a] sm:$0xff]
  %v7878 = vld [vmem:[%s173 + $0x13a] sm:$0xff]
  %v7879 = vld [vmem:[%s173 + $0x142] sm:$0xff]
  %v7880 = vld [vmem:[%s173 + $0x152] sm:$0xff]
  %v7881 = vld [vmem:[%s173 + $0x15a] sm:$0xff]
  %v7882 = vld [vmem:[%s173 + $0x16a] sm:$0xff]
  %v7883 = vld [vmem:[%s173 + $0x172] sm:$0xff]
  %v7884 = vld [vmem:[%s173 + $0x1b2] sm:$0xff]
  %v7885 = vld [vmem:[%s173 + $0x1ba] sm:$0xff]
  %v7886 = vld [vmem:[%s173 + $0x1ca] sm:$0xff]
  %v7887 = vld [vmem:[%s173 + $0x1d2] sm:$0xff]
  %v7888 = vld [vmem:[%s173 + $0x1e2] sm:$0xff]
  %v7889 = vld [vmem:[%s173 + $0x1ea] sm:$0xff]
  %v7890 = vld [vmem:[%s173 + $0x1fa] sm:$0xff]
  %v7891 = vld [vmem:[%s173 + $0x202] sm:$0xff]
  %v7892 = vld [vmem:[%s173 + $0x212] sm:$0xff]
  %v7893 = vld [vmem:[%s173 + $0x21a] sm:$0xff]
  %v7894 = vld [vmem:[%s173 + $0x22a] sm:$0xff]
  %v7895 = vld [vmem:[%s173 + $0x232] sm:$0xff]
  %v7896 = vld [vmem:[%s173 + $0x242] sm:$0xff]
  %v7897 = vld [vmem:[%s173 + $0x24a] sm:$0xff]
  %v7898 = vld [vmem:[%s173 + $0x25a] sm:$0xff]
  %v7899 = vld [vmem:[%s173 + $0x262] sm:$0xff]
  %v7900 = vld [vmem:[%s173 + $0x272] sm:$0xff]
  %v7901 = vld [vmem:[%s173 + $0x27a] sm:$0xff]
  %v7902 = vld [vmem:[%s173 + $0x28a] sm:$0xff]
  %v7903 = vld [vmem:[%s173 + $0x292] sm:$0xff]
  %v7904 = vld [vmem:[%s173 + $0x2a2] sm:$0xff]
  %v7905 = vld [vmem:[%s173 + $0x2aa] sm:$0xff]
  %v7906 = vld [vmem:[%s173 + $0x2ba] sm:$0xff]
  %v7907 = vld [vmem:[%s173 + $0x2c2] sm:$0xff]
  %v7908 = vld [vmem:[%s173 + $0x2d2] sm:$0xff]
  %v7909 = vld [vmem:[%s173 + $0x2da] sm:$0xff]
  %v7910 = vld [vmem:[%s173 + $0x2ea] sm:$0xff]
  %v7911 = vld [vmem:[%s173 + $0x2f2] sm:$0xff]
  %v7912 = vld [vmem:[%s173 + $0x302] sm:$0xff]
  %v7913 = vld [vmem:[%s173 + $0x30a] sm:$0xff]
  %v7914 = vld [vmem:[%s173 + $0x31a] sm:$0xff]
  %v7915 = vld [vmem:[%s173 + $0x322] sm:$0xff]
  %v7916 = vpack.c.bf16 %v7853, %v7852
  %v7917 = vpack.c.bf16 %v7855, %v7854
  %v7918 = vpack.c.bf16 %v7857, %v7856
  %v7919 = vpack.c.bf16 %v7859, %v7858
  %v7920 = vpack.c.bf16 %v7861, %v7860
  %v7921 = vpack.c.bf16 %v7863, %v7862
  %v7922 = vpack.c.bf16 %v7865, %v7864
  %v7923 = vpack.c.bf16 %v7867, %v7866
  %v7924 = vpack.c.bf16 %v7869, %v7868
  %v7925 = vpack.c.bf16 %v7871, %v7870
  %v7926 = vpack.c.bf16 %v7873, %v7872
  %v7927 = vpack.c.bf16 %v7875, %v7874
  %v7928 = vpack.c.bf16 %v7877, %v7876
  %v7929 = vpack.c.bf16 %v7879, %v7878
  %v7930 = vpack.c.bf16 %v7881, %v7880
  %v7931 = vpack.c.bf16 %v7883, %v7882
  %v7932 = vpack.c.bf16 %v7885, %v7884
  %v7933 = vpack.c.bf16 %v7887, %v7886
  %v7934 = vpack.c.bf16 %v7889, %v7888
  %v7935 = vpack.c.bf16 %v7891, %v7890
  %v7936 = vpack.c.bf16 %v7893, %v7892
  %v7937 = vpack.c.bf16 %v7895, %v7894
  %v7938 = vpack.c.bf16 %v7897, %v7896
  %v7939 = vpack.c.bf16 %v7899, %v7898
  %v7940 = vpack.c.bf16 %v7901, %v7900
  %v7941 = vpack.c.bf16 %v7903, %v7902
  %v7942 = vpack.c.bf16 %v7905, %v7904
  %v7943 = vpack.c.bf16 %v7907, %v7906
  %v7944 = vpack.c.bf16 %v7909, %v7908
  %v7945 = vpack.c.bf16 %v7911, %v7910
  %v7946 = vpack.c.bf16 %v7913, %v7912
  %v7947 = vpack.c.bf16 %v7915, %v7914
  %s7948 = scalar_lea.vmem %s2, 320
  %v7949 = vld [vmem:[%s7948] sm:$0xf]
  %v7950 = vld [vmem:[%s7948 + $0x4] sm:$0xf]
  %v7951 = vld [vmem:[%s7948 + $0x8] sm:$0xf]
  %v7952 = vld [vmem:[%s7948 + $0xc] sm:$0xf]
  %v7953 = vld [vmem:[%s7948 + $0x10] sm:$0xf]
  %v7954 = vld [vmem:[%s7948 + $0x14] sm:$0xf]
  %v7955 = vld [vmem:[%s7948 + $0x18] sm:$0xf]
  %v7956 = vld [vmem:[%s7948 + $0x1c] sm:$0xf]
  %v7957 = vld [vmem:[%s7948 + $0x20] sm:$0xf]
  %v7958 = vld [vmem:[%s7948 + $0x24] sm:$0xf]
  %v7959 = vld [vmem:[%s7948 + $0x28] sm:$0xf]
  %v7960 = vld [vmem:[%s7948 + $0x2c] sm:$0xf]
  %v7961 = vld [vmem:[%s7948 + $0x30] sm:$0xf]
  %v7962 = vld [vmem:[%s7948 + $0x34] sm:$0xf]
  %v7963 = vld [vmem:[%s7948 + $0x38] sm:$0xf]
  %v7964 = vld [vmem:[%s7948 + $0x3c] sm:$0xf]
  %v7981 = vunpack.c.l.b16 %v7949
  %v7982 = vunpack.c.l.b16 %v7950
  %v7983 = vunpack.c.l.b16 %v7951
  %v7984 = vunpack.c.l.b16 %v7952
  %v7985 = vunpack.c.l.b16 %v7953
  %v7986 = vunpack.c.l.b16 %v7954
  %v7987 = vunpack.c.l.b16 %v7955
  %v7988 = vunpack.c.l.b16 %v7956
  %v7989 = vunpack.c.l.b16 %v7957
  %v7990 = vunpack.c.l.b16 %v7958
  %v7991 = vunpack.c.l.b16 %v7959
  %v7992 = vunpack.c.l.b16 %v7960
  %v7993 = vunpack.c.l.b16 %v7961
  %v7994 = vunpack.c.l.b16 %v7962
  %v7995 = vunpack.c.l.b16 %v7963
  %v7996 = vunpack.c.l.b16 %v7964
  %v7997 = vpack.c.b16 %v7982, %v7981
  %v7998 = vpack.c.b16 %v7984, %v7983
  %v7999 = vpack.c.b16 %v7986, %v7985
  %v8000 = vpack.c.b16 %v7988, %v7987
  %v8001 = vpack.c.b16 %v7990, %v7989
  %v8002 = vpack.c.b16 %v7992, %v7991
  %v8003 = vpack.c.b16 %v7994, %v7993
  %v8004 = vpack.c.b16 %v7996, %v7995
  %8013 = vmatprep.subr.bf16.mxu0 0
  %8014 = vmatpush1.bf16.msra.mxu0 %v7997
  %8015 = vmatprep.subr.bf16.mxu0 0
  %8016 = vmatpush1.bf16.msra.mxu0 %v7998
  %8017 = vmatprep.subr.bf16.mxu0 0
  %8018 = vmatpush1.bf16.msra.mxu0 %v7999
  %8019 = vmatprep.subr.bf16.mxu0 0
  %8020 = vmatpush1.bf16.msra.mxu0 %v8000
  %8021 = vmatprep.subr.bf16.mxu0 0
  %8022 = vmatpush1.bf16.msra.mxu0 %v8001
  %8023 = vmatprep.subr.bf16.mxu0 0
  %8024 = vmatpush1.bf16.msra.mxu0 %v8002
  %8025 = vmatprep.subr.bf16.mxu0 0
  %8026 = vmatpush1.bf16.msra.mxu0 %v8003
  %8027 = vmatprep.subr.bf16.mxu0 0
  %8028 = vmatpush1.bf16.msra.mxu0 %v8004
  %8029 = vmatprep.subr.bf16.mxu0 0
  %8030 = vmatpush1.bf16.msra.mxu0 0
  %8031 = vmatprep.subr.bf16.mxu0 0
  %8032 = vmatpush1.bf16.msra.mxu0 0
  %8033 = vmatprep.subr.bf16.mxu0 0
  %8034 = vmatpush1.bf16.msra.mxu0 0
  %8035 = vmatprep.subr.bf16.mxu0 0
  %8036 = vmatpush1.bf16.msra.mxu0 0
  %8037 = vmatprep.subr.bf16.mxu0 0
  %8038 = vmatpush1.bf16.msra.mxu0 0
  %8039 = vmatprep.subr.bf16.mxu0 0
  %8040 = vmatpush1.bf16.msra.mxu0 0
  %8041 = vmatprep.subr.bf16.mxu0 0
  %8042 = vmatpush1.bf16.msra.mxu0 0
  %8043 = vmatprep.subr.bf16.mxu0 0
  %8044 = vmatpush1.bf16.msra.mxu0 0
  %8045 = vmatprep.mubr.bf16.mxu0 0
  %8046 = vmatmul.mubr.bf16.gmra.mrb[0].mxu0 %v7916
  %v8047 = vpop.f32.mrb[0].mxu0
  %v8048 = vadd.f32 0.0, %v8047
  %v8049 = vpop.f32.mrb[0].mxu0
  %v8050 = vpop.f32.mrb[0].mxu0
  %v8051 = vadd.f32 0.0, %v8050
  %v8052 = vpop.f32.mrb[0].mxu0
  %8053 = vmatprep.mubr.bf16.mxu0 0
  %8054 = vmatmul.mubr.bf16.gmra.mrb[0].mxu0 %v7917
  %v8055 = vpop.f32.mrb[0].mxu0
  %v8056 = vadd.f32 0.0, %v8055
  %v8057 = vpop.f32.mrb[0].mxu0
  %v8058 = vpop.f32.mrb[0].mxu0
  %v8059 = vadd.f32 0.0, %v8058
  %v8060 = vpop.f32.mrb[0].mxu0
  %8061 = vmatprep.mubr.bf16.mxu0 0
  %8062 = vmatmul.mubr.bf16.gmra.mrb[0].mxu0 %v7918
  %v8063 = vpop.f32.mrb[0].mxu0
  %v8064 = vadd.f32 0.0, %v8063
  %v8065 = vpop.f32.mrb[0].mxu0
  %v8066 = vpop.f32.mrb[0].mxu0
  %v8067 = vadd.f32 0.0, %v8066
  %v8068 = vpop.f32.mrb[0].mxu0
  %8069 = vmatprep.mubr.bf16.mxu0 0
  %8070 = vmatmul.mubr.bf16.gmra.mrb[0].mxu0 %v7919
  %v8071 = vpop.f32.mrb[0].mxu0
  %v8072 = vadd.f32 0.0, %v8071
  %v8073 = vpop.f32.mrb[0].mxu0
  %v8074 = vpop.f32.mrb[0].mxu0
  %v8075 = vadd.f32 0.0, %v8074
  %v8076 = vpop.f32.mrb[0].mxu0
  %8077 = vmatprep.mubr.bf16.mxu0 0
  %8078 = vmatmul.mubr.bf16.gmra.mrb[0].mxu0 %v7920
  %v8079 = vpop.f32.mrb[0].mxu0
  %v8080 = vadd.f32 0.0, %v8079
  %v8081 = vpop.f32.mrb[0].mxu0
  %v8082 = vpop.f32.mrb[0].mxu0
  %v8083 = vadd.f32 0.0, %v8082
  %v8084 = vpop.f32.mrb[0].mxu0
  %8085 = vmatprep.mubr.bf16.mxu0 0
  %8086 = vmatmul.mubr.bf16.gmra.mrb[0].mxu0 %v7921
  %v8087 = vpop.f32.mrb[0].mxu0
  %v8088 = vadd.f32 0.0, %v8087
  %v8089 = vpop.f32.mrb[0].mxu0
  %v8090 = vpop.f32.mrb[0].mxu0
  %v8091 = vadd.f32 0.0, %v8090
  %v8092 = vpop.f32.mrb[0].mxu0
  %8093 = vmatprep.mubr.bf16.mxu0 0
  %8094 = vmatmul.mubr.bf16.gmra.mrb[0].mxu0 %v7922
  %v8095 = vpop.f32.mrb[0].mxu0
  %v8096 = vadd.f32 0.0, %v8095
  %v8097 = vpop.f32.mrb[0].mxu0
  %v8098 = vpop.f32.mrb[0].mxu0
  %v8099 = vadd.f32 0.0, %v8098
  %v8100 = vpop.f32.mrb[0].mxu0
  %8101 = vmatprep.mubr.bf16.mxu0 0
  %8102 = vmatmul.mubr.bf16.gmra.mrb[0].mxu0 %v7923
  %v8103 = vpop.f32.mrb[0].mxu0
  %v8104 = vadd.f32 0.0, %v8103
  %v8105 = vpop.f32.mrb[0].mxu0
  %v8106 = vpop.f32.mrb[0].mxu0
  %v8107 = vadd.f32 0.0, %v8106
  %v8108 = vpop.f32.mrb[0].mxu0
  %8109 = vmatprep.mubr.bf16.mxu0 0
  %8110 = vmatmul.mubr.bf16.gmra.mrb[0].mxu0 %v7924
  %v8111 = vpop.f32.mrb[0].mxu0
  %v8112 = vadd.f32 0.0, %v8111
  %v8113 = vpop.f32.mrb[0].mxu0
  %v8114 = vpop.f32.mrb[0].mxu0
  %v8115 = vadd.f32 0.0, %v8114
  %v8116 = vpop.f32.mrb[0].mxu0
  %8117 = vmatprep.mubr.bf16.mxu0 0
  %8118 = vmatmul.mubr.bf16.gmra.mrb[0].mxu0 %v7925
  %v8119 = vpop.f32.mrb[0].mxu0
  %v8120 = vadd.f32 0.0, %v8119
  %v8121 = vpop.f32.mrb[0].mxu0
  %v8122 = vpop.f32.mrb[0].mxu0
  %v8123 = vadd.f32 0.0, %v8122
  %v8124 = vpop.f32.mrb[0].mxu0
  %8125 = vmatprep.mubr.bf16.mxu0 0
  %8126 = vmatmul.mubr.bf16.gmra.mrb[0].mxu0 %v7926
  %v8127 = vpop.f32.mrb[0].mxu0
  %v8128 = vadd.f32 0.0, %v8127
  %v8129 = vpop.f32.mrb[0].mxu0
  %v8130 = vpop.f32.mrb[0].mxu0
  %v8131 = vadd.f32 0.0, %v8130
  %v8132 = vpop.f32.mrb[0].mxu0
  %8133 = vmatprep.mubr.bf16.mxu0 0
  %8134 = vmatmul.mubr.bf16.gmra.mrb[0].mxu0 %v7927
  %v8135 = vpop.f32.mrb[0].mxu0
  %v8136 = vadd.f32 0.0, %v8135
  %v8137 = vpop.f32.mrb[0].mxu0
  %v8138 = vpop.f32.mrb[0].mxu0
  %v8139 = vadd.f32 0.0, %v8138
  %v8140 = vpop.f32.mrb[0].mxu0
  %8141 = vmatprep.mubr.bf16.mxu0 0
  %8142 = vmatmul.mubr.bf16.gmra.mrb[0].mxu0 %v7928
  %v8143 = vpop.f32.mrb[0].mxu0
  %v8144 = vadd.f32 0.0, %v8143
  %v8145 = vpop.f32.mrb[0].mxu0
  %v8146 = vpop.f32.mrb[0].mxu0
  %v8147 = vadd.f32 0.0, %v8146
  %v8148 = vpop.f32.mrb[0].mxu0
  %8149 = vmatprep.mubr.bf16.mxu0 0
  %8150 = vmatmul.mubr.bf16.gmra.mrb[0].mxu0 %v7929
  %v8151 = vpop.f32.mrb[0].mxu0
  %v8152 = vadd.f32 0.0, %v8151
  %v8153 = vpop.f32.mrb[0].mxu0
  %v8154 = vpop.f32.mrb[0].mxu0
  %v8155 = vadd.f32 0.0, %v8154
  %v8156 = vpop.f32.mrb[0].mxu0
  %8157 = vmatprep.mubr.bf16.mxu0 0
  %8158 = vmatmul.mubr.bf16.gmra.mrb[0].mxu0 %v7930
  %v8159 = vpop.f32.mrb[0].mxu0
  %v8160 = vadd.f32 0.0, %v8159
  %v8161 = vpop.f32.mrb[0].mxu0
  %v8162 = vpop.f32.mrb[0].mxu0
  %v8163 = vadd.f32 0.0, %v8162
  %v8164 = vpop.f32.mrb[0].mxu0
  %8165 = vmatprep.mubr.bf16.mxu0 0
  %8166 = vmatmul.mubr.bf16.gmra.mrb[0].mxu0 %v7931
  %v8167 = vpop.f32.mrb[0].mxu0
  %v8168 = vadd.f32 0.0, %v8167
  %v8169 = vpop.f32.mrb[0].mxu0
  %v8170 = vpop.f32.mrb[0].mxu0
  %v8171 = vadd.f32 0.0, %v8170
  %v8172 = vpop.f32.mrb[0].mxu0
  %8173 = vmatprep.mubr.bf16.mxu0 0
  %8174 = vmatmul.mubr.bf16.gmra.mrb[0].mxu0 %v7932
  %v8175 = vpop.f32.mrb[0].mxu0
  %v8176 = vadd.f32 0.0, %v8175
  %v8177 = vpop.f32.mrb[0].mxu0
  %v8178 = vpop.f32.mrb[0].mxu0
  %v8179 = vadd.f32 0.0, %v8178
  %v8180 = vpop.f32.mrb[0].mxu0
  %8181 = vmatprep.mubr.bf16.mxu0 0
  %8182 = vmatmul.mubr.bf16.gmra.mrb[0].mxu0 %v7933
  %v8183 = vpop.f32.mrb[0].mxu0
  %v8184 = vadd.f32 0.0, %v8183
  %v8185 = vpop.f32.mrb[0].mxu0
  %v8186 = vpop.f32.mrb[0].mxu0
  %v8187 = vadd.f32 0.0, %v8186
  %v8188 = vpop.f32.mrb[0].mxu0
  %8189 = vmatprep.mubr.bf16.mxu0 0
  %8190 = vmatmul.mubr.bf16.gmra.mrb[0].mxu0 %v7934
  %v8191 = vpop.f32.mrb[0].mxu0
  %v8192 = vadd.f32 0.0, %v8191
  %v8193 = vpop.f32.mrb[0].mxu0
  %v8194 = vpop.f32.mrb[0].mxu0
  %v8195 = vadd.f32 0.0, %v8194
  %v8196 = vpop.f32.mrb[0].mxu0
  %8197 = vmatprep.mubr.bf16.mxu0 0
  %8198 = vmatmul.mubr.bf16.gmra.mrb[0].mxu0 %v7935
  %v8199 = vpop.f32.mrb[0].mxu0
  %v8200 = vadd.f32 0.0, %v8199
  %v8201 = vpop.f32.mrb[0].mxu0
  %v8202 = vpop.f32.mrb[0].mxu0
  %v8203 = vadd.f32 0.0, %v8202
  %v8204 = vpop.f32.mrb[0].mxu0
  %8205 = vmatprep.mubr.bf16.mxu0 0
  %8206 = vmatmul.mubr.bf16.gmra.mrb[0].mxu0 %v7936
  %v8207 = vpop.f32.mrb[0].mxu0
  %v8208 = vadd.f32 0.0, %v8207
  %v8209 = vpop.f32.mrb[0].mxu0
  %v8210 = vpop.f32.mrb[0].mxu0
  %v8211 = vadd.f32 0.0, %v8210
  %v8212 = vpop.f32.mrb[0].mxu0
  %8213 = vmatprep.mubr.bf16.mxu0 0
  %8214 = vmatmul.mubr.bf16.gmra.mrb[0].mxu0 %v7937
  %v8215 = vpop.f32.mrb[0].mxu0
  %v8216 = vadd.f32 0.0, %v8215
  %v8217 = vpop.f32.mrb[0].mxu0
  %v8218 = vpop.f32.mrb[0].mxu0
  %v8219 = vadd.f32 0.0, %v8218
  %v8220 = vpop.f32.mrb[0].mxu0
  %8221 = vmatprep.mubr.bf16.mxu0 0
  %8222 = vmatmul.mubr.bf16.gmra.mrb[0].mxu0 %v7938
  %v8223 = vpop.f32.mrb[0].mxu0
  %v8224 = vadd.f32 0.0, %v8223
  %v8225 = vpop.f32.mrb[0].mxu0
  %v8226 = vpop.f32.mrb[0].mxu0
  %v8227 = vadd.f32 0.0, %v8226
  %v8228 = vpop.f32.mrb[0].mxu0
  %8229 = vmatprep.mubr.bf16.mxu0 0
  %8230 = vmatmul.mubr.bf16.gmra.mrb[0].mxu0 %v7939
  %v8231 = vpop.f32.mrb[0].mxu0
  %v8232 = vadd.f32 0.0, %v8231
  %v8233 = vpop.f32.mrb[0].mxu0
  %v8234 = vpop.f32.mrb[0].mxu0
  %v8235 = vadd.f32 0.0, %v8234
  %v8236 = vpop.f32.mrb[0].mxu0
  %8237 = vmatprep.mubr.bf16.mxu0 0
  %8238 = vmatmul.mubr.bf16.gmra.mrb[0].mxu0 %v7940
  %v8239 = vpop.f32.mrb[0].mxu0
  %v8240 = vadd.f32 0.0, %v8239
  %v8241 = vpop.f32.mrb[0].mxu0
  %v8242 = vpop.f32.mrb[0].mxu0
  %v8243 = vadd.f32 0.0, %v8242
  %v8244 = vpop.f32.mrb[0].mxu0
  %8245 = vmatprep.mubr.bf16.mxu0 0
  %8246 = vmatmul.mubr.bf16.gmra.mrb[0].mxu0 %v7941
  %v8247 = vpop.f32.mrb[0].mxu0
  %v8248 = vadd.f32 0.0, %v8247
  %v8249 = vpop.f32.mrb[0].mxu0
  %v8250 = vpop.f32.mrb[0].mxu0
  %v8251 = vadd.f32 0.0, %v8250
  %v8252 = vpop.f32.mrb[0].mxu0
  %8253 = vmatprep.mubr.bf16.mxu0 0
  %8254 = vmatmul.mubr.bf16.gmra.mrb[0].mxu0 %v7942
  %v8255 = vpop.f32.mrb[0].mxu0
  %v8256 = vadd.f32 0.0, %v8255
  %v8257 = vpop.f32.mrb[0].mxu0
  %v8258 = vpop.f32.mrb[0].mxu0
  %v8259 = vadd.f32 0.0, %v8258
  %v8260 = vpop.f32.mrb[0].mxu0
  %8261 = vmatprep.mubr.bf16.mxu0 0
  %8262 = vmatmul.mubr.bf16.gmra.mrb[0].mxu0 %v7943
  %v8263 = vpop.f32.mrb[0].mxu0
  %v8264 = vadd.f32 0.0, %v8263
  %v8265 = vpop.f32.mrb[0].mxu0
  %v8266 = vpop.f32.mrb[0].mxu0
  %v8267 = vadd.f32 0.0, %v8266
  %v8268 = vpop.f32.mrb[0].mxu0
  %8269 = vmatprep.mubr.bf16.mxu0 0
  %8270 = vmatmul.mubr.bf16.gmra.mrb[0].mxu0 %v7944
  %v8271 = vpop.f32.mrb[0].mxu0
  %v8272 = vadd.f32 0.0, %v8271
  %v8273 = vpop.f32.mrb[0].mxu0
  %v8274 = vpop.f32.mrb[0].mxu0
  %v8275 = vadd.f32 0.0, %v8274
  %v8276 = vpop.f32.mrb[0].mxu0
  %8277 = vmatprep.mubr.bf16.mxu0 0
  %8278 = vmatmul.mubr.bf16.gmra.mrb[0].mxu0 %v7945
  %v8279 = vpop.f32.mrb[0].mxu0
  %v8280 = vadd.f32 0.0, %v8279
  %v8281 = vpop.f32.mrb[0].mxu0
  %v8282 = vpop.f32.mrb[0].mxu0
  %v8283 = vadd.f32 0.0, %v8282
  %v8284 = vpop.f32.mrb[0].mxu0
  %8285 = vmatprep.mubr.bf16.mxu0 0
  %8286 = vmatmul.mubr.bf16.gmra.mrb[0].mxu0 %v7946
  %v8287 = vpop.f32.mrb[0].mxu0
  %v8288 = vadd.f32 0.0, %v8287
  %v8289 = vpop.f32.mrb[0].mxu0
  %v8290 = vpop.f32.mrb[0].mxu0
  %v8291 = vadd.f32 0.0, %v8290
  %v8292 = vpop.f32.mrb[0].mxu0
  %8293 = vmatprep.mubr.bf16.mxu0 0
  %8294 = vmatmul.mubr.bf16.gmra.mrb[0].mxu0 %v7947
  %v8295 = vpop.f32.mrb[0].mxu0
  %v8296 = vadd.f32 0.0, %v8295
  %v8297 = vpop.f32.mrb[0].mxu0
  %v8298 = vpop.f32.mrb[0].mxu0
  %v8299 = vadd.f32 0.0, %v8298
  %v8300 = vpop.f32.mrb[0].mxu0
  %8301 = vdwg.mxu0
  %v8302 = vadd.f32 %v7788, %v8048
  %v8303 = vadd.f32 %v7789, %v8051
  %v8304 = vadd.f32 %v7790, %v8056
  %v8305 = vadd.f32 %v7791, %v8059
  %v8306 = vadd.f32 %v7792, %v8064
  %v8307 = vadd.f32 %v7793, %v8067
  %v8308 = vadd.f32 %v7794, %v8072
  %v8309 = vadd.f32 %v7795, %v8075
  %v8310 = vadd.f32 %v7796, %v8080
  %v8311 = vadd.f32 %v7797, %v8083
  %v8312 = vadd.f32 %v7798, %v8088
  %v8313 = vadd.f32 %v7799, %v8091
  %v8314 = vadd.f32 %v7800, %v8096
  %v8315 = vadd.f32 %v7801, %v8099
  %v8316 = vadd.f32 %v7802, %v8104
  %v8317 = vadd.f32 %v7803, %v8107
  %v8318 = vadd.f32 %v7804, %v8112
  %v8319 = vadd.f32 %v7805, %v8115
  %v8320 = vadd.f32 %v7806, %v8120
  %v8321 = vadd.f32 %v7807, %v8123
  %v8322 = vadd.f32 %v7808, %v8128
  %v8323 = vadd.f32 %v7809, %v8131
  %v8324 = vadd.f32 %v7810, %v8136
  %v8325 = vadd.f32 %v7811, %v8139
  %v8326 = vadd.f32 %v7812, %v8144
  %v8327 = vadd.f32 %v7813, %v8147
  %v8328 = vadd.f32 %v7814, %v8152
  %v8329 = vadd.f32 %v7815, %v8155
  %v8330 = vadd.f32 %v7816, %v8160
  %v8331 = vadd.f32 %v7817, %v8163
  %v8332 = vadd.f32 %v7818, %v8168
  %v8333 = vadd.f32 %v7819, %v8171
  %v8334 = vadd.f32 %v7820, %v8176
  %v8335 = vadd.f32 %v7821, %v8179
  %v8336 = vadd.f32 %v7822, %v8184
  %v8337 = vadd.f32 %v7823, %v8187
  %v8338 = vadd.f32 %v7824, %v8192
  %v8339 = vadd.f32 %v7825, %v8195
  %v8340 = vadd.f32 %v7826, %v8200
  %v8341 = vadd.f32 %v7827, %v8203
  %v8342 = vadd.f32 %v7828, %v8208
  %v8343 = vadd.f32 %v7829, %v8211
  %v8344 = vadd.f32 %v7830, %v8216
  %v8345 = vadd.f32 %v7831, %v8219
  %v8346 = vadd.f32 %v7832, %v8224
  %v8347 = vadd.f32 %v7833, %v8227
  %v8348 = vadd.f32 %v7834, %v8232
  %v8349 = vadd.f32 %v7835, %v8235
  %v8350 = vadd.f32 %v7836, %v8240
  %v8351 = vadd.f32 %v7837, %v8243
  %v8352 = vadd.f32 %v7838, %v8248
  %v8353 = vadd.f32 %v7839, %v8251
  %v8354 = vadd.f32 %v7840, %v8256
  %v8355 = vadd.f32 %v7841, %v8259
  %v8356 = vadd.f32 %v7842, %v8264
  %v8357 = vadd.f32 %v7843, %v8267
  %v8358 = vadd.f32 %v7844, %v8272
  %v8359 = vadd.f32 %v7845, %v8275
  %v8360 = vadd.f32 %v7846, %v8280
  %v8361 = vadd.f32 %v7847, %v8283
  %v8362 = vadd.f32 %v7848, %v8288
  %v8363 = vadd.f32 %v7849, %v8291
  %v8364 = vadd.f32 %v7850, %v8296
  %v8365 = vadd.f32 %v7851, %v8299
  %v8366 = vld [vmem:[%s3193] sm:$0xff]
  %v8367 = vld [vmem:[%s3193 + $0x8] sm:$0xff]
  %v8368 = vld [vmem:[%s3193 + $0x18] sm:$0xff]
  %v8369 = vld [vmem:[%s3193 + $0x20] sm:$0xff]
  %v8370 = vld [vmem:[%s3193 + $0x30] sm:$0xff]
  %v8371 = vld [vmem:[%s3193 + $0x38] sm:$0xff]
  %v8372 = vld [vmem:[%s3193 + $0x48] sm:$0xff]
  %v8373 = vld [vmem:[%s3193 + $0x50] sm:$0xff]
  %v8374 = vld [vmem:[%s3193 + $0x60] sm:$0xff]
  %v8375 = vld [vmem:[%s3193 + $0x68] sm:$0xff]
  %v8376 = vld [vmem:[%s3193 + $0x78] sm:$0xff]
  %v8377 = vld [vmem:[%s3193 + $0x80] sm:$0xff]
  %v8378 = vld [vmem:[%s3193 + $0x90] sm:$0xff]
  %v8379 = vld [vmem:[%s3193 + $0x98] sm:$0xff]
  %v8380 = vld [vmem:[%s3193 + $0xa8] sm:$0xff]
  %v8381 = vld [vmem:[%s3193 + $0xb0] sm:$0xff]
  %v8382 = vld [vmem:[%s3193 + $0xc0] sm:$0xff]
  %v8383 = vld [vmem:[%s3193 + $0xc8] sm:$0xff]
  %v8384 = vld [vmem:[%s3193 + $0xd8] sm:$0xff]
  %v8385 = vld [vmem:[%s3193 + $0xe0] sm:$0xff]
  %v8386 = vld [vmem:[%s3193 + $0xf0] sm:$0xff]
  %v8387 = vld [vmem:[%s3193 + $0xf8] sm:$0xff]
  %v8388 = vld [vmem:[%s3193 + $0x108] sm:$0xff]
  %v8389 = vld [vmem:[%s3193 + $0x110] sm:$0xff]
  %v8390 = vld [vmem:[%s3193 + $0x120] sm:$0xff]
  %v8391 = vld [vmem:[%s3193 + $0x128] sm:$0xff]
  %v8392 = vld [vmem:[%s3193 + $0x138] sm:$0xff]
  %v8393 = vld [vmem:[%s3193 + $0x140] sm:$0xff]
  %v8394 = vld [vmem:[%s3193 + $0x150] sm:$0xff]
  %v8395 = vld [vmem:[%s3193 + $0x158] sm:$0xff]
  %v8396 = vld [vmem:[%s3193 + $0x168] sm:$0xff]
  %v8397 = vld [vmem:[%s3193 + $0x170] sm:$0xff]
  %v8398 = vld [vmem:[%s3193 + $0x1b0] sm:$0xff]
  %v8399 = vld [vmem:[%s3193 + $0x1b8] sm:$0xff]
  %v8400 = vld [vmem:[%s3193 + $0x1c8] sm:$0xff]
  %v8401 = vld [vmem:[%s3193 + $0x1d0] sm:$0xff]
  %v8402 = vld [vmem:[%s3193 + $0x1e0] sm:$0xff]
  %v8403 = vld [vmem:[%s3193 + $0x1e8] sm:$0xff]
  %v8404 = vld [vmem:[%s3193 + $0x1f8] sm:$0xff]
  %v8405 = vld [vmem:[%s3193 + $0x200] sm:$0xff]
  %v8406 = vld [vmem:[%s3193 + $0x210] sm:$0xff]
  %v8407 = vld [vmem:[%s3193 + $0x218] sm:$0xff]
  %v8408 = vld [vmem:[%s3193 + $0x228] sm:$0xff]
  %v8409 = vld [vmem:[%s3193 + $0x230] sm:$0xff]
  %v8410 = vld [vmem:[%s3193 + $0x240] sm:$0xff]
  %v8411 = vld [vmem:[%s3193 + $0x248] sm:$0xff]
  %v8412 = vld [vmem:[%s3193 + $0x258] sm:$0xff]
  %v8413 = vld [vmem:[%s3193 + $0x260] sm:$0xff]
  %v8414 = vld [vmem:[%s3193 + $0x270] sm:$0xff]
  %v8415 = vld [vmem:[%s3193 + $0x278] sm:$0xff]
  %v8416 = vld [vmem:[%s3193 + $0x288] sm:$0xff]
  %v8417 = vld [vmem:[%s3193 + $0x290] sm:$0xff]
  %v8418 = vld [vmem:[%s3193 + $0x2a0] sm:$0xff]
  %v8419 = vld [vmem:[%s3193 + $0x2a8] sm:$0xff]
  %v8420 = vld [vmem:[%s3193 + $0x2b8] sm:$0xff]
  %v8421 = vld [vmem:[%s3193 + $0x2c0] sm:$0xff]
  %v8422 = vld [vmem:[%s3193 + $0x2d0] sm:$0xff]
  %v8423 = vld [vmem:[%s3193 + $0x2d8] sm:$0xff]
  %v8424 = vld [vmem:[%s3193 + $0x2e8] sm:$0xff]
  %v8425 = vld [vmem:[%s3193 + $0x2f0] sm:$0xff]
  %v8426 = vld [vmem:[%s3193 + $0x300] sm:$0xff]
  %v8427 = vld [vmem:[%s3193 + $0x308] sm:$0xff]
  %v8428 = vld [vmem:[%s3193 + $0x318] sm:$0xff]
  %v8429 = vld [vmem:[%s3193 + $0x320] sm:$0xff]
  %v8430 = vpack.c.bf16 %v8367, %v8366
  %v8431 = vpack.c.bf16 %v8369, %v8368
  %v8432 = vpack.c.bf16 %v8371, %v8370
  %v8433 = vpack.c.bf16 %v8373, %v8372
  %v8434 = vpack.c.bf16 %v8375, %v8374
  %v8435 = vpack.c.bf16 %v8377, %v8376
  %v8436 = vpack.c.bf16 %v8379, %v8378
  %v8437 = vpack.c.bf16 %v8381, %v8380
  %v8438 = vpack.c.bf16 %v8383, %v8382
  %v8439 = vpack.c.bf16 %v8385, %v8384
  %v8440 = vpack.c.bf16 %v8387, %v8386
  %v8441 = vpack.c.bf16 %v8389, %v8388
  %v8442 = vpack.c.bf16 %v8391, %v8390
  %v8443 = vpack.c.bf16 %v8393, %v8392
  %v8444 = vpack.c.bf16 %v8395, %v8394
  %v8445 = vpack.c.bf16 %v8397, %v8396
  %v8446 = vpack.c.bf16 %v8399, %v8398
  %v8447 = vpack.c.bf16 %v8401, %v8400
  %v8448 = vpack.c.bf16 %v8403, %v8402
  %v8449 = vpack.c.bf16 %v8405, %v8404
  %v8450 = vpack.c.bf16 %v8407, %v8406
  %v8451 = vpack.c.bf16 %v8409, %v8408
  %v8452 = vpack.c.bf16 %v8411, %v8410
  %v8453 = vpack.c.bf16 %v8413, %v8412
  %v8454 = vpack.c.bf16 %v8415, %v8414
  %v8455 = vpack.c.bf16 %v8417, %v8416
  %v8456 = vpack.c.bf16 %v8419, %v8418
  %v8457 = vpack.c.bf16 %v8421, %v8420
  %v8458 = vpack.c.bf16 %v8423, %v8422
  %v8459 = vpack.c.bf16 %v8425, %v8424
  %v8460 = vpack.c.bf16 %v8427, %v8426
  %v8461 = vpack.c.bf16 %v8429, %v8428
  %s8462 = scalar_lea.vmem %s2, 384
  %v8463 = vld [vmem:[%s8462] sm:$0xf]
  %v8464 = vld [vmem:[%s8462 + $0x4] sm:$0xf]
  %v8465 = vld [vmem:[%s8462 + $0x8] sm:$0xf]
  %v8466 = vld [vmem:[%s8462 + $0xc] sm:$0xf]
  %v8467 = vld [vmem:[%s8462 + $0x10] sm:$0xf]
  %v8468 = vld [vmem:[%s8462 + $0x14] sm:$0xf]
  %v8469 = vld [vmem:[%s8462 + $0x18] sm:$0xf]
  %v8470 = vld [vmem:[%s8462 + $0x1c] sm:$0xf]
  %v8471 = vld [vmem:[%s8462 + $0x20] sm:$0xf]
  %v8472 = vld [vmem:[%s8462 + $0x24] sm:$0xf]
  %v8473 = vld [vmem:[%s8462 + $0x28] sm:$0xf]
  %v8474 = vld [vmem:[%s8462 + $0x2c] sm:$0xf]
  %v8475 = vld [vmem:[%s8462 + $0x30] sm:$0xf]
  %v8476 = vld [vmem:[%s8462 + $0x34] sm:$0xf]
  %v8477 = vld [vmem:[%s8462 + $0x38] sm:$0xf]
  %v8478 = vld [vmem:[%s8462 + $0x3c] sm:$0xf]
  %v8495 = vunpack.c.l.b16 %v8463
  %v8496 = vunpack.c.l.b16 %v8464
  %v8497 = vunpack.c.l.b16 %v8465
  %v8498 = vunpack.c.l.b16 %v8466
  %v8499 = vunpack.c.l.b16 %v8467
  %v8500 = vunpack.c.l.b16 %v8468
  %v8501 = vunpack.c.l.b16 %v8469
  %v8502 = vunpack.c.l.b16 %v8470
  %v8503 = vunpack.c.l.b16 %v8471
  %v8504 = vunpack.c.l.b16 %v8472
  %v8505 = vunpack.c.l.b16 %v8473
  %v8506 = vunpack.c.l.b16 %v8474
  %v8507 = vunpack.c.l.b16 %v8475
  %v8508 = vunpack.c.l.b16 %v8476
  %v8509 = vunpack.c.l.b16 %v8477
  %v8510 = vunpack.c.l.b16 %v8478
  %v8511 = vpack.c.b16 %v8496, %v8495
  %v8512 = vpack.c.b16 %v8498, %v8497
  %v8513 = vpack.c.b16 %v8500, %v8499
  %v8514 = vpack.c.b16 %v8502, %v8501
  %v8515 = vpack.c.b16 %v8504, %v8503
  %v8516 = vpack.c.b16 %v8506, %v8505
  %v8517 = vpack.c.b16 %v8508, %v8507
  %v8518 = vpack.c.b16 %v8510, %v8509
  %8527 = vmatprep.subr.bf16.mxu0 0
  %8528 = vmatpush1.bf16.msra.mxu0 %v8511
  %8529 = vmatprep.subr.bf16.mxu0 0
  %8530 = vmatpush1.bf16.msra.mxu0 %v8512
  %8531 = vmatprep.subr.bf16.mxu0 0
  %8532 = vmatpush1.bf16.msra.mxu0 %v8513
  %8533 = vmatprep.subr.bf16.mxu0 0
  %8534 = vmatpush1.bf16.msra.mxu0 %v8514
  %8535 = vmatprep.subr.bf16.mxu0 0
  %8536 = vmatpush1.bf16.msra.mxu0 %v8515
  %8537 = vmatprep.subr.bf16.mxu0 0
  %8538 = vmatpush1.bf16.msra.mxu0 %v8516
  %8539 = vmatprep.subr.bf16.mxu0 0
  %8540 = vmatpush1.bf16.msra.mxu0 %v8517
  %8541 = vmatprep.subr.bf16.mxu0 0
  %8542 = vmatpush1.bf16.msra.mxu0 %v8518
  %8543 = vmatprep.subr.bf16.mxu0 0
  %8544 = vmatpush1.bf16.msra.mxu0 0
  %8545 = vmatprep.subr.bf16.mxu0 0
  %8546 = vmatpush1.bf16.msra.mxu0 0
  %8547 = vmatprep.subr.bf16.mxu0 0
  %8548 = vmatpush1.bf16.msra.mxu0 0
  %8549 = vmatprep.subr.bf16.mxu0 0
  %8550 = vmatpush1.bf16.msra.mxu0 0
  %8551 = vmatprep.subr.bf16.mxu0 0
  %8552 = vmatpush1.bf16.msra.mxu0 0
  %8553 = vmatprep.subr.bf16.mxu0 0
  %8554 = vmatpush1.bf16.msra.mxu0 0
  %8555 = vmatprep.subr.bf16.mxu0 0
  %8556 = vmatpush1.bf16.msra.mxu0 0
  %8557 = vmatprep.subr.bf16.mxu0 0
  %8558 = vmatpush1.bf16.msra.mxu0 0
  %8559 = vmatprep.mubr.bf16.mxu0 0
  %8560 = vmatmul.mubr.bf16.gmra.mrb[0].mxu0 %v8430
  %v8561 = vpop.f32.mrb[0].mxu0
  %v8562 = vadd.f32 0.0, %v8561
  %v8563 = vpop.f32.mrb[0].mxu0
  %v8564 = vpop.f32.mrb[0].mxu0
  %v8565 = vadd.f32 0.0, %v8564
  %v8566 = vpop.f32.mrb[0].mxu0
  %8567 = vmatprep.mubr.bf16.mxu0 0
  %8568 = vmatmul.mubr.bf16.gmra.mrb[0].mxu0 %v8431
  %v8569 = vpop.f32.mrb[0].mxu0
  %v8570 = vadd.f32 0.0, %v8569
  %v8571 = vpop.f32.mrb[0].mxu0
  %v8572 = vpop.f32.mrb[0].mxu0
  %v8573 = vadd.f32 0.0, %v8572
  %v8574 = vpop.f32.mrb[0].mxu0
  %8575 = vmatprep.mubr.bf16.mxu0 0
  %8576 = vmatmul.mubr.bf16.gmra.mrb[0].mxu0 %v8432
  %v8577 = vpop.f32.mrb[0].mxu0
  %v8578 = vadd.f32 0.0, %v8577
  %v8579 = vpop.f32.mrb[0].mxu0
  %v8580 = vpop.f32.mrb[0].mxu0
  %v8581 = vadd.f32 0.0, %v8580
  %v8582 = vpop.f32.mrb[0].mxu0
  %8583 = vmatprep.mubr.bf16.mxu0 0
  %8584 = vmatmul.mubr.bf16.gmra.mrb[0].mxu0 %v8433
  %v8585 = vpop.f32.mrb[0].mxu0
  %v8586 = vadd.f32 0.0, %v8585
  %v8587 = vpop.f32.mrb[0].mxu0
  %v8588 = vpop.f32.mrb[0].mxu0
  %v8589 = vadd.f32 0.0, %v8588
  %v8590 = vpop.f32.mrb[0].mxu0
  %8591 = vmatprep.mubr.bf16.mxu0 0
  %8592 = vmatmul.mubr.bf16.gmra.mrb[0].mxu0 %v8434
  %v8593 = vpop.f32.mrb[0].mxu0
  %v8594 = vadd.f32 0.0, %v8593
  %v8595 = vpop.f32.mrb[0].mxu0
  %v8596 = vpop.f32.mrb[0].mxu0
  %v8597 = vadd.f32 0.0, %v8596
  %v8598 = vpop.f32.mrb[0].mxu0
  %8599 = vmatprep.mubr.bf16.mxu0 0
  %8600 = vmatmul.mubr.bf16.gmra.mrb[0].mxu0 %v8435
  %v8601 = vpop.f32.mrb[0].mxu0
  %v8602 = vadd.f32 0.0, %v8601
  %v8603 = vpop.f32.mrb[0].mxu0
  %v8604 = vpop.f32.mrb[0].mxu0
  %v8605 = vadd.f32 0.0, %v8604
  %v8606 = vpop.f32.mrb[0].mxu0
  %8607 = vmatprep.mubr.bf16.mxu0 0
  %8608 = vmatmul.mubr.bf16.gmra.mrb[0].mxu0 %v8436
  %v8609 = vpop.f32.mrb[0].mxu0
  %v8610 = vadd.f32 0.0, %v8609
  %v8611 = vpop.f32.mrb[0].mxu0
  %v8612 = vpop.f32.mrb[0].mxu0
  %v8613 = vadd.f32 0.0, %v8612
  %v8614 = vpop.f32.mrb[0].mxu0
  %8615 = vmatprep.mubr.bf16.mxu0 0
  %8616 = vmatmul.mubr.bf16.gmra.mrb[0].mxu0 %v8437
  %v8617 = vpop.f32.mrb[0].mxu0
  %v8618 = vadd.f32 0.0, %v8617
  %v8619 = vpop.f32.mrb[0].mxu0
  %v8620 = vpop.f32.mrb[0].mxu0
  %v8621 = vadd.f32 0.0, %v8620
  %v8622 = vpop.f32.mrb[0].mxu0
  %8623 = vmatprep.mubr.bf16.mxu0 0
  %8624 = vmatmul.mubr.bf16.gmra.mrb[0].mxu0 %v8438
  %v8625 = vpop.f32.mrb[0].mxu0
  %v8626 = vadd.f32 0.0, %v8625
  %v8627 = vpop.f32.mrb[0].mxu0
  %v8628 = vpop.f32.mrb[0].mxu0
  %v8629 = vadd.f32 0.0, %v8628
  %v8630 = vpop.f32.mrb[0].mxu0
  %8631 = vmatprep.mubr.bf16.mxu0 0
  %8632 = vmatmul.mubr.bf16.gmra.mrb[0].mxu0 %v8439
  %v8633 = vpop.f32.mrb[0].mxu0
  %v8634 = vadd.f32 0.0, %v8633
  %v8635 = vpop.f32.mrb[0].mxu0
  %v8636 = vpop.f32.mrb[0].mxu0
  %v8637 = vadd.f32 0.0, %v8636
  %v8638 = vpop.f32.mrb[0].mxu0
  %8639 = vmatprep.mubr.bf16.mxu0 0
  %8640 = vmatmul.mubr.bf16.gmra.mrb[0].mxu0 %v8440
  %v8641 = vpop.f32.mrb[0].mxu0
  %v8642 = vadd.f32 0.0, %v8641
  %v8643 = vpop.f32.mrb[0].mxu0
  %v8644 = vpop.f32.mrb[0].mxu0
  %v8645 = vadd.f32 0.0, %v8644
  %v8646 = vpop.f32.mrb[0].mxu0
  %8647 = vmatprep.mubr.bf16.mxu0 0
  %8648 = vmatmul.mubr.bf16.gmra.mrb[0].mxu0 %v8441
  %v8649 = vpop.f32.mrb[0].mxu0
  %v8650 = vadd.f32 0.0, %v8649
  %v8651 = vpop.f32.mrb[0].mxu0
  %v8652 = vpop.f32.mrb[0].mxu0
  %v8653 = vadd.f32 0.0, %v8652
  %v8654 = vpop.f32.mrb[0].mxu0
  %8655 = vmatprep.mubr.bf16.mxu0 0
  %8656 = vmatmul.mubr.bf16.gmra.mrb[0].mxu0 %v8442
  %v8657 = vpop.f32.mrb[0].mxu0
  %v8658 = vadd.f32 0.0, %v8657
  %v8659 = vpop.f32.mrb[0].mxu0
  %v8660 = vpop.f32.mrb[0].mxu0
  %v8661 = vadd.f32 0.0, %v8660
  %v8662 = vpop.f32.mrb[0].mxu0
  %8663 = vmatprep.mubr.bf16.mxu0 0
  %8664 = vmatmul.mubr.bf16.gmra.mrb[0].mxu0 %v8443
  %v8665 = vpop.f32.mrb[0].mxu0
  %v8666 = vadd.f32 0.0, %v8665
  %v8667 = vpop.f32.mrb[0].mxu0
  %v8668 = vpop.f32.mrb[0].mxu0
  %v8669 = vadd.f32 0.0, %v8668
  %v8670 = vpop.f32.mrb[0].mxu0
  %8671 = vmatprep.mubr.bf16.mxu0 0
  %8672 = vmatmul.mubr.bf16.gmra.mrb[0].mxu0 %v8444
  %v8673 = vpop.f32.mrb[0].mxu0
  %v8674 = vadd.f32 0.0, %v8673
  %v8675 = vpop.f32.mrb[0].mxu0
  %v8676 = vpop.f32.mrb[0].mxu0
  %v8677 = vadd.f32 0.0, %v8676
  %v8678 = vpop.f32.mrb[0].mxu0
  %8679 = vmatprep.mubr.bf16.mxu0 0
  %8680 = vmatmul.mubr.bf16.gmra.mrb[0].mxu0 %v8445
  %v8681 = vpop.f32.mrb[0].mxu0
  %v8682 = vadd.f32 0.0, %v8681
  %v8683 = vpop.f32.mrb[0].mxu0
  %v8684 = vpop.f32.mrb[0].mxu0
  %v8685 = vadd.f32 0.0, %v8684
  %v8686 = vpop.f32.mrb[0].mxu0
  %8687 = vmatprep.mubr.bf16.mxu0 0
  %8688 = vmatmul.mubr.bf16.gmra.mrb[0].mxu0 %v8446
  %v8689 = vpop.f32.mrb[0].mxu0
  %v8690 = vadd.f32 0.0, %v8689
  %v8691 = vpop.f32.mrb[0].mxu0
  %v8692 = vpop.f32.mrb[0].mxu0
  %v8693 = vadd.f32 0.0, %v8692
  %v8694 = vpop.f32.mrb[0].mxu0
  %8695 = vmatprep.mubr.bf16.mxu0 0
  %8696 = vmatmul.mubr.bf16.gmra.mrb[0].mxu0 %v8447
  %v8697 = vpop.f32.mrb[0].mxu0
  %v8698 = vadd.f32 0.0, %v8697
  %v8699 = vpop.f32.mrb[0].mxu0
  %v8700 = vpop.f32.mrb[0].mxu0
  %v8701 = vadd.f32 0.0, %v8700
  %v8702 = vpop.f32.mrb[0].mxu0
  %8703 = vmatprep.mubr.bf16.mxu0 0
  %8704 = vmatmul.mubr.bf16.gmra.mrb[0].mxu0 %v8448
  %v8705 = vpop.f32.mrb[0].mxu0
  %v8706 = vadd.f32 0.0, %v8705
  %v8707 = vpop.f32.mrb[0].mxu0
  %v8708 = vpop.f32.mrb[0].mxu0
  %v8709 = vadd.f32 0.0, %v8708
  %v8710 = vpop.f32.mrb[0].mxu0
  %8711 = vmatprep.mubr.bf16.mxu0 0
  %8712 = vmatmul.mubr.bf16.gmra.mrb[0].mxu0 %v8449
  %v8713 = vpop.f32.mrb[0].mxu0
  %v8714 = vadd.f32 0.0, %v8713
  %v8715 = vpop.f32.mrb[0].mxu0
  %v8716 = vpop.f32.mrb[0].mxu0
  %v8717 = vadd.f32 0.0, %v8716
  %v8718 = vpop.f32.mrb[0].mxu0
  %8719 = vmatprep.mubr.bf16.mxu0 0
  %8720 = vmatmul.mubr.bf16.gmra.mrb[0].mxu0 %v8450
  %v8721 = vpop.f32.mrb[0].mxu0
  %v8722 = vadd.f32 0.0, %v8721
  %v8723 = vpop.f32.mrb[0].mxu0
  %v8724 = vpop.f32.mrb[0].mxu0
  %v8725 = vadd.f32 0.0, %v8724
  %v8726 = vpop.f32.mrb[0].mxu0
  %8727 = vmatprep.mubr.bf16.mxu0 0
  %8728 = vmatmul.mubr.bf16.gmra.mrb[0].mxu0 %v8451
  %v8729 = vpop.f32.mrb[0].mxu0
  %v8730 = vadd.f32 0.0, %v8729
  %v8731 = vpop.f32.mrb[0].mxu0
  %v8732 = vpop.f32.mrb[0].mxu0
  %v8733 = vadd.f32 0.0, %v8732
  %v8734 = vpop.f32.mrb[0].mxu0
  %8735 = vmatprep.mubr.bf16.mxu0 0
  %8736 = vmatmul.mubr.bf16.gmra.mrb[0].mxu0 %v8452
  %v8737 = vpop.f32.mrb[0].mxu0
  %v8738 = vadd.f32 0.0, %v8737
  %v8739 = vpop.f32.mrb[0].mxu0
  %v8740 = vpop.f32.mrb[0].mxu0
  %v8741 = vadd.f32 0.0, %v8740
  %v8742 = vpop.f32.mrb[0].mxu0
  %8743 = vmatprep.mubr.bf16.mxu0 0
  %8744 = vmatmul.mubr.bf16.gmra.mrb[0].mxu0 %v8453
  %v8745 = vpop.f32.mrb[0].mxu0
  %v8746 = vadd.f32 0.0, %v8745
  %v8747 = vpop.f32.mrb[0].mxu0
  %v8748 = vpop.f32.mrb[0].mxu0
  %v8749 = vadd.f32 0.0, %v8748
  %v8750 = vpop.f32.mrb[0].mxu0
  %8751 = vmatprep.mubr.bf16.mxu0 0
  %8752 = vmatmul.mubr.bf16.gmra.mrb[0].mxu0 %v8454
  %v8753 = vpop.f32.mrb[0].mxu0
  %v8754 = vadd.f32 0.0, %v8753
  %v8755 = vpop.f32.mrb[0].mxu0
  %v8756 = vpop.f32.mrb[0].mxu0
  %v8757 = vadd.f32 0.0, %v8756
  %v8758 = vpop.f32.mrb[0].mxu0
  %8759 = vmatprep.mubr.bf16.mxu0 0
  %8760 = vmatmul.mubr.bf16.gmra.mrb[0].mxu0 %v8455
  %v8761 = vpop.f32.mrb[0].mxu0
  %v8762 = vadd.f32 0.0, %v8761
  %v8763 = vpop.f32.mrb[0].mxu0
  %v8764 = vpop.f32.mrb[0].mxu0
  %v8765 = vadd.f32 0.0, %v8764
  %v8766 = vpop.f32.mrb[0].mxu0
  %8767 = vmatprep.mubr.bf16.mxu0 0
  %8768 = vmatmul.mubr.bf16.gmra.mrb[0].mxu0 %v8456
  %v8769 = vpop.f32.mrb[0].mxu0
  %v8770 = vadd.f32 0.0, %v8769
  %v8771 = vpop.f32.mrb[0].mxu0
  %v8772 = vpop.f32.mrb[0].mxu0
  %v8773 = vadd.f32 0.0, %v8772
  %v8774 = vpop.f32.mrb[0].mxu0
  %8775 = vmatprep.mubr.bf16.mxu0 0
  %8776 = vmatmul.mubr.bf16.gmra.mrb[0].mxu0 %v8457
  %v8777 = vpop.f32.mrb[0].mxu0
  %v8778 = vadd.f32 0.0, %v8777
  %v8779 = vpop.f32.mrb[0].mxu0
  %v8780 = vpop.f32.mrb[0].mxu0
  %v8781 = vadd.f32 0.0, %v8780
  %v8782 = vpop.f32.mrb[0].mxu0
  %8783 = vmatprep.mubr.bf16.mxu0 0
  %8784 = vmatmul.mubr.bf16.gmra.mrb[0].mxu0 %v8458
  %v8785 = vpop.f32.mrb[0].mxu0
  %v8786 = vadd.f32 0.0, %v8785
  %v8787 = vpop.f32.mrb[0].mxu0
  %v8788 = vpop.f32.mrb[0].mxu0
  %v8789 = vadd.f32 0.0, %v8788
  %v8790 = vpop.f32.mrb[0].mxu0
  %8791 = vmatprep.mubr.bf16.mxu0 0
  %8792 = vmatmul.mubr.bf16.gmra.mrb[0].mxu0 %v8459
  %v8793 = vpop.f32.mrb[0].mxu0
  %v8794 = vadd.f32 0.0, %v8793
  %v8795 = vpop.f32.mrb[0].mxu0
  %v8796 = vpop.f32.mrb[0].mxu0
  %v8797 = vadd.f32 0.0, %v8796
  %v8798 = vpop.f32.mrb[0].mxu0
  %8799 = vmatprep.mubr.bf16.mxu0 0
  %8800 = vmatmul.mubr.bf16.gmra.mrb[0].mxu0 %v8460
  %v8801 = vpop.f32.mrb[0].mxu0
  %v8802 = vadd.f32 0.0, %v8801
  %v8803 = vpop.f32.mrb[0].mxu0
  %v8804 = vpop.f32.mrb[0].mxu0
  %v8805 = vadd.f32 0.0, %v8804
  %v8806 = vpop.f32.mrb[0].mxu0
  %8807 = vmatprep.mubr.bf16.mxu0 0
  %8808 = vmatmul.mubr.bf16.gmra.mrb[0].mxu0 %v8461
  %v8809 = vpop.f32.mrb[0].mxu0
  %v8810 = vadd.f32 0.0, %v8809
  %v8811 = vpop.f32.mrb[0].mxu0
  %v8812 = vpop.f32.mrb[0].mxu0
  %v8813 = vadd.f32 0.0, %v8812
  %v8814 = vpop.f32.mrb[0].mxu0
  %8815 = vdwg.mxu0
  %v8816 = vadd.f32 %v8302, %v8562
  %v8817 = vadd.f32 %v8303, %v8565
  %v8818 = vadd.f32 %v8304, %v8570
  %v8819 = vadd.f32 %v8305, %v8573
  %v8820 = vadd.f32 %v8306, %v8578
  %v8821 = vadd.f32 %v8307, %v8581
  %v8822 = vadd.f32 %v8308, %v8586
  %v8823 = vadd.f32 %v8309, %v8589
  %v8824 = vadd.f32 %v8310, %v8594
  %v8825 = vadd.f32 %v8311, %v8597
  %v8826 = vadd.f32 %v8312, %v8602
  %v8827 = vadd.f32 %v8313, %v8605
  %v8828 = vadd.f32 %v8314, %v8610
  %v8829 = vadd.f32 %v8315, %v8613
  %v8830 = vadd.f32 %v8316, %v8618
  %v8831 = vadd.f32 %v8317, %v8621
  %v8832 = vadd.f32 %v8318, %v8626
  %v8833 = vadd.f32 %v8319, %v8629
  %v8834 = vadd.f32 %v8320, %v8634
  %v8835 = vadd.f32 %v8321, %v8637
  %v8836 = vadd.f32 %v8322, %v8642
  %v8837 = vadd.f32 %v8323, %v8645
  %v8838 = vadd.f32 %v8324, %v8650
  %v8839 = vadd.f32 %v8325, %v8653
  %v8840 = vadd.f32 %v8326, %v8658
  %v8841 = vadd.f32 %v8327, %v8661
  %v8842 = vadd.f32 %v8328, %v8666
  %v8843 = vadd.f32 %v8329, %v8669
  %v8844 = vadd.f32 %v8330, %v8674
  %v8845 = vadd.f32 %v8331, %v8677
  %v8846 = vadd.f32 %v8332, %v8682
  %v8847 = vadd.f32 %v8333, %v8685
  %v8848 = vadd.f32 %v8334, %v8690
  %v8849 = vadd.f32 %v8335, %v8693
  %v8850 = vadd.f32 %v8336, %v8698
  %v8851 = vadd.f32 %v8337, %v8701
  %v8852 = vadd.f32 %v8338, %v8706
  %v8853 = vadd.f32 %v8339, %v8709
  %v8854 = vadd.f32 %v8340, %v8714
  %v8855 = vadd.f32 %v8341, %v8717
  %v8856 = vadd.f32 %v8342, %v8722
  %v8857 = vadd.f32 %v8343, %v8725
  %v8858 = vadd.f32 %v8344, %v8730
  %v8859 = vadd.f32 %v8345, %v8733
  %v8860 = vadd.f32 %v8346, %v8738
  %v8861 = vadd.f32 %v8347, %v8741
  %v8862 = vadd.f32 %v8348, %v8746
  %v8863 = vadd.f32 %v8349, %v8749
  %v8864 = vadd.f32 %v8350, %v8754
  %v8865 = vadd.f32 %v8351, %v8757
  %v8866 = vadd.f32 %v8352, %v8762
  %v8867 = vadd.f32 %v8353, %v8765
  %v8868 = vadd.f32 %v8354, %v8770
  %v8869 = vadd.f32 %v8355, %v8773
  %v8870 = vadd.f32 %v8356, %v8778
  %v8871 = vadd.f32 %v8357, %v8781
  %v8872 = vadd.f32 %v8358, %v8786
  %v8873 = vadd.f32 %v8359, %v8789
  %v8874 = vadd.f32 %v8360, %v8794
  %v8875 = vadd.f32 %v8361, %v8797
  %v8876 = vadd.f32 %v8362, %v8802
  %v8877 = vadd.f32 %v8363, %v8805
  %v8878 = vadd.f32 %v8364, %v8810
  %v8879 = vadd.f32 %v8365, %v8813
  %v8880 = vld [vmem:[%s3193 + $0x1] sm:$0xff]
  %v8881 = vld [vmem:[%s3193 + $0x9] sm:$0xff]
  %v8882 = vld [vmem:[%s3193 + $0x19] sm:$0xff]
  %v8883 = vld [vmem:[%s3193 + $0x21] sm:$0xff]
  %v8884 = vld [vmem:[%s3193 + $0x31] sm:$0xff]
  %v8885 = vld [vmem:[%s3193 + $0x39] sm:$0xff]
  %v8886 = vld [vmem:[%s3193 + $0x49] sm:$0xff]
  %v8887 = vld [vmem:[%s3193 + $0x51] sm:$0xff]
  %v8888 = vld [vmem:[%s3193 + $0x61] sm:$0xff]
  %v8889 = vld [vmem:[%s3193 + $0x69] sm:$0xff]
  %v8890 = vld [vmem:[%s3193 + $0x79] sm:$0xff]
  %v8891 = vld [vmem:[%s3193 + $0x81] sm:$0xff]
  %v8892 = vld [vmem:[%s3193 + $0x91] sm:$0xff]
  %v8893 = vld [vmem:[%s3193 + $0x99] sm:$0xff]
  %v8894 = vld [vmem:[%s3193 + $0xa9] sm:$0xff]
  %v8895 = vld [vmem:[%s3193 + $0xb1] sm:$0xff]
  %v8896 = vld [vmem:[%s3193 + $0xc1] sm:$0xff]
  %v8897 = vld [vmem:[%s3193 + $0xc9] sm:$0xff]
  %v8898 = vld [vmem:[%s3193 + $0xd9] sm:$0xff]
  %v8899 = vld [vmem:[%s3193 + $0xe1] sm:$0xff]
  %v8900 = vld [vmem:[%s3193 + $0xf1] sm:$0xff]
  %v8901 = vld [vmem:[%s3193 + $0xf9] sm:$0xff]
  %v8902 = vld [vmem:[%s3193 + $0x109] sm:$0xff]
  %v8903 = vld [vmem:[%s3193 + $0x111] sm:$0xff]
  %v8904 = vld [vmem:[%s3193 + $0x121] sm:$0xff]
  %v8905 = vld [vmem:[%s3193 + $0x129] sm:$0xff]
  %v8906 = vld [vmem:[%s3193 + $0x139] sm:$0xff]
  %v8907 = vld [vmem:[%s3193 + $0x141] sm:$0xff]
  %v8908 = vld [vmem:[%s3193 + $0x151] sm:$0xff]
  %v8909 = vld [vmem:[%s3193 + $0x159] sm:$0xff]
  %v8910 = vld [vmem:[%s3193 + $0x169] sm:$0xff]
  %v8911 = vld [vmem:[%s3193 + $0x171] sm:$0xff]
  %v8912 = vld [vmem:[%s3193 + $0x1b1] sm:$0xff]
  %v8913 = vld [vmem:[%s3193 + $0x1b9] sm:$0xff]
  %v8914 = vld [vmem:[%s3193 + $0x1c9] sm:$0xff]
  %v8915 = vld [vmem:[%s3193 + $0x1d1] sm:$0xff]
  %v8916 = vld [vmem:[%s3193 + $0x1e1] sm:$0xff]
  %v8917 = vld [vmem:[%s3193 + $0x1e9] sm:$0xff]
  %v8918 = vld [vmem:[%s3193 + $0x1f9] sm:$0xff]
  %v8919 = vld [vmem:[%s3193 + $0x201] sm:$0xff]
  %v8920 = vld [vmem:[%s3193 + $0x211] sm:$0xff]
  %v8921 = vld [vmem:[%s3193 + $0x219] sm:$0xff]
  %v8922 = vld [vmem:[%s3193 + $0x229] sm:$0xff]
  %v8923 = vld [vmem:[%s3193 + $0x231] sm:$0xff]
  %v8924 = vld [vmem:[%s3193 + $0x241] sm:$0xff]
  %v8925 = vld [vmem:[%s3193 + $0x249] sm:$0xff]
  %v8926 = vld [vmem:[%s3193 + $0x259] sm:$0xff]
  %v8927 = vld [vmem:[%s3193 + $0x261] sm:$0xff]
  %v8928 = vld [vmem:[%s3193 + $0x271] sm:$0xff]
  %v8929 = vld [vmem:[%s3193 + $0x279] sm:$0xff]
  %v8930 = vld [vmem:[%s3193 + $0x289] sm:$0xff]
  %v8931 = vld [vmem:[%s3193 + $0x291] sm:$0xff]
  %v8932 = vld [vmem:[%s3193 + $0x2a1] sm:$0xff]
  %v8933 = vld [vmem:[%s3193 + $0x2a9] sm:$0xff]
  %v8934 = vld [vmem:[%s3193 + $0x2b9] sm:$0xff]
  %v8935 = vld [vmem:[%s3193 + $0x2c1] sm:$0xff]
  %v8936 = vld [vmem:[%s3193 + $0x2d1] sm:$0xff]
  %v8937 = vld [vmem:[%s3193 + $0x2d9] sm:$0xff]
  %v8938 = vld [vmem:[%s3193 + $0x2e9] sm:$0xff]
  %v8939 = vld [vmem:[%s3193 + $0x2f1] sm:$0xff]
  %v8940 = vld [vmem:[%s3193 + $0x301] sm:$0xff]
  %v8941 = vld [vmem:[%s3193 + $0x309] sm:$0xff]
  %v8942 = vld [vmem:[%s3193 + $0x319] sm:$0xff]
  %v8943 = vld [vmem:[%s3193 + $0x321] sm:$0xff]
  %v8944 = vpack.c.bf16 %v8881, %v8880
  %v8945 = vpack.c.bf16 %v8883, %v8882
  %v8946 = vpack.c.bf16 %v8885, %v8884
  %v8947 = vpack.c.bf16 %v8887, %v8886
  %v8948 = vpack.c.bf16 %v8889, %v8888
  %v8949 = vpack.c.bf16 %v8891, %v8890
  %v8950 = vpack.c.bf16 %v8893, %v8892
  %v8951 = vpack.c.bf16 %v8895, %v8894
  %v8952 = vpack.c.bf16 %v8897, %v8896
  %v8953 = vpack.c.bf16 %v8899, %v8898
  %v8954 = vpack.c.bf16 %v8901, %v8900
  %v8955 = vpack.c.bf16 %v8903, %v8902
  %v8956 = vpack.c.bf16 %v8905, %v8904
  %v8957 = vpack.c.bf16 %v8907, %v8906
  %v8958 = vpack.c.bf16 %v8909, %v8908
  %v8959 = vpack.c.bf16 %v8911, %v8910
  %v8960 = vpack.c.bf16 %v8913, %v8912
  %v8961 = vpack.c.bf16 %v8915, %v8914
  %v8962 = vpack.c.bf16 %v8917, %v8916
  %v8963 = vpack.c.bf16 %v8919, %v8918
  %v8964 = vpack.c.bf16 %v8921, %v8920
  %v8965 = vpack.c.bf16 %v8923, %v8922
  %v8966 = vpack.c.bf16 %v8925, %v8924
  %v8967 = vpack.c.bf16 %v8927, %v8926
  %v8968 = vpack.c.bf16 %v8929, %v8928
  %v8969 = vpack.c.bf16 %v8931, %v8930
  %v8970 = vpack.c.bf16 %v8933, %v8932
  %v8971 = vpack.c.bf16 %v8935, %v8934
  %v8972 = vpack.c.bf16 %v8937, %v8936
  %v8973 = vpack.c.bf16 %v8939, %v8938
  %v8974 = vpack.c.bf16 %v8941, %v8940
  %v8975 = vpack.c.bf16 %v8943, %v8942
  %s8976 = scalar_lea.vmem %s2, 448
  %v8977 = vld [vmem:[%s8976] sm:$0xf]
  %v8978 = vld [vmem:[%s8976 + $0x4] sm:$0xf]
  %v8979 = vld [vmem:[%s8976 + $0x8] sm:$0xf]
  %v8980 = vld [vmem:[%s8976 + $0xc] sm:$0xf]
  %v8981 = vld [vmem:[%s8976 + $0x10] sm:$0xf]
  %v8982 = vld [vmem:[%s8976 + $0x14] sm:$0xf]
  %v8983 = vld [vmem:[%s8976 + $0x18] sm:$0xf]
  %v8984 = vld [vmem:[%s8976 + $0x1c] sm:$0xf]
  %v8985 = vld [vmem:[%s8976 + $0x20] sm:$0xf]
  %v8986 = vld [vmem:[%s8976 + $0x24] sm:$0xf]
  %v8987 = vld [vmem:[%s8976 + $0x28] sm:$0xf]
  %v8988 = vld [vmem:[%s8976 + $0x2c] sm:$0xf]
  %v8989 = vld [vmem:[%s8976 + $0x30] sm:$0xf]
  %v8990 = vld [vmem:[%s8976 + $0x34] sm:$0xf]
  %v8991 = vld [vmem:[%s8976 + $0x38] sm:$0xf]
  %v8992 = vld [vmem:[%s8976 + $0x3c] sm:$0xf]
  %v9009 = vunpack.c.l.b16 %v8977
  %v9010 = vunpack.c.l.b16 %v8978
  %v9011 = vunpack.c.l.b16 %v8979
  %v9012 = vunpack.c.l.b16 %v8980
  %v9013 = vunpack.c.l.b16 %v8981
  %v9014 = vunpack.c.l.b16 %v8982
  %v9015 = vunpack.c.l.b16 %v8983
  %v9016 = vunpack.c.l.b16 %v8984
  %v9017 = vunpack.c.l.b16 %v8985
  %v9018 = vunpack.c.l.b16 %v8986
  %v9019 = vunpack.c.l.b16 %v8987
  %v9020 = vunpack.c.l.b16 %v8988
  %v9021 = vunpack.c.l.b16 %v8989
  %v9022 = vunpack.c.l.b16 %v8990
  %v9023 = vunpack.c.l.b16 %v8991
  %v9024 = vunpack.c.l.b16 %v8992
  %v9025 = vpack.c.b16 %v9010, %v9009
  %v9026 = vpack.c.b16 %v9012, %v9011
  %v9027 = vpack.c.b16 %v9014, %v9013
  %v9028 = vpack.c.b16 %v9016, %v9015
  %v9029 = vpack.c.b16 %v9018, %v9017
  %v9030 = vpack.c.b16 %v9020, %v9019
  %v9031 = vpack.c.b16 %v9022, %v9021
  %v9032 = vpack.c.b16 %v9024, %v9023
  %9041 = vmatprep.subr.bf16.mxu0 0
  %9042 = vmatpush1.bf16.msra.mxu0 %v9025
  %9043 = vmatprep.subr.bf16.mxu0 0
  %9044 = vmatpush1.bf16.msra.mxu0 %v9026
  %9045 = vmatprep.subr.bf16.mxu0 0
  %9046 = vmatpush1.bf16.msra.mxu0 %v9027
  %9047 = vmatprep.subr.bf16.mxu0 0
  %9048 = vmatpush1.bf16.msra.mxu0 %v9028
  %9049 = vmatprep.subr.bf16.mxu0 0
  %9050 = vmatpush1.bf16.msra.mxu0 %v9029
  %9051 = vmatprep.subr.bf16.mxu0 0
  %9052 = vmatpush1.bf16.msra.mxu0 %v9030
  %9053 = vmatprep.subr.bf16.mxu0 0
  %9054 = vmatpush1.bf16.msra.mxu0 %v9031
  %9055 = vmatprep.subr.bf16.mxu0 0
  %9056 = vmatpush1.bf16.msra.mxu0 %v9032
  %9057 = vmatprep.subr.bf16.mxu0 0
  %9058 = vmatpush1.bf16.msra.mxu0 0
  %9059 = vmatprep.subr.bf16.mxu0 0
  %9060 = vmatpush1.bf16.msra.mxu0 0
  %9061 = vmatprep.subr.bf16.mxu0 0
  %9062 = vmatpush1.bf16.msra.mxu0 0
  %9063 = vmatprep.subr.bf16.mxu0 0
  %9064 = vmatpush1.bf16.msra.mxu0 0
  %9065 = vmatprep.subr.bf16.mxu0 0
  %9066 = vmatpush1.bf16.msra.mxu0 0
  %9067 = vmatprep.subr.bf16.mxu0 0
  %9068 = vmatpush1.bf16.msra.mxu0 0
  %9069 = vmatprep.subr.bf16.mxu0 0
  %9070 = vmatpush1.bf16.msra.mxu0 0
  %9071 = vmatprep.subr.bf16.mxu0 0
  %9072 = vmatpush1.bf16.msra.mxu0 0
  %9073 = vmatprep.mubr.bf16.mxu0 0
  %9074 = vmatmul.mubr.bf16.gmra.mrb[0].mxu0 %v8944
  %v9075 = vpop.f32.mrb[0].mxu0
  %v9076 = vadd.f32 0.0, %v9075
  %v9077 = vpop.f32.mrb[0].mxu0
  %v9078 = vpop.f32.mrb[0].mxu0
  %v9079 = vadd.f32 0.0, %v9078
  %v9080 = vpop.f32.mrb[0].mxu0
  %9081 = vmatprep.mubr.bf16.mxu0 0
  %9082 = vmatmul.mubr.bf16.gmra.mrb[0].mxu0 %v8945
  %v9083 = vpop.f32.mrb[0].mxu0
  %v9084 = vadd.f32 0.0, %v9083
  %v9085 = vpop.f32.mrb[0].mxu0
  %v9086 = vpop.f32.mrb[0].mxu0
  %v9087 = vadd.f32 0.0, %v9086
  %v9088 = vpop.f32.mrb[0].mxu0
  %9089 = vmatprep.mubr.bf16.mxu0 0
  %9090 = vmatmul.mubr.bf16.gmra.mrb[0].mxu0 %v8946
  %v9091 = vpop.f32.mrb[0].mxu0
  %v9092 = vadd.f32 0.0, %v9091
  %v9093 = vpop.f32.mrb[0].mxu0
  %v9094 = vpop.f32.mrb[0].mxu0
  %v9095 = vadd.f32 0.0, %v9094
  %v9096 = vpop.f32.mrb[0].mxu0
  %9097 = vmatprep.mubr.bf16.mxu0 0
  %9098 = vmatmul.mubr.bf16.gmra.mrb[0].mxu0 %v8947
  %v9099 = vpop.f32.mrb[0].mxu0
  %v9100 = vadd.f32 0.0, %v9099
  %v9101 = vpop.f32.mrb[0].mxu0
  %v9102 = vpop.f32.mrb[0].mxu0
  %v9103 = vadd.f32 0.0, %v9102
  %v9104 = vpop.f32.mrb[0].mxu0
  %9105 = vmatprep.mubr.bf16.mxu0 0
  %9106 = vmatmul.mubr.bf16.gmra.mrb[0].mxu0 %v8948
  %v9107 = vpop.f32.mrb[0].mxu0
  %v9108 = vadd.f32 0.0, %v9107
  %v9109 = vpop.f32.mrb[0].mxu0
  %v9110 = vpop.f32.mrb[0].mxu0
  %v9111 = vadd.f32 0.0, %v9110
  %v9112 = vpop.f32.mrb[0].mxu0
  %9113 = vmatprep.mubr.bf16.mxu0 0
  %9114 = vmatmul.mubr.bf16.gmra.mrb[0].mxu0 %v8949
  %v9115 = vpop.f32.mrb[0].mxu0
  %v9116 = vadd.f32 0.0, %v9115
  %v9117 = vpop.f32.mrb[0].mxu0
  %v9118 = vpop.f32.mrb[0].mxu0
  %v9119 = vadd.f32 0.0, %v9118
  %v9120 = vpop.f32.mrb[0].mxu0
  %9121 = vmatprep.mubr.bf16.mxu0 0
  %9122 = vmatmul.mubr.bf16.gmra.mrb[0].mxu0 %v8950
  %v9123 = vpop.f32.mrb[0].mxu0
  %v9124 = vadd.f32 0.0, %v9123
  %v9125 = vpop.f32.mrb[0].mxu0
  %v9126 = vpop.f32.mrb[0].mxu0
  %v9127 = vadd.f32 0.0, %v9126
  %v9128 = vpop.f32.mrb[0].mxu0
  %9129 = vmatprep.mubr.bf16.mxu0 0
  %9130 = vmatmul.mubr.bf16.gmra.mrb[0].mxu0 %v8951
  %v9131 = vpop.f32.mrb[0].mxu0
  %v9132 = vadd.f32 0.0, %v9131
  %v9133 = vpop.f32.mrb[0].mxu0
  %v9134 = vpop.f32.mrb[0].mxu0
  %v9135 = vadd.f32 0.0, %v9134
  %v9136 = vpop.f32.mrb[0].mxu0
  %9137 = vmatprep.mubr.bf16.mxu0 0
  %9138 = vmatmul.mubr.bf16.gmra.mrb[0].mxu0 %v8952
  %v9139 = vpop.f32.mrb[0].mxu0
  %v9140 = vadd.f32 0.0, %v9139
  %v9141 = vpop.f32.mrb[0].mxu0
  %v9142 = vpop.f32.mrb[0].mxu0
  %v9143 = vadd.f32 0.0, %v9142
  %v9144 = vpop.f32.mrb[0].mxu0
  %9145 = vmatprep.mubr.bf16.mxu0 0
  %9146 = vmatmul.mubr.bf16.gmra.mrb[0].mxu0 %v8953
  %v9147 = vpop.f32.mrb[0].mxu0
  %v9148 = vadd.f32 0.0, %v9147
  %v9149 = vpop.f32.mrb[0].mxu0
  %v9150 = vpop.f32.mrb[0].mxu0
  %v9151 = vadd.f32 0.0, %v9150
  %v9152 = vpop.f32.mrb[0].mxu0
  %9153 = vmatprep.mubr.bf16.mxu0 0
  %9154 = vmatmul.mubr.bf16.gmra.mrb[0].mxu0 %v8954
  %v9155 = vpop.f32.mrb[0].mxu0
  %v9156 = vadd.f32 0.0, %v9155
  %v9157 = vpop.f32.mrb[0].mxu0
  %v9158 = vpop.f32.mrb[0].mxu0
  %v9159 = vadd.f32 0.0, %v9158
  %v9160 = vpop.f32.mrb[0].mxu0
  %9161 = vmatprep.mubr.bf16.mxu0 0
  %9162 = vmatmul.mubr.bf16.gmra.mrb[0].mxu0 %v8955
  %v9163 = vpop.f32.mrb[0].mxu0
  %v9164 = vadd.f32 0.0, %v9163
  %v9165 = vpop.f32.mrb[0].mxu0
  %v9166 = vpop.f32.mrb[0].mxu0
  %v9167 = vadd.f32 0.0, %v9166
  %v9168 = vpop.f32.mrb[0].mxu0
  %9169 = vmatprep.mubr.bf16.mxu0 0
  %9170 = vmatmul.mubr.bf16.gmra.mrb[0].mxu0 %v8956
  %v9171 = vpop.f32.mrb[0].mxu0
  %v9172 = vadd.f32 0.0, %v9171
  %v9173 = vpop.f32.mrb[0].mxu0
  %v9174 = vpop.f32.mrb[0].mxu0
  %v9175 = vadd.f32 0.0, %v9174
  %v9176 = vpop.f32.mrb[0].mxu0
  %9177 = vmatprep.mubr.bf16.mxu0 0
  %9178 = vmatmul.mubr.bf16.gmra.mrb[0].mxu0 %v8957
  %v9179 = vpop.f32.mrb[0].mxu0
  %v9180 = vadd.f32 0.0, %v9179
  %v9181 = vpop.f32.mrb[0].mxu0
  %v9182 = vpop.f32.mrb[0].mxu0
  %v9183 = vadd.f32 0.0, %v9182
  %v9184 = vpop.f32.mrb[0].mxu0
  %9185 = vmatprep.mubr.bf16.mxu0 0
  %9186 = vmatmul.mubr.bf16.gmra.mrb[0].mxu0 %v8958
  %v9187 = vpop.f32.mrb[0].mxu0
  %v9188 = vadd.f32 0.0, %v9187
  %v9189 = vpop.f32.mrb[0].mxu0
  %v9190 = vpop.f32.mrb[0].mxu0
  %v9191 = vadd.f32 0.0, %v9190
  %v9192 = vpop.f32.mrb[0].mxu0
  %9193 = vmatprep.mubr.bf16.mxu0 0
  %9194 = vmatmul.mubr.bf16.gmra.mrb[0].mxu0 %v8959
  %v9195 = vpop.f32.mrb[0].mxu0
  %v9196 = vadd.f32 0.0, %v9195
  %v9197 = vpop.f32.mrb[0].mxu0
  %v9198 = vpop.f32.mrb[0].mxu0
  %v9199 = vadd.f32 0.0, %v9198
  %v9200 = vpop.f32.mrb[0].mxu0
  %9201 = vmatprep.mubr.bf16.mxu0 0
  %9202 = vmatmul.mubr.bf16.gmra.mrb[0].mxu0 %v8960
  %v9203 = vpop.f32.mrb[0].mxu0
  %v9204 = vadd.f32 0.0, %v9203
  %v9205 = vpop.f32.mrb[0].mxu0
  %v9206 = vpop.f32.mrb[0].mxu0
  %v9207 = vadd.f32 0.0, %v9206
  %v9208 = vpop.f32.mrb[0].mxu0
  %9209 = vmatprep.mubr.bf16.mxu0 0
  %9210 = vmatmul.mubr.bf16.gmra.mrb[0].mxu0 %v8961
  %v9211 = vpop.f32.mrb[0].mxu0
  %v9212 = vadd.f32 0.0, %v9211
  %v9213 = vpop.f32.mrb[0].mxu0
  %v9214 = vpop.f32.mrb[0].mxu0
  %v9215 = vadd.f32 0.0, %v9214
  %v9216 = vpop.f32.mrb[0].mxu0
  %9217 = vmatprep.mubr.bf16.mxu0 0
  %9218 = vmatmul.mubr.bf16.gmra.mrb[0].mxu0 %v8962
  %v9219 = vpop.f32.mrb[0].mxu0
  %v9220 = vadd.f32 0.0, %v9219
  %v9221 = vpop.f32.mrb[0].mxu0
  %v9222 = vpop.f32.mrb[0].mxu0
  %v9223 = vadd.f32 0.0, %v9222
  %v9224 = vpop.f32.mrb[0].mxu0
  %9225 = vmatprep.mubr.bf16.mxu0 0
  %9226 = vmatmul.mubr.bf16.gmra.mrb[0].mxu0 %v8963
  %v9227 = vpop.f32.mrb[0].mxu0
  %v9228 = vadd.f32 0.0, %v9227
  %v9229 = vpop.f32.mrb[0].mxu0
  %v9230 = vpop.f32.mrb[0].mxu0
  %v9231 = vadd.f32 0.0, %v9230
  %v9232 = vpop.f32.mrb[0].mxu0
  %9233 = vmatprep.mubr.bf16.mxu0 0
  %9234 = vmatmul.mubr.bf16.gmra.mrb[0].mxu0 %v8964
  %v9235 = vpop.f32.mrb[0].mxu0
  %v9236 = vadd.f32 0.0, %v9235
  %v9237 = vpop.f32.mrb[0].mxu0
  %v9238 = vpop.f32.mrb[0].mxu0
  %v9239 = vadd.f32 0.0, %v9238
  %v9240 = vpop.f32.mrb[0].mxu0
  %9241 = vmatprep.mubr.bf16.mxu0 0
  %9242 = vmatmul.mubr.bf16.gmra.mrb[0].mxu0 %v8965
  %v9243 = vpop.f32.mrb[0].mxu0
  %v9244 = vadd.f32 0.0, %v9243
  %v9245 = vpop.f32.mrb[0].mxu0
  %v9246 = vpop.f32.mrb[0].mxu0
  %v9247 = vadd.f32 0.0, %v9246
  %v9248 = vpop.f32.mrb[0].mxu0
  %9249 = vmatprep.mubr.bf16.mxu0 0
  %9250 = vmatmul.mubr.bf16.gmra.mrb[0].mxu0 %v8966
  %v9251 = vpop.f32.mrb[0].mxu0
  %v9252 = vadd.f32 0.0, %v9251
  %v9253 = vpop.f32.mrb[0].mxu0
  %v9254 = vpop.f32.mrb[0].mxu0
  %v9255 = vadd.f32 0.0, %v9254
  %v9256 = vpop.f32.mrb[0].mxu0
  %9257 = vmatprep.mubr.bf16.mxu0 0
  %9258 = vmatmul.mubr.bf16.gmra.mrb[0].mxu0 %v8967
  %v9259 = vpop.f32.mrb[0].mxu0
  %v9260 = vadd.f32 0.0, %v9259
  %v9261 = vpop.f32.mrb[0].mxu0
  %v9262 = vpop.f32.mrb[0].mxu0
  %v9263 = vadd.f32 0.0, %v9262
  %v9264 = vpop.f32.mrb[0].mxu0
  %9265 = vmatprep.mubr.bf16.mxu0 0
  %9266 = vmatmul.mubr.bf16.gmra.mrb[0].mxu0 %v8968
  %v9267 = vpop.f32.mrb[0].mxu0
  %v9268 = vadd.f32 0.0, %v9267
  %v9269 = vpop.f32.mrb[0].mxu0
  %v9270 = vpop.f32.mrb[0].mxu0
  %v9271 = vadd.f32 0.0, %v9270
  %v9272 = vpop.f32.mrb[0].mxu0
  %9273 = vmatprep.mubr.bf16.mxu0 0
  %9274 = vmatmul.mubr.bf16.gmra.mrb[0].mxu0 %v8969
  %v9275 = vpop.f32.mrb[0].mxu0
  %v9276 = vadd.f32 0.0, %v9275
  %v9277 = vpop.f32.mrb[0].mxu0
  %v9278 = vpop.f32.mrb[0].mxu0
  %v9279 = vadd.f32 0.0, %v9278
  %v9280 = vpop.f32.mrb[0].mxu0
  %9281 = vmatprep.mubr.bf16.mxu0 0
  %9282 = vmatmul.mubr.bf16.gmra.mrb[0].mxu0 %v8970
  %v9283 = vpop.f32.mrb[0].mxu0
  %v9284 = vadd.f32 0.0, %v9283
  %v9285 = vpop.f32.mrb[0].mxu0
  %v9286 = vpop.f32.mrb[0].mxu0
  %v9287 = vadd.f32 0.0, %v9286
  %v9288 = vpop.f32.mrb[0].mxu0
  %9289 = vmatprep.mubr.bf16.mxu0 0
  %9290 = vmatmul.mubr.bf16.gmra.mrb[0].mxu0 %v8971
  %v9291 = vpop.f32.mrb[0].mxu0
  %v9292 = vadd.f32 0.0, %v9291
  %v9293 = vpop.f32.mrb[0].mxu0
  %v9294 = vpop.f32.mrb[0].mxu0
  %v9295 = vadd.f32 0.0, %v9294
  %v9296 = vpop.f32.mrb[0].mxu0
  %9297 = vmatprep.mubr.bf16.mxu0 0
  %9298 = vmatmul.mubr.bf16.gmra.mrb[0].mxu0 %v8972
  %v9299 = vpop.f32.mrb[0].mxu0
  %v9300 = vadd.f32 0.0, %v9299
  %v9301 = vpop.f32.mrb[0].mxu0
  %v9302 = vpop.f32.mrb[0].mxu0
  %v9303 = vadd.f32 0.0, %v9302
  %v9304 = vpop.f32.mrb[0].mxu0
  %9305 = vmatprep.mubr.bf16.mxu0 0
  %9306 = vmatmul.mubr.bf16.gmra.mrb[0].mxu0 %v8973
  %v9307 = vpop.f32.mrb[0].mxu0
  %v9308 = vadd.f32 0.0, %v9307
  %v9309 = vpop.f32.mrb[0].mxu0
  %v9310 = vpop.f32.mrb[0].mxu0
  %v9311 = vadd.f32 0.0, %v9310
  %v9312 = vpop.f32.mrb[0].mxu0
  %9313 = vmatprep.mubr.bf16.mxu0 0
  %9314 = vmatmul.mubr.bf16.gmra.mrb[0].mxu0 %v8974
  %v9315 = vpop.f32.mrb[0].mxu0
  %v9316 = vadd.f32 0.0, %v9315
  %v9317 = vpop.f32.mrb[0].mxu0
  %v9318 = vpop.f32.mrb[0].mxu0
  %v9319 = vadd.f32 0.0, %v9318
  %v9320 = vpop.f32.mrb[0].mxu0
  %9321 = vmatprep.mubr.bf16.mxu0 0
  %9322 = vmatmul.mubr.bf16.gmra.mrb[0].mxu0 %v8975
  %v9323 = vpop.f32.mrb[0].mxu0
  %v9324 = vadd.f32 0.0, %v9323
  %v9325 = vpop.f32.mrb[0].mxu0
  %v9326 = vpop.f32.mrb[0].mxu0
  %v9327 = vadd.f32 0.0, %v9326
  %v9328 = vpop.f32.mrb[0].mxu0
  %9329 = vdwg.mxu0
  %v9330 = vadd.f32 %v8816, %v9076
  %v9331 = vadd.f32 %v8817, %v9079
  %v9332 = vadd.f32 %v8818, %v9084
  %v9333 = vadd.f32 %v8819, %v9087
  %v9334 = vadd.f32 %v8820, %v9092
  %v9335 = vadd.f32 %v8821, %v9095
  %v9336 = vadd.f32 %v8822, %v9100
  %v9337 = vadd.f32 %v8823, %v9103
  %v9338 = vadd.f32 %v8824, %v9108
  %v9339 = vadd.f32 %v8825, %v9111
  %v9340 = vadd.f32 %v8826, %v9116
  %v9341 = vadd.f32 %v8827, %v9119
  %v9342 = vadd.f32 %v8828, %v9124
  %v9343 = vadd.f32 %v8829, %v9127
  %v9344 = vadd.f32 %v8830, %v9132
  %v9345 = vadd.f32 %v8831, %v9135
  %v9346 = vadd.f32 %v8832, %v9140
  %v9347 = vadd.f32 %v8833, %v9143
  %v9348 = vadd.f32 %v8834, %v9148
  %v9349 = vadd.f32 %v8835, %v9151
  %v9350 = vadd.f32 %v8836, %v9156
  %v9351 = vadd.f32 %v8837, %v9159
  %v9352 = vadd.f32 %v8838, %v9164
  %v9353 = vadd.f32 %v8839, %v9167
  %v9354 = vadd.f32 %v8840, %v9172
  %v9355 = vadd.f32 %v8841, %v9175
  %v9356 = vadd.f32 %v8842, %v9180
  %v9357 = vadd.f32 %v8843, %v9183
  %v9358 = vadd.f32 %v8844, %v9188
  %v9359 = vadd.f32 %v8845, %v9191
  %v9360 = vadd.f32 %v8846, %v9196
  %v9361 = vadd.f32 %v8847, %v9199
  %v9362 = vadd.f32 %v8848, %v9204
  %v9363 = vadd.f32 %v8849, %v9207
  %v9364 = vadd.f32 %v8850, %v9212
  %v9365 = vadd.f32 %v8851, %v9215
  %v9366 = vadd.f32 %v8852, %v9220
  %v9367 = vadd.f32 %v8853, %v9223
  %v9368 = vadd.f32 %v8854, %v9228
  %v9369 = vadd.f32 %v8855, %v9231
  %v9370 = vadd.f32 %v8856, %v9236
  %v9371 = vadd.f32 %v8857, %v9239
  %v9372 = vadd.f32 %v8858, %v9244
  %v9373 = vadd.f32 %v8859, %v9247
  %v9374 = vadd.f32 %v8860, %v9252
  %v9375 = vadd.f32 %v8861, %v9255
  %v9376 = vadd.f32 %v8862, %v9260
  %v9377 = vadd.f32 %v8863, %v9263
  %v9378 = vadd.f32 %v8864, %v9268
  %v9379 = vadd.f32 %v8865, %v9271
  %v9380 = vadd.f32 %v8866, %v9276
  %v9381 = vadd.f32 %v8867, %v9279
  %v9382 = vadd.f32 %v8868, %v9284
  %v9383 = vadd.f32 %v8869, %v9287
  %v9384 = vadd.f32 %v8870, %v9292
  %v9385 = vadd.f32 %v8871, %v9295
  %v9386 = vadd.f32 %v8872, %v9300
  %v9387 = vadd.f32 %v8873, %v9303
  %v9388 = vadd.f32 %v8874, %v9308
  %v9389 = vadd.f32 %v8875, %v9311
  %v9390 = vadd.f32 %v8876, %v9316
  %v9391 = vadd.f32 %v8877, %v9319
  %v9392 = vadd.f32 %v8878, %v9324
  %v9393 = vadd.f32 %v8879, %v9327
  %v9394 = vld [vmem:[%s3193 + $0x2] sm:$0xff]
  %v9395 = vld [vmem:[%s3193 + $0xa] sm:$0xff]
  %v9396 = vld [vmem:[%s3193 + $0x1a] sm:$0xff]
  %v9397 = vld [vmem:[%s3193 + $0x22] sm:$0xff]
  %v9398 = vld [vmem:[%s3193 + $0x32] sm:$0xff]
  %v9399 = vld [vmem:[%s3193 + $0x3a] sm:$0xff]
  %v9400 = vld [vmem:[%s3193 + $0x4a] sm:$0xff]
  %v9401 = vld [vmem:[%s3193 + $0x52] sm:$0xff]
  %v9402 = vld [vmem:[%s3193 + $0x62] sm:$0xff]
  %v9403 = vld [vmem:[%s3193 + $0x6a] sm:$0xff]
  %v9404 = vld [vmem:[%s3193 + $0x7a] sm:$0xff]
  %v9405 = vld [vmem:[%s3193 + $0x82] sm:$0xff]
  %v9406 = vld [vmem:[%s3193 + $0x92] sm:$0xff]
  %v9407 = vld [vmem:[%s3193 + $0x9a] sm:$0xff]
  %v9408 = vld [vmem:[%s3193 + $0xaa] sm:$0xff]
  %v9409 = vld [vmem:[%s3193 + $0xb2] sm:$0xff]
  %v9410 = vld [vmem:[%s3193 + $0xc2] sm:$0xff]
  %v9411 = vld [vmem:[%s3193 + $0xca] sm:$0xff]
  %v9412 = vld [vmem:[%s3193 + $0xda] sm:$0xff]
  %v9413 = vld [vmem:[%s3193 + $0xe2] sm:$0xff]
  %v9414 = vld [vmem:[%s3193 + $0xf2] sm:$0xff]
  %v9415 = vld [vmem:[%s3193 + $0xfa] sm:$0xff]
  %v9416 = vld [vmem:[%s3193 + $0x10a] sm:$0xff]
  %v9417 = vld [vmem:[%s3193 + $0x112] sm:$0xff]
  %v9418 = vld [vmem:[%s3193 + $0x122] sm:$0xff]
  %v9419 = vld [vmem:[%s3193 + $0x12a] sm:$0xff]
  %v9420 = vld [vmem:[%s3193 + $0x13a] sm:$0xff]
  %v9421 = vld [vmem:[%s3193 + $0x142] sm:$0xff]
  %v9422 = vld [vmem:[%s3193 + $0x152] sm:$0xff]
  %v9423 = vld [vmem:[%s3193 + $0x15a] sm:$0xff]
  %v9424 = vld [vmem:[%s3193 + $0x16a] sm:$0xff]
  %v9425 = vld [vmem:[%s3193 + $0x172] sm:$0xff]
  %v9426 = vld [vmem:[%s3193 + $0x1b2] sm:$0xff]
  %v9427 = vld [vmem:[%s3193 + $0x1ba] sm:$0xff]
  %v9428 = vld [vmem:[%s3193 + $0x1ca] sm:$0xff]
  %v9429 = vld [vmem:[%s3193 + $0x1d2] sm:$0xff]
  %v9430 = vld [vmem:[%s3193 + $0x1e2] sm:$0xff]
  %v9431 = vld [vmem:[%s3193 + $0x1ea] sm:$0xff]
  %v9432 = vld [vmem:[%s3193 + $0x1fa] sm:$0xff]
  %v9433 = vld [vmem:[%s3193 + $0x202] sm:$0xff]
  %v9434 = vld [vmem:[%s3193 + $0x212] sm:$0xff]
  %v9435 = vld [vmem:[%s3193 + $0x21a] sm:$0xff]
  %v9436 = vld [vmem:[%s3193 + $0x22a] sm:$0xff]
  %v9437 = vld [vmem:[%s3193 + $0x232] sm:$0xff]
  %v9438 = vld [vmem:[%s3193 + $0x242] sm:$0xff]
  %v9439 = vld [vmem:[%s3193 + $0x24a] sm:$0xff]
  %v9440 = vld [vmem:[%s3193 + $0x25a] sm:$0xff]
  %v9441 = vld [vmem:[%s3193 + $0x262] sm:$0xff]
  %v9442 = vld [vmem:[%s3193 + $0x272] sm:$0xff]
  %v9443 = vld [vmem:[%s3193 + $0x27a] sm:$0xff]
  %v9444 = vld [vmem:[%s3193 + $0x28a] sm:$0xff]
  %v9445 = vld [vmem:[%s3193 + $0x292] sm:$0xff]
  %v9446 = vld [vmem:[%s3193 + $0x2a2] sm:$0xff]
  %v9447 = vld [vmem:[%s3193 + $0x2aa] sm:$0xff]
  %v9448 = vld [vmem:[%s3193 + $0x2ba] sm:$0xff]
  %v9449 = vld [vmem:[%s3193 + $0x2c2] sm:$0xff]
  %v9450 = vld [vmem:[%s3193 + $0x2d2] sm:$0xff]
  %v9451 = vld [vmem:[%s3193 + $0x2da] sm:$0xff]
  %v9452 = vld [vmem:[%s3193 + $0x2ea] sm:$0xff]
  %v9453 = vld [vmem:[%s3193 + $0x2f2] sm:$0xff]
  %v9454 = vld [vmem:[%s3193 + $0x302] sm:$0xff]
  %v9455 = vld [vmem:[%s3193 + $0x30a] sm:$0xff]
  %v9456 = vld [vmem:[%s3193 + $0x31a] sm:$0xff]
  %v9457 = vld [vmem:[%s3193 + $0x322] sm:$0xff]
  %v9458 = vpack.c.bf16 %v9395, %v9394
  %v9459 = vpack.c.bf16 %v9397, %v9396
  %v9460 = vpack.c.bf16 %v9399, %v9398
  %v9461 = vpack.c.bf16 %v9401, %v9400
  %v9462 = vpack.c.bf16 %v9403, %v9402
  %v9463 = vpack.c.bf16 %v9405, %v9404
  %v9464 = vpack.c.bf16 %v9407, %v9406
  %v9465 = vpack.c.bf16 %v9409, %v9408
  %v9466 = vpack.c.bf16 %v9411, %v9410
  %v9467 = vpack.c.bf16 %v9413, %v9412
  %v9468 = vpack.c.bf16 %v9415, %v9414
  %v9469 = vpack.c.bf16 %v9417, %v9416
  %v9470 = vpack.c.bf16 %v9419, %v9418
  %v9471 = vpack.c.bf16 %v9421, %v9420
  %v9472 = vpack.c.bf16 %v9423, %v9422
  %v9473 = vpack.c.bf16 %v9425, %v9424
  %v9474 = vpack.c.bf16 %v9427, %v9426
  %v9475 = vpack.c.bf16 %v9429, %v9428
  %v9476 = vpack.c.bf16 %v9431, %v9430
  %v9477 = vpack.c.bf16 %v9433, %v9432
  %v9478 = vpack.c.bf16 %v9435, %v9434
  %v9479 = vpack.c.bf16 %v9437, %v9436
  %v9480 = vpack.c.bf16 %v9439, %v9438
  %v9481 = vpack.c.bf16 %v9441, %v9440
  %v9482 = vpack.c.bf16 %v9443, %v9442
  %v9483 = vpack.c.bf16 %v9445, %v9444
  %v9484 = vpack.c.bf16 %v9447, %v9446
  %v9485 = vpack.c.bf16 %v9449, %v9448
  %v9486 = vpack.c.bf16 %v9451, %v9450
  %v9487 = vpack.c.bf16 %v9453, %v9452
  %v9488 = vpack.c.bf16 %v9455, %v9454
  %v9489 = vpack.c.bf16 %v9457, %v9456
  %s9490 = scalar_lea.vmem %s2, 512
  %v9491 = vld [vmem:[%s9490] sm:$0xf]
  %v9492 = vld [vmem:[%s9490 + $0x4] sm:$0xf]
  %v9493 = vld [vmem:[%s9490 + $0x8] sm:$0xf]
  %v9494 = vld [vmem:[%s9490 + $0xc] sm:$0xf]
  %v9495 = vld [vmem:[%s9490 + $0x10] sm:$0xf]
  %v9496 = vld [vmem:[%s9490 + $0x14] sm:$0xf]
  %v9497 = vld [vmem:[%s9490 + $0x18] sm:$0xf]
  %v9498 = vld [vmem:[%s9490 + $0x1c] sm:$0xf]
  %v9499 = vld [vmem:[%s9490 + $0x20] sm:$0xf]
  %v9500 = vld [vmem:[%s9490 + $0x24] sm:$0xf]
  %v9501 = vld [vmem:[%s9490 + $0x28] sm:$0xf]
  %v9502 = vld [vmem:[%s9490 + $0x2c] sm:$0xf]
  %v9503 = vld [vmem:[%s9490 + $0x30] sm:$0xf]
  %v9504 = vld [vmem:[%s9490 + $0x34] sm:$0xf]
  %v9505 = vld [vmem:[%s9490 + $0x38] sm:$0xf]
  %v9506 = vld [vmem:[%s9490 + $0x3c] sm:$0xf]
  %v9523 = vunpack.c.l.b16 %v9491
  %v9524 = vunpack.c.l.b16 %v9492
  %v9525 = vunpack.c.l.b16 %v9493
  %v9526 = vunpack.c.l.b16 %v9494
  %v9527 = vunpack.c.l.b16 %v9495
  %v9528 = vunpack.c.l.b16 %v9496
  %v9529 = vunpack.c.l.b16 %v9497
  %v9530 = vunpack.c.l.b16 %v9498
  %v9531 = vunpack.c.l.b16 %v9499
  %v9532 = vunpack.c.l.b16 %v9500
  %v9533 = vunpack.c.l.b16 %v9501
  %v9534 = vunpack.c.l.b16 %v9502
  %v9535 = vunpack.c.l.b16 %v9503
  %v9536 = vunpack.c.l.b16 %v9504
  %v9537 = vunpack.c.l.b16 %v9505
  %v9538 = vunpack.c.l.b16 %v9506
  %v9539 = vpack.c.b16 %v9524, %v9523
  %v9540 = vpack.c.b16 %v9526, %v9525
  %v9541 = vpack.c.b16 %v9528, %v9527
  %v9542 = vpack.c.b16 %v9530, %v9529
  %v9543 = vpack.c.b16 %v9532, %v9531
  %v9544 = vpack.c.b16 %v9534, %v9533
  %v9545 = vpack.c.b16 %v9536, %v9535
  %v9546 = vpack.c.b16 %v9538, %v9537
  %9555 = vmatprep.subr.bf16.mxu0 0
  %9556 = vmatpush1.bf16.msra.mxu0 %v9539
  %9557 = vmatprep.subr.bf16.mxu0 0
  %9558 = vmatpush1.bf16.msra.mxu0 %v9540
  %9559 = vmatprep.subr.bf16.mxu0 0
  %9560 = vmatpush1.bf16.msra.mxu0 %v9541
  %9561 = vmatprep.subr.bf16.mxu0 0
  %9562 = vmatpush1.bf16.msra.mxu0 %v9542
  %9563 = vmatprep.subr.bf16.mxu0 0
  %9564 = vmatpush1.bf16.msra.mxu0 %v9543
  %9565 = vmatprep.subr.bf16.mxu0 0
  %9566 = vmatpush1.bf16.msra.mxu0 %v9544
  %9567 = vmatprep.subr.bf16.mxu0 0
  %9568 = vmatpush1.bf16.msra.mxu0 %v9545
  %9569 = vmatprep.subr.bf16.mxu0 0
  %9570 = vmatpush1.bf16.msra.mxu0 %v9546
  %9571 = vmatprep.subr.bf16.mxu0 0
  %9572 = vmatpush1.bf16.msra.mxu0 0
  %9573 = vmatprep.subr.bf16.mxu0 0
  %9574 = vmatpush1.bf16.msra.mxu0 0
  %9575 = vmatprep.subr.bf16.mxu0 0
  %9576 = vmatpush1.bf16.msra.mxu0 0
  %9577 = vmatprep.subr.bf16.mxu0 0
  %9578 = vmatpush1.bf16.msra.mxu0 0
  %9579 = vmatprep.subr.bf16.mxu0 0
  %9580 = vmatpush1.bf16.msra.mxu0 0
  %9581 = vmatprep.subr.bf16.mxu0 0
  %9582 = vmatpush1.bf16.msra.mxu0 0
  %9583 = vmatprep.subr.bf16.mxu0 0
  %9584 = vmatpush1.bf16.msra.mxu0 0
  %9585 = vmatprep.subr.bf16.mxu0 0
  %9586 = vmatpush1.bf16.msra.mxu0 0
  %9587 = vmatprep.mubr.bf16.mxu0 0
  %9588 = vmatmul.mubr.bf16.gmra.mrb[0].mxu0 %v9458
  %v9589 = vpop.f32.mrb[0].mxu0
  %v9590 = vadd.f32 0.0, %v9589
  %v9591 = vpop.f32.mrb[0].mxu0
  %v9592 = vpop.f32.mrb[0].mxu0
  %v9593 = vadd.f32 0.0, %v9592
  %v9594 = vpop.f32.mrb[0].mxu0
  %9595 = vmatprep.mubr.bf16.mxu0 0
  %9596 = vmatmul.mubr.bf16.gmra.mrb[0].mxu0 %v9459
  %v9597 = vpop.f32.mrb[0].mxu0
  %v9598 = vadd.f32 0.0, %v9597
  %v9599 = vpop.f32.mrb[0].mxu0
  %v9600 = vpop.f32.mrb[0].mxu0
  %v9601 = vadd.f32 0.0, %v9600
  %v9602 = vpop.f32.mrb[0].mxu0
  %9603 = vmatprep.mubr.bf16.mxu0 0
  %9604 = vmatmul.mubr.bf16.gmra.mrb[0].mxu0 %v9460
  %v9605 = vpop.f32.mrb[0].mxu0
  %v9606 = vadd.f32 0.0, %v9605
  %v9607 = vpop.f32.mrb[0].mxu0
  %v9608 = vpop.f32.mrb[0].mxu0
  %v9609 = vadd.f32 0.0, %v9608
  %v9610 = vpop.f32.mrb[0].mxu0
  %9611 = vmatprep.mubr.bf16.mxu0 0
  %9612 = vmatmul.mubr.bf16.gmra.mrb[0].mxu0 %v9461
  %v9613 = vpop.f32.mrb[0].mxu0
  %v9614 = vadd.f32 0.0, %v9613
  %v9615 = vpop.f32.mrb[0].mxu0
  %v9616 = vpop.f32.mrb[0].mxu0
  %v9617 = vadd.f32 0.0, %v9616
  %v9618 = vpop.f32.mrb[0].mxu0
  %9619 = vmatprep.mubr.bf16.mxu0 0
  %9620 = vmatmul.mubr.bf16.gmra.mrb[0].mxu0 %v9462
  %v9621 = vpop.f32.mrb[0].mxu0
  %v9622 = vadd.f32 0.0, %v9621
  %v9623 = vpop.f32.mrb[0].mxu0
  %v9624 = vpop.f32.mrb[0].mxu0
  %v9625 = vadd.f32 0.0, %v9624
  %v9626 = vpop.f32.mrb[0].mxu0
  %9627 = vmatprep.mubr.bf16.mxu0 0
  %9628 = vmatmul.mubr.bf16.gmra.mrb[0].mxu0 %v9463
  %v9629 = vpop.f32.mrb[0].mxu0
  %v9630 = vadd.f32 0.0, %v9629
  %v9631 = vpop.f32.mrb[0].mxu0
  %v9632 = vpop.f32.mrb[0].mxu0
  %v9633 = vadd.f32 0.0, %v9632
  %v9634 = vpop.f32.mrb[0].mxu0
  %9635 = vmatprep.mubr.bf16.mxu0 0
  %9636 = vmatmul.mubr.bf16.gmra.mrb[0].mxu0 %v9464
  %v9637 = vpop.f32.mrb[0].mxu0
  %v9638 = vadd.f32 0.0, %v9637
  %v9639 = vpop.f32.mrb[0].mxu0
  %v9640 = vpop.f32.mrb[0].mxu0
  %v9641 = vadd.f32 0.0, %v9640
  %v9642 = vpop.f32.mrb[0].mxu0
  %9643 = vmatprep.mubr.bf16.mxu0 0
  %9644 = vmatmul.mubr.bf16.gmra.mrb[0].mxu0 %v9465
  %v9645 = vpop.f32.mrb[0].mxu0
  %v9646 = vadd.f32 0.0, %v9645
  %v9647 = vpop.f32.mrb[0].mxu0
  %v9648 = vpop.f32.mrb[0].mxu0
  %v9649 = vadd.f32 0.0, %v9648
  %v9650 = vpop.f32.mrb[0].mxu0
  %9651 = vmatprep.mubr.bf16.mxu0 0
  %9652 = vmatmul.mubr.bf16.gmra.mrb[0].mxu0 %v9466
  %v9653 = vpop.f32.mrb[0].mxu0
  %v9654 = vadd.f32 0.0, %v9653
  %v9655 = vpop.f32.mrb[0].mxu0
  %v9656 = vpop.f32.mrb[0].mxu0
  %v9657 = vadd.f32 0.0, %v9656
  %v9658 = vpop.f32.mrb[0].mxu0
  %9659 = vmatprep.mubr.bf16.mxu0 0
  %9660 = vmatmul.mubr.bf16.gmra.mrb[0].mxu0 %v9467
  %v9661 = vpop.f32.mrb[0].mxu0
  %v9662 = vadd.f32 0.0, %v9661
  %v9663 = vpop.f32.mrb[0].mxu0
  %v9664 = vpop.f32.mrb[0].mxu0
  %v9665 = vadd.f32 0.0, %v9664
  %v9666 = vpop.f32.mrb[0].mxu0
  %9667 = vmatprep.mubr.bf16.mxu0 0
  %9668 = vmatmul.mubr.bf16.gmra.mrb[0].mxu0 %v9468
  %v9669 = vpop.f32.mrb[0].mxu0
  %v9670 = vadd.f32 0.0, %v9669
  %v9671 = vpop.f32.mrb[0].mxu0
  %v9672 = vpop.f32.mrb[0].mxu0
  %v9673 = vadd.f32 0.0, %v9672
  %v9674 = vpop.f32.mrb[0].mxu0
  %9675 = vmatprep.mubr.bf16.mxu0 0
  %9676 = vmatmul.mubr.bf16.gmra.mrb[0].mxu0 %v9469
  %v9677 = vpop.f32.mrb[0].mxu0
  %v9678 = vadd.f32 0.0, %v9677
  %v9679 = vpop.f32.mrb[0].mxu0
  %v9680 = vpop.f32.mrb[0].mxu0
  %v9681 = vadd.f32 0.0, %v9680
  %v9682 = vpop.f32.mrb[0].mxu0
  %9683 = vmatprep.mubr.bf16.mxu0 0
  %9684 = vmatmul.mubr.bf16.gmra.mrb[0].mxu0 %v9470
  %v9685 = vpop.f32.mrb[0].mxu0
  %v9686 = vadd.f32 0.0, %v9685
  %v9687 = vpop.f32.mrb[0].mxu0
  %v9688 = vpop.f32.mrb[0].mxu0
  %v9689 = vadd.f32 0.0, %v9688
  %v9690 = vpop.f32.mrb[0].mxu0
  %9691 = vmatprep.mubr.bf16.mxu0 0
  %9692 = vmatmul.mubr.bf16.gmra.mrb[0].mxu0 %v9471
  %v9693 = vpop.f32.mrb[0].mxu0
  %v9694 = vadd.f32 0.0, %v9693
  %v9695 = vpop.f32.mrb[0].mxu0
  %v9696 = vpop.f32.mrb[0].mxu0
  %v9697 = vadd.f32 0.0, %v9696
  %v9698 = vpop.f32.mrb[0].mxu0
  %9699 = vmatprep.mubr.bf16.mxu0 0
  %9700 = vmatmul.mubr.bf16.gmra.mrb[0].mxu0 %v9472
  %v9701 = vpop.f32.mrb[0].mxu0
  %v9702 = vadd.f32 0.0, %v9701
  %v9703 = vpop.f32.mrb[0].mxu0
  %v9704 = vpop.f32.mrb[0].mxu0
  %v9705 = vadd.f32 0.0, %v9704
  %v9706 = vpop.f32.mrb[0].mxu0
  %9707 = vmatprep.mubr.bf16.mxu0 0
  %9708 = vmatmul.mubr.bf16.gmra.mrb[0].mxu0 %v9473
  %v9709 = vpop.f32.mrb[0].mxu0
  %v9710 = vadd.f32 0.0, %v9709
  %v9711 = vpop.f32.mrb[0].mxu0
  %v9712 = vpop.f32.mrb[0].mxu0
  %v9713 = vadd.f32 0.0, %v9712
  %v9714 = vpop.f32.mrb[0].mxu0
  %9715 = vmatprep.mubr.bf16.mxu0 0
  %9716 = vmatmul.mubr.bf16.gmra.mrb[0].mxu0 %v9474
  %v9717 = vpop.f32.mrb[0].mxu0
  %v9718 = vadd.f32 0.0, %v9717
  %v9719 = vpop.f32.mrb[0].mxu0
  %v9720 = vpop.f32.mrb[0].mxu0
  %v9721 = vadd.f32 0.0, %v9720
  %v9722 = vpop.f32.mrb[0].mxu0
  %9723 = vmatprep.mubr.bf16.mxu0 0
  %9724 = vmatmul.mubr.bf16.gmra.mrb[0].mxu0 %v9475
  %v9725 = vpop.f32.mrb[0].mxu0
  %v9726 = vadd.f32 0.0, %v9725
  %v9727 = vpop.f32.mrb[0].mxu0
  %v9728 = vpop.f32.mrb[0].mxu0
  %v9729 = vadd.f32 0.0, %v9728
  %v9730 = vpop.f32.mrb[0].mxu0
  %9731 = vmatprep.mubr.bf16.mxu0 0
  %9732 = vmatmul.mubr.bf16.gmra.mrb[0].mxu0 %v9476
  %v9733 = vpop.f32.mrb[0].mxu0
  %v9734 = vadd.f32 0.0, %v9733
  %v9735 = vpop.f32.mrb[0].mxu0
  %v9736 = vpop.f32.mrb[0].mxu0
  %v9737 = vadd.f32 0.0, %v9736
  %v9738 = vpop.f32.mrb[0].mxu0
  %9739 = vmatprep.mubr.bf16.mxu0 0
  %9740 = vmatmul.mubr.bf16.gmra.mrb[0].mxu0 %v9477
  %v9741 = vpop.f32.mrb[0].mxu0
  %v9742 = vadd.f32 0.0, %v9741
  %v9743 = vpop.f32.mrb[0].mxu0
  %v9744 = vpop.f32.mrb[0].mxu0
  %v9745 = vadd.f32 0.0, %v9744
  %v9746 = vpop.f32.mrb[0].mxu0
  %9747 = vmatprep.mubr.bf16.mxu0 0
  %9748 = vmatmul.mubr.bf16.gmra.mrb[0].mxu0 %v9478
  %v9749 = vpop.f32.mrb[0].mxu0
  %v9750 = vadd.f32 0.0, %v9749
  %v9751 = vpop.f32.mrb[0].mxu0
  %v9752 = vpop.f32.mrb[0].mxu0
  %v9753 = vadd.f32 0.0, %v9752
  %v9754 = vpop.f32.mrb[0].mxu0
  %9755 = vmatprep.mubr.bf16.mxu0 0
  %9756 = vmatmul.mubr.bf16.gmra.mrb[0].mxu0 %v9479
  %v9757 = vpop.f32.mrb[0].mxu0
  %v9758 = vadd.f32 0.0, %v9757
  %v9759 = vpop.f32.mrb[0].mxu0
  %v9760 = vpop.f32.mrb[0].mxu0
  %v9761 = vadd.f32 0.0, %v9760
  %v9762 = vpop.f32.mrb[0].mxu0
  %9763 = vmatprep.mubr.bf16.mxu0 0
  %9764 = vmatmul.mubr.bf16.gmra.mrb[0].mxu0 %v9480
  %v9765 = vpop.f32.mrb[0].mxu0
  %v9766 = vadd.f32 0.0, %v9765
  %v9767 = vpop.f32.mrb[0].mxu0
  %v9768 = vpop.f32.mrb[0].mxu0
  %v9769 = vadd.f32 0.0, %v9768
  %v9770 = vpop.f32.mrb[0].mxu0
  %9771 = vmatprep.mubr.bf16.mxu0 0
  %9772 = vmatmul.mubr.bf16.gmra.mrb[0].mxu0 %v9481
  %v9773 = vpop.f32.mrb[0].mxu0
  %v9774 = vadd.f32 0.0, %v9773
  %v9775 = vpop.f32.mrb[0].mxu0
  %v9776 = vpop.f32.mrb[0].mxu0
  %v9777 = vadd.f32 0.0, %v9776
  %v9778 = vpop.f32.mrb[0].mxu0
  %9779 = vmatprep.mubr.bf16.mxu0 0
  %9780 = vmatmul.mubr.bf16.gmra.mrb[0].mxu0 %v9482
  %v9781 = vpop.f32.mrb[0].mxu0
  %v9782 = vadd.f32 0.0, %v9781
  %v9783 = vpop.f32.mrb[0].mxu0
  %v9784 = vpop.f32.mrb[0].mxu0
  %v9785 = vadd.f32 0.0, %v9784
  %v9786 = vpop.f32.mrb[0].mxu0
  %9787 = vmatprep.mubr.bf16.mxu0 0
  %9788 = vmatmul.mubr.bf16.gmra.mrb[0].mxu0 %v9483
  %v9789 = vpop.f32.mrb[0].mxu0
  %v9790 = vadd.f32 0.0, %v9789
  %v9791 = vpop.f32.mrb[0].mxu0
  %v9792 = vpop.f32.mrb[0].mxu0
  %v9793 = vadd.f32 0.0, %v9792
  %v9794 = vpop.f32.mrb[0].mxu0
  %9795 = vmatprep.mubr.bf16.mxu0 0
  %9796 = vmatmul.mubr.bf16.gmra.mrb[0].mxu0 %v9484
  %v9797 = vpop.f32.mrb[0].mxu0
  %v9798 = vadd.f32 0.0, %v9797
  %v9799 = vpop.f32.mrb[0].mxu0
  %v9800 = vpop.f32.mrb[0].mxu0
  %v9801 = vadd.f32 0.0, %v9800
  %v9802 = vpop.f32.mrb[0].mxu0
  %9803 = vmatprep.mubr.bf16.mxu0 0
  %9804 = vmatmul.mubr.bf16.gmra.mrb[0].mxu0 %v9485
  %v9805 = vpop.f32.mrb[0].mxu0
  %v9806 = vadd.f32 0.0, %v9805
  %v9807 = vpop.f32.mrb[0].mxu0
  %v9808 = vpop.f32.mrb[0].mxu0
  %v9809 = vadd.f32 0.0, %v9808
  %v9810 = vpop.f32.mrb[0].mxu0
  %9811 = vmatprep.mubr.bf16.mxu0 0
  %9812 = vmatmul.mubr.bf16.gmra.mrb[0].mxu0 %v9486
  %v9813 = vpop.f32.mrb[0].mxu0
  %v9814 = vadd.f32 0.0, %v9813
  %v9815 = vpop.f32.mrb[0].mxu0
  %v9816 = vpop.f32.mrb[0].mxu0
  %v9817 = vadd.f32 0.0, %v9816
  %v9818 = vpop.f32.mrb[0].mxu0
  %9819 = vmatprep.mubr.bf16.mxu0 0
  %9820 = vmatmul.mubr.bf16.gmra.mrb[0].mxu0 %v9487
  %v9821 = vpop.f32.mrb[0].mxu0
  %v9822 = vadd.f32 0.0, %v9821
  %v9823 = vpop.f32.mrb[0].mxu0
  %v9824 = vpop.f32.mrb[0].mxu0
  %v9825 = vadd.f32 0.0, %v9824
  %v9826 = vpop.f32.mrb[0].mxu0
  %9827 = vmatprep.mubr.bf16.mxu0 0
  %9828 = vmatmul.mubr.bf16.gmra.mrb[0].mxu0 %v9488
  %v9829 = vpop.f32.mrb[0].mxu0
  %v9830 = vadd.f32 0.0, %v9829
  %v9831 = vpop.f32.mrb[0].mxu0
  %v9832 = vpop.f32.mrb[0].mxu0
  %v9833 = vadd.f32 0.0, %v9832
  %v9834 = vpop.f32.mrb[0].mxu0
  %9835 = vmatprep.mubr.bf16.mxu0 0
  %9836 = vmatmul.mubr.bf16.gmra.mrb[0].mxu0 %v9489
  %v9837 = vpop.f32.mrb[0].mxu0
  %v9838 = vadd.f32 0.0, %v9837
  %v9839 = vpop.f32.mrb[0].mxu0
  %v9840 = vpop.f32.mrb[0].mxu0
  %v9841 = vadd.f32 0.0, %v9840
  %v9842 = vpop.f32.mrb[0].mxu0
  %9843 = vdwg.mxu0
  %v9844 = vadd.f32 %v9330, %v9590
  %v9845 = vadd.f32 %v9331, %v9593
  %v9846 = vadd.f32 %v9332, %v9598
  %v9847 = vadd.f32 %v9333, %v9601
  %v9848 = vadd.f32 %v9334, %v9606
  %v9849 = vadd.f32 %v9335, %v9609
  %v9850 = vadd.f32 %v9336, %v9614
  %v9851 = vadd.f32 %v9337, %v9617
  %v9852 = vadd.f32 %v9338, %v9622
  %v9853 = vadd.f32 %v9339, %v9625
  %v9854 = vadd.f32 %v9340, %v9630
  %v9855 = vadd.f32 %v9341, %v9633
  %v9856 = vadd.f32 %v9342, %v9638
  %v9857 = vadd.f32 %v9343, %v9641
  %v9858 = vadd.f32 %v9344, %v9646
  %v9859 = vadd.f32 %v9345, %v9649
  %v9860 = vadd.f32 %v9346, %v9654
  %v9861 = vadd.f32 %v9347, %v9657
  %v9862 = vadd.f32 %v9348, %v9662
  %v9863 = vadd.f32 %v9349, %v9665
  %v9864 = vadd.f32 %v9350, %v9670
  %v9865 = vadd.f32 %v9351, %v9673
  %v9866 = vadd.f32 %v9352, %v9678
  %v9867 = vadd.f32 %v9353, %v9681
  %v9868 = vadd.f32 %v9354, %v9686
  %v9869 = vadd.f32 %v9355, %v9689
  %v9870 = vadd.f32 %v9356, %v9694
  %v9871 = vadd.f32 %v9357, %v9697
  %v9872 = vadd.f32 %v9358, %v9702
  %v9873 = vadd.f32 %v9359, %v9705
  %v9874 = vadd.f32 %v9360, %v9710
  %v9875 = vadd.f32 %v9361, %v9713
  %v9876 = vadd.f32 %v9362, %v9718
  %v9877 = vadd.f32 %v9363, %v9721
  %v9878 = vadd.f32 %v9364, %v9726
  %v9879 = vadd.f32 %v9365, %v9729
  %v9880 = vadd.f32 %v9366, %v9734
  %v9881 = vadd.f32 %v9367, %v9737
  %v9882 = vadd.f32 %v9368, %v9742
  %v9883 = vadd.f32 %v9369, %v9745
  %v9884 = vadd.f32 %v9370, %v9750
  %v9885 = vadd.f32 %v9371, %v9753
  %v9886 = vadd.f32 %v9372, %v9758
  %v9887 = vadd.f32 %v9373, %v9761
  %v9888 = vadd.f32 %v9374, %v9766
  %v9889 = vadd.f32 %v9375, %v9769
  %v9890 = vadd.f32 %v9376, %v9774
  %v9891 = vadd.f32 %v9377, %v9777
  %v9892 = vadd.f32 %v9378, %v9782
  %v9893 = vadd.f32 %v9379, %v9785
  %v9894 = vadd.f32 %v9380, %v9790
  %v9895 = vadd.f32 %v9381, %v9793
  %v9896 = vadd.f32 %v9382, %v9798
  %v9897 = vadd.f32 %v9383, %v9801
  %v9898 = vadd.f32 %v9384, %v9806
  %v9899 = vadd.f32 %v9385, %v9809
  %v9900 = vadd.f32 %v9386, %v9814
  %v9901 = vadd.f32 %v9387, %v9817
  %v9902 = vadd.f32 %v9388, %v9822
  %v9903 = vadd.f32 %v9389, %v9825
  %v9904 = vadd.f32 %v9390, %v9830
  %v9905 = vadd.f32 %v9391, %v9833
  %v9906 = vadd.f32 %v9392, %v9838
  %v9907 = vadd.f32 %v9393, %v9841
  %v9908 = vlaneseq
  %v9909 = vshrl.u32 %v9908, 7
  %v9910 = vsub.s32 3, %v9909
  %v9911 = vrot.slane %v22, %v9910
  %v9912 = vadd.f32 %v9844, %v9911
  %v9913 = vadd.f32 %v9845, %v9911
  %v9914 = vadd.f32 %v9846, %v9911
  %v9915 = vadd.f32 %v9847, %v9911
  %v9916 = vadd.f32 %v9848, %v9911
  %v9917 = vadd.f32 %v9849, %v9911
  %v9918 = vadd.f32 %v9850, %v9911
  %v9919 = vadd.f32 %v9851, %v9911
  %v9920 = vadd.f32 %v9852, %v9911
  %v9921 = vadd.f32 %v9853, %v9911
  %v9922 = vadd.f32 %v9854, %v9911
  %v9923 = vadd.f32 %v9855, %v9911
  %v9924 = vadd.f32 %v9856, %v9911
  %v9925 = vadd.f32 %v9857, %v9911
  %v9926 = vadd.f32 %v9858, %v9911
  %v9927 = vadd.f32 %v9859, %v9911
  %v9928 = vadd.f32 %v9860, %v9911
  %v9929 = vadd.f32 %v9861, %v9911
  %v9930 = vadd.f32 %v9862, %v9911
  %v9931 = vadd.f32 %v9863, %v9911
  %v9932 = vadd.f32 %v9864, %v9911
  %v9933 = vadd.f32 %v9865, %v9911
  %v9934 = vadd.f32 %v9866, %v9911
  %v9935 = vadd.f32 %v9867, %v9911
  %v9936 = vadd.f32 %v9868, %v9911
  %v9937 = vadd.f32 %v9869, %v9911
  %v9938 = vadd.f32 %v9870, %v9911
  %v9939 = vadd.f32 %v9871, %v9911
  %v9940 = vadd.f32 %v9872, %v9911
  %v9941 = vadd.f32 %v9873, %v9911
  %v9942 = vadd.f32 %v9874, %v9911
  %v9943 = vadd.f32 %v9875, %v9911
  %v9944 = vadd.f32 %v9876, %v9911
  %v9945 = vadd.f32 %v9877, %v9911
  %v9946 = vadd.f32 %v9878, %v9911
  %v9947 = vadd.f32 %v9879, %v9911
  %v9948 = vadd.f32 %v9880, %v9911
  %v9949 = vadd.f32 %v9881, %v9911
  %v9950 = vadd.f32 %v9882, %v9911
  %v9951 = vadd.f32 %v9883, %v9911
  %v9952 = vadd.f32 %v9884, %v9911
  %v9953 = vadd.f32 %v9885, %v9911
  %v9954 = vadd.f32 %v9886, %v9911
  %v9955 = vadd.f32 %v9887, %v9911
  %v9956 = vadd.f32 %v9888, %v9911
  %v9957 = vadd.f32 %v9889, %v9911
  %v9958 = vadd.f32 %v9890, %v9911
  %v9959 = vadd.f32 %v9891, %v9911
  %v9960 = vadd.f32 %v9892, %v9911
  %v9961 = vadd.f32 %v9893, %v9911
  %v9962 = vadd.f32 %v9894, %v9911
  %v9963 = vadd.f32 %v9895, %v9911
  %v9964 = vadd.f32 %v9896, %v9911
  %v9965 = vadd.f32 %v9897, %v9911
  %v9966 = vadd.f32 %v9898, %v9911
  %v9967 = vadd.f32 %v9899, %v9911
  %v9968 = vadd.f32 %v9900, %v9911
  %v9969 = vadd.f32 %v9901, %v9911
  %v9970 = vadd.f32 %v9902, %v9911
  %v9971 = vadd.f32 %v9903, %v9911
  %v9972 = vadd.f32 %v9904, %v9911
  %v9973 = vadd.f32 %v9905, %v9911
  %v9974 = vadd.f32 %v9906, %v9911
  %v9975 = vadd.f32 %v9907, %v9911
  %v9976 = vadd.f32 %v9912, %v9913
  %v9977 = vadd.f32 %v9976, %v9914
  %v9978 = vadd.f32 %v9977, %v9915
  %v9979 = vadd.f32 %v9978, %v9916
  %v9980 = vadd.f32 %v9979, %v9917
  %v9981 = vadd.f32 %v9980, %v9918
  %v9982 = vadd.f32 %v9981, %v9919
  %v9983 = vadd.f32 %v9982, %v9920
  %v9984 = vadd.f32 %v9983, %v9921
  %v9985 = vadd.f32 %v9984, %v9922
  %v9986 = vadd.f32 %v9985, %v9923
  %v9987 = vadd.f32 %v9986, %v9924
  %v9988 = vadd.f32 %v9987, %v9925
  %v9989 = vadd.f32 %v9988, %v9926
  %v9990 = vadd.f32 %v9989, %v9927
  %v9991 = vadd.f32 %v9990, %v9928
  %v9992 = vadd.f32 %v9991, %v9929
  %v9993 = vadd.f32 %v9992, %v9930
  %v9994 = vadd.f32 %v9993, %v9931
  %v9995 = vadd.f32 %v9994, %v9932
  %v9996 = vadd.f32 %v9995, %v9933
  %v9997 = vadd.f32 %v9996, %v9934
  %v9998 = vadd.f32 %v9997, %v9935
  %v9999 = vadd.f32 %v9998, %v9936
  %v10000 = vadd.f32 %v9999, %v9937
  %v10001 = vadd.f32 %v10000, %v9938
  %v10002 = vadd.f32 %v10001, %v9939
  %v10003 = vadd.f32 %v10002, %v9940
  %v10004 = vadd.f32 %v10003, %v9941
  %v10005 = vadd.f32 %v10004, %v9942
  %v10006 = vadd.f32 %v10005, %v9943
  %v10007 = vadd.f32 %v10006, %v9944
  %v10008 = vadd.f32 %v10007, %v9945
  %v10009 = vadd.f32 %v10008, %v9946
  %v10010 = vadd.f32 %v10009, %v9947
  %v10011 = vadd.f32 %v10010, %v9948
  %v10012 = vadd.f32 %v10011, %v9949
  %v10013 = vadd.f32 %v10012, %v9950
  %v10014 = vadd.f32 %v10013, %v9951
  %v10015 = vadd.f32 %v10014, %v9952
  %v10016 = vadd.f32 %v10015, %v9953
  %v10017 = vadd.f32 %v10016, %v9954
  %v10018 = vadd.f32 %v10017, %v9955
  %v10019 = vadd.f32 %v10018, %v9956
  %v10020 = vadd.f32 %v10019, %v9957
  %v10021 = vadd.f32 %v10020, %v9958
  %v10022 = vadd.f32 %v10021, %v9959
  %v10023 = vadd.f32 %v10022, %v9960
  %v10024 = vadd.f32 %v10023, %v9961
  %v10025 = vadd.f32 %v10024, %v9962
  %v10026 = vadd.f32 %v10025, %v9963
  %v10027 = vadd.f32 %v10026, %v9964
  %v10028 = vadd.f32 %v10027, %v9965
  %v10029 = vadd.f32 %v10028, %v9966
  %v10030 = vadd.f32 %v10029, %v9967
  %v10031 = vadd.f32 %v10030, %v9968
  %v10032 = vadd.f32 %v10031, %v9969
  %v10033 = vadd.f32 %v10032, %v9970
  %v10034 = vadd.f32 %v10033, %v9971
  %v10035 = vadd.f32 %v10034, %v9972
  %v10036 = vadd.f32 %v10035, %v9973
  %v10037 = vadd.f32 %v10036, %v9974
  %v10038 = vadd.f32 %v10037, %v9975
  %v10039 = vrot.slane %v10038, 4
  %v10040 = vadd.f32 %v10038, %v10039
  %v10041 = vrot.slane %v10040, 2
  %v10042 = vadd.f32 %v10040, %v10041
  %v10043 = vrot.slane %v10042, 1
  %v10044 = vadd.f32 %v10042, %v10043
  %v10045 = vmul.f32 %v9912, %v9912
  %v10046 = vmul.f32 %v9913, %v9913
  %v10047 = vmul.f32 %v9914, %v9914
  %v10048 = vmul.f32 %v9915, %v9915
  %v10049 = vmul.f32 %v9916, %v9916
  %v10050 = vmul.f32 %v9917, %v9917
  %v10051 = vmul.f32 %v9918, %v9918
  %v10052 = vmul.f32 %v9919, %v9919
  %v10053 = vmul.f32 %v9920, %v9920
  %v10054 = vmul.f32 %v9921, %v9921
  %v10055 = vmul.f32 %v9922, %v9922
  %v10056 = vmul.f32 %v9923, %v9923
  %v10057 = vmul.f32 %v9924, %v9924
  %v10058 = vmul.f32 %v9925, %v9925
  %v10059 = vmul.f32 %v9926, %v9926
  %v10060 = vmul.f32 %v9927, %v9927
  %v10061 = vmul.f32 %v9928, %v9928
  %v10062 = vmul.f32 %v9929, %v9929
  %v10063 = vmul.f32 %v9930, %v9930
  %v10064 = vmul.f32 %v9931, %v9931
  %v10065 = vmul.f32 %v9932, %v9932
  %v10066 = vmul.f32 %v9933, %v9933
  %v10067 = vmul.f32 %v9934, %v9934
  %v10068 = vmul.f32 %v9935, %v9935
  %v10069 = vmul.f32 %v9936, %v9936
  %v10070 = vmul.f32 %v9937, %v9937
  %v10071 = vmul.f32 %v9938, %v9938
  %v10072 = vmul.f32 %v9939, %v9939
  %v10073 = vmul.f32 %v9940, %v9940
  %v10074 = vmul.f32 %v9941, %v9941
  %v10075 = vmul.f32 %v9942, %v9942
  %v10076 = vmul.f32 %v9943, %v9943
  %v10077 = vmul.f32 %v9944, %v9944
  %v10078 = vmul.f32 %v9945, %v9945
  %v10079 = vmul.f32 %v9946, %v9946
  %v10080 = vmul.f32 %v9947, %v9947
  %v10081 = vmul.f32 %v9948, %v9948
  %v10082 = vmul.f32 %v9949, %v9949
  %v10083 = vmul.f32 %v9950, %v9950
  %v10084 = vmul.f32 %v9951, %v9951
  %v10085 = vmul.f32 %v9952, %v9952
  %v10086 = vmul.f32 %v9953, %v9953
  %v10087 = vmul.f32 %v9954, %v9954
  %v10088 = vmul.f32 %v9955, %v9955
  %v10089 = vmul.f32 %v9956, %v9956
  %v10090 = vmul.f32 %v9957, %v9957
  %v10091 = vmul.f32 %v9958, %v9958
  %v10092 = vmul.f32 %v9959, %v9959
  %v10093 = vmul.f32 %v9960, %v9960
  %v10094 = vmul.f32 %v9961, %v9961
  %v10095 = vmul.f32 %v9962, %v9962
  %v10096 = vmul.f32 %v9963, %v9963
  %v10097 = vmul.f32 %v9964, %v9964
  %v10098 = vmul.f32 %v9965, %v9965
  %v10099 = vmul.f32 %v9966, %v9966
  %v10100 = vmul.f32 %v9967, %v9967
  %v10101 = vmul.f32 %v9968, %v9968
  %v10102 = vmul.f32 %v9969, %v9969
  %v10103 = vmul.f32 %v9970, %v9970
  %v10104 = vmul.f32 %v9971, %v9971
  %v10105 = vmul.f32 %v9972, %v9972
  %v10106 = vmul.f32 %v9973, %v9973
  %v10107 = vmul.f32 %v9974, %v9974
  %v10108 = vmul.f32 %v9975, %v9975
  %v10109 = vadd.f32 %v10045, %v10046
  %v10110 = vadd.f32 %v10109, %v10047
  %v10111 = vadd.f32 %v10110, %v10048
  %v10112 = vadd.f32 %v10111, %v10049
  %v10113 = vadd.f32 %v10112, %v10050
  %v10114 = vadd.f32 %v10113, %v10051
  %v10115 = vadd.f32 %v10114, %v10052
  %v10116 = vadd.f32 %v10115, %v10053
  %v10117 = vadd.f32 %v10116, %v10054
  %v10118 = vadd.f32 %v10117, %v10055
  %v10119 = vadd.f32 %v10118, %v10056
  %v10120 = vadd.f32 %v10119, %v10057
  %v10121 = vadd.f32 %v10120, %v10058
  %v10122 = vadd.f32 %v10121, %v10059
  %v10123 = vadd.f32 %v10122, %v10060
  %v10124 = vadd.f32 %v10123, %v10061
  %v10125 = vadd.f32 %v10124, %v10062
  %v10126 = vadd.f32 %v10125, %v10063
  %v10127 = vadd.f32 %v10126, %v10064
  %v10128 = vadd.f32 %v10127, %v10065
  %v10129 = vadd.f32 %v10128, %v10066
  %v10130 = vadd.f32 %v10129, %v10067
  %v10131 = vadd.f32 %v10130, %v10068
  %v10132 = vadd.f32 %v10131, %v10069
  %v10133 = vadd.f32 %v10132, %v10070
  %v10134 = vadd.f32 %v10133, %v10071
  %v10135 = vadd.f32 %v10134, %v10072
  %v10136 = vadd.f32 %v10135, %v10073
  %v10137 = vadd.f32 %v10136, %v10074
  %v10138 = vadd.f32 %v10137, %v10075
  %v10139 = vadd.f32 %v10138, %v10076
  %v10140 = vadd.f32 %v10139, %v10077
  %v10141 = vadd.f32 %v10140, %v10078
  %v10142 = vadd.f32 %v10141, %v10079
  %v10143 = vadd.f32 %v10142, %v10080
  %v10144 = vadd.f32 %v10143, %v10081
  %v10145 = vadd.f32 %v10144, %v10082
  %v10146 = vadd.f32 %v10145, %v10083
  %v10147 = vadd.f32 %v10146, %v10084
  %v10148 = vadd.f32 %v10147, %v10085
  %v10149 = vadd.f32 %v10148, %v10086
  %v10150 = vadd.f32 %v10149, %v10087
  %v10151 = vadd.f32 %v10150, %v10088
  %v10152 = vadd.f32 %v10151, %v10089
  %v10153 = vadd.f32 %v10152, %v10090
  %v10154 = vadd.f32 %v10153, %v10091
  %v10155 = vadd.f32 %v10154, %v10092
  %v10156 = vadd.f32 %v10155, %v10093
  %v10157 = vadd.f32 %v10156, %v10094
  %v10158 = vadd.f32 %v10157, %v10095
  %v10159 = vadd.f32 %v10158, %v10096
  %v10160 = vadd.f32 %v10159, %v10097
  %v10161 = vadd.f32 %v10160, %v10098
  %v10162 = vadd.f32 %v10161, %v10099
  %v10163 = vadd.f32 %v10162, %v10100
  %v10164 = vadd.f32 %v10163, %v10101
  %v10165 = vadd.f32 %v10164, %v10102
  %v10166 = vadd.f32 %v10165, %v10103
  %v10167 = vadd.f32 %v10166, %v10104
  %v10168 = vadd.f32 %v10167, %v10105
  %v10169 = vadd.f32 %v10168, %v10106
  %v10170 = vadd.f32 %v10169, %v10107
  %v10171 = vadd.f32 %v10170, %v10108
  %v10172 = vrot.slane %v10171, 4
  %v10173 = vadd.f32 %v10171, %v10172
  %v10174 = vrot.slane %v10173, 2
  %v10175 = vadd.f32 %v10173, %v10174
  %v10176 = vrot.slane %v10175, 1
  %v10177 = vadd.f32 %v10175, %v10176
  %v10178 = vmul.f32 %v10044, 0.001953125
  %v10179 = vmul.f32 %v10177, 0.001953125
  %v10180 = vmul.f32 %v10178, %v10178
  %v10181 = vsub.f32 %v10179, %v10180
  %v10182 = vadd.f32 %v10181, 1e-05
  %v10183 = vrsqrt.pop %v10182
  %v10184 = vmul.f32 %v22, %v10183
  %v10185 = vmul.f32 %v10178, %v10184
  %v10187 = vrot.slane %v10185, 7
  %v10189 = vsub.f32 %v22, %v10187
  %v10190 = vlaneseq
  %v10191 = vshrl.u32 %v10190, 7
  %v10192 = vsub.s32 4, %v10191
  %v10193 = vrot.slane %v10184, %v10192
  %v10194 = vmul.f32 %v9912, %v10193
  %v10195 = vmul.f32 %v9913, %v10193
  %v10196 = vmul.f32 %v9914, %v10193
  %v10197 = vmul.f32 %v9915, %v10193
  %v10198 = vmul.f32 %v9916, %v10193
  %v10199 = vmul.f32 %v9917, %v10193
  %v10200 = vmul.f32 %v9918, %v10193
  %v10201 = vmul.f32 %v9919, %v10193
  %v10202 = vmul.f32 %v9920, %v10193
  %v10203 = vmul.f32 %v9921, %v10193
  %v10204 = vmul.f32 %v9922, %v10193
  %v10205 = vmul.f32 %v9923, %v10193
  %v10206 = vmul.f32 %v9924, %v10193
  %v10207 = vmul.f32 %v9925, %v10193
  %v10208 = vmul.f32 %v9926, %v10193
  %v10209 = vmul.f32 %v9927, %v10193
  %v10210 = vmul.f32 %v9928, %v10193
  %v10211 = vmul.f32 %v9929, %v10193
  %v10212 = vmul.f32 %v9930, %v10193
  %v10213 = vmul.f32 %v9931, %v10193
  %v10214 = vmul.f32 %v9932, %v10193
  %v10215 = vmul.f32 %v9933, %v10193
  %v10216 = vmul.f32 %v9934, %v10193
  %v10217 = vmul.f32 %v9935, %v10193
  %v10218 = vmul.f32 %v9936, %v10193
  %v10219 = vmul.f32 %v9937, %v10193
  %v10220 = vmul.f32 %v9938, %v10193
  %v10221 = vmul.f32 %v9939, %v10193
  %v10222 = vmul.f32 %v9940, %v10193
  %v10223 = vmul.f32 %v9941, %v10193
  %v10224 = vmul.f32 %v9942, %v10193
  %v10225 = vmul.f32 %v9943, %v10193
  %v10226 = vmul.f32 %v9944, %v10193
  %v10227 = vmul.f32 %v9945, %v10193
  %v10228 = vmul.f32 %v9946, %v10193
  %v10229 = vmul.f32 %v9947, %v10193
  %v10230 = vmul.f32 %v9948, %v10193
  %v10231 = vmul.f32 %v9949, %v10193
  %v10232 = vmul.f32 %v9950, %v10193
  %v10233 = vmul.f32 %v9951, %v10193
  %v10234 = vmul.f32 %v9952, %v10193
  %v10235 = vmul.f32 %v9953, %v10193
  %v10236 = vmul.f32 %v9954, %v10193
  %v10237 = vmul.f32 %v9955, %v10193
  %v10238 = vmul.f32 %v9956, %v10193
  %v10239 = vmul.f32 %v9957, %v10193
  %v10240 = vmul.f32 %v9958, %v10193
  %v10241 = vmul.f32 %v9959, %v10193
  %v10242 = vmul.f32 %v9960, %v10193
  %v10243 = vmul.f32 %v9961, %v10193
  %v10244 = vmul.f32 %v9962, %v10193
  %v10245 = vmul.f32 %v9963, %v10193
  %v10246 = vmul.f32 %v9964, %v10193
  %v10247 = vmul.f32 %v9965, %v10193
  %v10248 = vmul.f32 %v9966, %v10193
  %v10249 = vmul.f32 %v9967, %v10193
  %v10250 = vmul.f32 %v9968, %v10193
  %v10251 = vmul.f32 %v9969, %v10193
  %v10252 = vmul.f32 %v9970, %v10193
  %v10253 = vmul.f32 %v9971, %v10193
  %v10254 = vmul.f32 %v9972, %v10193
  %v10255 = vmul.f32 %v9973, %v10193
  %v10256 = vmul.f32 %v9974, %v10193
  %v10257 = vmul.f32 %v9975, %v10193
  %v10258 = vlaneseq
  %v10259 = vshrl.u32 %v10258, 7
  %v10260 = vsub.s32 5, %v10259
  %v10261 = vrot.slane %v10189, %v10260
  %v10262 = vadd.f32 %v10194, %v10261
  %v10263 = vadd.f32 %v10195, %v10261
  %v10264 = vadd.f32 %v10196, %v10261
  %v10265 = vadd.f32 %v10197, %v10261
  %v10266 = vadd.f32 %v10198, %v10261
  %v10267 = vadd.f32 %v10199, %v10261
  %v10268 = vadd.f32 %v10200, %v10261
  %v10269 = vadd.f32 %v10201, %v10261
  %v10270 = vadd.f32 %v10202, %v10261
  %v10271 = vadd.f32 %v10203, %v10261
  %v10272 = vadd.f32 %v10204, %v10261
  %v10273 = vadd.f32 %v10205, %v10261
  %v10274 = vadd.f32 %v10206, %v10261
  %v10275 = vadd.f32 %v10207, %v10261
  %v10276 = vadd.f32 %v10208, %v10261
  %v10277 = vadd.f32 %v10209, %v10261
  %v10278 = vadd.f32 %v10210, %v10261
  %v10279 = vadd.f32 %v10211, %v10261
  %v10280 = vadd.f32 %v10212, %v10261
  %v10281 = vadd.f32 %v10213, %v10261
  %v10282 = vadd.f32 %v10214, %v10261
  %v10283 = vadd.f32 %v10215, %v10261
  %v10284 = vadd.f32 %v10216, %v10261
  %v10285 = vadd.f32 %v10217, %v10261
  %v10286 = vadd.f32 %v10218, %v10261
  %v10287 = vadd.f32 %v10219, %v10261
  %v10288 = vadd.f32 %v10220, %v10261
  %v10289 = vadd.f32 %v10221, %v10261
  %v10290 = vadd.f32 %v10222, %v10261
  %v10291 = vadd.f32 %v10223, %v10261
  %v10292 = vadd.f32 %v10224, %v10261
  %v10293 = vadd.f32 %v10225, %v10261
  %v10294 = vadd.f32 %v10226, %v10261
  %v10295 = vadd.f32 %v10227, %v10261
  %v10296 = vadd.f32 %v10228, %v10261
  %v10297 = vadd.f32 %v10229, %v10261
  %v10298 = vadd.f32 %v10230, %v10261
  %v10299 = vadd.f32 %v10231, %v10261
  %v10300 = vadd.f32 %v10232, %v10261
  %v10301 = vadd.f32 %v10233, %v10261
  %v10302 = vadd.f32 %v10234, %v10261
  %v10303 = vadd.f32 %v10235, %v10261
  %v10304 = vadd.f32 %v10236, %v10261
  %v10305 = vadd.f32 %v10237, %v10261
  %v10306 = vadd.f32 %v10238, %v10261
  %v10307 = vadd.f32 %v10239, %v10261
  %v10308 = vadd.f32 %v10240, %v10261
  %v10309 = vadd.f32 %v10241, %v10261
  %v10310 = vadd.f32 %v10242, %v10261
  %v10311 = vadd.f32 %v10243, %v10261
  %v10312 = vadd.f32 %v10244, %v10261
  %v10313 = vadd.f32 %v10245, %v10261
  %v10314 = vadd.f32 %v10246, %v10261
  %v10315 = vadd.f32 %v10247, %v10261
  %v10316 = vadd.f32 %v10248, %v10261
  %v10317 = vadd.f32 %v10249, %v10261
  %v10318 = vadd.f32 %v10250, %v10261
  %v10319 = vadd.f32 %v10251, %v10261
  %v10320 = vadd.f32 %v10252, %v10261
  %v10321 = vadd.f32 %v10253, %v10261
  %v10322 = vadd.f32 %v10254, %v10261
  %v10323 = vadd.f32 %v10255, %v10261
  %v10324 = vadd.f32 %v10256, %v10261
  %v10325 = vadd.f32 %v10257, %v10261
  %v10326 = vadd.f32 %v109, %v10262
  %v10327 = vadd.f32 %v110, %v10263
  %v10328 = vadd.f32 %v111, %v10264
  %v10329 = vadd.f32 %v112, %v10265
  %v10330 = vadd.f32 %v113, %v10266
  %v10331 = vadd.f32 %v114, %v10267
  %v10332 = vadd.f32 %v115, %v10268
  %v10333 = vadd.f32 %v116, %v10269
  %v10334 = vadd.f32 %v117, %v10270
  %v10335 = vadd.f32 %v118, %v10271
  %v10336 = vadd.f32 %v119, %v10272
  %v10337 = vadd.f32 %v120, %v10273
  %v10338 = vadd.f32 %v121, %v10274
  %v10339 = vadd.f32 %v122, %v10275
  %v10340 = vadd.f32 %v123, %v10276
  %v10341 = vadd.f32 %v124, %v10277
  %v10342 = vadd.f32 %v125, %v10278
  %v10343 = vadd.f32 %v126, %v10279
  %v10344 = vadd.f32 %v127, %v10280
  %v10345 = vadd.f32 %v128, %v10281
  %v10346 = vadd.f32 %v129, %v10282
  %v10347 = vadd.f32 %v130, %v10283
  %v10348 = vadd.f32 %v131, %v10284
  %v10349 = vadd.f32 %v132, %v10285
  %v10350 = vadd.f32 %v133, %v10286
  %v10351 = vadd.f32 %v134, %v10287
  %v10352 = vadd.f32 %v135, %v10288
  %v10353 = vadd.f32 %v136, %v10289
  %v10354 = vadd.f32 %v137, %v10290
  %v10355 = vadd.f32 %v138, %v10291
  %v10356 = vadd.f32 %v139, %v10292
  %v10357 = vadd.f32 %v140, %v10293
  %v10358 = vadd.f32 %v141, %v10294
  %v10359 = vadd.f32 %v142, %v10295
  %v10360 = vadd.f32 %v143, %v10296
  %v10361 = vadd.f32 %v144, %v10297
  %v10362 = vadd.f32 %v145, %v10298
  %v10363 = vadd.f32 %v146, %v10299
  %v10364 = vadd.f32 %v147, %v10300
  %v10365 = vadd.f32 %v148, %v10301
  %v10366 = vadd.f32 %v149, %v10302
  %v10367 = vadd.f32 %v150, %v10303
  %v10368 = vadd.f32 %v151, %v10304
  %v10369 = vadd.f32 %v152, %v10305
  %v10370 = vadd.f32 %v153, %v10306
  %v10371 = vadd.f32 %v154, %v10307
  %v10372 = vadd.f32 %v155, %v10308
  %v10373 = vadd.f32 %v156, %v10309
  %v10374 = vadd.f32 %v157, %v10310
  %v10375 = vadd.f32 %v158, %v10311
  %v10376 = vadd.f32 %v159, %v10312
  %v10377 = vadd.f32 %v160, %v10313
  %v10378 = vadd.f32 %v161, %v10314
  %v10379 = vadd.f32 %v162, %v10315
  %v10380 = vadd.f32 %v163, %v10316
  %v10381 = vadd.f32 %v164, %v10317
  %v10382 = vadd.f32 %v165, %v10318
  %v10383 = vadd.f32 %v166, %v10319
  %v10384 = vadd.f32 %v167, %v10320
  %v10385 = vadd.f32 %v168, %v10321
  %v10386 = vadd.f32 %v169, %v10322
  %v10387 = vadd.f32 %v170, %v10323
  %v10388 = vadd.f32 %v171, %v10324
  %v10389 = vadd.f32 %v172, %v10325
  %10390 = vst [vmem:[%s5] sm:$0xff] %v10326
  %10391 = vst [vmem:[%s5 + $0x8] sm:$0xff] %v10327
  %10392 = vst [vmem:[%s5 + $0x10] sm:$0xff] %v10328
  %10393 = vst [vmem:[%s5 + $0x18] sm:$0xff] %v10329
  %10394 = vst [vmem:[%s5 + $0x20] sm:$0xff] %v10330
  %10395 = vst [vmem:[%s5 + $0x28] sm:$0xff] %v10331
  %10396 = vst [vmem:[%s5 + $0x30] sm:$0xff] %v10332
  %10397 = vst [vmem:[%s5 + $0x38] sm:$0xff] %v10333
  %10398 = vst [vmem:[%s5 + $0x40] sm:$0xff] %v10334
  %10399 = vst [vmem:[%s5 + $0x48] sm:$0xff] %v10335
  %10400 = vst [vmem:[%s5 + $0x50] sm:$0xff] %v10336
  %10401 = vst [vmem:[%s5 + $0x58] sm:$0xff] %v10337
  %10402 = vst [vmem:[%s5 + $0x60] sm:$0xff] %v10338
  %10403 = vst [vmem:[%s5 + $0x68] sm:$0xff] %v10339
  %10404 = vst [vmem:[%s5 + $0x70] sm:$0xff] %v10340
  %10405 = vst [vmem:[%s5 + $0x78] sm:$0xff] %v10341
  %10406 = vst [vmem:[%s5 + $0x80] sm:$0xff] %v10342
  %10407 = vst [vmem:[%s5 + $0x88] sm:$0xff] %v10343
  %10408 = vst [vmem:[%s5 + $0x90] sm:$0xff] %v10344
  %10409 = vst [vmem:[%s5 + $0x98] sm:$0xff] %v10345
  %10410 = vst [vmem:[%s5 + $0xa0] sm:$0xff] %v10346
  %10411 = vst [vmem:[%s5 + $0xa8] sm:$0xff] %v10347
  %10412 = vst [vmem:[%s5 + $0xb0] sm:$0xff] %v10348
  %10413 = vst [vmem:[%s5 + $0xb8] sm:$0xff] %v10349
  %10414 = vst [vmem:[%s5 + $0xc0] sm:$0xff] %v10350
  %10415 = vst [vmem:[%s5 + $0xc8] sm:$0xff] %v10351
  %10416 = vst [vmem:[%s5 + $0xd0] sm:$0xff] %v10352
  %10417 = vst [vmem:[%s5 + $0xd8] sm:$0xff] %v10353
  %10418 = vst [vmem:[%s5 + $0xe0] sm:$0xff] %v10354
  %10419 = vst [vmem:[%s5 + $0xe8] sm:$0xff] %v10355
  %10420 = vst [vmem:[%s5 + $0xf0] sm:$0xff] %v10356
  %10421 = vst [vmem:[%s5 + $0xf8] sm:$0xff] %v10357
  %10422 = vst [vmem:[%s5 + $0x100] sm:$0xff] %v10358
  %10423 = vst [vmem:[%s5 + $0x108] sm:$0xff] %v10359
  %10424 = vst [vmem:[%s5 + $0x110] sm:$0xff] %v10360
  %10425 = vst [vmem:[%s5 + $0x118] sm:$0xff] %v10361
  %10426 = vst [vmem:[%s5 + $0x120] sm:$0xff] %v10362
  %10427 = vst [vmem:[%s5 + $0x128] sm:$0xff] %v10363
  %10428 = vst [vmem:[%s5 + $0x130] sm:$0xff] %v10364
  %10429 = vst [vmem:[%s5 + $0x138] sm:$0xff] %v10365
  %10430 = vst [vmem:[%s5 + $0x140] sm:$0xff] %v10366
  %10431 = vst [vmem:[%s5 + $0x148] sm:$0xff] %v10367
  %10432 = vst [vmem:[%s5 + $0x150] sm:$0xff] %v10368
  %10433 = vst [vmem:[%s5 + $0x158] sm:$0xff] %v10369
  %10434 = vst [vmem:[%s5 + $0x160] sm:$0xff] %v10370
  %10435 = vst [vmem:[%s5 + $0x168] sm:$0xff] %v10371
  %10436 = vst [vmem:[%s5 + $0x170] sm:$0xff] %v10372
  %10437 = vst [vmem:[%s5 + $0x178] sm:$0xff] %v10373
  %10438 = vst [vmem:[%s5 + $0x180] sm:$0xff] %v10374
  %10439 = vst [vmem:[%s5 + $0x188] sm:$0xff] %v10375
  %10440 = vst [vmem:[%s5 + $0x190] sm:$0xff] %v10376
  %10441 = vst [vmem:[%s5 + $0x198] sm:$0xff] %v10377
  %10442 = vst [vmem:[%s5 + $0x1a0] sm:$0xff] %v10378
  %10443 = vst [vmem:[%s5 + $0x1a8] sm:$0xff] %v10379
  %10444 = vst [vmem:[%s5 + $0x1b0] sm:$0xff] %v10380
  %10445 = vst [vmem:[%s5 + $0x1b8] sm:$0xff] %v10381
  %10446 = vst [vmem:[%s5 + $0x1c0] sm:$0xff] %v10382
  %10447 = vst [vmem:[%s5 + $0x1c8] sm:$0xff] %v10383
  %10448 = vst [vmem:[%s5 + $0x1d0] sm:$0xff] %v10384
  %10449 = vst [vmem:[%s5 + $0x1d8] sm:$0xff] %v10385
  %10450 = vst [vmem:[%s5 + $0x1e0] sm:$0xff] %v10386
  %10451 = vst [vmem:[%s5 + $0x1e8] sm:$0xff] %v10387
  %10452 = vst [vmem:[%s5 + $0x1f0] sm:$0xff] %v10388
  %10453 = vst [vmem:[%s5 + $0x1f8] sm:$0xff] %v10389
  // Predicated region
  $region22: #{residual_block_pallas.1} parent=0 // pred_check
    _
  $region23: #{residual_block_pallas.1} parent=0 // pred_check_branch
    %10455 = sbr.rel (0) target = $region25
  $region24: #{residual_block_pallas.1} parent=0 // pred_region
    _
  $region25: #{residual_block_pallas.1} parent=0 // pred_fallthru
    _
  // Predicated region
  $region26: #{residual_block_pallas.1} parent=0 // pred_check
    _
  $region27: #{residual_block_pallas.1} parent=0 // pred_check_branch
    %10457 = sbr.rel (0) target = $region29
  $region28: #{residual_block_pallas.1} parent=0 // pred_region
    _
  $region29: #{residual_block_pallas.1} parent=0 // pred_fallthru
    _

</llo_original>
